<compile_context>
chip_gen: v5e
topology: v5e:2x2
jax: 0.10.0
libtpu: 0.0.40
codegen_flags: <defaults>
</compile_context>

<pallas_src>
import jax
import jax.numpy as jnp
import numpy as np
from jax.experimental import pallas as pl
from jax.experimental.pallas import tpu as pltpu

SEQ_LEN = 512          # fc1 expects 32 * 64 = 2048  ->  L / 8 = 64  ->  L = 512
BN_EPS = 1e-5


# ---------------------------------------------------------------------------
# Fused kernel: (TB samples / grid step) conv1..pool3 + fc head
# ---------------------------------------------------------------------------
def _seismic_kernel(x_ref, w1_ref, t1_ref, sel1_ref, w2_ref, t2_ref, sel2_ref,
                    w3_ref, t3_ref, w1p_ref, fb1_ref, fw2_ref, fb2_ref,
                    out_ref):
    f32, bf16 = jnp.float32, jnp.bfloat16
    TB = x_ref.shape[0]

    def pool_rows(rows_f32, sel_ref):
        # MaxPool1d(2,2) on (R, L) rows of post-ReLU data.  Pairwise max via a
        # lane roll (wrapped value lands on an odd lane -> never selected), then
        # ONE even-lane selection matmul whose output is zero-padded by 2 lanes
        # on each side for the next conv.  Returns bf16.
        L = rows_f32.shape[1]
        m = jnp.maximum(rows_f32, pltpu.roll(rows_f32, shift=L - 1, axis=1))
        p = jnp.dot(m.astype(bf16), sel_ref[...], preferred_element_type=f32)
        return p.astype(bf16)

    def im2col(p, lout):
        # p: (Cin, TB, lout + 4) bf16 (2-lane zero pad each side).  Returns the
        # 5-tap im2col operand (5*Cin, TB*lout), tap-major rows, samples and
        # positions merged on lanes (weight-stationary conv matmul, huge N).
        cin = p.shape[0]
        return jnp.concatenate(
            [p[:, :, k:k + lout].reshape(cin, TB * lout) for k in range(5)],
            axis=0)

    # ---- layer 1: Conv1d(1->8, k=5, pad=2) + folded BN1 + ReLU (VPU, f32) ----
    x2d = x_ref[...]                                     # (TB, 516) zero padded
    w1 = w1_ref[...]                                     # (8, 5), BN1 scale folded
    z1 = None
    for k in range(5):                                   # static unroll, no masks
        term = w1[:, k][:, None, None] * x2d[None, :, k:k + 512]   # (8, TB, 512)
        z1 = term if z1 is None else z1 + term
    z1 = jnp.maximum(z1 + t1_ref[...], 0.0)              # t1: (8, 1, 1)

    p1 = pool_rows(z1.reshape(8 * TB, 512), sel1_ref).reshape(8, TB, 260)

    # ---- layer 2: Conv1d(8->16) as one weight-stationary MXU matmul ----------
    xs2 = im2col(p1, 256)                                # (40, TB*256) bf16
    z2 = jnp.dot(w2_ref[...], xs2, preferred_element_type=f32)     # (16, TB*256)
    z2 = jnp.maximum(z2 + t2_ref[...], 0.0)              # t2: (16, 1), BN2 folded

    z2r = z2.reshape(16, TB, 256).reshape(16 * TB, 256)
    p2 = pool_rows(z2r, sel2_ref).reshape(16, TB, 132)

    # ---- layer 3: Conv1d(16->32) ---------------------------------------------
    xs3 = im2col(p2, 128)                                # (80, TB*128) bf16
    z3 = jnp.dot(w3_ref[...], xs3, preferred_element_type=f32)     # (32, TB*128)
    z3 = jnp.maximum(z3 + t3_ref[...], 0.0)              # t3: (32, 1)

    # ---- pool3 + flatten + fc1 (even-lane selection folded into fc1, bf16) ---
    z3r = z3.reshape(32, TB, 128).reshape(32 * TB, 128)
    m3 = jnp.maximum(z3r, pltpu.roll(z3r, shift=127, axis=1))
    m3 = m3.astype(bf16).reshape(32, TB, 128)            # (32c, TB, 128) bf16
    # hc[c, o, b] = sum_j w1p[c, o, j] * m3[c, b, j]   (batched NT matmul)
    hc = jax.lax.dot_general(
        w1p_ref[...], m3,
        dimension_numbers=(((2,), (2,)), ((0,), (0,))),
        preferred_element_type=f32)                      # (32c, 32o, TB)
    h = jnp.maximum(jnp.sum(hc, axis=0) + fb1_ref[...], 0.0)       # (32o, TB)
    # TODO(synk): Dropout(p=0.3) is identity at inference; training-mode dropout
    # (stateful PRNG mask) intentionally not implemented.
    # fc2 on the VPU/XLU (an N=1 MXU matmul would waste the array).
    y = jnp.sum(h * fw2_ref[...], axis=0, keepdims=True) + fb2_ref[...]   # (1, TB)
    out_ref[...] = y.astype(out_ref.dtype)


# ---------------------------------------------------------------------------
# Wrapper
# ---------------------------------------------------------------------------
def seismic_cnn_forward(x, params):
    (w1s, t1, sel1, w2r, t2, sel2, w3r, t3, w1p3, fb1, fw2, fb2) = params
    B, C, L = x.shape
    assert C == 1 and L == SEQ_LEN, (C, L)

    # Batch tile: multiple of 8 (sublane tile), capped at 128 so the working
    # set fits v7x's 64 MiB VMEM; per-step overhead is negligible vs the
    # per-tile compute, and >1 grid step lets "parallel" use both v7x cores.
    TB = min(128, -(-B // 8) * 8)
    B_pad = -(-B // TB) * TB
    x2d = x[:, 0, :].astype(jnp.float32)
    x_pad = jnp.pad(x2d, ((0, B_pad - B), (2, 2)))       # (B_pad, 516)

    def full_spec(a):
        return pl.BlockSpec(a.shape, lambda i, nd=a.ndim: (0,) * nd)

    per_sample_macs = (8 * 5 * 512          # conv1 (VPU)
                       + 8 * 512 * 260      # pool1 selection matmul
                       + 16 * 40 * 256      # conv2
                       + 16 * 256 * 132     # pool2 selection matmul
                       + 32 * 80 * 128      # conv3
                       + 32 * 32 * 128      # fc1 (pool3 folded)
                       + 32)                # fc2
    param_bytes = sum(int(a.size) * a.dtype.itemsize for a in params)
    cost = pl.CostEstimate(flops=2 * per_sample_macs * B_pad,
                           transcendentals=0,
                           bytes_accessed=int(x_pad.size) * 4 + B_pad * 4
                                          + param_bytes)

    out = pl.pallas_call(
        _seismic_kernel,
        out_shape=jax.ShapeDtypeStruct((1, B_pad), jnp.float32),   # lane-dense
        grid=(B_pad // TB,),
        in_specs=[pl.BlockSpec((TB, L + 4), lambda i: (i, 0))]
                 + [full_spec(a) for a in params],
        out_specs=pl.BlockSpec((1, TB), lambda i: (0, i)),
        compiler_params=pltpu.CompilerParams(
            dimension_semantics=("parallel",),
            vmem_limit_bytes=40 * 1024 * 1024),
        cost_estimate=cost,
    )(x_pad, *params)
    return out[0, :B][:, None]


# ---------------------------------------------------------------------------
# Parameter init (shapes from SeismicCNN.__init__) + host-side packing
# ---------------------------------------------------------------------------
def init_raw_params(key):
    ks = jax.random.split(key, 18)

    def u(k, shape, fan_in):
        bound = 1.0 / np.sqrt(fan_in)
        return jax.random.uniform(k, shape, jnp.float32, -bound, bound)

    p = {}
    p["conv1_w"] = u(ks[0], (8, 1, 5), 1 * 5)
    p["conv1_b"] = u(ks[1], (8,), 1 * 5)
    p["conv2_w"] = u(ks[2], (16, 8, 5), 8 * 5)
    p["conv2_b"] = u(ks[3], (16,), 8 * 5)
    p["conv3_w"] = u(ks[4], (32, 16, 5), 16 * 5)
    p["conv3_b"] = u(ks[5], (32,), 16 * 5)
    p["fc1_w"] = u(ks[6], (32, 32 * 64), 32 * 64)
    p["fc1_b"] = u(ks[7], (32,), 32 * 64)
    p["fc2_w"] = u(ks[8], (1, 32), 32)
    p["fc2_b"] = u(ks[9], (1,), 32)
    # BatchNorm (inference): affine params + running statistics
    p["g1"] = 1.0 + 0.1 * jax.random.normal(ks[10], (8,), jnp.float32)
    p["beta1"] = 0.1 * jax.random.normal(ks[11], (8,), jnp.float32)
    p["rm1"] = 0.05 * jax.random.normal(ks[12], (8,), jnp.float32)
    p["rv1"] = 1.0 + 0.1 * jax.random.uniform(ks[13], (8,), jnp.float32)
    p["g2"] = 1.0 + 0.1 * jax.random.normal(ks[14], (16,), jnp.float32)
    p["beta2"] = 0.1 * jax.random.normal(ks[15], (16,), jnp.float32)
    p["rm2"] = 0.05 * jax.random.normal(ks[16], (16,), jnp.float32)
    p["rv2"] = 1.0 + 0.1 * jax.random.uniform(ks[17], (16,), jnp.float32)
    return p


def _sel_even_pad(L, pad):
    """Even-column max-pool selection matrix, output zero-padded by `pad` lanes."""
    Lh = L // 2
    m = np.zeros((L, Lh + 2 * pad), np.float32)
    m[2 * np.arange(Lh), pad + np.arange(Lh)] = 1.0      # exact 0/1 in bf16
    return jnp.asarray(m, dtype=jnp.bfloat16)


def pack_kernel_params(p):
    # BatchNorm (inference) fold: y = scale*(conv+bias-rm) + beta
    s1 = p["g1"] / jnp.sqrt(p["rv1"] + BN_EPS)
    t1 = (p["conv1_b"] - p["rm1"]) * s1 + p["beta1"]
    s2 = p["g2"] / jnp.sqrt(p["rv2"] + BN_EPS)
    t2 = (p["conv2_b"] - p["rm2"]) * s2 + p["beta2"]

    # conv1: (8,1,5) -> (8,5) with BN1 scale folded into the weights (f32, VPU).
    w1s = (p["conv1_w"][:, 0, :] * s1[:, None]).astype(jnp.float32)
    # conv2/conv3: (Cout,Cin,5) -> (Cout, 5*Cin), tap-major rows (matches the
    # im2col stacking order in the kernel); BN2 scale folded into conv2.  bf16.
    w2r = (jnp.transpose(p["conv2_w"], (0, 2, 1)).reshape(16, 40)
           * s2[:, None]).astype(jnp.bfloat16)
    w3r = jnp.transpose(p["conv3_w"], (0, 2, 1)).reshape(32, 80).astype(jnp.bfloat16)

    sel1 = _sel_even_pad(512, 2)          # (512, 260)
    sel2 = _sel_even_pad(256, 2)          # (256, 132)

    # fc1 (32, 2048); torch .view flatten order is (c, l'') channel-major.
    # Fold MaxPool3's even-lane selection into the fc1 weights: index j is the
    # pre-pool lane in [0,128) per channel; odd lanes are zero.  Stored bf16,
    # laid out (c, o, j) for the batched NT dot_general in the kernel.
    fc1 = np.asarray(p["fc1_w"], np.float32).reshape(32, 32, 64)   # (o, c, l'')
    w1p3 = np.zeros((32, 32, 128), np.float32)                     # (c, o, j)
    w1p3[:, :, 0::2] = np.transpose(fc1, (1, 0, 2))
    w1p3 = jnp.asarray(w1p3, dtype=jnp.bfloat16)

    fb1 = p["fc1_b"][:, None].astype(jnp.float32)        # (32, 1)
    fw2 = p["fc2_w"].T.astype(jnp.float32)               # (32, 1)
    fb2 = p["fc2_b"][None, :].astype(jnp.float32)        # (1, 1)
    return (w1s,
            t1[:, None, None].astype(jnp.float32),       # (8, 1, 1)
            sel1,
            w2r,
            t2[:, None].astype(jnp.float32),             # (16, 1)
            sel2,
            w3r,
            p["conv3_b"][:, None].astype(jnp.float32),   # (32, 1)
            w1p3, fb1, fw2, fb2)


# ---------------------------------------------------------------------------
# Pure-JAX reference (PyTorch eval-mode semantics) for a sanity check
# ---------------------------------------------------------------------------
def reference_forward(x, p):
    def conv(h, w, b):
        y = jax.lax.conv_general_dilated(
            h, w, window_strides=(1,), padding=[(2, 2)],
            dimension_numbers=("NCH", "OIH", "NCH"))
        return y + b[None, :, None]

    def bn(h, g, beta, rm, rv):
        return ((h - rm[None, :, None]) / jnp.sqrt(rv[None, :, None] + BN_EPS)
                * g[None, :, None] + beta[None, :, None])

    def pool(h):
        B, C, L = h.shape
        return h.reshape(B, C, L // 2, 2).max(axis=-1)

    h = jax.nn.relu(bn(conv(x, p["conv1_w"], p["conv1_b"]),
                       p["g1"], p["beta1"], p["rm1"], p["rv1"]))
    h = pool(h)
    h = jax.nn.relu(bn(conv(h, p["conv2_w"], p["conv2_b"]),
                       p["g2"], p["beta2"], p["rm2"], p["rv2"]))
    h = pool(h)
    h = jax.nn.relu(conv(h, p["conv3_w"], p["conv3_b"]))
    h = pool(h)
    h = h.reshape(h.shape[0], -1)
    h = jax.nn.relu(h @ p["fc1_w"].T + p["fc1_b"])       # dropout = identity (eval)
    return h @ p["fc2_w"].T + p["fc2_b"]


if __name__ == "__main__":
    key = jax.random.PRNGKey(0)
    kx, kp = jax.random.split(key)
    B = 2
    x = jax.random.normal(kx, (B, 1, SEQ_LEN), jnp.float32)

    raw = init_raw_params(kp)
    params = pack_kernel_params(raw)

    out = jax.jit(seismic_cnn_forward)(x, params)
    out = jax.block_until_ready(out)
    assert out.shape == (B, 1), out.shape

    # bf16 is used for conv2/conv3/fc1 operands (f32 accumulation), so results
    # differ from the f32 reference at the ~1e-2 level.
    ref = reference_forward(x, raw)
    np.testing.assert_allclose(np.asarray(out), np.asarray(ref), atol=5e-2, rtol=5e-2)

    print("KERNEL_OK")
</pallas_src>

<mosaic_0001>
module attributes {stable_mosaic.version = 11 : i64} {
  func.func @_seismic_kernel(%arg0: i32, %arg1: memref<8x516xf32, #tpu.memory_space<vmem>>, %arg2: memref<8x5xf32, #tpu.memory_space<vmem>>, %arg3: memref<8x1x1xf32, #tpu.memory_space<vmem>>, %arg4: memref<512x260xbf16, #tpu.memory_space<vmem>>, %arg5: memref<16x40xbf16, #tpu.memory_space<vmem>>, %arg6: memref<16x1xf32, #tpu.memory_space<vmem>>, %arg7: memref<256x132xbf16, #tpu.memory_space<vmem>>, %arg8: memref<32x80xbf16, #tpu.memory_space<vmem>>, %arg9: memref<32x1xf32, #tpu.memory_space<vmem>>, %arg10: memref<32x32x128xbf16, #tpu.memory_space<vmem>>, %arg11: memref<32x1xf32, #tpu.memory_space<vmem>>, %arg12: memref<32x1xf32, #tpu.memory_space<vmem>>, %arg13: memref<1x1xf32, #tpu.memory_space<vmem>>, %arg14: memref<1x8xf32, #tpu.memory_space<vmem>>) attributes {dimension_semantics = [#tpu.dimension_semantics<parallel>], iteration_bounds = array<i64: 1>, scalar_prefetch = 0 : i64, scratch_operands = 0 : i64, tpu.core_type = #tpu.core_type<tc>, window_params = [{transform_indices = @transform_0, window_bounds = array<i64: 8, 516>}, {pipeline_mode = #tpu.pipeline_mode<synchronous>, transform_indices = @transform_1, window_bounds = array<i64: 8, 5>}, {pipeline_mode = #tpu.pipeline_mode<synchronous>, transform_indices = @transform_2, window_bounds = array<i64: 8, 1, 1>}, {pipeline_mode = #tpu.pipeline_mode<synchronous>, transform_indices = @transform_3, window_bounds = array<i64: 512, 260>}, {pipeline_mode = #tpu.pipeline_mode<synchronous>, transform_indices = @transform_4, window_bounds = array<i64: 16, 40>}, {pipeline_mode = #tpu.pipeline_mode<synchronous>, transform_indices = @transform_5, window_bounds = array<i64: 16, 1>}, {pipeline_mode = #tpu.pipeline_mode<synchronous>, transform_indices = @transform_6, window_bounds = array<i64: 256, 132>}, {pipeline_mode = #tpu.pipeline_mode<synchronous>, transform_indices = @transform_7, window_bounds = array<i64: 32, 80>}, {pipeline_mode = #tpu.pipeline_mode<synchronous>, transform_indices = @transform_8, window_bounds = array<i64: 32, 1>}, {pipeline_mode = #tpu.pipeline_mode<synchronous>, transform_indices = @transform_9, window_bounds = array<i64: 32, 32, 128>}, {pipeline_mode = #tpu.pipeline_mode<synchronous>, transform_indices = @transform_10, window_bounds = array<i64: 32, 1>}, {pipeline_mode = #tpu.pipeline_mode<synchronous>, transform_indices = @transform_11, window_bounds = array<i64: 32, 1>}, {pipeline_mode = #tpu.pipeline_mode<synchronous>, transform_indices = @transform_12, window_bounds = array<i64: 1, 1>}, {transform_indices = @transform_13, window_bounds = array<i64: 1, 8>}]} {
    %c0 = arith.constant 0 : index
    %c0_0 = arith.constant 0 : index
    %0 = vector.load %arg1[%c0, %c0_0] : memref<8x516xf32, #tpu.memory_space<vmem>>, vector<8x516xf32>
    %c0_1 = arith.constant 0 : index
    %c0_2 = arith.constant 0 : index
    %1 = vector.load %arg2[%c0_1, %c0_2] : memref<8x5xf32, #tpu.memory_space<vmem>>, vector<8x5xf32>
    %2 = vector.extract_strided_slice %1 {offsets = [0, 0], sizes = [8, 1], strides = [1, 1]} : vector<8x5xf32> to vector<8x1xf32>
    %3 = vector.shape_cast %2 : vector<8x1xf32> to vector<8xf32>
    %4 = vector.shape_cast %3 : vector<8xf32> to vector<8x1x1xf32>
    %5 = vector.extract_strided_slice %0 {offsets = [0, 0], sizes = [8, 512], strides = [1, 1]} : vector<8x516xf32> to vector<8x512xf32>
    %6 = vector.shape_cast %5 : vector<8x512xf32> to vector<1x8x512xf32>
    %7 = vector.broadcast %4 : vector<8x1x1xf32> to vector<8x8x512xf32>
    %8 = vector.broadcast %6 : vector<1x8x512xf32> to vector<8x8x512xf32>
    %9 = arith.mulf %7, %8 : vector<8x8x512xf32>
    %10 = vector.extract_strided_slice %1 {offsets = [0, 1], sizes = [8, 1], strides = [1, 1]} : vector<8x5xf32> to vector<8x1xf32>
    %11 = vector.shape_cast %10 : vector<8x1xf32> to vector<8xf32>
    %12 = vector.shape_cast %11 : vector<8xf32> to vector<8x1x1xf32>
    %13 = vector.extract_strided_slice %0 {offsets = [0, 1], sizes = [8, 512], strides = [1, 1]} : vector<8x516xf32> to vector<8x512xf32>
    %14 = vector.shape_cast %13 : vector<8x512xf32> to vector<1x8x512xf32>
    %15 = vector.broadcast %12 : vector<8x1x1xf32> to vector<8x8x512xf32>
    %16 = vector.broadcast %14 : vector<1x8x512xf32> to vector<8x8x512xf32>
    %17 = arith.mulf %15, %16 : vector<8x8x512xf32>
    %18 = arith.addf %9, %17 : vector<8x8x512xf32>
    %19 = vector.extract_strided_slice %1 {offsets = [0, 2], sizes = [8, 1], strides = [1, 1]} : vector<8x5xf32> to vector<8x1xf32>
    %20 = vector.shape_cast %19 : vector<8x1xf32> to vector<8xf32>
    %21 = vector.shape_cast %20 : vector<8xf32> to vector<8x1x1xf32>
    %22 = vector.extract_strided_slice %0 {offsets = [0, 2], sizes = [8, 512], strides = [1, 1]} : vector<8x516xf32> to vector<8x512xf32>
    %23 = vector.shape_cast %22 : vector<8x512xf32> to vector<1x8x512xf32>
    %24 = vector.broadcast %21 : vector<8x1x1xf32> to vector<8x8x512xf32>
    %25 = vector.broadcast %23 : vector<1x8x512xf32> to vector<8x8x512xf32>
    %26 = arith.mulf %24, %25 : vector<8x8x512xf32>
    %27 = arith.addf %18, %26 : vector<8x8x512xf32>
    %28 = vector.extract_strided_slice %1 {offsets = [0, 3], sizes = [8, 1], strides = [1, 1]} : vector<8x5xf32> to vector<8x1xf32>
    %29 = vector.shape_cast %28 : vector<8x1xf32> to vector<8xf32>
    %30 = vector.shape_cast %29 : vector<8xf32> to vector<8x1x1xf32>
    %31 = vector.extract_strided_slice %0 {offsets = [0, 3], sizes = [8, 512], strides = [1, 1]} : vector<8x516xf32> to vector<8x512xf32>
    %32 = vector.shape_cast %31 : vector<8x512xf32> to vector<1x8x512xf32>
    %33 = vector.broadcast %30 : vector<8x1x1xf32> to vector<8x8x512xf32>
    %34 = vector.broadcast %32 : vector<1x8x512xf32> to vector<8x8x512xf32>
    %35 = arith.mulf %33, %34 : vector<8x8x512xf32>
    %36 = arith.addf %27, %35 : vector<8x8x512xf32>
    %37 = vector.extract_strided_slice %1 {offsets = [0, 4], sizes = [8, 1], strides = [1, 1]} : vector<8x5xf32> to vector<8x1xf32>
    %38 = vector.shape_cast %37 : vector<8x1xf32> to vector<8xf32>
    %39 = vector.shape_cast %38 : vector<8xf32> to vector<8x1x1xf32>
    %40 = vector.extract_strided_slice %0 {offsets = [0, 4], sizes = [8, 512], strides = [1, 1]} : vector<8x516xf32> to vector<8x512xf32>
    %41 = vector.shape_cast %40 : vector<8x512xf32> to vector<1x8x512xf32>
    %42 = vector.broadcast %39 : vector<8x1x1xf32> to vector<8x8x512xf32>
    %43 = vector.broadcast %41 : vector<1x8x512xf32> to vector<8x8x512xf32>
    %44 = arith.mulf %42, %43 : vector<8x8x512xf32>
    %45 = arith.addf %36, %44 : vector<8x8x512xf32>
    %c0_3 = arith.constant 0 : index
    %c0_4 = arith.constant 0 : index
    %c0_5 = arith.constant 0 : index
    %46 = vector.load %arg3[%c0_3, %c0_4, %c0_5] : memref<8x1x1xf32, #tpu.memory_space<vmem>>, vector<8x1x1xf32>
    %47 = vector.broadcast %46 : vector<8x1x1xf32> to vector<8x8x512xf32>
    %48 = arith.addf %45, %47 : vector<8x8x512xf32>
    %cst = arith.constant 0.000000e+00 : f32
    %49 = vector.broadcast %cst : f32 to vector<8x8x512xf32>
    %50 = arith.maximumf %48, %49 : vector<8x8x512xf32>
    %51 = vector.shape_cast %50 : vector<8x8x512xf32> to vector<64x512xf32>
    %c511_i32 = arith.constant 511 : i32
    %52 = tpu.dynamic_rotate %51 by %c511_i32 dim 1 : vector<64x512xf32>, i32 -> vector<64x512xf32>
    %53 = arith.maximumf %51, %52 : vector<64x512xf32>
    %54 = arith.truncf %53 : vector<64x512xf32> to vector<64x512xbf16>
    %c0_6 = arith.constant 0 : index
    %c0_7 = arith.constant 0 : index
    %55 = vector.load %arg4[%c0_6, %c0_7] : memref<512x260xbf16, #tpu.memory_space<vmem>>, vector<512x260xbf16>
    %cst_8 = arith.constant dense<0.000000e+00> : vector<64x260xf32>
    %56 = tpu.matmul %54, %55, %cst_8 {dimension_numbers = #tpu.dot_dimension_numbers<[1], [0], [0], [1], [0, 0, 1, 1], [], []>} : vector<64x512xbf16>, vector<512x260xbf16>, vector<64x260xf32> -> vector<64x260xf32>
    %57 = arith.truncf %56 : vector<64x260xf32> to vector<64x260xbf16>
    %58 = vector.shape_cast %57 : vector<64x260xbf16> to vector<8x8x260xbf16>
    %59 = vector.extract_strided_slice %58 {offsets = [0, 0, 0], sizes = [8, 8, 256], strides = [1, 1, 1]} : vector<8x8x260xbf16> to vector<8x8x256xbf16>
    %60 = vector.shape_cast %59 : vector<8x8x256xbf16> to vector<8x2048xbf16>
    %61 = vector.extract_strided_slice %58 {offsets = [0, 0, 1], sizes = [8, 8, 256], strides = [1, 1, 1]} : vector<8x8x260xbf16> to vector<8x8x256xbf16>
    %62 = vector.shape_cast %61 : vector<8x8x256xbf16> to vector<8x2048xbf16>
    %63 = vector.extract_strided_slice %58 {offsets = [0, 0, 2], sizes = [8, 8, 256], strides = [1, 1, 1]} : vector<8x8x260xbf16> to vector<8x8x256xbf16>
    %64 = vector.shape_cast %63 : vector<8x8x256xbf16> to vector<8x2048xbf16>
    %65 = vector.extract_strided_slice %58 {offsets = [0, 0, 3], sizes = [8, 8, 256], strides = [1, 1, 1]} : vector<8x8x260xbf16> to vector<8x8x256xbf16>
    %66 = vector.shape_cast %65 : vector<8x8x256xbf16> to vector<8x2048xbf16>
    %67 = vector.extract_strided_slice %58 {offsets = [0, 0, 4], sizes = [8, 8, 256], strides = [1, 1, 1]} : vector<8x8x260xbf16> to vector<8x8x256xbf16>
    %68 = vector.shape_cast %67 : vector<8x8x256xbf16> to vector<8x2048xbf16>
    %69 = tpu.concatenate %60, %62, %64, %66, %68 in 0 : vector<8x2048xbf16>, vector<8x2048xbf16>, vector<8x2048xbf16>, vector<8x2048xbf16>, vector<8x2048xbf16> -> vector<40x2048xbf16>
    %c0_9 = arith.constant 0 : index
    %c0_10 = arith.constant 0 : index
    %70 = vector.load %arg5[%c0_9, %c0_10] : memref<16x40xbf16, #tpu.memory_space<vmem>>, vector<16x40xbf16>
    %cst_11 = arith.constant dense<0.000000e+00> : vector<16x2048xf32>
    %71 = tpu.matmul %70, %69, %cst_11 {dimension_numbers = #tpu.dot_dimension_numbers<[1], [0], [0], [1], [0, 0, 1, 1], [], []>} : vector<16x40xbf16>, vector<40x2048xbf16>, vector<16x2048xf32> -> vector<16x2048xf32>
    %c0_12 = arith.constant 0 : index
    %c0_13 = arith.constant 0 : index
    %72 = vector.load %arg6[%c0_12, %c0_13] : memref<16x1xf32, #tpu.memory_space<vmem>>, vector<16x1xf32>
    %73 = vector.broadcast %72 : vector<16x1xf32> to vector<16x2048xf32>
    %74 = arith.addf %71, %73 : vector<16x2048xf32>
    %cst_14 = arith.constant 0.000000e+00 : f32
    %75 = vector.broadcast %cst_14 : f32 to vector<16x2048xf32>
    %76 = arith.maximumf %74, %75 : vector<16x2048xf32>
    %77 = vector.shape_cast %76 : vector<16x2048xf32> to vector<16x8x256xf32>
    %78 = vector.shape_cast %77 : vector<16x8x256xf32> to vector<128x256xf32>
    %c255_i32 = arith.constant 255 : i32
    %79 = tpu.dynamic_rotate %78 by %c255_i32 dim 1 : vector<128x256xf32>, i32 -> vector<128x256xf32>
    %80 = arith.maximumf %78, %79 : vector<128x256xf32>
    %81 = arith.truncf %80 : vector<128x256xf32> to vector<128x256xbf16>
    %c0_15 = arith.constant 0 : index
    %c0_16 = arith.constant 0 : index
    %82 = vector.load %arg7[%c0_15, %c0_16] : memref<256x132xbf16, #tpu.memory_space<vmem>>, vector<256x132xbf16>
    %cst_17 = arith.constant dense<0.000000e+00> : vector<128x132xf32>
    %83 = tpu.matmul %81, %82, %cst_17 {dimension_numbers = #tpu.dot_dimension_numbers<[1], [0], [0], [1], [0, 0, 1, 1], [], []>} : vector<128x256xbf16>, vector<256x132xbf16>, vector<128x132xf32> -> vector<128x132xf32>
    %84 = arith.truncf %83 : vector<128x132xf32> to vector<128x132xbf16>
    %85 = vector.shape_cast %84 : vector<128x132xbf16> to vector<16x8x132xbf16>
    %86 = vector.extract_strided_slice %85 {offsets = [0, 0, 0], sizes = [16, 8, 128], strides = [1, 1, 1]} : vector<16x8x132xbf16> to vector<16x8x128xbf16>
    %87 = vector.shape_cast %86 : vector<16x8x128xbf16> to vector<16x1024xbf16>
    %88 = vector.extract_strided_slice %85 {offsets = [0, 0, 1], sizes = [16, 8, 128], strides = [1, 1, 1]} : vector<16x8x132xbf16> to vector<16x8x128xbf16>
    %89 = vector.shape_cast %88 : vector<16x8x128xbf16> to vector<16x1024xbf16>
    %90 = vector.extract_strided_slice %85 {offsets = [0, 0, 2], sizes = [16, 8, 128], strides = [1, 1, 1]} : vector<16x8x132xbf16> to vector<16x8x128xbf16>
    %91 = vector.shape_cast %90 : vector<16x8x128xbf16> to vector<16x1024xbf16>
    %92 = vector.extract_strided_slice %85 {offsets = [0, 0, 3], sizes = [16, 8, 128], strides = [1, 1, 1]} : vector<16x8x132xbf16> to vector<16x8x128xbf16>
    %93 = vector.shape_cast %92 : vector<16x8x128xbf16> to vector<16x1024xbf16>
    %94 = vector.extract_strided_slice %85 {offsets = [0, 0, 4], sizes = [16, 8, 128], strides = [1, 1, 1]} : vector<16x8x132xbf16> to vector<16x8x128xbf16>
    %95 = vector.shape_cast %94 : vector<16x8x128xbf16> to vector<16x1024xbf16>
    %96 = tpu.concatenate %87, %89, %91, %93, %95 in 0 : vector<16x1024xbf16>, vector<16x1024xbf16>, vector<16x1024xbf16>, vector<16x1024xbf16>, vector<16x1024xbf16> -> vector<80x1024xbf16>
    %c0_18 = arith.constant 0 : index
    %c0_19 = arith.constant 0 : index
    %97 = vector.load %arg8[%c0_18, %c0_19] : memref<32x80xbf16, #tpu.memory_space<vmem>>, vector<32x80xbf16>
    %cst_20 = arith.constant dense<0.000000e+00> : vector<32x1024xf32>
    %98 = tpu.matmul %97, %96, %cst_20 {dimension_numbers = #tpu.dot_dimension_numbers<[1], [0], [0], [1], [0, 0, 1, 1], [], []>} : vector<32x80xbf16>, vector<80x1024xbf16>, vector<32x1024xf32> -> vector<32x1024xf32>
    %c0_21 = arith.constant 0 : index
    %c0_22 = arith.constant 0 : index
    %99 = vector.load %arg9[%c0_21, %c0_22] : memref<32x1xf32, #tpu.memory_space<vmem>>, vector<32x1xf32>
    %100 = vector.broadcast %99 : vector<32x1xf32> to vector<32x1024xf32>
    %101 = arith.addf %98, %100 : vector<32x1024xf32>
    %cst_23 = arith.constant 0.000000e+00 : f32
    %102 = vector.broadcast %cst_23 : f32 to vector<32x1024xf32>
    %103 = arith.maximumf %101, %102 : vector<32x1024xf32>
    %104 = vector.shape_cast %103 : vector<32x1024xf32> to vector<32x8x128xf32>
    %105 = vector.shape_cast %104 : vector<32x8x128xf32> to vector<256x128xf32>
    %c127_i32 = arith.constant 127 : i32
    %106 = tpu.dynamic_rotate %105 by %c127_i32 dim 1 : vector<256x128xf32>, i32 -> vector<256x128xf32>
    %107 = arith.maximumf %105, %106 : vector<256x128xf32>
    %108 = arith.truncf %107 : vector<256x128xf32> to vector<256x128xbf16>
    %109 = vector.shape_cast %108 : vector<256x128xbf16> to vector<32x8x128xbf16>
    %c0_24 = arith.constant 0 : index
    %c0_25 = arith.constant 0 : index
    %c0_26 = arith.constant 0 : index
    %110 = vector.load %arg10[%c0_24, %c0_25, %c0_26] : memref<32x32x128xbf16, #tpu.memory_space<vmem>>, vector<32x32x128xbf16>
    %cst_27 = arith.constant dense<0.000000e+00> : vector<32x32x8xf32>
    %111 = tpu.matmul %110, %109, %cst_27 {dimension_numbers = #tpu.dot_dimension_numbers<[2], [2], [1], [1], [0, 0, 0, 1, 1, 1], [0], [0]>} : vector<32x32x128xbf16>, vector<32x8x128xbf16>, vector<32x32x8xf32> -> vector<32x32x8xf32>
    %cst_28 = arith.constant dense<0.000000e+00> : vector<32x8xf32>
    %112 = vector.multi_reduction <add>, %111, %cst_28 [0] : vector<32x32x8xf32> to vector<32x8xf32>
    %c0_29 = arith.constant 0 : index
    %c0_30 = arith.constant 0 : index
    %113 = vector.load %arg11[%c0_29, %c0_30] : memref<32x1xf32, #tpu.memory_space<vmem>>, vector<32x1xf32>
    %114 = vector.broadcast %113 : vector<32x1xf32> to vector<32x8xf32>
    %115 = arith.addf %112, %114 : vector<32x8xf32>
    %cst_31 = arith.constant 0.000000e+00 : f32
    %116 = vector.broadcast %cst_31 : f32 to vector<32x8xf32>
    %117 = arith.maximumf %115, %116 : vector<32x8xf32>
    %c0_32 = arith.constant 0 : index
    %c0_33 = arith.constant 0 : index
    %118 = vector.load %arg12[%c0_32, %c0_33] : memref<32x1xf32, #tpu.memory_space<vmem>>, vector<32x1xf32>
    %119 = vector.broadcast %118 : vector<32x1xf32> to vector<32x8xf32>
    %120 = arith.mulf %117, %119 : vector<32x8xf32>
    %cst_34 = arith.constant dense<0.000000e+00> : vector<8xf32>
    %121 = vector.multi_reduction <add>, %120, %cst_34 [0] : vector<32x8xf32> to vector<8xf32>
    %122 = vector.shape_cast %121 : vector<8xf32> to vector<1x8xf32>
    %c0_35 = arith.constant 0 : index
    %c0_36 = arith.constant 0 : index
    %123 = vector.load %arg13[%c0_35, %c0_36] : memref<1x1xf32, #tpu.memory_space<vmem>>, vector<1x1xf32>
    %124 = vector.broadcast %123 : vector<1x1xf32> to vector<1x8xf32>
    %125 = arith.addf %122, %124 : vector<1x8xf32>
    %c0_37 = arith.constant 0 : index
    %c0_38 = arith.constant 0 : index
    %126 = vector.load %arg14[%c0_37, %c0_38] : memref<1x8xf32, #tpu.memory_space<vmem>>, vector<1x8xf32>
    tpu.vector_store %arg14[%c0_37, %c0_38], %125 {strides = array<i32>} : memref<1x8xf32, #tpu.memory_space<vmem>>, vector<1x8xf32>,
    return
  }
  func.func @transform_0(%arg0: i32) -> (i32, i32) {
    %c0_i32 = arith.constant 0 : i32
    %c0_i32_0 = arith.constant 0 : i32
    return %arg0, %c0_i32 : i32, i32
  }
  func.func @transform_1(%arg0: i32) -> (i32, i32) {
    %c0_i32 = arith.constant 0 : i32
    %c0_i32_0 = arith.constant 0 : i32
    %c0_i32_1 = arith.constant 0 : i32
    return %c0_i32, %c0_i32_0 : i32, i32
  }
  func.func @transform_2(%arg0: i32) -> (i32, i32, i32) {
    %c0_i32 = arith.constant 0 : i32
    %c0_i32_0 = arith.constant 0 : i32
    %c0_i32_1 = arith.constant 0 : i32
    %c0_i32_2 = arith.constant 0 : i32
    return %c0_i32, %c0_i32_0, %c0_i32_1 : i32, i32, i32
  }
  func.func @transform_3(%arg0: i32) -> (i32, i32) {
    %c0_i32 = arith.constant 0 : i32
    %c0_i32_0 = arith.constant 0 : i32
    %c0_i32_1 = arith.constant 0 : i32
    return %c0_i32, %c0_i32_0 : i32, i32
  }
  func.func @transform_4(%arg0: i32) -> (i32, i32) {
    %c0_i32 = arith.constant 0 : i32
    %c0_i32_0 = arith.constant 0 : i32
    %c0_i32_1 = arith.constant 0 : i32
    return %c0_i32, %c0_i32_0 : i32, i32
  }
  func.func @transform_5(%arg0: i32) -> (i32, i32) {
    %c0_i32 = arith.constant 0 : i32
    %c0_i32_0 = arith.constant 0 : i32
    %c0_i32_1 = arith.constant 0 : i32
    return %c0_i32, %c0_i32_0 : i32, i32
  }
  func.func @transform_6(%arg0: i32) -> (i32, i32) {
    %c0_i32 = arith.constant 0 : i32
    %c0_i32_0 = arith.constant 0 : i32
    %c0_i32_1 = arith.constant 0 : i32
    return %c0_i32, %c0_i32_0 : i32, i32
  }
  func.func @transform_7(%arg0: i32) -> (i32, i32) {
    %c0_i32 = arith.constant 0 : i32
    %c0_i32_0 = arith.constant 0 : i32
    %c0_i32_1 = arith.constant 0 : i32
    return %c0_i32, %c0_i32_0 : i32, i32
  }
  func.func @transform_8(%arg0: i32) -> (i32, i32) {
    %c0_i32 = arith.constant 0 : i32
    %c0_i32_0 = arith.constant 0 : i32
    %c0_i32_1 = arith.constant 0 : i32
    return %c0_i32, %c0_i32_0 : i32, i32
  }
  func.func @transform_9(%arg0: i32) -> (i32, i32, i32) {
    %c0_i32 = arith.constant 0 : i32
    %c0_i32_0 = arith.constant 0 : i32
    %c0_i32_1 = arith.constant 0 : i32
    %c0_i32_2 = arith.constant 0 : i32
    return %c0_i32, %c0_i32_0, %c0_i32_1 : i32, i32, i32
  }
  func.func @transform_10(%arg0: i32) -> (i32, i32) {
    %c0_i32 = arith.constant 0 : i32
    %c0_i32_0 = arith.constant 0 : i32
    %c0_i32_1 = arith.constant 0 : i32
    return %c0_i32, %c0_i32_0 : i32, i32
  }
  func.func @transform_11(%arg0: i32) -> (i32, i32) {
    %c0_i32 = arith.constant 0 : i32
    %c0_i32_0 = arith.constant 0 : i32
    %c0_i32_1 = arith.constant 0 : i32
    return %c0_i32, %c0_i32_0 : i32, i32
  }
  func.func @transform_12(%arg0: i32) -> (i32, i32) {
    %c0_i32 = arith.constant 0 : i32
    %c0_i32_0 = arith.constant 0 : i32
    %c0_i32_1 = arith.constant 0 : i32
    return %c0_i32, %c0_i32_0 : i32, i32
  }
  func.func @transform_13(%arg0: i32) -> (i32, i32) {
    %c0_i32 = arith.constant 0 : i32
    %c0_i32_0 = arith.constant 0 : i32
    return %c0_i32, %arg0 : i32, i32
  }
}

</mosaic_0001>

<llo_original>
// kernel: seismic_cnn_forward.1
$region0: #{seismic_cnn_forward.1}
  #allocation0 [shape = 'u32[]', space=smem, size = 0x4, offset = 0x4, fixed_abs, tag = 'smem constant byte address 0x4 - core index']
  #allocation1 [shape = 'u32[72,128]{1,0:T(1,128)}', space=vmem, size = 0x9000, scoped, tag = 'internal scratch']
  #allocation2 [shape = 'f32[1,1]{1,0:T(1,128)S(1)}', space=vmem, size = 0x200, scoped, tag = 'scoped memory for seismic_cnn_forward.1']
  %s0 = inlined_call_operand.vmem [shape: f32[8,516], index: 0, kind: input, shape index: {}]
  %s1 = inlined_call_operand.vmem [shape: f32[8,5], index: 1, kind: input, shape index: {}]
  %s2 = inlined_call_operand.vmem [shape: f32[8,1,1], index: 2, kind: input, shape index: {}]
  %s3 = inlined_call_operand.vmem [shape: bf16[512,260], index: 3, kind: input, shape index: {}]
  %s4 = inlined_call_operand.vmem [shape: bf16[16,40], index: 4, kind: input, shape index: {}]
  %s5 = inlined_call_operand.vmem [shape: f32[16,1], index: 5, kind: input, shape index: {}]
  %s6 = inlined_call_operand.vmem [shape: bf16[256,132], index: 6, kind: input, shape index: {}]
  %s7 = inlined_call_operand.vmem [shape: bf16[32,80], index: 7, kind: input, shape index: {}]
  %s8 = inlined_call_operand.vmem [shape: f32[32,1], index: 8, kind: input, shape index: {}]
  %s9 = inlined_call_operand.vmem [shape: bf16[32,32,128], index: 9, kind: input, shape index: {}]
  %s10 = inlined_call_operand.vmem [shape: f32[32,1], index: 10, kind: input, shape index: {}]
  %s11 = inlined_call_operand.vmem [shape: f32[32,1], index: 11, kind: input, shape index: {}]
  %s12 = inlined_call_operand.<no memory space> [shape: f32[1,1], index: 12, kind: input, shape index: {}]
  %s13 = inlined_call_operand.vmem [shape: f32[1,8], index: 13, kind: output, shape index: {}]
  %s14 = sld [smem:[#allocation0]]
  $region62: #{seismic_cnn_forward.1} parent=0
    _
  %s16 = ssub.s32 1, %s14
  %s17 = scalar_select 0, %s16, %s14
  %v18 = vstv %s12
  %19 = vst [vmem:[#allocation2] sm:$0x1] %v18
  // Predicated region
  $region2: #{seismic_cnn_forward.1} parent=0 // pred_check
    _
  $region3: #{seismic_cnn_forward.1} parent=0 // pred_check_branch
    %21 = sbr.rel (0) target = $region5
  $region4: #{seismic_cnn_forward.1} parent=0 // pred_region
    _
  $region5: #{seismic_cnn_forward.1} parent=0 // pred_fallthru
    _
  // Predicated region
  $region6: #{seismic_cnn_forward.1} parent=0 // pred_check
    _
  $region7: #{seismic_cnn_forward.1} parent=0 // pred_check_branch
    %23 = sbr.rel (0) target = $region9
  $region8: #{seismic_cnn_forward.1} parent=0 // pred_region
    _
  $region9: #{seismic_cnn_forward.1} parent=0 // pred_fallthru
    _
  // Predicated region
  $region10: #{seismic_cnn_forward.1} parent=0 // pred_check
    _
  $region11: #{seismic_cnn_forward.1} parent=0 // pred_check_branch
    %25 = sbr.rel (0) target = $region13
  $region12: #{seismic_cnn_forward.1} parent=0 // pred_region
    _
  $region13: #{seismic_cnn_forward.1} parent=0 // pred_fallthru
    _
  // Predicated region
  $region14: #{seismic_cnn_forward.1} parent=0 // pred_check
    _
  $region15: #{seismic_cnn_forward.1} parent=0 // pred_check_branch
    %27 = sbr.rel (0) target = $region17
  $region16: #{seismic_cnn_forward.1} parent=0 // pred_region
    _
  $region17: #{seismic_cnn_forward.1} parent=0 // pred_fallthru
    _
  // Predicated region
  $region18: #{seismic_cnn_forward.1} parent=0 // pred_check
    _
  $region19: #{seismic_cnn_forward.1} parent=0 // pred_check_branch
    %29 = sbr.rel (0) target = $region21
  $region20: #{seismic_cnn_forward.1} parent=0 // pred_region
    _
  $region21: #{seismic_cnn_forward.1} parent=0 // pred_fallthru
    _
  // Predicated region
  $region22: #{seismic_cnn_forward.1} parent=0 // pred_check
    _
  $region23: #{seismic_cnn_forward.1} parent=0 // pred_check_branch
    %31 = sbr.rel (0) target = $region25
  $region24: #{seismic_cnn_forward.1} parent=0 // pred_region
    _
  $region25: #{seismic_cnn_forward.1} parent=0 // pred_fallthru
    _
  // Predicated region
  $region26: #{seismic_cnn_forward.1} parent=0 // pred_check
    _
  $region27: #{seismic_cnn_forward.1} parent=0 // pred_check_branch
    %33 = sbr.rel (0) target = $region29
  $region28: #{seismic_cnn_forward.1} parent=0 // pred_region
    _
  $region29: #{seismic_cnn_forward.1} parent=0 // pred_fallthru
    _
  // Predicated region
  $region30: #{seismic_cnn_forward.1} parent=0 // pred_check
    _
  $region31: #{seismic_cnn_forward.1} parent=0 // pred_check_branch
    %35 = sbr.rel (0) target = $region33
  $region32: #{seismic_cnn_forward.1} parent=0 // pred_region
    _
  $region33: #{seismic_cnn_forward.1} parent=0 // pred_fallthru
    _
  // Predicated region
  $region34: #{seismic_cnn_forward.1} parent=0 // pred_check
    _
  $region35: #{seismic_cnn_forward.1} parent=0 // pred_check_branch
    %37 = sbr.rel (0) target = $region37
  $region36: #{seismic_cnn_forward.1} parent=0 // pred_region
    _
  $region37: #{seismic_cnn_forward.1} parent=0 // pred_fallthru
    _
  // Predicated region
  $region38: #{seismic_cnn_forward.1} parent=0 // pred_check
    _
  $region39: #{seismic_cnn_forward.1} parent=0 // pred_check_branch
    %39 = sbr.rel (0) target = $region41
  $region40: #{seismic_cnn_forward.1} parent=0 // pred_region
    _
  $region41: #{seismic_cnn_forward.1} parent=0 // pred_fallthru
    _
  // Predicated region
  $region42: #{seismic_cnn_forward.1} parent=0 // pred_check
    _
  $region43: #{seismic_cnn_forward.1} parent=0 // pred_check_branch
    %41 = sbr.rel (0) target = $region45
  $region44: #{seismic_cnn_forward.1} parent=0 // pred_region
    _
  $region45: #{seismic_cnn_forward.1} parent=0 // pred_fallthru
    _
  // Predicated region
  $region46: #{seismic_cnn_forward.1} parent=0 // pred_check
    _
  $region47: #{seismic_cnn_forward.1} parent=0 // pred_check_branch
    %43 = sbr.rel (0) target = $region49
  $region48: #{seismic_cnn_forward.1} parent=0 // pred_region
    _
  $region49: #{seismic_cnn_forward.1} parent=0 // pred_fallthru
    _
  // Predicated region
  $region50: #{seismic_cnn_forward.1} parent=0 // pred_check
    _
  $region51: #{seismic_cnn_forward.1} parent=0 // pred_check_branch
    %45 = sbr.rel (0) target = $region53
  $region52: #{seismic_cnn_forward.1} parent=0 // pred_region
    _
  $region53: #{seismic_cnn_forward.1} parent=0 // pred_fallthru
    _
  %v47 = vld [vmem:[%s0] sm:$0xff]
  %v48 = vld [vmem:[%s0 + $0x8] sm:$0xff]
  %v49 = vld [vmem:[%s0 + $0x10] sm:$0xff]
  %v50 = vld [vmem:[%s0 + $0x18] sm:$0xff]
  %v51 = vld [vmem:[%s0 + $0x20] sm:$0xff]
  %v52 = vld [vmem:[%s1] sm:$0xff]
  %v54 = vrot.slane %v52, 1
  %v55 = vrot.slane %v52, 2
  %v56 = vrot.slane %v52, 3
  %v57 = vrot.slane %v52, 4
  %v58 = vrot.slane %v52, 5
  %v59 = vrot.slane %v52, 6
  %v60 = vrot.slane %v52, 7
  %v61 = vperm.slane %v52, 0
  %v62 = vperm.slane %v54, 0
  %v63 = vperm.slane %v55, 0
  %v64 = vperm.slane %v56, 0
  %v65 = vperm.slane %v57, 0
  %v66 = vperm.slane %v58, 0
  %v67 = vperm.slane %v59, 0
  %v68 = vperm.slane %v60, 0
  %69 = vset.pattern.permute.xlu0 0
  %70 = vperm.xlu0 %69, %v61
  %v71 = vpop.permute.xlu0 %70
  %73 = vset.pattern.permute.xlu0 0
  %74 = vperm.xlu0 %73, %v62
  %v75 = vpop.permute.xlu0 %74
  %77 = vset.pattern.permute.xlu0 0
  %78 = vperm.xlu0 %77, %v63
  %v79 = vpop.permute.xlu0 %78
  %81 = vset.pattern.permute.xlu0 0
  %82 = vperm.xlu0 %81, %v64
  %v83 = vpop.permute.xlu0 %82
  %85 = vset.pattern.permute.xlu0 0
  %86 = vperm.xlu0 %85, %v65
  %v87 = vpop.permute.xlu0 %86
  %89 = vset.pattern.permute.xlu0 0
  %90 = vperm.xlu0 %89, %v66
  %v91 = vpop.permute.xlu0 %90
  %93 = vset.pattern.permute.xlu0 0
  %94 = vperm.xlu0 %93, %v67
  %v95 = vpop.permute.xlu0 %94
  %97 = vset.pattern.permute.xlu0 0
  %98 = vperm.xlu0 %97, %v68
  %v99 = vpop.permute.xlu0 %98
  %v101 = vmul.f32 %v71, %v47
  %v102 = vmul.f32 %v71, %v48
  %v103 = vmul.f32 %v71, %v49
  %v104 = vmul.f32 %v71, %v50
  %v105 = vmul.f32 %v75, %v47
  %v106 = vmul.f32 %v75, %v48
  %v107 = vmul.f32 %v75, %v49
  %v108 = vmul.f32 %v75, %v50
  %v109 = vmul.f32 %v79, %v47
  %v110 = vmul.f32 %v79, %v48
  %v111 = vmul.f32 %v79, %v49
  %v112 = vmul.f32 %v79, %v50
  %v113 = vmul.f32 %v83, %v47
  %v114 = vmul.f32 %v83, %v48
  %v115 = vmul.f32 %v83, %v49
  %v116 = vmul.f32 %v83, %v50
  %v117 = vmul.f32 %v87, %v47
  %v118 = vmul.f32 %v87, %v48
  %v119 = vmul.f32 %v87, %v49
  %v120 = vmul.f32 %v87, %v50
  %v121 = vmul.f32 %v91, %v47
  %v122 = vmul.f32 %v91, %v48
  %v123 = vmul.f32 %v91, %v49
  %v124 = vmul.f32 %v91, %v50
  %v125 = vmul.f32 %v95, %v47
  %v126 = vmul.f32 %v95, %v48
  %v127 = vmul.f32 %v95, %v49
  %v128 = vmul.f32 %v95, %v50
  %v129 = vmul.f32 %v99, %v47
  %v130 = vmul.f32 %v99, %v48
  %v131 = vmul.f32 %v99, %v49
  %v132 = vmul.f32 %v99, %v50
  %133 = vset.pattern.permute.xlu0 1
  %134 = vperm.xlu0 %133, %v61
  %v135 = vpop.permute.xlu0 %134
  %137 = vset.pattern.permute.xlu0 1
  %138 = vperm.xlu0 %137, %v62
  %v139 = vpop.permute.xlu0 %138
  %141 = vset.pattern.permute.xlu0 1
  %142 = vperm.xlu0 %141, %v63
  %v143 = vpop.permute.xlu0 %142
  %145 = vset.pattern.permute.xlu0 1
  %146 = vperm.xlu0 %145, %v64
  %v147 = vpop.permute.xlu0 %146
  %149 = vset.pattern.permute.xlu0 1
  %150 = vperm.xlu0 %149, %v65
  %v151 = vpop.permute.xlu0 %150
  %153 = vset.pattern.permute.xlu0 1
  %154 = vperm.xlu0 %153, %v66
  %v155 = vpop.permute.xlu0 %154
  %157 = vset.pattern.permute.xlu0 1
  %158 = vperm.xlu0 %157, %v67
  %v159 = vpop.permute.xlu0 %158
  %161 = vset.pattern.permute.xlu0 1
  %162 = vperm.xlu0 %161, %v68
  %v163 = vpop.permute.xlu0 %162
  %v165 = vmul.f32 %v135, %v47
  %v166 = vmul.f32 %v135, %v48
  %v167 = vmul.f32 %v135, %v49
  %v168 = vmul.f32 %v135, %v50
  %v169 = vmul.f32 %v135, %v51
  %v170 = vmul.f32 %v139, %v47
  %v171 = vmul.f32 %v139, %v48
  %v172 = vmul.f32 %v139, %v49
  %v173 = vmul.f32 %v139, %v50
  %v174 = vmul.f32 %v139, %v51
  %v175 = vmul.f32 %v143, %v47
  %v176 = vmul.f32 %v143, %v48
  %v177 = vmul.f32 %v143, %v49
  %v178 = vmul.f32 %v143, %v50
  %v179 = vmul.f32 %v143, %v51
  %v180 = vmul.f32 %v147, %v47
  %v181 = vmul.f32 %v147, %v48
  %v182 = vmul.f32 %v147, %v49
  %v183 = vmul.f32 %v147, %v50
  %v184 = vmul.f32 %v147, %v51
  %v185 = vmul.f32 %v151, %v47
  %v186 = vmul.f32 %v151, %v48
  %v187 = vmul.f32 %v151, %v49
  %v188 = vmul.f32 %v151, %v50
  %v189 = vmul.f32 %v151, %v51
  %v190 = vmul.f32 %v155, %v47
  %v191 = vmul.f32 %v155, %v48
  %v192 = vmul.f32 %v155, %v49
  %v193 = vmul.f32 %v155, %v50
  %v194 = vmul.f32 %v155, %v51
  %v195 = vmul.f32 %v159, %v47
  %v196 = vmul.f32 %v159, %v48
  %v197 = vmul.f32 %v159, %v49
  %v198 = vmul.f32 %v159, %v50
  %v199 = vmul.f32 %v159, %v51
  %v200 = vmul.f32 %v163, %v47
  %v201 = vmul.f32 %v163, %v48
  %v202 = vmul.f32 %v163, %v49
  %v203 = vmul.f32 %v163, %v50
  %v204 = vmul.f32 %v163, %v51
  %245 = vrot.lane.b32.xlu0 %v165, 127
  %v246 = vpop.permute.xlu0 %245
  %247 = vrot.lane.b32.xlu0 %v166, 127
  %v248 = vpop.permute.xlu0 %247
  %249 = vrot.lane.b32.xlu0 %v167, 127
  %v250 = vpop.permute.xlu0 %249
  %251 = vrot.lane.b32.xlu0 %v168, 127
  %v252 = vpop.permute.xlu0 %251
  %253 = vrot.lane.b32.xlu0 %v169, 127
  %v254 = vpop.permute.xlu0 %253
  %255 = vrot.lane.b32.xlu0 %v170, 127
  %v256 = vpop.permute.xlu0 %255
  %257 = vrot.lane.b32.xlu0 %v171, 127
  %v258 = vpop.permute.xlu0 %257
  %259 = vrot.lane.b32.xlu0 %v172, 127
  %v260 = vpop.permute.xlu0 %259
  %261 = vrot.lane.b32.xlu0 %v173, 127
  %v262 = vpop.permute.xlu0 %261
  %263 = vrot.lane.b32.xlu0 %v174, 127
  %v264 = vpop.permute.xlu0 %263
  %265 = vrot.lane.b32.xlu0 %v175, 127
  %v266 = vpop.permute.xlu0 %265
  %267 = vrot.lane.b32.xlu0 %v176, 127
  %v268 = vpop.permute.xlu0 %267
  %269 = vrot.lane.b32.xlu0 %v177, 127
  %v270 = vpop.permute.xlu0 %269
  %271 = vrot.lane.b32.xlu0 %v178, 127
  %v272 = vpop.permute.xlu0 %271
  %273 = vrot.lane.b32.xlu0 %v179, 127
  %v274 = vpop.permute.xlu0 %273
  %275 = vrot.lane.b32.xlu0 %v180, 127
  %v276 = vpop.permute.xlu0 %275
  %277 = vrot.lane.b32.xlu0 %v181, 127
  %v278 = vpop.permute.xlu0 %277
  %279 = vrot.lane.b32.xlu0 %v182, 127
  %v280 = vpop.permute.xlu0 %279
  %281 = vrot.lane.b32.xlu0 %v183, 127
  %v282 = vpop.permute.xlu0 %281
  %283 = vrot.lane.b32.xlu0 %v184, 127
  %v284 = vpop.permute.xlu0 %283
  %285 = vrot.lane.b32.xlu0 %v185, 127
  %v286 = vpop.permute.xlu0 %285
  %287 = vrot.lane.b32.xlu0 %v186, 127
  %v288 = vpop.permute.xlu0 %287
  %289 = vrot.lane.b32.xlu0 %v187, 127
  %v290 = vpop.permute.xlu0 %289
  %291 = vrot.lane.b32.xlu0 %v188, 127
  %v292 = vpop.permute.xlu0 %291
  %293 = vrot.lane.b32.xlu0 %v189, 127
  %v294 = vpop.permute.xlu0 %293
  %295 = vrot.lane.b32.xlu0 %v190, 127
  %v296 = vpop.permute.xlu0 %295
  %297 = vrot.lane.b32.xlu0 %v191, 127
  %v298 = vpop.permute.xlu0 %297
  %299 = vrot.lane.b32.xlu0 %v192, 127
  %v300 = vpop.permute.xlu0 %299
  %301 = vrot.lane.b32.xlu0 %v193, 127
  %v302 = vpop.permute.xlu0 %301
  %303 = vrot.lane.b32.xlu0 %v194, 127
  %v304 = vpop.permute.xlu0 %303
  %305 = vrot.lane.b32.xlu0 %v195, 127
  %v306 = vpop.permute.xlu0 %305
  %307 = vrot.lane.b32.xlu0 %v196, 127
  %v308 = vpop.permute.xlu0 %307
  %309 = vrot.lane.b32.xlu0 %v197, 127
  %v310 = vpop.permute.xlu0 %309
  %311 = vrot.lane.b32.xlu0 %v198, 127
  %v312 = vpop.permute.xlu0 %311
  %313 = vrot.lane.b32.xlu0 %v199, 127
  %v314 = vpop.permute.xlu0 %313
  %315 = vrot.lane.b32.xlu0 %v200, 127
  %v316 = vpop.permute.xlu0 %315
  %317 = vrot.lane.b32.xlu0 %v201, 127
  %v318 = vpop.permute.xlu0 %317
  %319 = vrot.lane.b32.xlu0 %v202, 127
  %v320 = vpop.permute.xlu0 %319
  %321 = vrot.lane.b32.xlu0 %v203, 127
  %v322 = vpop.permute.xlu0 %321
  %323 = vrot.lane.b32.xlu0 %v204, 127
  %v324 = vpop.permute.xlu0 %323
  %vm325 = vcmask 1039360
  %v326 = vsel %vm325, %v246, %v248
  %v327 = vsel %vm325, %v248, %v250
  %v328 = vsel %vm325, %v250, %v252
  %v329 = vsel %vm325, %v252, %v254
  %v330 = vsel %vm325, %v256, %v258
  %v331 = vsel %vm325, %v258, %v260
  %v332 = vsel %vm325, %v260, %v262
  %v333 = vsel %vm325, %v262, %v264
  %v334 = vsel %vm325, %v266, %v268
  %v335 = vsel %vm325, %v268, %v270
  %v336 = vsel %vm325, %v270, %v272
  %v337 = vsel %vm325, %v272, %v274
  %v338 = vsel %vm325, %v276, %v278
  %v339 = vsel %vm325, %v278, %v280
  %v340 = vsel %vm325, %v280, %v282
  %v341 = vsel %vm325, %v282, %v284
  %v342 = vsel %vm325, %v286, %v288
  %v343 = vsel %vm325, %v288, %v290
  %v344 = vsel %vm325, %v290, %v292
  %v345 = vsel %vm325, %v292, %v294
  %v346 = vsel %vm325, %v296, %v298
  %v347 = vsel %vm325, %v298, %v300
  %v348 = vsel %vm325, %v300, %v302
  %v349 = vsel %vm325, %v302, %v304
  %v350 = vsel %vm325, %v306, %v308
  %v351 = vsel %vm325, %v308, %v310
  %v352 = vsel %vm325, %v310, %v312
  %v353 = vsel %vm325, %v312, %v314
  %v354 = vsel %vm325, %v316, %v318
  %v355 = vsel %vm325, %v318, %v320
  %v356 = vsel %vm325, %v320, %v322
  %v357 = vsel %vm325, %v322, %v324
  %v390 = vadd.f32 %v101, %v326
  %v391 = vadd.f32 %v102, %v327
  %v392 = vadd.f32 %v103, %v328
  %v393 = vadd.f32 %v104, %v329
  %v394 = vadd.f32 %v105, %v330
  %v395 = vadd.f32 %v106, %v331
  %v396 = vadd.f32 %v107, %v332
  %v397 = vadd.f32 %v108, %v333
  %v398 = vadd.f32 %v109, %v334
  %v399 = vadd.f32 %v110, %v335
  %v400 = vadd.f32 %v111, %v336
  %v401 = vadd.f32 %v112, %v337
  %v402 = vadd.f32 %v113, %v338
  %v403 = vadd.f32 %v114, %v339
  %v404 = vadd.f32 %v115, %v340
  %v405 = vadd.f32 %v116, %v341
  %v406 = vadd.f32 %v117, %v342
  %v407 = vadd.f32 %v118, %v343
  %v408 = vadd.f32 %v119, %v344
  %v409 = vadd.f32 %v120, %v345
  %v410 = vadd.f32 %v121, %v346
  %v411 = vadd.f32 %v122, %v347
  %v412 = vadd.f32 %v123, %v348
  %v413 = vadd.f32 %v124, %v349
  %v414 = vadd.f32 %v125, %v350
  %v415 = vadd.f32 %v126, %v351
  %v416 = vadd.f32 %v127, %v352
  %v417 = vadd.f32 %v128, %v353
  %v418 = vadd.f32 %v129, %v354
  %v419 = vadd.f32 %v130, %v355
  %v420 = vadd.f32 %v131, %v356
  %v421 = vadd.f32 %v132, %v357
  %422 = vset.pattern.permute.xlu0 2
  %423 = vperm.xlu0 %422, %v61
  %v424 = vpop.permute.xlu0 %423
  %426 = vset.pattern.permute.xlu0 2
  %427 = vperm.xlu0 %426, %v62
  %v428 = vpop.permute.xlu0 %427
  %430 = vset.pattern.permute.xlu0 2
  %431 = vperm.xlu0 %430, %v63
  %v432 = vpop.permute.xlu0 %431
  %434 = vset.pattern.permute.xlu0 2
  %435 = vperm.xlu0 %434, %v64
  %v436 = vpop.permute.xlu0 %435
  %438 = vset.pattern.permute.xlu0 2
  %439 = vperm.xlu0 %438, %v65
  %v440 = vpop.permute.xlu0 %439
  %442 = vset.pattern.permute.xlu0 2
  %443 = vperm.xlu0 %442, %v66
  %v444 = vpop.permute.xlu0 %443
  %446 = vset.pattern.permute.xlu0 2
  %447 = vperm.xlu0 %446, %v67
  %v448 = vpop.permute.xlu0 %447
  %450 = vset.pattern.permute.xlu0 2
  %451 = vperm.xlu0 %450, %v68
  %v452 = vpop.permute.xlu0 %451
  %v454 = vmul.f32 %v424, %v47
  %v455 = vmul.f32 %v424, %v48
  %v456 = vmul.f32 %v424, %v49
  %v457 = vmul.f32 %v424, %v50
  %v458 = vmul.f32 %v424, %v51
  %v459 = vmul.f32 %v428, %v47
  %v460 = vmul.f32 %v428, %v48
  %v461 = vmul.f32 %v428, %v49
  %v462 = vmul.f32 %v428, %v50
  %v463 = vmul.f32 %v428, %v51
  %v464 = vmul.f32 %v432, %v47
  %v465 = vmul.f32 %v432, %v48
  %v466 = vmul.f32 %v432, %v49
  %v467 = vmul.f32 %v432, %v50
  %v468 = vmul.f32 %v432, %v51
  %v469 = vmul.f32 %v436, %v47
  %v470 = vmul.f32 %v436, %v48
  %v471 = vmul.f32 %v436, %v49
  %v472 = vmul.f32 %v436, %v50
  %v473 = vmul.f32 %v436, %v51
  %v474 = vmul.f32 %v440, %v47
  %v475 = vmul.f32 %v440, %v48
  %v476 = vmul.f32 %v440, %v49
  %v477 = vmul.f32 %v440, %v50
  %v478 = vmul.f32 %v440, %v51
  %v479 = vmul.f32 %v444, %v47
  %v480 = vmul.f32 %v444, %v48
  %v481 = vmul.f32 %v444, %v49
  %v482 = vmul.f32 %v444, %v50
  %v483 = vmul.f32 %v444, %v51
  %v484 = vmul.f32 %v448, %v47
  %v485 = vmul.f32 %v448, %v48
  %v486 = vmul.f32 %v448, %v49
  %v487 = vmul.f32 %v448, %v50
  %v488 = vmul.f32 %v448, %v51
  %v489 = vmul.f32 %v452, %v47
  %v490 = vmul.f32 %v452, %v48
  %v491 = vmul.f32 %v452, %v49
  %v492 = vmul.f32 %v452, %v50
  %v493 = vmul.f32 %v452, %v51
  %534 = vrot.lane.b32.xlu0 %v454, 126
  %v535 = vpop.permute.xlu0 %534
  %536 = vrot.lane.b32.xlu0 %v455, 126
  %v537 = vpop.permute.xlu0 %536
  %538 = vrot.lane.b32.xlu0 %v456, 126
  %v539 = vpop.permute.xlu0 %538
  %540 = vrot.lane.b32.xlu0 %v457, 126
  %v541 = vpop.permute.xlu0 %540
  %542 = vrot.lane.b32.xlu0 %v458, 126
  %v543 = vpop.permute.xlu0 %542
  %544 = vrot.lane.b32.xlu0 %v459, 126
  %v545 = vpop.permute.xlu0 %544
  %546 = vrot.lane.b32.xlu0 %v460, 126
  %v547 = vpop.permute.xlu0 %546
  %548 = vrot.lane.b32.xlu0 %v461, 126
  %v549 = vpop.permute.xlu0 %548
  %550 = vrot.lane.b32.xlu0 %v462, 126
  %v551 = vpop.permute.xlu0 %550
  %552 = vrot.lane.b32.xlu0 %v463, 126
  %v553 = vpop.permute.xlu0 %552
  %554 = vrot.lane.b32.xlu0 %v464, 126
  %v555 = vpop.permute.xlu0 %554
  %556 = vrot.lane.b32.xlu0 %v465, 126
  %v557 = vpop.permute.xlu0 %556
  %558 = vrot.lane.b32.xlu0 %v466, 126
  %v559 = vpop.permute.xlu0 %558
  %560 = vrot.lane.b32.xlu0 %v467, 126
  %v561 = vpop.permute.xlu0 %560
  %562 = vrot.lane.b32.xlu0 %v468, 126
  %v563 = vpop.permute.xlu0 %562
  %564 = vrot.lane.b32.xlu0 %v469, 126
  %v565 = vpop.permute.xlu0 %564
  %566 = vrot.lane.b32.xlu0 %v470, 126
  %v567 = vpop.permute.xlu0 %566
  %568 = vrot.lane.b32.xlu0 %v471, 126
  %v569 = vpop.permute.xlu0 %568
  %570 = vrot.lane.b32.xlu0 %v472, 126
  %v571 = vpop.permute.xlu0 %570
  %572 = vrot.lane.b32.xlu0 %v473, 126
  %v573 = vpop.permute.xlu0 %572
  %574 = vrot.lane.b32.xlu0 %v474, 126
  %v575 = vpop.permute.xlu0 %574
  %576 = vrot.lane.b32.xlu0 %v475, 126
  %v577 = vpop.permute.xlu0 %576
  %578 = vrot.lane.b32.xlu0 %v476, 126
  %v579 = vpop.permute.xlu0 %578
  %580 = vrot.lane.b32.xlu0 %v477, 126
  %v581 = vpop.permute.xlu0 %580
  %582 = vrot.lane.b32.xlu0 %v478, 126
  %v583 = vpop.permute.xlu0 %582
  %584 = vrot.lane.b32.xlu0 %v479, 126
  %v585 = vpop.permute.xlu0 %584
  %586 = vrot.lane.b32.xlu0 %v480, 126
  %v587 = vpop.permute.xlu0 %586
  %588 = vrot.lane.b32.xlu0 %v481, 126
  %v589 = vpop.permute.xlu0 %588
  %590 = vrot.lane.b32.xlu0 %v482, 126
  %v591 = vpop.permute.xlu0 %590
  %592 = vrot.lane.b32.xlu0 %v483, 126
  %v593 = vpop.permute.xlu0 %592
  %594 = vrot.lane.b32.xlu0 %v484, 126
  %v595 = vpop.permute.xlu0 %594
  %596 = vrot.lane.b32.xlu0 %v485, 126
  %v597 = vpop.permute.xlu0 %596
  %598 = vrot.lane.b32.xlu0 %v486, 126
  %v599 = vpop.permute.xlu0 %598
  %600 = vrot.lane.b32.xlu0 %v487, 126
  %v601 = vpop.permute.xlu0 %600
  %602 = vrot.lane.b32.xlu0 %v488, 126
  %v603 = vpop.permute.xlu0 %602
  %604 = vrot.lane.b32.xlu0 %v489, 126
  %v605 = vpop.permute.xlu0 %604
  %606 = vrot.lane.b32.xlu0 %v490, 126
  %v607 = vpop.permute.xlu0 %606
  %608 = vrot.lane.b32.xlu0 %v491, 126
  %v609 = vpop.permute.xlu0 %608
  %610 = vrot.lane.b32.xlu0 %v492, 126
  %v611 = vpop.permute.xlu0 %610
  %612 = vrot.lane.b32.xlu0 %v493, 126
  %v613 = vpop.permute.xlu0 %612
  %vm614 = vcmask 1031168
  %v615 = vsel %vm614, %v535, %v537
  %v616 = vsel %vm614, %v537, %v539
  %v617 = vsel %vm614, %v539, %v541
  %v618 = vsel %vm614, %v541, %v543
  %v619 = vsel %vm614, %v545, %v547
  %v620 = vsel %vm614, %v547, %v549
  %v621 = vsel %vm614, %v549, %v551
  %v622 = vsel %vm614, %v551, %v553
  %v623 = vsel %vm614, %v555, %v557
  %v624 = vsel %vm614, %v557, %v559
  %v625 = vsel %vm614, %v559, %v561
  %v626 = vsel %vm614, %v561, %v563
  %v627 = vsel %vm614, %v565, %v567
  %v628 = vsel %vm614, %v567, %v569
  %v629 = vsel %vm614, %v569, %v571
  %v630 = vsel %vm614, %v571, %v573
  %v631 = vsel %vm614, %v575, %v577
  %v632 = vsel %vm614, %v577, %v579
  %v633 = vsel %vm614, %v579, %v581
  %v634 = vsel %vm614, %v581, %v583
  %v635 = vsel %vm614, %v585, %v587
  %v636 = vsel %vm614, %v587, %v589
  %v637 = vsel %vm614, %v589, %v591
  %v638 = vsel %vm614, %v591, %v593
  %v639 = vsel %vm614, %v595, %v597
  %v640 = vsel %vm614, %v597, %v599
  %v641 = vsel %vm614, %v599, %v601
  %v642 = vsel %vm614, %v601, %v603
  %v643 = vsel %vm614, %v605, %v607
  %v644 = vsel %vm614, %v607, %v609
  %v645 = vsel %vm614, %v609, %v611
  %v646 = vsel %vm614, %v611, %v613
  %v679 = vadd.f32 %v390, %v615
  %v680 = vadd.f32 %v391, %v616
  %v681 = vadd.f32 %v392, %v617
  %v682 = vadd.f32 %v393, %v618
  %v683 = vadd.f32 %v394, %v619
  %v684 = vadd.f32 %v395, %v620
  %v685 = vadd.f32 %v396, %v621
  %v686 = vadd.f32 %v397, %v622
  %v687 = vadd.f32 %v398, %v623
  %v688 = vadd.f32 %v399, %v624
  %v689 = vadd.f32 %v400, %v625
  %v690 = vadd.f32 %v401, %v626
  %v691 = vadd.f32 %v402, %v627
  %v692 = vadd.f32 %v403, %v628
  %v693 = vadd.f32 %v404, %v629
  %v694 = vadd.f32 %v405, %v630
  %v695 = vadd.f32 %v406, %v631
  %v696 = vadd.f32 %v407, %v632
  %v697 = vadd.f32 %v408, %v633
  %v698 = vadd.f32 %v409, %v634
  %v699 = vadd.f32 %v410, %v635
  %v700 = vadd.f32 %v411, %v636
  %v701 = vadd.f32 %v412, %v637
  %v702 = vadd.f32 %v413, %v638
  %v703 = vadd.f32 %v414, %v639
  %v704 = vadd.f32 %v415, %v640
  %v705 = vadd.f32 %v416, %v641
  %v706 = vadd.f32 %v417, %v642
  %v707 = vadd.f32 %v418, %v643
  %v708 = vadd.f32 %v419, %v644
  %v709 = vadd.f32 %v420, %v645
  %v710 = vadd.f32 %v421, %v646
  %711 = vset.pattern.permute.xlu0 3
  %712 = vperm.xlu0 %711, %v61
  %v713 = vpop.permute.xlu0 %712
  %715 = vset.pattern.permute.xlu0 3
  %716 = vperm.xlu0 %715, %v62
  %v717 = vpop.permute.xlu0 %716
  %719 = vset.pattern.permute.xlu0 3
  %720 = vperm.xlu0 %719, %v63
  %v721 = vpop.permute.xlu0 %720
  %723 = vset.pattern.permute.xlu0 3
  %724 = vperm.xlu0 %723, %v64
  %v725 = vpop.permute.xlu0 %724
  %727 = vset.pattern.permute.xlu0 3
  %728 = vperm.xlu0 %727, %v65
  %v729 = vpop.permute.xlu0 %728
  %731 = vset.pattern.permute.xlu0 3
  %732 = vperm.xlu0 %731, %v66
  %v733 = vpop.permute.xlu0 %732
  %735 = vset.pattern.permute.xlu0 3
  %736 = vperm.xlu0 %735, %v67
  %v737 = vpop.permute.xlu0 %736
  %739 = vset.pattern.permute.xlu0 3
  %740 = vperm.xlu0 %739, %v68
  %v741 = vpop.permute.xlu0 %740
  %v743 = vmul.f32 %v713, %v47
  %v744 = vmul.f32 %v713, %v48
  %v745 = vmul.f32 %v713, %v49
  %v746 = vmul.f32 %v713, %v50
  %v747 = vmul.f32 %v713, %v51
  %v748 = vmul.f32 %v717, %v47
  %v749 = vmul.f32 %v717, %v48
  %v750 = vmul.f32 %v717, %v49
  %v751 = vmul.f32 %v717, %v50
  %v752 = vmul.f32 %v717, %v51
  %v753 = vmul.f32 %v721, %v47
  %v754 = vmul.f32 %v721, %v48
  %v755 = vmul.f32 %v721, %v49
  %v756 = vmul.f32 %v721, %v50
  %v757 = vmul.f32 %v721, %v51
  %v758 = vmul.f32 %v725, %v47
  %v759 = vmul.f32 %v725, %v48
  %v760 = vmul.f32 %v725, %v49
  %v761 = vmul.f32 %v725, %v50
  %v762 = vmul.f32 %v725, %v51
  %v763 = vmul.f32 %v729, %v47
  %v764 = vmul.f32 %v729, %v48
  %v765 = vmul.f32 %v729, %v49
  %v766 = vmul.f32 %v729, %v50
  %v767 = vmul.f32 %v729, %v51
  %v768 = vmul.f32 %v733, %v47
  %v769 = vmul.f32 %v733, %v48
  %v770 = vmul.f32 %v733, %v49
  %v771 = vmul.f32 %v733, %v50
  %v772 = vmul.f32 %v733, %v51
  %v773 = vmul.f32 %v737, %v47
  %v774 = vmul.f32 %v737, %v48
  %v775 = vmul.f32 %v737, %v49
  %v776 = vmul.f32 %v737, %v50
  %v777 = vmul.f32 %v737, %v51
  %v778 = vmul.f32 %v741, %v47
  %v779 = vmul.f32 %v741, %v48
  %v780 = vmul.f32 %v741, %v49
  %v781 = vmul.f32 %v741, %v50
  %v782 = vmul.f32 %v741, %v51
  %823 = vrot.lane.b32.xlu0 %v743, 125
  %v824 = vpop.permute.xlu0 %823
  %825 = vrot.lane.b32.xlu0 %v744, 125
  %v826 = vpop.permute.xlu0 %825
  %827 = vrot.lane.b32.xlu0 %v745, 125
  %v828 = vpop.permute.xlu0 %827
  %829 = vrot.lane.b32.xlu0 %v746, 125
  %v830 = vpop.permute.xlu0 %829
  %831 = vrot.lane.b32.xlu0 %v747, 125
  %v832 = vpop.permute.xlu0 %831
  %833 = vrot.lane.b32.xlu0 %v748, 125
  %v834 = vpop.permute.xlu0 %833
  %835 = vrot.lane.b32.xlu0 %v749, 125
  %v836 = vpop.permute.xlu0 %835
  %837 = vrot.lane.b32.xlu0 %v750, 125
  %v838 = vpop.permute.xlu0 %837
  %839 = vrot.lane.b32.xlu0 %v751, 125
  %v840 = vpop.permute.xlu0 %839
  %841 = vrot.lane.b32.xlu0 %v752, 125
  %v842 = vpop.permute.xlu0 %841
  %843 = vrot.lane.b32.xlu0 %v753, 125
  %v844 = vpop.permute.xlu0 %843
  %845 = vrot.lane.b32.xlu0 %v754, 125
  %v846 = vpop.permute.xlu0 %845
  %847 = vrot.lane.b32.xlu0 %v755, 125
  %v848 = vpop.permute.xlu0 %847
  %849 = vrot.lane.b32.xlu0 %v756, 125
  %v850 = vpop.permute.xlu0 %849
  %851 = vrot.lane.b32.xlu0 %v757, 125
  %v852 = vpop.permute.xlu0 %851
  %853 = vrot.lane.b32.xlu0 %v758, 125
  %v854 = vpop.permute.xlu0 %853
  %855 = vrot.lane.b32.xlu0 %v759, 125
  %v856 = vpop.permute.xlu0 %855
  %857 = vrot.lane.b32.xlu0 %v760, 125
  %v858 = vpop.permute.xlu0 %857
  %859 = vrot.lane.b32.xlu0 %v761, 125
  %v860 = vpop.permute.xlu0 %859
  %861 = vrot.lane.b32.xlu0 %v762, 125
  %v862 = vpop.permute.xlu0 %861
  %863 = vrot.lane.b32.xlu0 %v763, 125
  %v864 = vpop.permute.xlu0 %863
  %865 = vrot.lane.b32.xlu0 %v764, 125
  %v866 = vpop.permute.xlu0 %865
  %867 = vrot.lane.b32.xlu0 %v765, 125
  %v868 = vpop.permute.xlu0 %867
  %869 = vrot.lane.b32.xlu0 %v766, 125
  %v870 = vpop.permute.xlu0 %869
  %871 = vrot.lane.b32.xlu0 %v767, 125
  %v872 = vpop.permute.xlu0 %871
  %873 = vrot.lane.b32.xlu0 %v768, 125
  %v874 = vpop.permute.xlu0 %873
  %875 = vrot.lane.b32.xlu0 %v769, 125
  %v876 = vpop.permute.xlu0 %875
  %877 = vrot.lane.b32.xlu0 %v770, 125
  %v878 = vpop.permute.xlu0 %877
  %879 = vrot.lane.b32.xlu0 %v771, 125
  %v880 = vpop.permute.xlu0 %879
  %881 = vrot.lane.b32.xlu0 %v772, 125
  %v882 = vpop.permute.xlu0 %881
  %883 = vrot.lane.b32.xlu0 %v773, 125
  %v884 = vpop.permute.xlu0 %883
  %885 = vrot.lane.b32.xlu0 %v774, 125
  %v886 = vpop.permute.xlu0 %885
  %887 = vrot.lane.b32.xlu0 %v775, 125
  %v888 = vpop.permute.xlu0 %887
  %889 = vrot.lane.b32.xlu0 %v776, 125
  %v890 = vpop.permute.xlu0 %889
  %891 = vrot.lane.b32.xlu0 %v777, 125
  %v892 = vpop.permute.xlu0 %891
  %893 = vrot.lane.b32.xlu0 %v778, 125
  %v894 = vpop.permute.xlu0 %893
  %895 = vrot.lane.b32.xlu0 %v779, 125
  %v896 = vpop.permute.xlu0 %895
  %897 = vrot.lane.b32.xlu0 %v780, 125
  %v898 = vpop.permute.xlu0 %897
  %899 = vrot.lane.b32.xlu0 %v781, 125
  %v900 = vpop.permute.xlu0 %899
  %901 = vrot.lane.b32.xlu0 %v782, 125
  %v902 = vpop.permute.xlu0 %901
  %vm903 = vcmask 1022976
  %v904 = vsel %vm903, %v824, %v826
  %v905 = vsel %vm903, %v826, %v828
  %v906 = vsel %vm903, %v828, %v830
  %v907 = vsel %vm903, %v830, %v832
  %v908 = vsel %vm903, %v834, %v836
  %v909 = vsel %vm903, %v836, %v838
  %v910 = vsel %vm903, %v838, %v840
  %v911 = vsel %vm903, %v840, %v842
  %v912 = vsel %vm903, %v844, %v846
  %v913 = vsel %vm903, %v846, %v848
  %v914 = vsel %vm903, %v848, %v850
  %v915 = vsel %vm903, %v850, %v852
  %v916 = vsel %vm903, %v854, %v856
  %v917 = vsel %vm903, %v856, %v858
  %v918 = vsel %vm903, %v858, %v860
  %v919 = vsel %vm903, %v860, %v862
  %v920 = vsel %vm903, %v864, %v866
  %v921 = vsel %vm903, %v866, %v868
  %v922 = vsel %vm903, %v868, %v870
  %v923 = vsel %vm903, %v870, %v872
  %v924 = vsel %vm903, %v874, %v876
  %v925 = vsel %vm903, %v876, %v878
  %v926 = vsel %vm903, %v878, %v880
  %v927 = vsel %vm903, %v880, %v882
  %v928 = vsel %vm903, %v884, %v886
  %v929 = vsel %vm903, %v886, %v888
  %v930 = vsel %vm903, %v888, %v890
  %v931 = vsel %vm903, %v890, %v892
  %v932 = vsel %vm903, %v894, %v896
  %v933 = vsel %vm903, %v896, %v898
  %v934 = vsel %vm903, %v898, %v900
  %v935 = vsel %vm903, %v900, %v902
  %v968 = vadd.f32 %v679, %v904
  %v969 = vadd.f32 %v680, %v905
  %v970 = vadd.f32 %v681, %v906
  %v971 = vadd.f32 %v682, %v907
  %v972 = vadd.f32 %v683, %v908
  %v973 = vadd.f32 %v684, %v909
  %v974 = vadd.f32 %v685, %v910
  %v975 = vadd.f32 %v686, %v911
  %v976 = vadd.f32 %v687, %v912
  %v977 = vadd.f32 %v688, %v913
  %v978 = vadd.f32 %v689, %v914
  %v979 = vadd.f32 %v690, %v915
  %v980 = vadd.f32 %v691, %v916
  %v981 = vadd.f32 %v692, %v917
  %v982 = vadd.f32 %v693, %v918
  %v983 = vadd.f32 %v694, %v919
  %v984 = vadd.f32 %v695, %v920
  %v985 = vadd.f32 %v696, %v921
  %v986 = vadd.f32 %v697, %v922
  %v987 = vadd.f32 %v698, %v923
  %v988 = vadd.f32 %v699, %v924
  %v989 = vadd.f32 %v700, %v925
  %v990 = vadd.f32 %v701, %v926
  %v991 = vadd.f32 %v702, %v927
  %v992 = vadd.f32 %v703, %v928
  %v993 = vadd.f32 %v704, %v929
  %v994 = vadd.f32 %v705, %v930
  %v995 = vadd.f32 %v706, %v931
  %v996 = vadd.f32 %v707, %v932
  %v997 = vadd.f32 %v708, %v933
  %v998 = vadd.f32 %v709, %v934
  %v999 = vadd.f32 %v710, %v935
  %1000 = vset.pattern.permute.xlu0 4
  %1001 = vperm.xlu0 %1000, %v61
  %v1002 = vpop.permute.xlu0 %1001
  %1004 = vset.pattern.permute.xlu0 4
  %1005 = vperm.xlu0 %1004, %v62
  %v1006 = vpop.permute.xlu0 %1005
  %1008 = vset.pattern.permute.xlu0 4
  %1009 = vperm.xlu0 %1008, %v63
  %v1010 = vpop.permute.xlu0 %1009
  %1012 = vset.pattern.permute.xlu0 4
  %1013 = vperm.xlu0 %1012, %v64
  %v1014 = vpop.permute.xlu0 %1013
  %1016 = vset.pattern.permute.xlu0 4
  %1017 = vperm.xlu0 %1016, %v65
  %v1018 = vpop.permute.xlu0 %1017
  %1020 = vset.pattern.permute.xlu0 4
  %1021 = vperm.xlu0 %1020, %v66
  %v1022 = vpop.permute.xlu0 %1021
  %1024 = vset.pattern.permute.xlu0 4
  %1025 = vperm.xlu0 %1024, %v67
  %v1026 = vpop.permute.xlu0 %1025
  %1028 = vset.pattern.permute.xlu0 4
  %1029 = vperm.xlu0 %1028, %v68
  %v1030 = vpop.permute.xlu0 %1029
  %v1032 = vmul.f32 %v1002, %v47
  %v1033 = vmul.f32 %v1002, %v48
  %v1034 = vmul.f32 %v1002, %v49
  %v1035 = vmul.f32 %v1002, %v50
  %v1036 = vmul.f32 %v1002, %v51
  %v1037 = vmul.f32 %v1006, %v47
  %v1038 = vmul.f32 %v1006, %v48
  %v1039 = vmul.f32 %v1006, %v49
  %v1040 = vmul.f32 %v1006, %v50
  %v1041 = vmul.f32 %v1006, %v51
  %v1042 = vmul.f32 %v1010, %v47
  %v1043 = vmul.f32 %v1010, %v48
  %v1044 = vmul.f32 %v1010, %v49
  %v1045 = vmul.f32 %v1010, %v50
  %v1046 = vmul.f32 %v1010, %v51
  %v1047 = vmul.f32 %v1014, %v47
  %v1048 = vmul.f32 %v1014, %v48
  %v1049 = vmul.f32 %v1014, %v49
  %v1050 = vmul.f32 %v1014, %v50
  %v1051 = vmul.f32 %v1014, %v51
  %v1052 = vmul.f32 %v1018, %v47
  %v1053 = vmul.f32 %v1018, %v48
  %v1054 = vmul.f32 %v1018, %v49
  %v1055 = vmul.f32 %v1018, %v50
  %v1056 = vmul.f32 %v1018, %v51
  %v1057 = vmul.f32 %v1022, %v47
  %v1058 = vmul.f32 %v1022, %v48
  %v1059 = vmul.f32 %v1022, %v49
  %v1060 = vmul.f32 %v1022, %v50
  %v1061 = vmul.f32 %v1022, %v51
  %v1062 = vmul.f32 %v1026, %v47
  %v1063 = vmul.f32 %v1026, %v48
  %v1064 = vmul.f32 %v1026, %v49
  %v1065 = vmul.f32 %v1026, %v50
  %v1066 = vmul.f32 %v1026, %v51
  %v1067 = vmul.f32 %v1030, %v47
  %v1068 = vmul.f32 %v1030, %v48
  %v1069 = vmul.f32 %v1030, %v49
  %v1070 = vmul.f32 %v1030, %v50
  %v1071 = vmul.f32 %v1030, %v51
  %1112 = vrot.lane.b32.xlu0 %v1032, 124
  %v1113 = vpop.permute.xlu0 %1112
  %1114 = vrot.lane.b32.xlu0 %v1033, 124
  %v1115 = vpop.permute.xlu0 %1114
  %1116 = vrot.lane.b32.xlu0 %v1034, 124
  %v1117 = vpop.permute.xlu0 %1116
  %1118 = vrot.lane.b32.xlu0 %v1035, 124
  %v1119 = vpop.permute.xlu0 %1118
  %1120 = vrot.lane.b32.xlu0 %v1036, 124
  %v1121 = vpop.permute.xlu0 %1120
  %1122 = vrot.lane.b32.xlu0 %v1037, 124
  %v1123 = vpop.permute.xlu0 %1122
  %1124 = vrot.lane.b32.xlu0 %v1038, 124
  %v1125 = vpop.permute.xlu0 %1124
  %1126 = vrot.lane.b32.xlu0 %v1039, 124
  %v1127 = vpop.permute.xlu0 %1126
  %1128 = vrot.lane.b32.xlu0 %v1040, 124
  %v1129 = vpop.permute.xlu0 %1128
  %1130 = vrot.lane.b32.xlu0 %v1041, 124
  %v1131 = vpop.permute.xlu0 %1130
  %1132 = vrot.lane.b32.xlu0 %v1042, 124
  %v1133 = vpop.permute.xlu0 %1132
  %1134 = vrot.lane.b32.xlu0 %v1043, 124
  %v1135 = vpop.permute.xlu0 %1134
  %1136 = vrot.lane.b32.xlu0 %v1044, 124
  %v1137 = vpop.permute.xlu0 %1136
  %1138 = vrot.lane.b32.xlu0 %v1045, 124
  %v1139 = vpop.permute.xlu0 %1138
  %1140 = vrot.lane.b32.xlu0 %v1046, 124
  %v1141 = vpop.permute.xlu0 %1140
  %1142 = vrot.lane.b32.xlu0 %v1047, 124
  %v1143 = vpop.permute.xlu0 %1142
  %1144 = vrot.lane.b32.xlu0 %v1048, 124
  %v1145 = vpop.permute.xlu0 %1144
  %1146 = vrot.lane.b32.xlu0 %v1049, 124
  %v1147 = vpop.permute.xlu0 %1146
  %1148 = vrot.lane.b32.xlu0 %v1050, 124
  %v1149 = vpop.permute.xlu0 %1148
  %1150 = vrot.lane.b32.xlu0 %v1051, 124
  %v1151 = vpop.permute.xlu0 %1150
  %1152 = vrot.lane.b32.xlu0 %v1052, 124
  %v1153 = vpop.permute.xlu0 %1152
  %1154 = vrot.lane.b32.xlu0 %v1053, 124
  %v1155 = vpop.permute.xlu0 %1154
  %1156 = vrot.lane.b32.xlu0 %v1054, 124
  %v1157 = vpop.permute.xlu0 %1156
  %1158 = vrot.lane.b32.xlu0 %v1055, 124
  %v1159 = vpop.permute.xlu0 %1158
  %1160 = vrot.lane.b32.xlu0 %v1056, 124
  %v1161 = vpop.permute.xlu0 %1160
  %1162 = vrot.lane.b32.xlu0 %v1057, 124
  %v1163 = vpop.permute.xlu0 %1162
  %1164 = vrot.lane.b32.xlu0 %v1058, 124
  %v1165 = vpop.permute.xlu0 %1164
  %1166 = vrot.lane.b32.xlu0 %v1059, 124
  %v1167 = vpop.permute.xlu0 %1166
  %1168 = vrot.lane.b32.xlu0 %v1060, 124
  %v1169 = vpop.permute.xlu0 %1168
  %1170 = vrot.lane.b32.xlu0 %v1061, 124
  %v1171 = vpop.permute.xlu0 %1170
  %1172 = vrot.lane.b32.xlu0 %v1062, 124
  %v1173 = vpop.permute.xlu0 %1172
  %1174 = vrot.lane.b32.xlu0 %v1063, 124
  %v1175 = vpop.permute.xlu0 %1174
  %1176 = vrot.lane.b32.xlu0 %v1064, 124
  %v1177 = vpop.permute.xlu0 %1176
  %1178 = vrot.lane.b32.xlu0 %v1065, 124
  %v1179 = vpop.permute.xlu0 %1178
  %1180 = vrot.lane.b32.xlu0 %v1066, 124
  %v1181 = vpop.permute.xlu0 %1180
  %1182 = vrot.lane.b32.xlu0 %v1067, 124
  %v1183 = vpop.permute.xlu0 %1182
  %1184 = vrot.lane.b32.xlu0 %v1068, 124
  %v1185 = vpop.permute.xlu0 %1184
  %1186 = vrot.lane.b32.xlu0 %v1069, 124
  %v1187 = vpop.permute.xlu0 %1186
  %1188 = vrot.lane.b32.xlu0 %v1070, 124
  %v1189 = vpop.permute.xlu0 %1188
  %1190 = vrot.lane.b32.xlu0 %v1071, 124
  %v1191 = vpop.permute.xlu0 %1190
  %vm1192 = vcmask 1014784
  %v1193 = vsel %vm1192, %v1113, %v1115
  %v1194 = vsel %vm1192, %v1115, %v1117
  %v1195 = vsel %vm1192, %v1117, %v1119
  %v1196 = vsel %vm1192, %v1119, %v1121
  %v1197 = vsel %vm1192, %v1123, %v1125
  %v1198 = vsel %vm1192, %v1125, %v1127
  %v1199 = vsel %vm1192, %v1127, %v1129
  %v1200 = vsel %vm1192, %v1129, %v1131
  %v1201 = vsel %vm1192, %v1133, %v1135
  %v1202 = vsel %vm1192, %v1135, %v1137
  %v1203 = vsel %vm1192, %v1137, %v1139
  %v1204 = vsel %vm1192, %v1139, %v1141
  %v1205 = vsel %vm1192, %v1143, %v1145
  %v1206 = vsel %vm1192, %v1145, %v1147
  %v1207 = vsel %vm1192, %v1147, %v1149
  %v1208 = vsel %vm1192, %v1149, %v1151
  %v1209 = vsel %vm1192, %v1153, %v1155
  %v1210 = vsel %vm1192, %v1155, %v1157
  %v1211 = vsel %vm1192, %v1157, %v1159
  %v1212 = vsel %vm1192, %v1159, %v1161
  %v1213 = vsel %vm1192, %v1163, %v1165
  %v1214 = vsel %vm1192, %v1165, %v1167
  %v1215 = vsel %vm1192, %v1167, %v1169
  %v1216 = vsel %vm1192, %v1169, %v1171
  %v1217 = vsel %vm1192, %v1173, %v1175
  %v1218 = vsel %vm1192, %v1175, %v1177
  %v1219 = vsel %vm1192, %v1177, %v1179
  %v1220 = vsel %vm1192, %v1179, %v1181
  %v1221 = vsel %vm1192, %v1183, %v1185
  %v1222 = vsel %vm1192, %v1185, %v1187
  %v1223 = vsel %vm1192, %v1187, %v1189
  %v1224 = vsel %vm1192, %v1189, %v1191
  %v1257 = vadd.f32 %v968, %v1193
  %v1258 = vadd.f32 %v969, %v1194
  %v1259 = vadd.f32 %v970, %v1195
  %v1260 = vadd.f32 %v971, %v1196
  %v1261 = vadd.f32 %v972, %v1197
  %v1262 = vadd.f32 %v973, %v1198
  %v1263 = vadd.f32 %v974, %v1199
  %v1264 = vadd.f32 %v975, %v1200
  %v1265 = vadd.f32 %v976, %v1201
  %v1266 = vadd.f32 %v977, %v1202
  %v1267 = vadd.f32 %v978, %v1203
  %v1268 = vadd.f32 %v979, %v1204
  %v1269 = vadd.f32 %v980, %v1205
  %v1270 = vadd.f32 %v981, %v1206
  %v1271 = vadd.f32 %v982, %v1207
  %v1272 = vadd.f32 %v983, %v1208
  %v1273 = vadd.f32 %v984, %v1209
  %v1274 = vadd.f32 %v985, %v1210
  %v1275 = vadd.f32 %v986, %v1211
  %v1276 = vadd.f32 %v987, %v1212
  %v1277 = vadd.f32 %v988, %v1213
  %v1278 = vadd.f32 %v989, %v1214
  %v1279 = vadd.f32 %v990, %v1215
  %v1280 = vadd.f32 %v991, %v1216
  %v1281 = vadd.f32 %v992, %v1217
  %v1282 = vadd.f32 %v993, %v1218
  %v1283 = vadd.f32 %v994, %v1219
  %v1284 = vadd.f32 %v995, %v1220
  %v1285 = vadd.f32 %v996, %v1221
  %v1286 = vadd.f32 %v997, %v1222
  %v1287 = vadd.f32 %v998, %v1223
  %v1288 = vadd.f32 %v999, %v1224
  %v1289 = vld [vmem:[%s2] sm:$0x1]
  %v1290 = vld [vmem:[%s2 + $0x1] sm:$0x1]
  %v1291 = vld [vmem:[%s2 + $0x2] sm:$0x1]
  %v1292 = vld [vmem:[%s2 + $0x3] sm:$0x1]
  %v1293 = vld [vmem:[%s2 + $0x4] sm:$0x1]
  %v1294 = vld [vmem:[%s2 + $0x5] sm:$0x1]
  %v1295 = vld [vmem:[%s2 + $0x6] sm:$0x1]
  %v1296 = vld [vmem:[%s2 + $0x7] sm:$0x1]
  %v1305 = vperm.slane %v1289, 0
  %v1306 = vperm.slane %v1290, 0
  %v1307 = vperm.slane %v1291, 0
  %v1308 = vperm.slane %v1292, 0
  %v1309 = vperm.slane %v1293, 0
  %v1310 = vperm.slane %v1294, 0
  %v1311 = vperm.slane %v1295, 0
  %v1312 = vperm.slane %v1296, 0
  %1313 = vset.pattern.permute.xlu0 0
  %1314 = vperm.xlu0 %1313, %v1305
  %v1315 = vpop.permute.xlu0 %1314
  %1317 = vset.pattern.permute.xlu0 0
  %1318 = vperm.xlu0 %1317, %v1306
  %v1319 = vpop.permute.xlu0 %1318
  %1321 = vset.pattern.permute.xlu0 0
  %1322 = vperm.xlu0 %1321, %v1307
  %v1323 = vpop.permute.xlu0 %1322
  %1325 = vset.pattern.permute.xlu0 0
  %1326 = vperm.xlu0 %1325, %v1308
  %v1327 = vpop.permute.xlu0 %1326
  %1329 = vset.pattern.permute.xlu0 0
  %1330 = vperm.xlu0 %1329, %v1309
  %v1331 = vpop.permute.xlu0 %1330
  %1333 = vset.pattern.permute.xlu0 0
  %1334 = vperm.xlu0 %1333, %v1310
  %v1335 = vpop.permute.xlu0 %1334
  %1337 = vset.pattern.permute.xlu0 0
  %1338 = vperm.xlu0 %1337, %v1311
  %v1339 = vpop.permute.xlu0 %1338
  %1341 = vset.pattern.permute.xlu0 0
  %1342 = vperm.xlu0 %1341, %v1312
  %v1343 = vpop.permute.xlu0 %1342
  %v1345 = vadd.f32 %v1257, %v1315
  %v1346 = vadd.f32 %v1258, %v1315
  %v1347 = vadd.f32 %v1259, %v1315
  %v1348 = vadd.f32 %v1260, %v1315
  %v1349 = vadd.f32 %v1261, %v1319
  %v1350 = vadd.f32 %v1262, %v1319
  %v1351 = vadd.f32 %v1263, %v1319
  %v1352 = vadd.f32 %v1264, %v1319
  %v1353 = vadd.f32 %v1265, %v1323
  %v1354 = vadd.f32 %v1266, %v1323
  %v1355 = vadd.f32 %v1267, %v1323
  %v1356 = vadd.f32 %v1268, %v1323
  %v1357 = vadd.f32 %v1269, %v1327
  %v1358 = vadd.f32 %v1270, %v1327
  %v1359 = vadd.f32 %v1271, %v1327
  %v1360 = vadd.f32 %v1272, %v1327
  %v1361 = vadd.f32 %v1273, %v1331
  %v1362 = vadd.f32 %v1274, %v1331
  %v1363 = vadd.f32 %v1275, %v1331
  %v1364 = vadd.f32 %v1276, %v1331
  %v1365 = vadd.f32 %v1277, %v1335
  %v1366 = vadd.f32 %v1278, %v1335
  %v1367 = vadd.f32 %v1279, %v1335
  %v1368 = vadd.f32 %v1280, %v1335
  %v1369 = vadd.f32 %v1281, %v1339
  %v1370 = vadd.f32 %v1282, %v1339
  %v1371 = vadd.f32 %v1283, %v1339
  %v1372 = vadd.f32 %v1284, %v1339
  %v1373 = vadd.f32 %v1285, %v1343
  %v1374 = vadd.f32 %v1286, %v1343
  %v1375 = vadd.f32 %v1287, %v1343
  %v1376 = vadd.f32 %v1288, %v1343
  %v1377 = vmax.f32 %v1345, 0.0
  %v1378 = vmax.f32 %v1346, 0.0
  %v1379 = vmax.f32 %v1347, 0.0
  %v1380 = vmax.f32 %v1348, 0.0
  %v1381 = vmax.f32 %v1349, 0.0
  %v1382 = vmax.f32 %v1350, 0.0
  %v1383 = vmax.f32 %v1351, 0.0
  %v1384 = vmax.f32 %v1352, 0.0
  %v1385 = vmax.f32 %v1353, 0.0
  %v1386 = vmax.f32 %v1354, 0.0
  %v1387 = vmax.f32 %v1355, 0.0
  %v1388 = vmax.f32 %v1356, 0.0
  %v1389 = vmax.f32 %v1357, 0.0
  %v1390 = vmax.f32 %v1358, 0.0
  %v1391 = vmax.f32 %v1359, 0.0
  %v1392 = vmax.f32 %v1360, 0.0
  %v1393 = vmax.f32 %v1361, 0.0
  %v1394 = vmax.f32 %v1362, 0.0
  %v1395 = vmax.f32 %v1363, 0.0
  %v1396 = vmax.f32 %v1364, 0.0
  %v1397 = vmax.f32 %v1365, 0.0
  %v1398 = vmax.f32 %v1366, 0.0
  %v1399 = vmax.f32 %v1367, 0.0
  %v1400 = vmax.f32 %v1368, 0.0
  %v1401 = vmax.f32 %v1369, 0.0
  %v1402 = vmax.f32 %v1370, 0.0
  %v1403 = vmax.f32 %v1371, 0.0
  %v1404 = vmax.f32 %v1372, 0.0
  %v1405 = vmax.f32 %v1373, 0.0
  %v1406 = vmax.f32 %v1374, 0.0
  %v1407 = vmax.f32 %v1375, 0.0
  %v1408 = vmax.f32 %v1376, 0.0
  %1409 = vrot.lane.b32.xlu0 %v1377, 127
  %v1410 = vpop.permute.xlu0 %1409
  %1411 = vrot.lane.b32.xlu0 %v1381, 127
  %v1412 = vpop.permute.xlu0 %1411
  %1413 = vrot.lane.b32.xlu0 %v1385, 127
  %v1414 = vpop.permute.xlu0 %1413
  %1415 = vrot.lane.b32.xlu0 %v1389, 127
  %v1416 = vpop.permute.xlu0 %1415
  %1417 = vrot.lane.b32.xlu0 %v1393, 127
  %v1418 = vpop.permute.xlu0 %1417
  %1419 = vrot.lane.b32.xlu0 %v1397, 127
  %v1420 = vpop.permute.xlu0 %1419
  %1421 = vrot.lane.b32.xlu0 %v1401, 127
  %v1422 = vpop.permute.xlu0 %1421
  %1423 = vrot.lane.b32.xlu0 %v1405, 127
  %v1424 = vpop.permute.xlu0 %1423
  %1425 = vrot.lane.b32.xlu0 %v1378, 127
  %v1426 = vpop.permute.xlu0 %1425
  %1427 = vrot.lane.b32.xlu0 %v1382, 127
  %v1428 = vpop.permute.xlu0 %1427
  %1429 = vrot.lane.b32.xlu0 %v1386, 127
  %v1430 = vpop.permute.xlu0 %1429
  %1431 = vrot.lane.b32.xlu0 %v1390, 127
  %v1432 = vpop.permute.xlu0 %1431
  %1433 = vrot.lane.b32.xlu0 %v1394, 127
  %v1434 = vpop.permute.xlu0 %1433
  %1435 = vrot.lane.b32.xlu0 %v1398, 127
  %v1436 = vpop.permute.xlu0 %1435
  %1437 = vrot.lane.b32.xlu0 %v1402, 127
  %v1438 = vpop.permute.xlu0 %1437
  %1439 = vrot.lane.b32.xlu0 %v1406, 127
  %v1440 = vpop.permute.xlu0 %1439
  %1441 = vrot.lane.b32.xlu0 %v1379, 127
  %v1442 = vpop.permute.xlu0 %1441
  %1443 = vrot.lane.b32.xlu0 %v1383, 127
  %v1444 = vpop.permute.xlu0 %1443
  %1445 = vrot.lane.b32.xlu0 %v1387, 127
  %v1446 = vpop.permute.xlu0 %1445
  %1447 = vrot.lane.b32.xlu0 %v1391, 127
  %v1448 = vpop.permute.xlu0 %1447
  %1449 = vrot.lane.b32.xlu0 %v1395, 127
  %v1450 = vpop.permute.xlu0 %1449
  %1451 = vrot.lane.b32.xlu0 %v1399, 127
  %v1452 = vpop.permute.xlu0 %1451
  %1453 = vrot.lane.b32.xlu0 %v1403, 127
  %v1454 = vpop.permute.xlu0 %1453
  %1455 = vrot.lane.b32.xlu0 %v1407, 127
  %v1456 = vpop.permute.xlu0 %1455
  %1457 = vrot.lane.b32.xlu0 %v1380, 127
  %v1458 = vpop.permute.xlu0 %1457
  %1459 = vrot.lane.b32.xlu0 %v1384, 127
  %v1460 = vpop.permute.xlu0 %1459
  %1461 = vrot.lane.b32.xlu0 %v1388, 127
  %v1462 = vpop.permute.xlu0 %1461
  %1463 = vrot.lane.b32.xlu0 %v1392, 127
  %v1464 = vpop.permute.xlu0 %1463
  %1465 = vrot.lane.b32.xlu0 %v1396, 127
  %v1466 = vpop.permute.xlu0 %1465
  %1467 = vrot.lane.b32.xlu0 %v1400, 127
  %v1468 = vpop.permute.xlu0 %1467
  %1469 = vrot.lane.b32.xlu0 %v1404, 127
  %v1470 = vpop.permute.xlu0 %1469
  %1471 = vrot.lane.b32.xlu0 %v1408, 127
  %v1472 = vpop.permute.xlu0 %1471
  %v1473 = vlaneseq
  %v1474 = vand.u32 %v1473, 127
  %vm1475 = vcmp.lt.s32.totalorder %v1474, 127
  %v1476 = vsel %vm1475, %v1442, %v1458
  %v1477 = vsel %vm1475, %v1444, %v1460
  %v1478 = vsel %vm1475, %v1446, %v1462
  %v1479 = vsel %vm1475, %v1448, %v1464
  %v1480 = vsel %vm1475, %v1450, %v1466
  %v1481 = vsel %vm1475, %v1452, %v1468
  %v1482 = vsel %vm1475, %v1454, %v1470
  %v1483 = vsel %vm1475, %v1456, %v1472
  %v1484 = vsel %vm1475, %v1426, %v1442
  %v1485 = vsel %vm1475, %v1428, %v1444
  %v1486 = vsel %vm1475, %v1430, %v1446
  %v1487 = vsel %vm1475, %v1432, %v1448
  %v1488 = vsel %vm1475, %v1434, %v1450
  %v1489 = vsel %vm1475, %v1436, %v1452
  %v1490 = vsel %vm1475, %v1438, %v1454
  %v1491 = vsel %vm1475, %v1440, %v1456
  %v1492 = vsel %vm1475, %v1410, %v1426
  %v1493 = vsel %vm1475, %v1412, %v1428
  %v1494 = vsel %vm1475, %v1414, %v1430
  %v1495 = vsel %vm1475, %v1416, %v1432
  %v1496 = vsel %vm1475, %v1418, %v1434
  %v1497 = vsel %vm1475, %v1420, %v1436
  %v1498 = vsel %vm1475, %v1422, %v1438
  %v1499 = vsel %vm1475, %v1424, %v1440
  %v1500 = vsel %vm1475, %v1458, %v1410
  %v1501 = vsel %vm1475, %v1460, %v1412
  %v1502 = vsel %vm1475, %v1462, %v1414
  %v1503 = vsel %vm1475, %v1464, %v1416
  %v1504 = vsel %vm1475, %v1466, %v1418
  %v1505 = vsel %vm1475, %v1468, %v1420
  %v1506 = vsel %vm1475, %v1470, %v1422
  %v1507 = vsel %vm1475, %v1472, %v1424
  %v1508 = vmax.f32 %v1377, %v1492
  %v1509 = vmax.f32 %v1378, %v1484
  %v1510 = vmax.f32 %v1379, %v1476
  %v1511 = vmax.f32 %v1380, %v1500
  %v1512 = vmax.f32 %v1381, %v1493
  %v1513 = vmax.f32 %v1382, %v1485
  %v1514 = vmax.f32 %v1383, %v1477
  %v1515 = vmax.f32 %v1384, %v1501
  %v1516 = vmax.f32 %v1385, %v1494
  %v1517 = vmax.f32 %v1386, %v1486
  %v1518 = vmax.f32 %v1387, %v1478
  %v1519 = vmax.f32 %v1388, %v1502
  %v1520 = vmax.f32 %v1389, %v1495
  %v1521 = vmax.f32 %v1390, %v1487
  %v1522 = vmax.f32 %v1391, %v1479
  %v1523 = vmax.f32 %v1392, %v1503
  %v1524 = vmax.f32 %v1393, %v1496
  %v1525 = vmax.f32 %v1394, %v1488
  %v1526 = vmax.f32 %v1395, %v1480
  %v1527 = vmax.f32 %v1396, %v1504
  %v1528 = vmax.f32 %v1397, %v1497
  %v1529 = vmax.f32 %v1398, %v1489
  %v1530 = vmax.f32 %v1399, %v1481
  %v1531 = vmax.f32 %v1400, %v1505
  %v1532 = vmax.f32 %v1401, %v1498
  %v1533 = vmax.f32 %v1402, %v1490
  %v1534 = vmax.f32 %v1403, %v1482
  %v1535 = vmax.f32 %v1404, %v1506
  %v1536 = vmax.f32 %v1405, %v1499
  %v1537 = vmax.f32 %v1406, %v1491
  %v1538 = vmax.f32 %v1407, %v1483
  %v1539 = vmax.f32 %v1408, %v1507
  %v1540 = vpack.c.bf16 %v1512, %v1508
  %v1541 = vpack.c.bf16 %v1513, %v1509
  %v1542 = vpack.c.bf16 %v1514, %v1510
  %v1543 = vpack.c.bf16 %v1515, %v1511
  %v1544 = vpack.c.bf16 %v1520, %v1516
  %v1545 = vpack.c.bf16 %v1521, %v1517
  %v1546 = vpack.c.bf16 %v1522, %v1518
  %v1547 = vpack.c.bf16 %v1523, %v1519
  %v1548 = vpack.c.bf16 %v1528, %v1524
  %v1549 = vpack.c.bf16 %v1529, %v1525
  %v1550 = vpack.c.bf16 %v1530, %v1526
  %v1551 = vpack.c.bf16 %v1531, %v1527
  %v1552 = vpack.c.bf16 %v1536, %v1532
  %v1553 = vpack.c.bf16 %v1537, %v1533
  %v1554 = vpack.c.bf16 %v1538, %v1534
  %v1555 = vpack.c.bf16 %v1539, %v1535
  %v1556 = vld [vmem:[%s3] sm:$0xff]
  %v1557 = vld [vmem:[%s3 + $0x8] sm:$0xf]
  %v1558 = vld [vmem:[%s3 + $0xc] sm:$0xff]
  %v1559 = vld [vmem:[%s3 + $0x14] sm:$0xf]
  %v1560 = vld [vmem:[%s3 + $0x18] sm:$0xff]
  %v1561 = vld [vmem:[%s3 + $0x20] sm:$0xf]
  %v1562 = vld [vmem:[%s3 + $0x24] sm:$0xff]
  %v1563 = vld [vmem:[%s3 + $0x2c] sm:$0xf]
  %v1564 = vld [vmem:[%s3 + $0x30] sm:$0xff]
  %v1565 = vld [vmem:[%s3 + $0x38] sm:$0xf]
  %v1566 = vld [vmem:[%s3 + $0x3c] sm:$0xff]
  %v1567 = vld [vmem:[%s3 + $0x44] sm:$0xf]
  %v1568 = vld [vmem:[%s3 + $0x48] sm:$0xff]
  %v1569 = vld [vmem:[%s3 + $0x50] sm:$0xf]
  %v1570 = vld [vmem:[%s3 + $0x54] sm:$0xff]
  %v1571 = vld [vmem:[%s3 + $0x5c] sm:$0xf]
  %v1572 = vld [vmem:[%s3 + $0x60] sm:$0xff]
  %v1573 = vld [vmem:[%s3 + $0x68] sm:$0xf]
  %v1574 = vld [vmem:[%s3 + $0x6c] sm:$0xff]
  %v1575 = vld [vmem:[%s3 + $0x74] sm:$0xf]
  %v1576 = vld [vmem:[%s3 + $0x78] sm:$0xff]
  %v1577 = vld [vmem:[%s3 + $0x80] sm:$0xf]
  %v1578 = vld [vmem:[%s3 + $0x84] sm:$0xff]
  %v1579 = vld [vmem:[%s3 + $0x8c] sm:$0xf]
  %v1580 = vld [vmem:[%s3 + $0x90] sm:$0xff]
  %v1581 = vld [vmem:[%s3 + $0x98] sm:$0xf]
  %v1582 = vld [vmem:[%s3 + $0x9c] sm:$0xff]
  %v1583 = vld [vmem:[%s3 + $0xa4] sm:$0xf]
  %v1584 = vld [vmem:[%s3 + $0xa8] sm:$0xff]
  %v1585 = vld [vmem:[%s3 + $0xb0] sm:$0xf]
  %v1586 = vld [vmem:[%s3 + $0xb4] sm:$0xff]
  %v1587 = vld [vmem:[%s3 + $0xbc] sm:$0xf]
  %v1588 = vld [vmem:[%s3 + $0xc0] sm:$0xff]
  %v1589 = vld [vmem:[%s3 + $0xc8] sm:$0xf]
  %v1590 = vld [vmem:[%s3 + $0xcc] sm:$0xff]
  %v1591 = vld [vmem:[%s3 + $0xd4] sm:$0xf]
  %v1592 = vld [vmem:[%s3 + $0xd8] sm:$0xff]
  %v1593 = vld [vmem:[%s3 + $0xe0] sm:$0xf]
  %v1594 = vld [vmem:[%s3 + $0xe4] sm:$0xff]
  %v1595 = vld [vmem:[%s3 + $0xec] sm:$0xf]
  %v1596 = vld [vmem:[%s3 + $0xf0] sm:$0xff]
  %v1597 = vld [vmem:[%s3 + $0xf8] sm:$0xf]
  %v1598 = vld [vmem:[%s3 + $0xfc] sm:$0xff]
  %v1599 = vld [vmem:[%s3 + $0x104] sm:$0xf]
  %v1600 = vld [vmem:[%s3 + $0x108] sm:$0xff]
  %v1601 = vld [vmem:[%s3 + $0x110] sm:$0xf]
  %v1602 = vld [vmem:[%s3 + $0x114] sm:$0xff]
  %v1603 = vld [vmem:[%s3 + $0x11c] sm:$0xf]
  %v1604 = vld [vmem:[%s3 + $0x120] sm:$0xff]
  %v1605 = vld [vmem:[%s3 + $0x128] sm:$0xf]
  %v1606 = vld [vmem:[%s3 + $0x12c] sm:$0xff]
  %v1607 = vld [vmem:[%s3 + $0x134] sm:$0xf]
  %v1608 = vld [vmem:[%s3 + $0x138] sm:$0xff]
  %v1609 = vld [vmem:[%s3 + $0x140] sm:$0xf]
  %v1610 = vld [vmem:[%s3 + $0x144] sm:$0xff]
  %v1611 = vld [vmem:[%s3 + $0x14c] sm:$0xf]
  %v1612 = vld [vmem:[%s3 + $0x150] sm:$0xff]
  %v1613 = vld [vmem:[%s3 + $0x158] sm:$0xf]
  %v1614 = vld [vmem:[%s3 + $0x15c] sm:$0xff]
  %v1615 = vld [vmem:[%s3 + $0x164] sm:$0xf]
  %v1616 = vld [vmem:[%s3 + $0x168] sm:$0xff]
  %v1617 = vld [vmem:[%s3 + $0x170] sm:$0xf]
  %v1618 = vld [vmem:[%s3 + $0x174] sm:$0xff]
  %v1619 = vld [vmem:[%s3 + $0x17c] sm:$0xf]
  %v1620 = vld [vmem:[%s3 + $0x180] sm:$0xff]
  %v1621 = vld [vmem:[%s3 + $0x188] sm:$0xf]
  %v1622 = vld [vmem:[%s3 + $0x18c] sm:$0xff]
  %v1623 = vld [vmem:[%s3 + $0x194] sm:$0xf]
  %v1624 = vld [vmem:[%s3 + $0x198] sm:$0xff]
  %v1625 = vld [vmem:[%s3 + $0x1a0] sm:$0xf]
  %v1626 = vld [vmem:[%s3 + $0x1a4] sm:$0xff]
  %v1627 = vld [vmem:[%s3 + $0x1ac] sm:$0xf]
  %v1628 = vld [vmem:[%s3 + $0x1b0] sm:$0xff]
  %v1629 = vld [vmem:[%s3 + $0x1b8] sm:$0xf]
  %v1630 = vld [vmem:[%s3 + $0x1bc] sm:$0xff]
  %v1631 = vld [vmem:[%s3 + $0x1c4] sm:$0xf]
  %v1632 = vld [vmem:[%s3 + $0x1c8] sm:$0xff]
  %v1633 = vld [vmem:[%s3 + $0x1d0] sm:$0xf]
  %v1634 = vld [vmem:[%s3 + $0x1d4] sm:$0xff]
  %v1635 = vld [vmem:[%s3 + $0x1dc] sm:$0xf]
  %v1636 = vld [vmem:[%s3 + $0x1e0] sm:$0xff]
  %v1637 = vld [vmem:[%s3 + $0x1e8] sm:$0xf]
  %v1638 = vld [vmem:[%s3 + $0x1ec] sm:$0xff]
  %v1639 = vld [vmem:[%s3 + $0x1f4] sm:$0xf]
  %v1640 = vld [vmem:[%s3 + $0x1f8] sm:$0xff]
  %v1641 = vld [vmem:[%s3 + $0x200] sm:$0xf]
  %v1642 = vld [vmem:[%s3 + $0x204] sm:$0xff]
  %v1643 = vld [vmem:[%s3 + $0x20c] sm:$0xf]
  %v1644 = vld [vmem:[%s3 + $0x210] sm:$0xff]
  %v1645 = vld [vmem:[%s3 + $0x218] sm:$0xf]
  %v1646 = vld [vmem:[%s3 + $0x21c] sm:$0xff]
  %v1647 = vld [vmem:[%s3 + $0x224] sm:$0xf]
  %v1648 = vld [vmem:[%s3 + $0x228] sm:$0xff]
  %v1649 = vld [vmem:[%s3 + $0x230] sm:$0xf]
  %v1650 = vld [vmem:[%s3 + $0x234] sm:$0xff]
  %v1651 = vld [vmem:[%s3 + $0x23c] sm:$0xf]
  %v1652 = vld [vmem:[%s3 + $0x240] sm:$0xff]
  %v1653 = vld [vmem:[%s3 + $0x248] sm:$0xf]
  %v1654 = vld [vmem:[%s3 + $0x24c] sm:$0xff]
  %v1655 = vld [vmem:[%s3 + $0x254] sm:$0xf]
  %v1656 = vld [vmem:[%s3 + $0x258] sm:$0xff]
  %v1657 = vld [vmem:[%s3 + $0x260] sm:$0xf]
  %v1658 = vld [vmem:[%s3 + $0x264] sm:$0xff]
  %v1659 = vld [vmem:[%s3 + $0x26c] sm:$0xf]
  %v1660 = vld [vmem:[%s3 + $0x270] sm:$0xff]
  %v1661 = vld [vmem:[%s3 + $0x278] sm:$0xf]
  %v1662 = vld [vmem:[%s3 + $0x27c] sm:$0xff]
  %v1663 = vld [vmem:[%s3 + $0x284] sm:$0xf]
  %v1664 = vld [vmem:[%s3 + $0x288] sm:$0xff]
  %v1665 = vld [vmem:[%s3 + $0x290] sm:$0xf]
  %v1666 = vld [vmem:[%s3 + $0x294] sm:$0xff]
  %v1667 = vld [vmem:[%s3 + $0x29c] sm:$0xf]
  %v1668 = vld [vmem:[%s3 + $0x2a0] sm:$0xff]
  %v1669 = vld [vmem:[%s3 + $0x2a8] sm:$0xf]
  %v1670 = vld [vmem:[%s3 + $0x2ac] sm:$0xff]
  %v1671 = vld [vmem:[%s3 + $0x2b4] sm:$0xf]
  %v1672 = vld [vmem:[%s3 + $0x2b8] sm:$0xff]
  %v1673 = vld [vmem:[%s3 + $0x2c0] sm:$0xf]
  %v1674 = vld [vmem:[%s3 + $0x2c4] sm:$0xff]
  %v1675 = vld [vmem:[%s3 + $0x2cc] sm:$0xf]
  %v1676 = vld [vmem:[%s3 + $0x2d0] sm:$0xff]
  %v1677 = vld [vmem:[%s3 + $0x2d8] sm:$0xf]
  %v1678 = vld [vmem:[%s3 + $0x2dc] sm:$0xff]
  %v1679 = vld [vmem:[%s3 + $0x2e4] sm:$0xf]
  %v1680 = vld [vmem:[%s3 + $0x2e8] sm:$0xff]
  %v1681 = vld [vmem:[%s3 + $0x2f0] sm:$0xf]
  %v1682 = vld [vmem:[%s3 + $0x2f4] sm:$0xff]
  %v1683 = vld [vmem:[%s3 + $0x2fc] sm:$0xf]
  %v1812 = vunpack.c.l.b16 %v1556
  %v1813 = vunpack.c.h.b16 %v1556
  %v1814 = vunpack.c.l.b16 %v1557
  %v1815 = vunpack.c.l.b16 %v1558
  %v1816 = vunpack.c.h.b16 %v1558
  %v1817 = vunpack.c.l.b16 %v1559
  %v1818 = vunpack.c.l.b16 %v1560
  %v1819 = vunpack.c.h.b16 %v1560
  %v1820 = vunpack.c.l.b16 %v1561
  %v1821 = vunpack.c.l.b16 %v1562
  %v1822 = vunpack.c.h.b16 %v1562
  %v1823 = vunpack.c.l.b16 %v1563
  %v1824 = vunpack.c.l.b16 %v1564
  %v1825 = vunpack.c.h.b16 %v1564
  %v1826 = vunpack.c.l.b16 %v1565
  %v1827 = vunpack.c.l.b16 %v1566
  %v1828 = vunpack.c.h.b16 %v1566
  %v1829 = vunpack.c.l.b16 %v1567
  %v1830 = vunpack.c.l.b16 %v1568
  %v1831 = vunpack.c.h.b16 %v1568
  %v1832 = vunpack.c.l.b16 %v1569
  %v1833 = vunpack.c.l.b16 %v1570
  %v1834 = vunpack.c.h.b16 %v1570
  %v1835 = vunpack.c.l.b16 %v1571
  %v1836 = vunpack.c.l.b16 %v1572
  %v1837 = vunpack.c.h.b16 %v1572
  %v1838 = vunpack.c.l.b16 %v1573
  %v1839 = vunpack.c.l.b16 %v1574
  %v1840 = vunpack.c.h.b16 %v1574
  %v1841 = vunpack.c.l.b16 %v1575
  %v1842 = vunpack.c.l.b16 %v1576
  %v1843 = vunpack.c.h.b16 %v1576
  %v1844 = vunpack.c.l.b16 %v1577
  %v1845 = vunpack.c.l.b16 %v1578
  %v1846 = vunpack.c.h.b16 %v1578
  %v1847 = vunpack.c.l.b16 %v1579
  %v1848 = vunpack.c.l.b16 %v1580
  %v1849 = vunpack.c.h.b16 %v1580
  %v1850 = vunpack.c.l.b16 %v1581
  %v1851 = vunpack.c.l.b16 %v1582
  %v1852 = vunpack.c.h.b16 %v1582
  %v1853 = vunpack.c.l.b16 %v1583
  %v1854 = vunpack.c.l.b16 %v1584
  %v1855 = vunpack.c.h.b16 %v1584
  %v1856 = vunpack.c.l.b16 %v1585
  %v1857 = vunpack.c.l.b16 %v1586
  %v1858 = vunpack.c.h.b16 %v1586
  %v1859 = vunpack.c.l.b16 %v1587
  %v1860 = vunpack.c.l.b16 %v1588
  %v1861 = vunpack.c.h.b16 %v1588
  %v1862 = vunpack.c.l.b16 %v1589
  %v1863 = vunpack.c.l.b16 %v1590
  %v1864 = vunpack.c.h.b16 %v1590
  %v1865 = vunpack.c.l.b16 %v1591
  %v1866 = vunpack.c.l.b16 %v1592
  %v1867 = vunpack.c.h.b16 %v1592
  %v1868 = vunpack.c.l.b16 %v1593
  %v1869 = vunpack.c.l.b16 %v1594
  %v1870 = vunpack.c.h.b16 %v1594
  %v1871 = vunpack.c.l.b16 %v1595
  %v1872 = vunpack.c.l.b16 %v1596
  %v1873 = vunpack.c.h.b16 %v1596
  %v1874 = vunpack.c.l.b16 %v1597
  %v1875 = vunpack.c.l.b16 %v1598
  %v1876 = vunpack.c.h.b16 %v1598
  %v1877 = vunpack.c.l.b16 %v1599
  %v1878 = vunpack.c.l.b16 %v1600
  %v1879 = vunpack.c.h.b16 %v1600
  %v1880 = vunpack.c.l.b16 %v1601
  %v1881 = vunpack.c.l.b16 %v1602
  %v1882 = vunpack.c.h.b16 %v1602
  %v1883 = vunpack.c.l.b16 %v1603
  %v1884 = vunpack.c.l.b16 %v1604
  %v1885 = vunpack.c.h.b16 %v1604
  %v1886 = vunpack.c.l.b16 %v1605
  %v1887 = vunpack.c.l.b16 %v1606
  %v1888 = vunpack.c.h.b16 %v1606
  %v1889 = vunpack.c.l.b16 %v1607
  %v1890 = vunpack.c.l.b16 %v1608
  %v1891 = vunpack.c.h.b16 %v1608
  %v1892 = vunpack.c.l.b16 %v1609
  %v1893 = vunpack.c.l.b16 %v1610
  %v1894 = vunpack.c.h.b16 %v1610
  %v1895 = vunpack.c.l.b16 %v1611
  %v1896 = vunpack.c.l.b16 %v1612
  %v1897 = vunpack.c.h.b16 %v1612
  %v1898 = vunpack.c.l.b16 %v1613
  %v1899 = vunpack.c.l.b16 %v1614
  %v1900 = vunpack.c.h.b16 %v1614
  %v1901 = vunpack.c.l.b16 %v1615
  %v1902 = vunpack.c.l.b16 %v1616
  %v1903 = vunpack.c.h.b16 %v1616
  %v1904 = vunpack.c.l.b16 %v1617
  %v1905 = vunpack.c.l.b16 %v1618
  %v1906 = vunpack.c.h.b16 %v1618
  %v1907 = vunpack.c.l.b16 %v1619
  %v1908 = vunpack.c.l.b16 %v1620
  %v1909 = vunpack.c.h.b16 %v1620
  %v1910 = vunpack.c.l.b16 %v1621
  %v1911 = vunpack.c.l.b16 %v1622
  %v1912 = vunpack.c.h.b16 %v1622
  %v1913 = vunpack.c.l.b16 %v1623
  %v1914 = vunpack.c.l.b16 %v1624
  %v1915 = vunpack.c.h.b16 %v1624
  %v1916 = vunpack.c.l.b16 %v1625
  %v1917 = vunpack.c.l.b16 %v1626
  %v1918 = vunpack.c.h.b16 %v1626
  %v1919 = vunpack.c.l.b16 %v1627
  %v1920 = vunpack.c.l.b16 %v1628
  %v1921 = vunpack.c.h.b16 %v1628
  %v1922 = vunpack.c.l.b16 %v1629
  %v1923 = vunpack.c.l.b16 %v1630
  %v1924 = vunpack.c.h.b16 %v1630
  %v1925 = vunpack.c.l.b16 %v1631
  %v1926 = vunpack.c.l.b16 %v1632
  %v1927 = vunpack.c.h.b16 %v1632
  %v1928 = vunpack.c.l.b16 %v1633
  %v1929 = vunpack.c.l.b16 %v1634
  %v1930 = vunpack.c.h.b16 %v1634
  %v1931 = vunpack.c.l.b16 %v1635
  %v1932 = vunpack.c.l.b16 %v1636
  %v1933 = vunpack.c.h.b16 %v1636
  %v1934 = vunpack.c.l.b16 %v1637
  %v1935 = vunpack.c.l.b16 %v1638
  %v1936 = vunpack.c.h.b16 %v1638
  %v1937 = vunpack.c.l.b16 %v1639
  %v1938 = vunpack.c.l.b16 %v1640
  %v1939 = vunpack.c.h.b16 %v1640
  %v1940 = vunpack.c.l.b16 %v1641
  %v1941 = vunpack.c.l.b16 %v1642
  %v1942 = vunpack.c.h.b16 %v1642
  %v1943 = vunpack.c.l.b16 %v1643
  %v1944 = vunpack.c.l.b16 %v1644
  %v1945 = vunpack.c.h.b16 %v1644
  %v1946 = vunpack.c.l.b16 %v1645
  %v1947 = vunpack.c.l.b16 %v1646
  %v1948 = vunpack.c.h.b16 %v1646
  %v1949 = vunpack.c.l.b16 %v1647
  %v1950 = vunpack.c.l.b16 %v1648
  %v1951 = vunpack.c.h.b16 %v1648
  %v1952 = vunpack.c.l.b16 %v1649
  %v1953 = vunpack.c.l.b16 %v1650
  %v1954 = vunpack.c.h.b16 %v1650
  %v1955 = vunpack.c.l.b16 %v1651
  %v1956 = vunpack.c.l.b16 %v1652
  %v1957 = vunpack.c.h.b16 %v1652
  %v1958 = vunpack.c.l.b16 %v1653
  %v1959 = vunpack.c.l.b16 %v1654
  %v1960 = vunpack.c.h.b16 %v1654
  %v1961 = vunpack.c.l.b16 %v1655
  %v1962 = vunpack.c.l.b16 %v1656
  %v1963 = vunpack.c.h.b16 %v1656
  %v1964 = vunpack.c.l.b16 %v1657
  %v1965 = vunpack.c.l.b16 %v1658
  %v1966 = vunpack.c.h.b16 %v1658
  %v1967 = vunpack.c.l.b16 %v1659
  %v1968 = vunpack.c.l.b16 %v1660
  %v1969 = vunpack.c.h.b16 %v1660
  %v1970 = vunpack.c.l.b16 %v1661
  %v1971 = vunpack.c.l.b16 %v1662
  %v1972 = vunpack.c.h.b16 %v1662
  %v1973 = vunpack.c.l.b16 %v1663
  %v1974 = vunpack.c.l.b16 %v1664
  %v1975 = vunpack.c.h.b16 %v1664
  %v1976 = vunpack.c.l.b16 %v1665
  %v1977 = vunpack.c.l.b16 %v1666
  %v1978 = vunpack.c.h.b16 %v1666
  %v1979 = vunpack.c.l.b16 %v1667
  %v1980 = vunpack.c.l.b16 %v1668
  %v1981 = vunpack.c.h.b16 %v1668
  %v1982 = vunpack.c.l.b16 %v1669
  %v1983 = vunpack.c.l.b16 %v1670
  %v1984 = vunpack.c.h.b16 %v1670
  %v1985 = vunpack.c.l.b16 %v1671
  %v1986 = vunpack.c.l.b16 %v1672
  %v1987 = vunpack.c.h.b16 %v1672
  %v1988 = vunpack.c.l.b16 %v1673
  %v1989 = vunpack.c.l.b16 %v1674
  %v1990 = vunpack.c.h.b16 %v1674
  %v1991 = vunpack.c.l.b16 %v1675
  %v1992 = vunpack.c.l.b16 %v1676
  %v1993 = vunpack.c.h.b16 %v1676
  %v1994 = vunpack.c.l.b16 %v1677
  %v1995 = vunpack.c.l.b16 %v1678
  %v1996 = vunpack.c.h.b16 %v1678
  %v1997 = vunpack.c.l.b16 %v1679
  %v1998 = vunpack.c.l.b16 %v1680
  %v1999 = vunpack.c.h.b16 %v1680
  %v2000 = vunpack.c.l.b16 %v1681
  %v2001 = vunpack.c.l.b16 %v1682
  %v2002 = vunpack.c.h.b16 %v1682
  %v2003 = vunpack.c.l.b16 %v1683
  %v2004 = vpack.c.b16 %v1815, %v1812
  %v2005 = vpack.c.b16 %v1816, %v1813
  %v2006 = vpack.c.b16 %v1817, %v1814
  %v2007 = vpack.c.b16 %v1821, %v1818
  %v2008 = vpack.c.b16 %v1822, %v1819
  %v2009 = vpack.c.b16 %v1823, %v1820
  %v2010 = vpack.c.b16 %v1827, %v1824
  %v2011 = vpack.c.b16 %v1828, %v1825
  %v2012 = vpack.c.b16 %v1829, %v1826
  %v2013 = vpack.c.b16 %v1833, %v1830
  %v2014 = vpack.c.b16 %v1834, %v1831
  %v2015 = vpack.c.b16 %v1835, %v1832
  %v2016 = vpack.c.b16 %v1839, %v1836
  %v2017 = vpack.c.b16 %v1840, %v1837
  %v2018 = vpack.c.b16 %v1841, %v1838
  %v2019 = vpack.c.b16 %v1845, %v1842
  %v2020 = vpack.c.b16 %v1846, %v1843
  %v2021 = vpack.c.b16 %v1847, %v1844
  %v2022 = vpack.c.b16 %v1851, %v1848
  %v2023 = vpack.c.b16 %v1852, %v1849
  %v2024 = vpack.c.b16 %v1853, %v1850
  %v2025 = vpack.c.b16 %v1857, %v1854
  %v2026 = vpack.c.b16 %v1858, %v1855
  %v2027 = vpack.c.b16 %v1859, %v1856
  %v2028 = vpack.c.b16 %v1863, %v1860
  %v2029 = vpack.c.b16 %v1864, %v1861
  %v2030 = vpack.c.b16 %v1865, %v1862
  %v2031 = vpack.c.b16 %v1869, %v1866
  %v2032 = vpack.c.b16 %v1870, %v1867
  %v2033 = vpack.c.b16 %v1871, %v1868
  %v2034 = vpack.c.b16 %v1875, %v1872
  %v2035 = vpack.c.b16 %v1876, %v1873
  %v2036 = vpack.c.b16 %v1877, %v1874
  %v2037 = vpack.c.b16 %v1881, %v1878
  %v2038 = vpack.c.b16 %v1882, %v1879
  %v2039 = vpack.c.b16 %v1883, %v1880
  %v2040 = vpack.c.b16 %v1887, %v1884
  %v2041 = vpack.c.b16 %v1888, %v1885
  %v2042 = vpack.c.b16 %v1889, %v1886
  %v2043 = vpack.c.b16 %v1893, %v1890
  %v2044 = vpack.c.b16 %v1894, %v1891
  %v2045 = vpack.c.b16 %v1895, %v1892
  %v2046 = vpack.c.b16 %v1899, %v1896
  %v2047 = vpack.c.b16 %v1900, %v1897
  %v2048 = vpack.c.b16 %v1901, %v1898
  %v2049 = vpack.c.b16 %v1905, %v1902
  %v2050 = vpack.c.b16 %v1906, %v1903
  %v2051 = vpack.c.b16 %v1907, %v1904
  %v2052 = vpack.c.b16 %v1911, %v1908
  %v2053 = vpack.c.b16 %v1912, %v1909
  %v2054 = vpack.c.b16 %v1913, %v1910
  %v2055 = vpack.c.b16 %v1917, %v1914
  %v2056 = vpack.c.b16 %v1918, %v1915
  %v2057 = vpack.c.b16 %v1919, %v1916
  %v2058 = vpack.c.b16 %v1923, %v1920
  %v2059 = vpack.c.b16 %v1924, %v1921
  %v2060 = vpack.c.b16 %v1925, %v1922
  %v2061 = vpack.c.b16 %v1929, %v1926
  %v2062 = vpack.c.b16 %v1930, %v1927
  %v2063 = vpack.c.b16 %v1931, %v1928
  %v2064 = vpack.c.b16 %v1935, %v1932
  %v2065 = vpack.c.b16 %v1936, %v1933
  %v2066 = vpack.c.b16 %v1937, %v1934
  %v2067 = vpack.c.b16 %v1941, %v1938
  %v2068 = vpack.c.b16 %v1942, %v1939
  %v2069 = vpack.c.b16 %v1943, %v1940
  %v2070 = vpack.c.b16 %v1947, %v1944
  %v2071 = vpack.c.b16 %v1948, %v1945
  %v2072 = vpack.c.b16 %v1949, %v1946
  %v2073 = vpack.c.b16 %v1953, %v1950
  %v2074 = vpack.c.b16 %v1954, %v1951
  %v2075 = vpack.c.b16 %v1955, %v1952
  %v2076 = vpack.c.b16 %v1959, %v1956
  %v2077 = vpack.c.b16 %v1960, %v1957
  %v2078 = vpack.c.b16 %v1961, %v1958
  %v2079 = vpack.c.b16 %v1965, %v1962
  %v2080 = vpack.c.b16 %v1966, %v1963
  %v2081 = vpack.c.b16 %v1967, %v1964
  %v2082 = vpack.c.b16 %v1971, %v1968
  %v2083 = vpack.c.b16 %v1972, %v1969
  %v2084 = vpack.c.b16 %v1973, %v1970
  %v2085 = vpack.c.b16 %v1977, %v1974
  %v2086 = vpack.c.b16 %v1978, %v1975
  %v2087 = vpack.c.b16 %v1979, %v1976
  %v2088 = vpack.c.b16 %v1983, %v1980
  %v2089 = vpack.c.b16 %v1984, %v1981
  %v2090 = vpack.c.b16 %v1985, %v1982
  %v2091 = vpack.c.b16 %v1989, %v1986
  %v2092 = vpack.c.b16 %v1990, %v1987
  %v2093 = vpack.c.b16 %v1991, %v1988
  %v2094 = vpack.c.b16 %v1995, %v1992
  %v2095 = vpack.c.b16 %v1996, %v1993
  %v2096 = vpack.c.b16 %v1997, %v1994
  %v2097 = vpack.c.b16 %v2001, %v1998
  %v2098 = vpack.c.b16 %v2002, %v1999
  %v2099 = vpack.c.b16 %v2003, %v2000
  %2196 = vmatpush.bf16.msra.mxu0 %v2025
  %2197 = vmatpush.bf16.msra.mxu0 %v2022
  %2198 = vmatpush.bf16.msra.mxu0 %v2019
  %2199 = vmatpush.bf16.msra.mxu0 %v2016
  %2200 = vmatpush.bf16.msra.mxu0 %v2013
  %2201 = vmatpush.bf16.msra.mxu0 %v2010
  %2202 = vmatpush.bf16.msra.mxu0 %v2007
  %2203 = vmatpush.bf16.msra.mxu0 %v2004
  %2204 = vmatmul.bf16.gmra.mxu0 %v1540
  %v2205 = vpop.f32.mrf.mxu0
  %v2206 = vadd.f32 0.0, %v2205
  %v2207 = vpop.f32.mrf.mxu0
  %v2208 = vadd.f32 0.0, %v2207
  %2209 = vmatmul.bf16.gmra.mxu0 %v1544
  %v2210 = vpop.f32.mrf.mxu0
  %v2211 = vadd.f32 0.0, %v2210
  %v2212 = vpop.f32.mrf.mxu0
  %v2213 = vadd.f32 0.0, %v2212
  %2214 = vmatmul.bf16.gmra.mxu0 %v1548
  %v2215 = vpop.f32.mrf.mxu0
  %v2216 = vadd.f32 0.0, %v2215
  %v2217 = vpop.f32.mrf.mxu0
  %v2218 = vadd.f32 0.0, %v2217
  %2219 = vmatmul.bf16.gmra.mxu0 %v1552
  %v2220 = vpop.f32.mrf.mxu0
  %v2221 = vadd.f32 0.0, %v2220
  %v2222 = vpop.f32.mrf.mxu0
  %v2223 = vadd.f32 0.0, %v2222
  %2224 = vdwg.mxu0
  %2225 = vmatpush.bf16.msra.mxu0 %v2049
  %2226 = vmatpush.bf16.msra.mxu0 %v2046
  %2227 = vmatpush.bf16.msra.mxu0 %v2043
  %2228 = vmatpush.bf16.msra.mxu0 %v2040
  %2229 = vmatpush.bf16.msra.mxu0 %v2037
  %2230 = vmatpush.bf16.msra.mxu0 %v2034
  %2231 = vmatpush.bf16.msra.mxu0 %v2031
  %2232 = vmatpush.bf16.msra.mxu0 %v2028
  %2233 = vmatmul.bf16.gmra.mxu0 %v1541
  %v2234 = vpop.f32.mrf.mxu0
  %v2235 = vadd.f32 %v2206, %v2234
  %v2236 = vpop.f32.mrf.mxu0
  %v2237 = vadd.f32 %v2208, %v2236
  %2238 = vmatmul.bf16.gmra.mxu0 %v1545
  %v2239 = vpop.f32.mrf.mxu0
  %v2240 = vadd.f32 %v2211, %v2239
  %v2241 = vpop.f32.mrf.mxu0
  %v2242 = vadd.f32 %v2213, %v2241
  %2243 = vmatmul.bf16.gmra.mxu0 %v1549
  %v2244 = vpop.f32.mrf.mxu0
  %v2245 = vadd.f32 %v2216, %v2244
  %v2246 = vpop.f32.mrf.mxu0
  %v2247 = vadd.f32 %v2218, %v2246
  %2248 = vmatmul.bf16.gmra.mxu0 %v1553
  %v2249 = vpop.f32.mrf.mxu0
  %v2250 = vadd.f32 %v2221, %v2249
  %v2251 = vpop.f32.mrf.mxu0
  %v2252 = vadd.f32 %v2223, %v2251
  %2253 = vdwg.mxu0
  %2254 = vmatpush.bf16.msra.mxu0 %v2073
  %2255 = vmatpush.bf16.msra.mxu0 %v2070
  %2256 = vmatpush.bf16.msra.mxu0 %v2067
  %2257 = vmatpush.bf16.msra.mxu0 %v2064
  %2258 = vmatpush.bf16.msra.mxu0 %v2061
  %2259 = vmatpush.bf16.msra.mxu0 %v2058
  %2260 = vmatpush.bf16.msra.mxu0 %v2055
  %2261 = vmatpush.bf16.msra.mxu0 %v2052
  %2262 = vmatmul.bf16.gmra.mxu0 %v1542
  %v2263 = vpop.f32.mrf.mxu0
  %v2264 = vadd.f32 %v2235, %v2263
  %v2265 = vpop.f32.mrf.mxu0
  %v2266 = vadd.f32 %v2237, %v2265
  %2267 = vmatmul.bf16.gmra.mxu0 %v1546
  %v2268 = vpop.f32.mrf.mxu0
  %v2269 = vadd.f32 %v2240, %v2268
  %v2270 = vpop.f32.mrf.mxu0
  %v2271 = vadd.f32 %v2242, %v2270
  %2272 = vmatmul.bf16.gmra.mxu0 %v1550
  %v2273 = vpop.f32.mrf.mxu0
  %v2274 = vadd.f32 %v2245, %v2273
  %v2275 = vpop.f32.mrf.mxu0
  %v2276 = vadd.f32 %v2247, %v2275
  %2277 = vmatmul.bf16.gmra.mxu0 %v1554
  %v2278 = vpop.f32.mrf.mxu0
  %v2279 = vadd.f32 %v2250, %v2278
  %v2280 = vpop.f32.mrf.mxu0
  %v2281 = vadd.f32 %v2252, %v2280
  %2282 = vdwg.mxu0
  %2283 = vmatpush.bf16.msra.mxu0 %v2097
  %2284 = vmatpush.bf16.msra.mxu0 %v2094
  %2285 = vmatpush.bf16.msra.mxu0 %v2091
  %2286 = vmatpush.bf16.msra.mxu0 %v2088
  %2287 = vmatpush.bf16.msra.mxu0 %v2085
  %2288 = vmatpush.bf16.msra.mxu0 %v2082
  %2289 = vmatpush.bf16.msra.mxu0 %v2079
  %2290 = vmatpush.bf16.msra.mxu0 %v2076
  %2291 = vmatmul.bf16.gmra.mxu0 %v1543
  %v2292 = vpop.f32.mrf.mxu0
  %v2293 = vadd.f32 %v2264, %v2292
  %v2294 = vpop.f32.mrf.mxu0
  %v2295 = vadd.f32 %v2266, %v2294
  %2296 = vmatmul.bf16.gmra.mxu0 %v1547
  %v2297 = vpop.f32.mrf.mxu0
  %v2298 = vadd.f32 %v2269, %v2297
  %v2299 = vpop.f32.mrf.mxu0
  %v2300 = vadd.f32 %v2271, %v2299
  %2301 = vmatmul.bf16.gmra.mxu0 %v1551
  %v2302 = vpop.f32.mrf.mxu0
  %v2303 = vadd.f32 %v2274, %v2302
  %v2304 = vpop.f32.mrf.mxu0
  %v2305 = vadd.f32 %v2276, %v2304
  %2306 = vmatmul.bf16.gmra.mxu0 %v1555
  %v2307 = vpop.f32.mrf.mxu0
  %v2308 = vadd.f32 %v2279, %v2307
  %v2309 = vpop.f32.mrf.mxu0
  %v2310 = vadd.f32 %v2281, %v2309
  %2311 = vdwg.mxu0
  %2312 = vmatpush.bf16.msra.mxu0 %v2026
  %2313 = vmatpush.bf16.msra.mxu0 %v2023
  %2314 = vmatpush.bf16.msra.mxu0 %v2020
  %2315 = vmatpush.bf16.msra.mxu0 %v2017
  %2316 = vmatpush.bf16.msra.mxu0 %v2014
  %2317 = vmatpush.bf16.msra.mxu0 %v2011
  %2318 = vmatpush.bf16.msra.mxu0 %v2008
  %2319 = vmatpush.bf16.msra.mxu0 %v2005
  %2320 = vmatmul.bf16.gmra.mxu0 %v1540
  %v2321 = vpop.f32.mrf.mxu0
  %v2322 = vadd.f32 0.0, %v2321
  %v2323 = vpop.f32.mrf.mxu0
  %v2324 = vadd.f32 0.0, %v2323
  %2325 = vmatmul.bf16.gmra.mxu0 %v1544
  %v2326 = vpop.f32.mrf.mxu0
  %v2327 = vadd.f32 0.0, %v2326
  %v2328 = vpop.f32.mrf.mxu0
  %v2329 = vadd.f32 0.0, %v2328
  %2330 = vmatmul.bf16.gmra.mxu0 %v1548
  %v2331 = vpop.f32.mrf.mxu0
  %v2332 = vadd.f32 0.0, %v2331
  %v2333 = vpop.f32.mrf.mxu0
  %v2334 = vadd.f32 0.0, %v2333
  %2335 = vmatmul.bf16.gmra.mxu0 %v1552
  %v2336 = vpop.f32.mrf.mxu0
  %v2337 = vadd.f32 0.0, %v2336
  %v2338 = vpop.f32.mrf.mxu0
  %v2339 = vadd.f32 0.0, %v2338
  %2340 = vdwg.mxu0
  %2341 = vmatpush.bf16.msra.mxu0 %v2050
  %2342 = vmatpush.bf16.msra.mxu0 %v2047
  %2343 = vmatpush.bf16.msra.mxu0 %v2044
  %2344 = vmatpush.bf16.msra.mxu0 %v2041
  %2345 = vmatpush.bf16.msra.mxu0 %v2038
  %2346 = vmatpush.bf16.msra.mxu0 %v2035
  %2347 = vmatpush.bf16.msra.mxu0 %v2032
  %2348 = vmatpush.bf16.msra.mxu0 %v2029
  %2349 = vmatmul.bf16.gmra.mxu0 %v1541
  %v2350 = vpop.f32.mrf.mxu0
  %v2351 = vadd.f32 %v2322, %v2350
  %v2352 = vpop.f32.mrf.mxu0
  %v2353 = vadd.f32 %v2324, %v2352
  %2354 = vmatmul.bf16.gmra.mxu0 %v1545
  %v2355 = vpop.f32.mrf.mxu0
  %v2356 = vadd.f32 %v2327, %v2355
  %v2357 = vpop.f32.mrf.mxu0
  %v2358 = vadd.f32 %v2329, %v2357
  %2359 = vmatmul.bf16.gmra.mxu0 %v1549
  %v2360 = vpop.f32.mrf.mxu0
  %v2361 = vadd.f32 %v2332, %v2360
  %v2362 = vpop.f32.mrf.mxu0
  %v2363 = vadd.f32 %v2334, %v2362
  %2364 = vmatmul.bf16.gmra.mxu0 %v1553
  %v2365 = vpop.f32.mrf.mxu0
  %v2366 = vadd.f32 %v2337, %v2365
  %v2367 = vpop.f32.mrf.mxu0
  %v2368 = vadd.f32 %v2339, %v2367
  %2369 = vdwg.mxu0
  %2370 = vmatpush.bf16.msra.mxu0 %v2074
  %2371 = vmatpush.bf16.msra.mxu0 %v2071
  %2372 = vmatpush.bf16.msra.mxu0 %v2068
  %2373 = vmatpush.bf16.msra.mxu0 %v2065
  %2374 = vmatpush.bf16.msra.mxu0 %v2062
  %2375 = vmatpush.bf16.msra.mxu0 %v2059
  %2376 = vmatpush.bf16.msra.mxu0 %v2056
  %2377 = vmatpush.bf16.msra.mxu0 %v2053
  %2378 = vmatmul.bf16.gmra.mxu0 %v1542
  %v2379 = vpop.f32.mrf.mxu0
  %v2380 = vadd.f32 %v2351, %v2379
  %v2381 = vpop.f32.mrf.mxu0
  %v2382 = vadd.f32 %v2353, %v2381
  %2383 = vmatmul.bf16.gmra.mxu0 %v1546
  %v2384 = vpop.f32.mrf.mxu0
  %v2385 = vadd.f32 %v2356, %v2384
  %v2386 = vpop.f32.mrf.mxu0
  %v2387 = vadd.f32 %v2358, %v2386
  %2388 = vmatmul.bf16.gmra.mxu0 %v1550
  %v2389 = vpop.f32.mrf.mxu0
  %v2390 = vadd.f32 %v2361, %v2389
  %v2391 = vpop.f32.mrf.mxu0
  %v2392 = vadd.f32 %v2363, %v2391
  %2393 = vmatmul.bf16.gmra.mxu0 %v1554
  %v2394 = vpop.f32.mrf.mxu0
  %v2395 = vadd.f32 %v2366, %v2394
  %v2396 = vpop.f32.mrf.mxu0
  %v2397 = vadd.f32 %v2368, %v2396
  %2398 = vdwg.mxu0
  %2399 = vmatpush.bf16.msra.mxu0 %v2098
  %2400 = vmatpush.bf16.msra.mxu0 %v2095
  %2401 = vmatpush.bf16.msra.mxu0 %v2092
  %2402 = vmatpush.bf16.msra.mxu0 %v2089
  %2403 = vmatpush.bf16.msra.mxu0 %v2086
  %2404 = vmatpush.bf16.msra.mxu0 %v2083
  %2405 = vmatpush.bf16.msra.mxu0 %v2080
  %2406 = vmatpush.bf16.msra.mxu0 %v2077
  %2407 = vmatmul.bf16.gmra.mxu0 %v1543
  %v2408 = vpop.f32.mrf.mxu0
  %v2409 = vadd.f32 %v2380, %v2408
  %v2410 = vpop.f32.mrf.mxu0
  %v2411 = vadd.f32 %v2382, %v2410
  %2412 = vmatmul.bf16.gmra.mxu0 %v1547
  %v2413 = vpop.f32.mrf.mxu0
  %v2414 = vadd.f32 %v2385, %v2413
  %v2415 = vpop.f32.mrf.mxu0
  %v2416 = vadd.f32 %v2387, %v2415
  %2417 = vmatmul.bf16.gmra.mxu0 %v1551
  %v2418 = vpop.f32.mrf.mxu0
  %v2419 = vadd.f32 %v2390, %v2418
  %v2420 = vpop.f32.mrf.mxu0
  %v2421 = vadd.f32 %v2392, %v2420
  %2422 = vmatmul.bf16.gmra.mxu0 %v1555
  %v2423 = vpop.f32.mrf.mxu0
  %v2424 = vadd.f32 %v2395, %v2423
  %v2425 = vpop.f32.mrf.mxu0
  %v2426 = vadd.f32 %v2397, %v2425
  %2427 = vdwg.mxu0
  %2428 = vmatpush.bf16.msra.mxu0 %v2027
  %2429 = vmatpush.bf16.msra.mxu0 %v2024
  %2430 = vmatpush.bf16.msra.mxu0 %v2021
  %2431 = vmatpush.bf16.msra.mxu0 %v2018
  %2432 = vmatpush.bf16.msra.mxu0 %v2015
  %2433 = vmatpush.bf16.msra.mxu0 %v2012
  %2434 = vmatpush.bf16.msra.mxu0 %v2009
  %2435 = vmatpush.bf16.msra.mxu0 %v2006
  %2436 = vmatmul.bf16.gmra.mxu0 %v1540
  %v2437 = vpop.f32.mrf.mxu0
  %v2438 = vadd.f32 0.0, %v2437
  %v2439 = vpop.f32.mrf.mxu0
  %v2440 = vadd.f32 0.0, %v2439
  %2441 = vmatmul.bf16.gmra.mxu0 %v1544
  %v2442 = vpop.f32.mrf.mxu0
  %v2443 = vadd.f32 0.0, %v2442
  %v2444 = vpop.f32.mrf.mxu0
  %v2445 = vadd.f32 0.0, %v2444
  %2446 = vmatmul.bf16.gmra.mxu0 %v1548
  %v2447 = vpop.f32.mrf.mxu0
  %v2448 = vadd.f32 0.0, %v2447
  %v2449 = vpop.f32.mrf.mxu0
  %v2450 = vadd.f32 0.0, %v2449
  %2451 = vmatmul.bf16.gmra.mxu0 %v1552
  %v2452 = vpop.f32.mrf.mxu0
  %v2453 = vadd.f32 0.0, %v2452
  %v2454 = vpop.f32.mrf.mxu0
  %v2455 = vadd.f32 0.0, %v2454
  %2456 = vdwg.mxu0
  %2457 = vmatpush.bf16.msra.mxu0 %v2051
  %2458 = vmatpush.bf16.msra.mxu0 %v2048
  %2459 = vmatpush.bf16.msra.mxu0 %v2045
  %2460 = vmatpush.bf16.msra.mxu0 %v2042
  %2461 = vmatpush.bf16.msra.mxu0 %v2039
  %2462 = vmatpush.bf16.msra.mxu0 %v2036
  %2463 = vmatpush.bf16.msra.mxu0 %v2033
  %2464 = vmatpush.bf16.msra.mxu0 %v2030
  %2465 = vmatmul.bf16.gmra.mxu0 %v1541
  %v2466 = vpop.f32.mrf.mxu0
  %v2467 = vadd.f32 %v2438, %v2466
  %v2468 = vpop.f32.mrf.mxu0
  %v2469 = vadd.f32 %v2440, %v2468
  %2470 = vmatmul.bf16.gmra.mxu0 %v1545
  %v2471 = vpop.f32.mrf.mxu0
  %v2472 = vadd.f32 %v2443, %v2471
  %v2473 = vpop.f32.mrf.mxu0
  %v2474 = vadd.f32 %v2445, %v2473
  %2475 = vmatmul.bf16.gmra.mxu0 %v1549
  %v2476 = vpop.f32.mrf.mxu0
  %v2477 = vadd.f32 %v2448, %v2476
  %v2478 = vpop.f32.mrf.mxu0
  %v2479 = vadd.f32 %v2450, %v2478
  %2480 = vmatmul.bf16.gmra.mxu0 %v1553
  %v2481 = vpop.f32.mrf.mxu0
  %v2482 = vadd.f32 %v2453, %v2481
  %v2483 = vpop.f32.mrf.mxu0
  %v2484 = vadd.f32 %v2455, %v2483
  %2485 = vdwg.mxu0
  %2486 = vmatpush.bf16.msra.mxu0 %v2075
  %2487 = vmatpush.bf16.msra.mxu0 %v2072
  %2488 = vmatpush.bf16.msra.mxu0 %v2069
  %2489 = vmatpush.bf16.msra.mxu0 %v2066
  %2490 = vmatpush.bf16.msra.mxu0 %v2063
  %2491 = vmatpush.bf16.msra.mxu0 %v2060
  %2492 = vmatpush.bf16.msra.mxu0 %v2057
  %2493 = vmatpush.bf16.msra.mxu0 %v2054
  %2494 = vmatmul.bf16.gmra.mxu0 %v1542
  %v2495 = vpop.f32.mrf.mxu0
  %v2496 = vadd.f32 %v2467, %v2495
  %v2497 = vpop.f32.mrf.mxu0
  %v2498 = vadd.f32 %v2469, %v2497
  %2499 = vmatmul.bf16.gmra.mxu0 %v1546
  %v2500 = vpop.f32.mrf.mxu0
  %v2501 = vadd.f32 %v2472, %v2500
  %v2502 = vpop.f32.mrf.mxu0
  %v2503 = vadd.f32 %v2474, %v2502
  %2504 = vmatmul.bf16.gmra.mxu0 %v1550
  %v2505 = vpop.f32.mrf.mxu0
  %v2506 = vadd.f32 %v2477, %v2505
  %v2507 = vpop.f32.mrf.mxu0
  %v2508 = vadd.f32 %v2479, %v2507
  %2509 = vmatmul.bf16.gmra.mxu0 %v1554
  %v2510 = vpop.f32.mrf.mxu0
  %v2511 = vadd.f32 %v2482, %v2510
  %v2512 = vpop.f32.mrf.mxu0
  %v2513 = vadd.f32 %v2484, %v2512
  %2514 = vdwg.mxu0
  %2515 = vmatpush.bf16.msra.mxu0 %v2099
  %2516 = vmatpush.bf16.msra.mxu0 %v2096
  %2517 = vmatpush.bf16.msra.mxu0 %v2093
  %2518 = vmatpush.bf16.msra.mxu0 %v2090
  %2519 = vmatpush.bf16.msra.mxu0 %v2087
  %2520 = vmatpush.bf16.msra.mxu0 %v2084
  %2521 = vmatpush.bf16.msra.mxu0 %v2081
  %2522 = vmatpush.bf16.msra.mxu0 %v2078
  %2523 = vmatmul.bf16.gmra.mxu0 %v1543
  %v2524 = vpop.f32.mrf.mxu0
  %v2525 = vadd.f32 %v2496, %v2524
  %v2526 = vpop.f32.mrf.mxu0
  %v2527 = vadd.f32 %v2498, %v2526
  %2528 = vmatmul.bf16.gmra.mxu0 %v1547
  %v2529 = vpop.f32.mrf.mxu0
  %v2530 = vadd.f32 %v2501, %v2529
  %v2531 = vpop.f32.mrf.mxu0
  %v2532 = vadd.f32 %v2503, %v2531
  %2533 = vmatmul.bf16.gmra.mxu0 %v1551
  %v2534 = vpop.f32.mrf.mxu0
  %v2535 = vadd.f32 %v2506, %v2534
  %v2536 = vpop.f32.mrf.mxu0
  %v2537 = vadd.f32 %v2508, %v2536
  %2538 = vmatmul.bf16.gmra.mxu0 %v1555
  %v2539 = vpop.f32.mrf.mxu0
  %v2540 = vadd.f32 %v2511, %v2539
  %v2541 = vpop.f32.mrf.mxu0
  %v2542 = vadd.f32 %v2513, %v2541
  %2543 = vdwg.mxu0
  %v2544 = vpack.c.bf16 %v2409, %v2293
  %v2545 = vpack.c.bf16 %v2525, %v2525
  %v2546 = vpack.c.bf16 %v2411, %v2295
  %v2547 = vpack.c.bf16 %v2527, %v2527
  %v2548 = vpack.c.bf16 %v2414, %v2298
  %v2549 = vpack.c.bf16 %v2530, %v2530
  %v2550 = vpack.c.bf16 %v2416, %v2300
  %v2551 = vpack.c.bf16 %v2532, %v2532
  %v2552 = vpack.c.bf16 %v2419, %v2303
  %v2553 = vpack.c.bf16 %v2535, %v2535
  %v2554 = vpack.c.bf16 %v2421, %v2305
  %v2555 = vpack.c.bf16 %v2537, %v2537
  %v2556 = vpack.c.bf16 %v2424, %v2308
  %v2557 = vpack.c.bf16 %v2540, %v2540
  %v2558 = vpack.c.bf16 %v2426, %v2310
  %v2559 = vpack.c.bf16 %v2542, %v2542
  %v2560 = vrot.slane %v2552, 4
  %vm2561 = vcmask 1047556
  %v2562 = vsel %vm2561, %v2560, %v2544
  %v2563 = vrot.slane %v2544, 4
  %v2564 = vsel %vm2561, %v2552, %v2563
  %v2566 = vunpack.c.l.s4 1983009808
  %v2567 = vunpack.c.0.s8 %v2566
  %v2568 = vperm.slane %v2562, %v2567
  %v2570 = vunpack.c.l.s4 1983009808
  %v2571 = vunpack.c.0.s8 %v2570
  %v2572 = vperm.slane %v2564, %v2571
  %v2573 = vrot.slane %v2556, 4
  %v2574 = vsel %vm2561, %v2573, %v2548
  %v2575 = vrot.slane %v2548, 4
  %v2576 = vsel %vm2561, %v2556, %v2575
  %v2578 = vunpack.c.l.s4 1983009808
  %v2579 = vunpack.c.0.s8 %v2578
  %v2580 = vperm.slane %v2574, %v2579
  %v2582 = vunpack.c.l.s4 1983009808
  %v2583 = vunpack.c.0.s8 %v2582
  %v2584 = vperm.slane %v2576, %v2583
  %v2585 = vrot.slane %v2580, 4
  %v2586 = vsel %vm2561, %v2585, %v2568
  %v2587 = vrot.slane %v2568, 4
  %v2588 = vsel %vm2561, %v2580, %v2587
  %v2590 = vunpack.c.l.s4 1934713408
  %v2591 = vunpack.c.0.s8 %v2590
  %v2592 = vperm.slane %v2586, %v2591
  %v2594 = vunpack.c.l.s4 1934713408
  %v2595 = vunpack.c.0.s8 %v2594
  %v2596 = vperm.slane %v2588, %v2595
  %v2597 = vrot.slane %v2584, 4
  %v2598 = vsel %vm2561, %v2597, %v2572
  %v2599 = vrot.slane %v2572, 4
  %v2600 = vsel %vm2561, %v2584, %v2599
  %v2602 = vunpack.c.l.s4 1934713408
  %v2603 = vunpack.c.0.s8 %v2602
  %v2604 = vperm.slane %v2598, %v2603
  %v2606 = vunpack.c.l.s4 1934713408
  %v2607 = vunpack.c.0.s8 %v2606
  %v2608 = vperm.slane %v2600, %v2607
  %v2609 = vrot.slane %v2604, 4
  %v2610 = vsel %vm2561, %v2609, %v2592
  %v2611 = vrot.slane %v2592, 4
  %v2612 = vsel %vm2561, %v2604, %v2611
  %v2613 = vrot.slane %v2608, 4
  %v2614 = vsel %vm2561, %v2613, %v2596
  %v2615 = vrot.slane %v2596, 4
  %v2616 = vsel %vm2561, %v2608, %v2615
  %v2617 = vrot.slane %v2554, 4
  %v2618 = vsel %vm2561, %v2617, %v2546
  %v2619 = vrot.slane %v2546, 4
  %v2620 = vsel %vm2561, %v2554, %v2619
  %v2622 = vunpack.c.l.s4 1983009808
  %v2623 = vunpack.c.0.s8 %v2622
  %v2624 = vperm.slane %v2618, %v2623
  %v2626 = vunpack.c.l.s4 1983009808
  %v2627 = vunpack.c.0.s8 %v2626
  %v2628 = vperm.slane %v2620, %v2627
  %v2629 = vrot.slane %v2558, 4
  %v2630 = vsel %vm2561, %v2629, %v2550
  %v2631 = vrot.slane %v2550, 4
  %v2632 = vsel %vm2561, %v2558, %v2631
  %v2634 = vunpack.c.l.s4 1983009808
  %v2635 = vunpack.c.0.s8 %v2634
  %v2636 = vperm.slane %v2630, %v2635
  %v2638 = vunpack.c.l.s4 1983009808
  %v2639 = vunpack.c.0.s8 %v2638
  %v2640 = vperm.slane %v2632, %v2639
  %v2641 = vrot.slane %v2636, 4
  %v2642 = vsel %vm2561, %v2641, %v2624
  %v2643 = vrot.slane %v2624, 4
  %v2644 = vsel %vm2561, %v2636, %v2643
  %v2646 = vunpack.c.l.s4 1934713408
  %v2647 = vunpack.c.0.s8 %v2646
  %v2648 = vperm.slane %v2642, %v2647
  %v2650 = vunpack.c.l.s4 1934713408
  %v2651 = vunpack.c.0.s8 %v2650
  %v2652 = vperm.slane %v2644, %v2651
  %v2653 = vrot.slane %v2640, 4
  %v2654 = vsel %vm2561, %v2653, %v2628
  %v2655 = vrot.slane %v2628, 4
  %v2656 = vsel %vm2561, %v2640, %v2655
  %v2658 = vunpack.c.l.s4 1934713408
  %v2659 = vunpack.c.0.s8 %v2658
  %v2660 = vperm.slane %v2654, %v2659
  %v2662 = vunpack.c.l.s4 1934713408
  %v2663 = vunpack.c.0.s8 %v2662
  %v2664 = vperm.slane %v2656, %v2663
  %v2665 = vrot.slane %v2660, 4
  %v2666 = vsel %vm2561, %v2665, %v2648
  %v2667 = vrot.slane %v2648, 4
  %v2668 = vsel %vm2561, %v2660, %v2667
  %v2669 = vrot.slane %v2664, 4
  %v2670 = vsel %vm2561, %v2669, %v2652
  %v2671 = vrot.slane %v2652, 4
  %v2672 = vsel %vm2561, %v2664, %v2671
  %v2675 = vpack.i.b16 %v2666, %v2610
  %v2676 = vshrl.u32 %v2610, 16
  %v2677 = vshrl.u32 %v2666, 16
  %v2678 = vpack.i.b16 %v2677, %v2676
  %v2681 = vpack.i.b16 %v2668, %v2612
  %v2682 = vshrl.u32 %v2612, 16
  %v2683 = vshrl.u32 %v2668, 16
  %v2684 = vpack.i.b16 %v2683, %v2682
  %v2687 = vpack.i.b16 %v2670, %v2614
  %v2688 = vshrl.u32 %v2614, 16
  %v2689 = vshrl.u32 %v2670, 16
  %v2690 = vpack.i.b16 %v2689, %v2688
  %v2693 = vpack.i.b16 %v2672, %v2616
  %v2694 = vshrl.u32 %v2616, 16
  %v2695 = vshrl.u32 %v2672, 16
  %v2696 = vpack.i.b16 %v2695, %v2694
  %v2697 = vunpack.c.l.b16 %v2675
  %v2698 = vunpack.c.h.b16 %v2675
  %v2699 = vpack.c.b16 %v2697, %v2697
  %v2700 = vpack.c.b16 %v2698, %v2698
  %v2701 = vunpack.c.l.b16 %v2678
  %v2702 = vunpack.c.h.b16 %v2678
  %v2703 = vpack.c.b16 %v2701, %v2701
  %v2704 = vpack.c.b16 %v2702, %v2702
  %v2705 = vunpack.c.l.b16 %v2681
  %v2706 = vunpack.c.h.b16 %v2681
  %v2707 = vpack.c.b16 %v2705, %v2705
  %v2708 = vpack.c.b16 %v2706, %v2706
  %v2709 = vunpack.c.l.b16 %v2684
  %v2710 = vunpack.c.h.b16 %v2684
  %v2711 = vpack.c.b16 %v2709, %v2709
  %v2712 = vpack.c.b16 %v2710, %v2710
  %v2713 = vunpack.c.l.b16 %v2687
  %v2714 = vunpack.c.h.b16 %v2687
  %v2715 = vpack.c.b16 %v2713, %v2713
  %v2716 = vpack.c.b16 %v2714, %v2714
  %v2717 = vunpack.c.l.b16 %v2690
  %v2718 = vunpack.c.h.b16 %v2690
  %v2719 = vpack.c.b16 %v2717, %v2717
  %v2720 = vpack.c.b16 %v2718, %v2718
  %v2721 = vunpack.c.l.b16 %v2693
  %v2722 = vunpack.c.h.b16 %v2693
  %v2723 = vpack.c.b16 %v2721, %v2721
  %v2724 = vpack.c.b16 %v2722, %v2722
  %v2725 = vunpack.c.l.b16 %v2696
  %v2726 = vunpack.c.h.b16 %v2696
  %v2727 = vpack.c.b16 %v2725, %v2725
  %v2728 = vpack.c.b16 %v2726, %v2726
  %2745 = vrot.lane.b32.xlu0 %v2544, 127
  %v2746 = vpop.permute.xlu0 %2745
  %2747 = vrot.lane.b32.xlu0 %v2545, 127
  %v2748 = vpop.permute.xlu0 %2747
  %2749 = vrot.lane.b32.xlu0 %v2546, 127
  %v2750 = vpop.permute.xlu0 %2749
  %2751 = vrot.lane.b32.xlu0 %v2547, 127
  %v2752 = vpop.permute.xlu0 %2751
  %2753 = vrot.lane.b32.xlu0 %v2548, 127
  %v2754 = vpop.permute.xlu0 %2753
  %2755 = vrot.lane.b32.xlu0 %v2549, 127
  %v2756 = vpop.permute.xlu0 %2755
  %2757 = vrot.lane.b32.xlu0 %v2550, 127
  %v2758 = vpop.permute.xlu0 %2757
  %2759 = vrot.lane.b32.xlu0 %v2551, 127
  %v2760 = vpop.permute.xlu0 %2759
  %2761 = vrot.lane.b32.xlu0 %v2552, 127
  %v2762 = vpop.permute.xlu0 %2761
  %2763 = vrot.lane.b32.xlu0 %v2553, 127
  %v2764 = vpop.permute.xlu0 %2763
  %2765 = vrot.lane.b32.xlu0 %v2554, 127
  %v2766 = vpop.permute.xlu0 %2765
  %2767 = vrot.lane.b32.xlu0 %v2555, 127
  %v2768 = vpop.permute.xlu0 %2767
  %2769 = vrot.lane.b32.xlu0 %v2556, 127
  %v2770 = vpop.permute.xlu0 %2769
  %2771 = vrot.lane.b32.xlu0 %v2557, 127
  %v2772 = vpop.permute.xlu0 %2771
  %2773 = vrot.lane.b32.xlu0 %v2558, 127
  %v2774 = vpop.permute.xlu0 %2773
  %2775 = vrot.lane.b32.xlu0 %v2559, 127
  %v2776 = vpop.permute.xlu0 %2775
  %v2777 = vrot.slane %v2746, 4
  %v2778 = vrot.slane %v2748, 4
  %v2779 = vrot.slane %v2750, 4
  %v2780 = vrot.slane %v2752, 4
  %v2781 = vrot.slane %v2754, 4
  %v2782 = vrot.slane %v2756, 4
  %v2783 = vrot.slane %v2758, 4
  %v2784 = vrot.slane %v2760, 4
  %v2785 = vrot.slane %v2762, 4
  %v2786 = vrot.slane %v2764, 4
  %v2787 = vrot.slane %v2766, 4
  %v2788 = vrot.slane %v2768, 4
  %v2789 = vrot.slane %v2770, 4
  %v2790 = vrot.slane %v2772, 4
  %v2791 = vrot.slane %v2774, 4
  %v2792 = vrot.slane %v2776, 4
  %vm2793 = vcmask 1043456
  %v2794 = vsel %vm2793, %v2777, %v2778
  %vm2795 = vcmask 1039360
  %v2796 = vsel %vm2795, %v2746, %v2794
  %v2797 = vsel %vm2793, %v2779, %v2780
  %v2798 = vsel %vm2795, %v2750, %v2797
  %v2799 = vsel %vm2793, %v2781, %v2782
  %v2800 = vsel %vm2795, %v2754, %v2799
  %v2801 = vsel %vm2793, %v2783, %v2784
  %v2802 = vsel %vm2795, %v2758, %v2801
  %v2803 = vsel %vm2793, %v2785, %v2786
  %v2804 = vsel %vm2795, %v2762, %v2803
  %v2805 = vsel %vm2793, %v2787, %v2788
  %v2806 = vsel %vm2795, %v2766, %v2805
  %v2807 = vsel %vm2793, %v2789, %v2790
  %v2808 = vsel %vm2795, %v2770, %v2807
  %v2809 = vsel %vm2793, %v2791, %v2792
  %v2810 = vsel %vm2795, %v2774, %v2809
  %v2819 = vrot.slane %v2804, 4
  %v2820 = vsel %vm2561, %v2819, %v2796
  %v2821 = vrot.slane %v2796, 4
  %v2822 = vsel %vm2561, %v2804, %v2821
  %v2824 = vunpack.c.l.s4 1983009808
  %v2825 = vunpack.c.0.s8 %v2824
  %v2826 = vperm.slane %v2820, %v2825
  %v2828 = vunpack.c.l.s4 1983009808
  %v2829 = vunpack.c.0.s8 %v2828
  %v2830 = vperm.slane %v2822, %v2829
  %v2831 = vrot.slane %v2808, 4
  %v2832 = vsel %vm2561, %v2831, %v2800
  %v2833 = vrot.slane %v2800, 4
  %v2834 = vsel %vm2561, %v2808, %v2833
  %v2836 = vunpack.c.l.s4 1983009808
  %v2837 = vunpack.c.0.s8 %v2836
  %v2838 = vperm.slane %v2832, %v2837
  %v2840 = vunpack.c.l.s4 1983009808
  %v2841 = vunpack.c.0.s8 %v2840
  %v2842 = vperm.slane %v2834, %v2841
  %v2843 = vrot.slane %v2838, 4
  %v2844 = vsel %vm2561, %v2843, %v2826
  %v2845 = vrot.slane %v2826, 4
  %v2846 = vsel %vm2561, %v2838, %v2845
  %v2848 = vunpack.c.l.s4 1934713408
  %v2849 = vunpack.c.0.s8 %v2848
  %v2850 = vperm.slane %v2844, %v2849
  %v2852 = vunpack.c.l.s4 1934713408
  %v2853 = vunpack.c.0.s8 %v2852
  %v2854 = vperm.slane %v2846, %v2853
  %v2855 = vrot.slane %v2842, 4
  %v2856 = vsel %vm2561, %v2855, %v2830
  %v2857 = vrot.slane %v2830, 4
  %v2858 = vsel %vm2561, %v2842, %v2857
  %v2860 = vunpack.c.l.s4 1934713408
  %v2861 = vunpack.c.0.s8 %v2860
  %v2862 = vperm.slane %v2856, %v2861
  %v2864 = vunpack.c.l.s4 1934713408
  %v2865 = vunpack.c.0.s8 %v2864
  %v2866 = vperm.slane %v2858, %v2865
  %v2867 = vrot.slane %v2862, 4
  %v2868 = vsel %vm2561, %v2867, %v2850
  %v2869 = vrot.slane %v2850, 4
  %v2870 = vsel %vm2561, %v2862, %v2869
  %v2871 = vrot.slane %v2866, 4
  %v2872 = vsel %vm2561, %v2871, %v2854
  %v2873 = vrot.slane %v2854, 4
  %v2874 = vsel %vm2561, %v2866, %v2873
  %v2875 = vrot.slane %v2806, 4
  %v2876 = vsel %vm2561, %v2875, %v2798
  %v2877 = vrot.slane %v2798, 4
  %v2878 = vsel %vm2561, %v2806, %v2877
  %v2880 = vunpack.c.l.s4 1983009808
  %v2881 = vunpack.c.0.s8 %v2880
  %v2882 = vperm.slane %v2876, %v2881
  %v2884 = vunpack.c.l.s4 1983009808
  %v2885 = vunpack.c.0.s8 %v2884
  %v2886 = vperm.slane %v2878, %v2885
  %v2887 = vrot.slane %v2810, 4
  %v2888 = vsel %vm2561, %v2887, %v2802
  %v2889 = vrot.slane %v2802, 4
  %v2890 = vsel %vm2561, %v2810, %v2889
  %v2892 = vunpack.c.l.s4 1983009808
  %v2893 = vunpack.c.0.s8 %v2892
  %v2894 = vperm.slane %v2888, %v2893
  %v2896 = vunpack.c.l.s4 1983009808
  %v2897 = vunpack.c.0.s8 %v2896
  %v2898 = vperm.slane %v2890, %v2897
  %v2899 = vrot.slane %v2894, 4
  %v2900 = vsel %vm2561, %v2899, %v2882
  %v2901 = vrot.slane %v2882, 4
  %v2902 = vsel %vm2561, %v2894, %v2901
  %v2904 = vunpack.c.l.s4 1934713408
  %v2905 = vunpack.c.0.s8 %v2904
  %v2906 = vperm.slane %v2900, %v2905
  %v2908 = vunpack.c.l.s4 1934713408
  %v2909 = vunpack.c.0.s8 %v2908
  %v2910 = vperm.slane %v2902, %v2909
  %v2911 = vrot.slane %v2898, 4
  %v2912 = vsel %vm2561, %v2911, %v2886
  %v2913 = vrot.slane %v2886, 4
  %v2914 = vsel %vm2561, %v2898, %v2913
  %v2916 = vunpack.c.l.s4 1934713408
  %v2917 = vunpack.c.0.s8 %v2916
  %v2918 = vperm.slane %v2912, %v2917
  %v2920 = vunpack.c.l.s4 1934713408
  %v2921 = vunpack.c.0.s8 %v2920
  %v2922 = vperm.slane %v2914, %v2921
  %v2923 = vrot.slane %v2918, 4
  %v2924 = vsel %vm2561, %v2923, %v2906
  %v2925 = vrot.slane %v2906, 4
  %v2926 = vsel %vm2561, %v2918, %v2925
  %v2927 = vrot.slane %v2922, 4
  %v2928 = vsel %vm2561, %v2927, %v2910
  %v2929 = vrot.slane %v2910, 4
  %v2930 = vsel %vm2561, %v2922, %v2929
  %v2933 = vpack.i.b16 %v2924, %v2868
  %v2934 = vshrl.u32 %v2868, 16
  %v2935 = vshrl.u32 %v2924, 16
  %v2936 = vpack.i.b16 %v2935, %v2934
  %v2939 = vpack.i.b16 %v2926, %v2870
  %v2940 = vshrl.u32 %v2870, 16
  %v2941 = vshrl.u32 %v2926, 16
  %v2942 = vpack.i.b16 %v2941, %v2940
  %v2945 = vpack.i.b16 %v2928, %v2872
  %v2946 = vshrl.u32 %v2872, 16
  %v2947 = vshrl.u32 %v2928, 16
  %v2948 = vpack.i.b16 %v2947, %v2946
  %v2951 = vpack.i.b16 %v2930, %v2874
  %v2952 = vshrl.u32 %v2874, 16
  %v2953 = vshrl.u32 %v2930, 16
  %v2954 = vpack.i.b16 %v2953, %v2952
  %v2955 = vunpack.c.l.b16 %v2933
  %v2956 = vunpack.c.h.b16 %v2933
  %v2957 = vpack.c.b16 %v2955, %v2955
  %v2958 = vpack.c.b16 %v2956, %v2956
  %v2959 = vunpack.c.l.b16 %v2936
  %v2960 = vunpack.c.h.b16 %v2936
  %v2961 = vpack.c.b16 %v2959, %v2959
  %v2962 = vpack.c.b16 %v2960, %v2960
  %v2963 = vunpack.c.l.b16 %v2939
  %v2964 = vunpack.c.h.b16 %v2939
  %v2965 = vpack.c.b16 %v2963, %v2963
  %v2966 = vpack.c.b16 %v2964, %v2964
  %v2967 = vunpack.c.l.b16 %v2942
  %v2968 = vunpack.c.h.b16 %v2942
  %v2969 = vpack.c.b16 %v2967, %v2967
  %v2970 = vpack.c.b16 %v2968, %v2968
  %v2971 = vunpack.c.l.b16 %v2945
  %v2972 = vunpack.c.h.b16 %v2945
  %v2973 = vpack.c.b16 %v2971, %v2971
  %v2974 = vpack.c.b16 %v2972, %v2972
  %v2975 = vunpack.c.l.b16 %v2948
  %v2976 = vunpack.c.h.b16 %v2948
  %v2977 = vpack.c.b16 %v2975, %v2975
  %v2978 = vpack.c.b16 %v2976, %v2976
  %v2979 = vunpack.c.l.b16 %v2951
  %v2980 = vunpack.c.h.b16 %v2951
  %v2981 = vpack.c.b16 %v2979, %v2979
  %v2982 = vpack.c.b16 %v2980, %v2980
  %v2983 = vunpack.c.l.b16 %v2954
  %v2984 = vunpack.c.h.b16 %v2954
  %v2985 = vpack.c.b16 %v2983, %v2983
  %v2986 = vpack.c.b16 %v2984, %v2984
  %2987 = vrot.lane.b32.xlu0 %v2544, 126
  %v2988 = vpop.permute.xlu0 %2987
  %2989 = vrot.lane.b32.xlu0 %v2545, 126
  %v2990 = vpop.permute.xlu0 %2989
  %2991 = vrot.lane.b32.xlu0 %v2546, 126
  %v2992 = vpop.permute.xlu0 %2991
  %2993 = vrot.lane.b32.xlu0 %v2547, 126
  %v2994 = vpop.permute.xlu0 %2993
  %2995 = vrot.lane.b32.xlu0 %v2548, 126
  %v2996 = vpop.permute.xlu0 %2995
  %2997 = vrot.lane.b32.xlu0 %v2549, 126
  %v2998 = vpop.permute.xlu0 %2997
  %2999 = vrot.lane.b32.xlu0 %v2550, 126
  %v3000 = vpop.permute.xlu0 %2999
  %3001 = vrot.lane.b32.xlu0 %v2551, 126
  %v3002 = vpop.permute.xlu0 %3001
  %3003 = vrot.lane.b32.xlu0 %v2552, 126
  %v3004 = vpop.permute.xlu0 %3003
  %3005 = vrot.lane.b32.xlu0 %v2553, 126
  %v3006 = vpop.permute.xlu0 %3005
  %3007 = vrot.lane.b32.xlu0 %v2554, 126
  %v3008 = vpop.permute.xlu0 %3007
  %3009 = vrot.lane.b32.xlu0 %v2555, 126
  %v3010 = vpop.permute.xlu0 %3009
  %3011 = vrot.lane.b32.xlu0 %v2556, 126
  %v3012 = vpop.permute.xlu0 %3011
  %3013 = vrot.lane.b32.xlu0 %v2557, 126
  %v3014 = vpop.permute.xlu0 %3013
  %3015 = vrot.lane.b32.xlu0 %v2558, 126
  %v3016 = vpop.permute.xlu0 %3015
  %3017 = vrot.lane.b32.xlu0 %v2559, 126
  %v3018 = vpop.permute.xlu0 %3017
  %v3019 = vrot.slane %v2988, 4
  %v3020 = vrot.slane %v2990, 4
  %v3021 = vrot.slane %v2992, 4
  %v3022 = vrot.slane %v2994, 4
  %v3023 = vrot.slane %v2996, 4
  %v3024 = vrot.slane %v2998, 4
  %v3025 = vrot.slane %v3000, 4
  %v3026 = vrot.slane %v3002, 4
  %v3027 = vrot.slane %v3004, 4
  %v3028 = vrot.slane %v3006, 4
  %v3029 = vrot.slane %v3008, 4
  %v3030 = vrot.slane %v3010, 4
  %v3031 = vrot.slane %v3012, 4
  %v3032 = vrot.slane %v3014, 4
  %v3033 = vrot.slane %v3016, 4
  %v3034 = vrot.slane %v3018, 4
  %v3035 = vsel %vm2793, %v3019, %v3020
  %vm3036 = vcmask 1031168
  %v3037 = vsel %vm3036, %v2988, %v3035
  %v3038 = vsel %vm2793, %v3021, %v3022
  %v3039 = vsel %vm3036, %v2992, %v3038
  %v3040 = vsel %vm2793, %v3023, %v3024
  %v3041 = vsel %vm3036, %v2996, %v3040
  %v3042 = vsel %vm2793, %v3025, %v3026
  %v3043 = vsel %vm3036, %v3000, %v3042
  %v3044 = vsel %vm2793, %v3027, %v3028
  %v3045 = vsel %vm3036, %v3004, %v3044
  %v3046 = vsel %vm2793, %v3029, %v3030
  %v3047 = vsel %vm3036, %v3008, %v3046
  %v3048 = vsel %vm2793, %v3031, %v3032
  %v3049 = vsel %vm3036, %v3012, %v3048
  %v3050 = vsel %vm2793, %v3033, %v3034
  %v3051 = vsel %vm3036, %v3016, %v3050
  %v3060 = vrot.slane %v3045, 4
  %v3061 = vsel %vm2561, %v3060, %v3037
  %v3062 = vrot.slane %v3037, 4
  %v3063 = vsel %vm2561, %v3045, %v3062
  %v3065 = vunpack.c.l.s4 1983009808
  %v3066 = vunpack.c.0.s8 %v3065
  %v3067 = vperm.slane %v3061, %v3066
  %v3069 = vunpack.c.l.s4 1983009808
  %v3070 = vunpack.c.0.s8 %v3069
  %v3071 = vperm.slane %v3063, %v3070
  %v3072 = vrot.slane %v3049, 4
  %v3073 = vsel %vm2561, %v3072, %v3041
  %v3074 = vrot.slane %v3041, 4
  %v3075 = vsel %vm2561, %v3049, %v3074
  %v3077 = vunpack.c.l.s4 1983009808
  %v3078 = vunpack.c.0.s8 %v3077
  %v3079 = vperm.slane %v3073, %v3078
  %v3081 = vunpack.c.l.s4 1983009808
  %v3082 = vunpack.c.0.s8 %v3081
  %v3083 = vperm.slane %v3075, %v3082
  %v3084 = vrot.slane %v3079, 4
  %v3085 = vsel %vm2561, %v3084, %v3067
  %v3086 = vrot.slane %v3067, 4
  %v3087 = vsel %vm2561, %v3079, %v3086
  %v3089 = vunpack.c.l.s4 1934713408
  %v3090 = vunpack.c.0.s8 %v3089
  %v3091 = vperm.slane %v3085, %v3090
  %v3093 = vunpack.c.l.s4 1934713408
  %v3094 = vunpack.c.0.s8 %v3093
  %v3095 = vperm.slane %v3087, %v3094
  %v3096 = vrot.slane %v3083, 4
  %v3097 = vsel %vm2561, %v3096, %v3071
  %v3098 = vrot.slane %v3071, 4
  %v3099 = vsel %vm2561, %v3083, %v3098
  %v3101 = vunpack.c.l.s4 1934713408
  %v3102 = vunpack.c.0.s8 %v3101
  %v3103 = vperm.slane %v3097, %v3102
  %v3105 = vunpack.c.l.s4 1934713408
  %v3106 = vunpack.c.0.s8 %v3105
  %v3107 = vperm.slane %v3099, %v3106
  %v3108 = vrot.slane %v3103, 4
  %v3109 = vsel %vm2561, %v3108, %v3091
  %v3110 = vrot.slane %v3091, 4
  %v3111 = vsel %vm2561, %v3103, %v3110
  %v3112 = vrot.slane %v3107, 4
  %v3113 = vsel %vm2561, %v3112, %v3095
  %v3114 = vrot.slane %v3095, 4
  %v3115 = vsel %vm2561, %v3107, %v3114
  %v3116 = vrot.slane %v3047, 4
  %v3117 = vsel %vm2561, %v3116, %v3039
  %v3118 = vrot.slane %v3039, 4
  %v3119 = vsel %vm2561, %v3047, %v3118
  %v3121 = vunpack.c.l.s4 1983009808
  %v3122 = vunpack.c.0.s8 %v3121
  %v3123 = vperm.slane %v3117, %v3122
  %v3125 = vunpack.c.l.s4 1983009808
  %v3126 = vunpack.c.0.s8 %v3125
  %v3127 = vperm.slane %v3119, %v3126
  %v3128 = vrot.slane %v3051, 4
  %v3129 = vsel %vm2561, %v3128, %v3043
  %v3130 = vrot.slane %v3043, 4
  %v3131 = vsel %vm2561, %v3051, %v3130
  %v3133 = vunpack.c.l.s4 1983009808
  %v3134 = vunpack.c.0.s8 %v3133
  %v3135 = vperm.slane %v3129, %v3134
  %v3137 = vunpack.c.l.s4 1983009808
  %v3138 = vunpack.c.0.s8 %v3137
  %v3139 = vperm.slane %v3131, %v3138
  %v3140 = vrot.slane %v3135, 4
  %v3141 = vsel %vm2561, %v3140, %v3123
  %v3142 = vrot.slane %v3123, 4
  %v3143 = vsel %vm2561, %v3135, %v3142
  %v3145 = vunpack.c.l.s4 1934713408
  %v3146 = vunpack.c.0.s8 %v3145
  %v3147 = vperm.slane %v3141, %v3146
  %v3149 = vunpack.c.l.s4 1934713408
  %v3150 = vunpack.c.0.s8 %v3149
  %v3151 = vperm.slane %v3143, %v3150
  %v3152 = vrot.slane %v3139, 4
  %v3153 = vsel %vm2561, %v3152, %v3127
  %v3154 = vrot.slane %v3127, 4
  %v3155 = vsel %vm2561, %v3139, %v3154
  %v3157 = vunpack.c.l.s4 1934713408
  %v3158 = vunpack.c.0.s8 %v3157
  %v3159 = vperm.slane %v3153, %v3158
  %v3161 = vunpack.c.l.s4 1934713408
  %v3162 = vunpack.c.0.s8 %v3161
  %v3163 = vperm.slane %v3155, %v3162
  %v3164 = vrot.slane %v3159, 4
  %v3165 = vsel %vm2561, %v3164, %v3147
  %v3166 = vrot.slane %v3147, 4
  %v3167 = vsel %vm2561, %v3159, %v3166
  %v3168 = vrot.slane %v3163, 4
  %v3169 = vsel %vm2561, %v3168, %v3151
  %v3170 = vrot.slane %v3151, 4
  %v3171 = vsel %vm2561, %v3163, %v3170
  %v3174 = vpack.i.b16 %v3165, %v3109
  %v3175 = vshrl.u32 %v3109, 16
  %v3176 = vshrl.u32 %v3165, 16
  %v3177 = vpack.i.b16 %v3176, %v3175
  %v3180 = vpack.i.b16 %v3167, %v3111
  %v3181 = vshrl.u32 %v3111, 16
  %v3182 = vshrl.u32 %v3167, 16
  %v3183 = vpack.i.b16 %v3182, %v3181
  %v3186 = vpack.i.b16 %v3169, %v3113
  %v3187 = vshrl.u32 %v3113, 16
  %v3188 = vshrl.u32 %v3169, 16
  %v3189 = vpack.i.b16 %v3188, %v3187
  %v3192 = vpack.i.b16 %v3171, %v3115
  %v3193 = vshrl.u32 %v3115, 16
  %v3194 = vshrl.u32 %v3171, 16
  %v3195 = vpack.i.b16 %v3194, %v3193
  %v3196 = vunpack.c.l.b16 %v3174
  %v3197 = vunpack.c.h.b16 %v3174
  %v3198 = vpack.c.b16 %v3196, %v3196
  %v3199 = vpack.c.b16 %v3197, %v3197
  %v3200 = vunpack.c.l.b16 %v3177
  %v3201 = vunpack.c.h.b16 %v3177
  %v3202 = vpack.c.b16 %v3200, %v3200
  %v3203 = vpack.c.b16 %v3201, %v3201
  %v3204 = vunpack.c.l.b16 %v3180
  %v3205 = vunpack.c.h.b16 %v3180
  %v3206 = vpack.c.b16 %v3204, %v3204
  %v3207 = vpack.c.b16 %v3205, %v3205
  %v3208 = vunpack.c.l.b16 %v3183
  %v3209 = vunpack.c.h.b16 %v3183
  %v3210 = vpack.c.b16 %v3208, %v3208
  %v3211 = vpack.c.b16 %v3209, %v3209
  %v3212 = vunpack.c.l.b16 %v3186
  %v3213 = vunpack.c.h.b16 %v3186
  %v3214 = vpack.c.b16 %v3212, %v3212
  %v3215 = vpack.c.b16 %v3213, %v3213
  %v3216 = vunpack.c.l.b16 %v3189
  %v3217 = vunpack.c.h.b16 %v3189
  %v3218 = vpack.c.b16 %v3216, %v3216
  %v3219 = vpack.c.b16 %v3217, %v3217
  %v3220 = vunpack.c.l.b16 %v3192
  %v3221 = vunpack.c.h.b16 %v3192
  %v3222 = vpack.c.b16 %v3220, %v3220
  %v3223 = vpack.c.b16 %v3221, %v3221
  %v3224 = vunpack.c.l.b16 %v3195
  %v3225 = vunpack.c.h.b16 %v3195
  %v3226 = vpack.c.b16 %v3224, %v3224
  %v3227 = vpack.c.b16 %v3225, %v3225
  %3228 = vrot.lane.b32.xlu0 %v2544, 125
  %v3229 = vpop.permute.xlu0 %3228
  %3230 = vrot.lane.b32.xlu0 %v2545, 125
  %v3231 = vpop.permute.xlu0 %3230
  %3232 = vrot.lane.b32.xlu0 %v2546, 125
  %v3233 = vpop.permute.xlu0 %3232
  %3234 = vrot.lane.b32.xlu0 %v2547, 125
  %v3235 = vpop.permute.xlu0 %3234
  %3236 = vrot.lane.b32.xlu0 %v2548, 125
  %v3237 = vpop.permute.xlu0 %3236
  %3238 = vrot.lane.b32.xlu0 %v2549, 125
  %v3239 = vpop.permute.xlu0 %3238
  %3240 = vrot.lane.b32.xlu0 %v2550, 125
  %v3241 = vpop.permute.xlu0 %3240
  %3242 = vrot.lane.b32.xlu0 %v2551, 125
  %v3243 = vpop.permute.xlu0 %3242
  %3244 = vrot.lane.b32.xlu0 %v2552, 125
  %v3245 = vpop.permute.xlu0 %3244
  %3246 = vrot.lane.b32.xlu0 %v2553, 125
  %v3247 = vpop.permute.xlu0 %3246
  %3248 = vrot.lane.b32.xlu0 %v2554, 125
  %v3249 = vpop.permute.xlu0 %3248
  %3250 = vrot.lane.b32.xlu0 %v2555, 125
  %v3251 = vpop.permute.xlu0 %3250
  %3252 = vrot.lane.b32.xlu0 %v2556, 125
  %v3253 = vpop.permute.xlu0 %3252
  %3254 = vrot.lane.b32.xlu0 %v2557, 125
  %v3255 = vpop.permute.xlu0 %3254
  %3256 = vrot.lane.b32.xlu0 %v2558, 125
  %v3257 = vpop.permute.xlu0 %3256
  %3258 = vrot.lane.b32.xlu0 %v2559, 125
  %v3259 = vpop.permute.xlu0 %3258
  %v3260 = vrot.slane %v3229, 4
  %v3261 = vrot.slane %v3231, 4
  %v3262 = vrot.slane %v3233, 4
  %v3263 = vrot.slane %v3235, 4
  %v3264 = vrot.slane %v3237, 4
  %v3265 = vrot.slane %v3239, 4
  %v3266 = vrot.slane %v3241, 4
  %v3267 = vrot.slane %v3243, 4
  %v3268 = vrot.slane %v3245, 4
  %v3269 = vrot.slane %v3247, 4
  %v3270 = vrot.slane %v3249, 4
  %v3271 = vrot.slane %v3251, 4
  %v3272 = vrot.slane %v3253, 4
  %v3273 = vrot.slane %v3255, 4
  %v3274 = vrot.slane %v3257, 4
  %v3275 = vrot.slane %v3259, 4
  %v3276 = vsel %vm2793, %v3260, %v3261
  %vm3277 = vcmask 1022976
  %v3278 = vsel %vm3277, %v3229, %v3276
  %v3279 = vsel %vm2793, %v3262, %v3263
  %v3280 = vsel %vm3277, %v3233, %v3279
  %v3281 = vsel %vm2793, %v3264, %v3265
  %v3282 = vsel %vm3277, %v3237, %v3281
  %v3283 = vsel %vm2793, %v3266, %v3267
  %v3284 = vsel %vm3277, %v3241, %v3283
  %v3285 = vsel %vm2793, %v3268, %v3269
  %v3286 = vsel %vm3277, %v3245, %v3285
  %v3287 = vsel %vm2793, %v3270, %v3271
  %v3288 = vsel %vm3277, %v3249, %v3287
  %v3289 = vsel %vm2793, %v3272, %v3273
  %v3290 = vsel %vm3277, %v3253, %v3289
  %v3291 = vsel %vm2793, %v3274, %v3275
  %v3292 = vsel %vm3277, %v3257, %v3291
  %v3301 = vrot.slane %v3286, 4
  %v3302 = vsel %vm2561, %v3301, %v3278
  %v3303 = vrot.slane %v3278, 4
  %v3304 = vsel %vm2561, %v3286, %v3303
  %v3306 = vunpack.c.l.s4 1983009808
  %v3307 = vunpack.c.0.s8 %v3306
  %v3308 = vperm.slane %v3302, %v3307
  %v3310 = vunpack.c.l.s4 1983009808
  %v3311 = vunpack.c.0.s8 %v3310
  %v3312 = vperm.slane %v3304, %v3311
  %v3313 = vrot.slane %v3290, 4
  %v3314 = vsel %vm2561, %v3313, %v3282
  %v3315 = vrot.slane %v3282, 4
  %v3316 = vsel %vm2561, %v3290, %v3315
  %v3318 = vunpack.c.l.s4 1983009808
  %v3319 = vunpack.c.0.s8 %v3318
  %v3320 = vperm.slane %v3314, %v3319
  %v3322 = vunpack.c.l.s4 1983009808
  %v3323 = vunpack.c.0.s8 %v3322
  %v3324 = vperm.slane %v3316, %v3323
  %v3325 = vrot.slane %v3320, 4
  %v3326 = vsel %vm2561, %v3325, %v3308
  %v3327 = vrot.slane %v3308, 4
  %v3328 = vsel %vm2561, %v3320, %v3327
  %v3330 = vunpack.c.l.s4 1934713408
  %v3331 = vunpack.c.0.s8 %v3330
  %v3332 = vperm.slane %v3326, %v3331
  %v3334 = vunpack.c.l.s4 1934713408
  %v3335 = vunpack.c.0.s8 %v3334
  %v3336 = vperm.slane %v3328, %v3335
  %v3337 = vrot.slane %v3324, 4
  %v3338 = vsel %vm2561, %v3337, %v3312
  %v3339 = vrot.slane %v3312, 4
  %v3340 = vsel %vm2561, %v3324, %v3339
  %v3342 = vunpack.c.l.s4 1934713408
  %v3343 = vunpack.c.0.s8 %v3342
  %v3344 = vperm.slane %v3338, %v3343
  %v3346 = vunpack.c.l.s4 1934713408
  %v3347 = vunpack.c.0.s8 %v3346
  %v3348 = vperm.slane %v3340, %v3347
  %v3349 = vrot.slane %v3344, 4
  %v3350 = vsel %vm2561, %v3349, %v3332
  %v3351 = vrot.slane %v3332, 4
  %v3352 = vsel %vm2561, %v3344, %v3351
  %v3353 = vrot.slane %v3348, 4
  %v3354 = vsel %vm2561, %v3353, %v3336
  %v3355 = vrot.slane %v3336, 4
  %v3356 = vsel %vm2561, %v3348, %v3355
  %v3357 = vrot.slane %v3288, 4
  %v3358 = vsel %vm2561, %v3357, %v3280
  %v3359 = vrot.slane %v3280, 4
  %v3360 = vsel %vm2561, %v3288, %v3359
  %v3362 = vunpack.c.l.s4 1983009808
  %v3363 = vunpack.c.0.s8 %v3362
  %v3364 = vperm.slane %v3358, %v3363
  %v3366 = vunpack.c.l.s4 1983009808
  %v3367 = vunpack.c.0.s8 %v3366
  %v3368 = vperm.slane %v3360, %v3367
  %v3369 = vrot.slane %v3292, 4
  %v3370 = vsel %vm2561, %v3369, %v3284
  %v3371 = vrot.slane %v3284, 4
  %v3372 = vsel %vm2561, %v3292, %v3371
  %v3374 = vunpack.c.l.s4 1983009808
  %v3375 = vunpack.c.0.s8 %v3374
  %v3376 = vperm.slane %v3370, %v3375
  %v3378 = vunpack.c.l.s4 1983009808
  %v3379 = vunpack.c.0.s8 %v3378
  %v3380 = vperm.slane %v3372, %v3379
  %v3381 = vrot.slane %v3376, 4
  %v3382 = vsel %vm2561, %v3381, %v3364
  %v3383 = vrot.slane %v3364, 4
  %v3384 = vsel %vm2561, %v3376, %v3383
  %v3386 = vunpack.c.l.s4 1934713408
  %v3387 = vunpack.c.0.s8 %v3386
  %v3388 = vperm.slane %v3382, %v3387
  %v3390 = vunpack.c.l.s4 1934713408
  %v3391 = vunpack.c.0.s8 %v3390
  %v3392 = vperm.slane %v3384, %v3391
  %v3393 = vrot.slane %v3380, 4
  %v3394 = vsel %vm2561, %v3393, %v3368
  %v3395 = vrot.slane %v3368, 4
  %v3396 = vsel %vm2561, %v3380, %v3395
  %v3398 = vunpack.c.l.s4 1934713408
  %v3399 = vunpack.c.0.s8 %v3398
  %v3400 = vperm.slane %v3394, %v3399
  %v3402 = vunpack.c.l.s4 1934713408
  %v3403 = vunpack.c.0.s8 %v3402
  %v3404 = vperm.slane %v3396, %v3403
  %v3405 = vrot.slane %v3400, 4
  %v3406 = vsel %vm2561, %v3405, %v3388
  %v3407 = vrot.slane %v3388, 4
  %v3408 = vsel %vm2561, %v3400, %v3407
  %v3409 = vrot.slane %v3404, 4
  %v3410 = vsel %vm2561, %v3409, %v3392
  %v3411 = vrot.slane %v3392, 4
  %v3412 = vsel %vm2561, %v3404, %v3411
  %v3415 = vpack.i.b16 %v3406, %v3350
  %v3416 = vshrl.u32 %v3350, 16
  %v3417 = vshrl.u32 %v3406, 16
  %v3418 = vpack.i.b16 %v3417, %v3416
  %v3421 = vpack.i.b16 %v3408, %v3352
  %v3422 = vshrl.u32 %v3352, 16
  %v3423 = vshrl.u32 %v3408, 16
  %v3424 = vpack.i.b16 %v3423, %v3422
  %v3427 = vpack.i.b16 %v3410, %v3354
  %v3428 = vshrl.u32 %v3354, 16
  %v3429 = vshrl.u32 %v3410, 16
  %v3430 = vpack.i.b16 %v3429, %v3428
  %v3433 = vpack.i.b16 %v3412, %v3356
  %v3434 = vshrl.u32 %v3356, 16
  %v3435 = vshrl.u32 %v3412, 16
  %v3436 = vpack.i.b16 %v3435, %v3434
  %v3437 = vunpack.c.l.b16 %v3415
  %v3438 = vunpack.c.h.b16 %v3415
  %v3439 = vpack.c.b16 %v3437, %v3437
  %v3440 = vpack.c.b16 %v3438, %v3438
  %v3441 = vunpack.c.l.b16 %v3418
  %v3442 = vunpack.c.h.b16 %v3418
  %v3443 = vpack.c.b16 %v3441, %v3441
  %v3444 = vpack.c.b16 %v3442, %v3442
  %v3445 = vunpack.c.l.b16 %v3421
  %v3446 = vunpack.c.h.b16 %v3421
  %v3447 = vpack.c.b16 %v3445, %v3445
  %v3448 = vpack.c.b16 %v3446, %v3446
  %v3449 = vunpack.c.l.b16 %v3424
  %v3450 = vunpack.c.h.b16 %v3424
  %v3451 = vpack.c.b16 %v3449, %v3449
  %v3452 = vpack.c.b16 %v3450, %v3450
  %v3453 = vunpack.c.l.b16 %v3427
  %v3454 = vunpack.c.h.b16 %v3427
  %v3455 = vpack.c.b16 %v3453, %v3453
  %v3456 = vpack.c.b16 %v3454, %v3454
  %v3457 = vunpack.c.l.b16 %v3430
  %v3458 = vunpack.c.h.b16 %v3430
  %v3459 = vpack.c.b16 %v3457, %v3457
  %v3460 = vpack.c.b16 %v3458, %v3458
  %v3461 = vunpack.c.l.b16 %v3433
  %v3462 = vunpack.c.h.b16 %v3433
  %v3463 = vpack.c.b16 %v3461, %v3461
  %v3464 = vpack.c.b16 %v3462, %v3462
  %v3465 = vunpack.c.l.b16 %v3436
  %v3466 = vunpack.c.h.b16 %v3436
  %v3467 = vpack.c.b16 %v3465, %v3465
  %v3468 = vpack.c.b16 %v3466, %v3466
  %3469 = vrot.lane.b32.xlu0 %v2544, 124
  %v3470 = vpop.permute.xlu0 %3469
  %3471 = vrot.lane.b32.xlu0 %v2545, 124
  %v3472 = vpop.permute.xlu0 %3471
  %3473 = vrot.lane.b32.xlu0 %v2546, 124
  %v3474 = vpop.permute.xlu0 %3473
  %3475 = vrot.lane.b32.xlu0 %v2547, 124
  %v3476 = vpop.permute.xlu0 %3475
  %3477 = vrot.lane.b32.xlu0 %v2548, 124
  %v3478 = vpop.permute.xlu0 %3477
  %3479 = vrot.lane.b32.xlu0 %v2549, 124
  %v3480 = vpop.permute.xlu0 %3479
  %3481 = vrot.lane.b32.xlu0 %v2550, 124
  %v3482 = vpop.permute.xlu0 %3481
  %3483 = vrot.lane.b32.xlu0 %v2551, 124
  %v3484 = vpop.permute.xlu0 %3483
  %3485 = vrot.lane.b32.xlu0 %v2552, 124
  %v3486 = vpop.permute.xlu0 %3485
  %3487 = vrot.lane.b32.xlu0 %v2553, 124
  %v3488 = vpop.permute.xlu0 %3487
  %3489 = vrot.lane.b32.xlu0 %v2554, 124
  %v3490 = vpop.permute.xlu0 %3489
  %3491 = vrot.lane.b32.xlu0 %v2555, 124
  %v3492 = vpop.permute.xlu0 %3491
  %3493 = vrot.lane.b32.xlu0 %v2556, 124
  %v3494 = vpop.permute.xlu0 %3493
  %3495 = vrot.lane.b32.xlu0 %v2557, 124
  %v3496 = vpop.permute.xlu0 %3495
  %3497 = vrot.lane.b32.xlu0 %v2558, 124
  %v3498 = vpop.permute.xlu0 %3497
  %3499 = vrot.lane.b32.xlu0 %v2559, 124
  %v3500 = vpop.permute.xlu0 %3499
  %v3501 = vrot.slane %v3470, 4
  %v3502 = vrot.slane %v3472, 4
  %v3503 = vrot.slane %v3474, 4
  %v3504 = vrot.slane %v3476, 4
  %v3505 = vrot.slane %v3478, 4
  %v3506 = vrot.slane %v3480, 4
  %v3507 = vrot.slane %v3482, 4
  %v3508 = vrot.slane %v3484, 4
  %v3509 = vrot.slane %v3486, 4
  %v3510 = vrot.slane %v3488, 4
  %v3511 = vrot.slane %v3490, 4
  %v3512 = vrot.slane %v3492, 4
  %v3513 = vrot.slane %v3494, 4
  %v3514 = vrot.slane %v3496, 4
  %v3515 = vrot.slane %v3498, 4
  %v3516 = vrot.slane %v3500, 4
  %v3517 = vsel %vm2793, %v3501, %v3502
  %vm3518 = vcmask 1014784
  %v3519 = vsel %vm3518, %v3470, %v3517
  %v3520 = vsel %vm2793, %v3503, %v3504
  %v3521 = vsel %vm3518, %v3474, %v3520
  %v3522 = vsel %vm2793, %v3505, %v3506
  %v3523 = vsel %vm3518, %v3478, %v3522
  %v3524 = vsel %vm2793, %v3507, %v3508
  %v3525 = vsel %vm3518, %v3482, %v3524
  %v3526 = vsel %vm2793, %v3509, %v3510
  %v3527 = vsel %vm3518, %v3486, %v3526
  %v3528 = vsel %vm2793, %v3511, %v3512
  %v3529 = vsel %vm3518, %v3490, %v3528
  %v3530 = vsel %vm2793, %v3513, %v3514
  %v3531 = vsel %vm3518, %v3494, %v3530
  %v3532 = vsel %vm2793, %v3515, %v3516
  %v3533 = vsel %vm3518, %v3498, %v3532
  %v3542 = vrot.slane %v3527, 4
  %v3543 = vsel %vm2561, %v3542, %v3519
  %v3544 = vrot.slane %v3519, 4
  %v3545 = vsel %vm2561, %v3527, %v3544
  %v3547 = vunpack.c.l.s4 1983009808
  %v3548 = vunpack.c.0.s8 %v3547
  %v3549 = vperm.slane %v3543, %v3548
  %v3551 = vunpack.c.l.s4 1983009808
  %v3552 = vunpack.c.0.s8 %v3551
  %v3553 = vperm.slane %v3545, %v3552
  %v3554 = vrot.slane %v3531, 4
  %v3555 = vsel %vm2561, %v3554, %v3523
  %v3556 = vrot.slane %v3523, 4
  %v3557 = vsel %vm2561, %v3531, %v3556
  %v3559 = vunpack.c.l.s4 1983009808
  %v3560 = vunpack.c.0.s8 %v3559
  %v3561 = vperm.slane %v3555, %v3560
  %v3563 = vunpack.c.l.s4 1983009808
  %v3564 = vunpack.c.0.s8 %v3563
  %v3565 = vperm.slane %v3557, %v3564
  %v3566 = vrot.slane %v3561, 4
  %v3567 = vsel %vm2561, %v3566, %v3549
  %v3568 = vrot.slane %v3549, 4
  %v3569 = vsel %vm2561, %v3561, %v3568
  %v3571 = vunpack.c.l.s4 1934713408
  %v3572 = vunpack.c.0.s8 %v3571
  %v3573 = vperm.slane %v3567, %v3572
  %v3575 = vunpack.c.l.s4 1934713408
  %v3576 = vunpack.c.0.s8 %v3575
  %v3577 = vperm.slane %v3569, %v3576
  %v3578 = vrot.slane %v3565, 4
  %v3579 = vsel %vm2561, %v3578, %v3553
  %v3580 = vrot.slane %v3553, 4
  %v3581 = vsel %vm2561, %v3565, %v3580
  %v3583 = vunpack.c.l.s4 1934713408
  %v3584 = vunpack.c.0.s8 %v3583
  %v3585 = vperm.slane %v3579, %v3584
  %v3587 = vunpack.c.l.s4 1934713408
  %v3588 = vunpack.c.0.s8 %v3587
  %v3589 = vperm.slane %v3581, %v3588
  %v3590 = vrot.slane %v3585, 4
  %v3591 = vsel %vm2561, %v3590, %v3573
  %v3592 = vrot.slane %v3573, 4
  %v3593 = vsel %vm2561, %v3585, %v3592
  %v3594 = vrot.slane %v3589, 4
  %v3595 = vsel %vm2561, %v3594, %v3577
  %v3596 = vrot.slane %v3577, 4
  %v3597 = vsel %vm2561, %v3589, %v3596
  %v3598 = vrot.slane %v3529, 4
  %v3599 = vsel %vm2561, %v3598, %v3521
  %v3600 = vrot.slane %v3521, 4
  %v3601 = vsel %vm2561, %v3529, %v3600
  %v3603 = vunpack.c.l.s4 1983009808
  %v3604 = vunpack.c.0.s8 %v3603
  %v3605 = vperm.slane %v3599, %v3604
  %v3607 = vunpack.c.l.s4 1983009808
  %v3608 = vunpack.c.0.s8 %v3607
  %v3609 = vperm.slane %v3601, %v3608
  %v3610 = vrot.slane %v3533, 4
  %v3611 = vsel %vm2561, %v3610, %v3525
  %v3612 = vrot.slane %v3525, 4
  %v3613 = vsel %vm2561, %v3533, %v3612
  %v3615 = vunpack.c.l.s4 1983009808
  %v3616 = vunpack.c.0.s8 %v3615
  %v3617 = vperm.slane %v3611, %v3616
  %v3619 = vunpack.c.l.s4 1983009808
  %v3620 = vunpack.c.0.s8 %v3619
  %v3621 = vperm.slane %v3613, %v3620
  %v3622 = vrot.slane %v3617, 4
  %v3623 = vsel %vm2561, %v3622, %v3605
  %v3624 = vrot.slane %v3605, 4
  %v3625 = vsel %vm2561, %v3617, %v3624
  %v3627 = vunpack.c.l.s4 1934713408
  %v3628 = vunpack.c.0.s8 %v3627
  %v3629 = vperm.slane %v3623, %v3628
  %v3631 = vunpack.c.l.s4 1934713408
  %v3632 = vunpack.c.0.s8 %v3631
  %v3633 = vperm.slane %v3625, %v3632
  %v3634 = vrot.slane %v3621, 4
  %v3635 = vsel %vm2561, %v3634, %v3609
  %v3636 = vrot.slane %v3609, 4
  %v3637 = vsel %vm2561, %v3621, %v3636
  %v3639 = vunpack.c.l.s4 1934713408
  %v3640 = vunpack.c.0.s8 %v3639
  %v3641 = vperm.slane %v3635, %v3640
  %v3643 = vunpack.c.l.s4 1934713408
  %v3644 = vunpack.c.0.s8 %v3643
  %v3645 = vperm.slane %v3637, %v3644
  %v3646 = vrot.slane %v3641, 4
  %v3647 = vsel %vm2561, %v3646, %v3629
  %v3648 = vrot.slane %v3629, 4
  %v3649 = vsel %vm2561, %v3641, %v3648
  %v3650 = vrot.slane %v3645, 4
  %v3651 = vsel %vm2561, %v3650, %v3633
  %v3652 = vrot.slane %v3633, 4
  %v3653 = vsel %vm2561, %v3645, %v3652
  %v3656 = vpack.i.b16 %v3647, %v3591
  %v3657 = vshrl.u32 %v3591, 16
  %v3658 = vshrl.u32 %v3647, 16
  %v3659 = vpack.i.b16 %v3658, %v3657
  %v3662 = vpack.i.b16 %v3649, %v3593
  %v3663 = vshrl.u32 %v3593, 16
  %v3664 = vshrl.u32 %v3649, 16
  %v3665 = vpack.i.b16 %v3664, %v3663
  %v3668 = vpack.i.b16 %v3651, %v3595
  %v3669 = vshrl.u32 %v3595, 16
  %v3670 = vshrl.u32 %v3651, 16
  %v3671 = vpack.i.b16 %v3670, %v3669
  %v3674 = vpack.i.b16 %v3653, %v3597
  %v3675 = vshrl.u32 %v3597, 16
  %v3676 = vshrl.u32 %v3653, 16
  %v3677 = vpack.i.b16 %v3676, %v3675
  %v3678 = vunpack.c.l.b16 %v3656
  %v3679 = vunpack.c.h.b16 %v3656
  %v3680 = vpack.c.b16 %v3678, %v3678
  %v3681 = vpack.c.b16 %v3679, %v3679
  %v3682 = vunpack.c.l.b16 %v3659
  %v3683 = vunpack.c.h.b16 %v3659
  %v3684 = vpack.c.b16 %v3682, %v3682
  %v3685 = vpack.c.b16 %v3683, %v3683
  %v3686 = vunpack.c.l.b16 %v3662
  %v3687 = vunpack.c.h.b16 %v3662
  %v3688 = vpack.c.b16 %v3686, %v3686
  %v3689 = vpack.c.b16 %v3687, %v3687
  %v3690 = vunpack.c.l.b16 %v3665
  %v3691 = vunpack.c.h.b16 %v3665
  %v3692 = vpack.c.b16 %v3690, %v3690
  %v3693 = vpack.c.b16 %v3691, %v3691
  %v3694 = vunpack.c.l.b16 %v3668
  %v3695 = vunpack.c.h.b16 %v3668
  %v3696 = vpack.c.b16 %v3694, %v3694
  %v3697 = vpack.c.b16 %v3695, %v3695
  %v3698 = vunpack.c.l.b16 %v3671
  %v3699 = vunpack.c.h.b16 %v3671
  %v3700 = vpack.c.b16 %v3698, %v3698
  %v3701 = vpack.c.b16 %v3699, %v3699
  %v3702 = vunpack.c.l.b16 %v3674
  %v3703 = vunpack.c.h.b16 %v3674
  %v3704 = vpack.c.b16 %v3702, %v3702
  %v3705 = vpack.c.b16 %v3703, %v3703
  %v3706 = vunpack.c.l.b16 %v3677
  %v3707 = vunpack.c.h.b16 %v3677
  %v3708 = vpack.c.b16 %v3706, %v3706
  %v3709 = vpack.c.b16 %v3707, %v3707
  %v3710 = vrot.slane %v2957, 4
  %v3711 = vrot.slane %v2958, 4
  %v3712 = vrot.slane %v2961, 4
  %v3713 = vrot.slane %v2962, 4
  %v3714 = vrot.slane %v2965, 4
  %v3715 = vrot.slane %v2966, 4
  %v3716 = vrot.slane %v2969, 4
  %v3717 = vrot.slane %v2970, 4
  %v3718 = vrot.slane %v2973, 4
  %v3719 = vrot.slane %v2974, 4
  %v3720 = vrot.slane %v2977, 4
  %v3721 = vrot.slane %v2978, 4
  %v3722 = vrot.slane %v2981, 4
  %v3723 = vrot.slane %v2982, 4
  %v3724 = vrot.slane %v2985, 4
  %v3725 = vrot.slane %v2986, 4
  %v3726 = vrot.slane %v3439, 4
  %v3727 = vrot.slane %v3440, 4
  %v3728 = vrot.slane %v3443, 4
  %v3729 = vrot.slane %v3444, 4
  %v3730 = vrot.slane %v3447, 4
  %v3731 = vrot.slane %v3448, 4
  %v3732 = vrot.slane %v3451, 4
  %v3733 = vrot.slane %v3452, 4
  %v3734 = vrot.slane %v3455, 4
  %v3735 = vrot.slane %v3456, 4
  %v3736 = vrot.slane %v3459, 4
  %v3737 = vrot.slane %v3460, 4
  %v3738 = vrot.slane %v3463, 4
  %v3739 = vrot.slane %v3464, 4
  %v3740 = vrot.slane %v3467, 4
  %v3741 = vrot.slane %v3468, 4
  %vm3742 = vcmask 1043456
  %v3745 = vsel %vm3742, %v2699, %v3710
  %v3749 = vsel %vm3742, %v2700, %v3711
  %v3753 = vsel %vm3742, %v2703, %v3712
  %v3757 = vsel %vm3742, %v2704, %v3713
  %v3761 = vsel %vm3742, %v2707, %v3714
  %v3765 = vsel %vm3742, %v2708, %v3715
  %v3769 = vsel %vm3742, %v2711, %v3716
  %v3773 = vsel %vm3742, %v2712, %v3717
  %v3777 = vsel %vm3742, %v2715, %v3718
  %v3781 = vsel %vm3742, %v2716, %v3719
  %v3785 = vsel %vm3742, %v2719, %v3720
  %v3789 = vsel %vm3742, %v2720, %v3721
  %v3793 = vsel %vm3742, %v2723, %v3722
  %v3797 = vsel %vm3742, %v2724, %v3723
  %v3801 = vsel %vm3742, %v2727, %v3724
  %v3805 = vsel %vm3742, %v2728, %v3725
  %v3809 = vsel %vm3742, %v3198, %v3726
  %v3813 = vsel %vm3742, %v3199, %v3727
  %v3817 = vsel %vm3742, %v3202, %v3728
  %v3821 = vsel %vm3742, %v3203, %v3729
  %v3825 = vsel %vm3742, %v3206, %v3730
  %v3829 = vsel %vm3742, %v3207, %v3731
  %v3833 = vsel %vm3742, %v3210, %v3732
  %v3837 = vsel %vm3742, %v3211, %v3733
  %v3841 = vsel %vm3742, %v3214, %v3734
  %v3845 = vsel %vm3742, %v3215, %v3735
  %v3849 = vsel %vm3742, %v3218, %v3736
  %v3853 = vsel %vm3742, %v3219, %v3737
  %v3857 = vsel %vm3742, %v3222, %v3738
  %v3861 = vsel %vm3742, %v3223, %v3739
  %v3865 = vsel %vm3742, %v3226, %v3740
  %v3869 = vsel %vm3742, %v3227, %v3741
  %v3871 = vld [vmem:[%s4] sm:$0xf]
  %v3872 = vld [vmem:[%s4 + $0x4] sm:$0xf]
  %v3873 = vld [vmem:[%s5] sm:$0xff]
  %v3874 = vld [vmem:[%s5 + $0x8] sm:$0xff]
  %3876 = vset.pattern.permute.xlu0 0
  %3877 = vperm.xlu0 %3876, %v3873
  %v3878 = vpop.permute.xlu0 %3877
  %3881 = vset.pattern.permute.xlu0 0
  %3882 = vperm.xlu0 %3881, %v3874
  %v3883 = vpop.permute.xlu0 %3882
  %v3887 = vunpack.c.l.b16 %v3871
  %v3888 = vunpack.c.l.b16 %v3872
  %v3889 = vpack.c.b16 %v3888, %v3887
  %vm3890 = vcmask 326656
  %v3892 = vsel %vm3890, %v3889, 0
  %v3895 = vsel %vm3742, %v3680, 0
  %v3898 = vsel %vm3742, %v3681, 0
  %v3901 = vsel %vm3742, %v3684, 0
  %v3904 = vsel %vm3742, %v3685, 0
  %v3907 = vsel %vm3742, %v3688, 0
  %v3910 = vsel %vm3742, %v3689, 0
  %v3913 = vsel %vm3742, %v3692, 0
  %v3916 = vsel %vm3742, %v3693, 0
  %v3919 = vsel %vm3742, %v3696, 0
  %v3922 = vsel %vm3742, %v3697, 0
  %v3925 = vsel %vm3742, %v3700, 0
  %v3928 = vsel %vm3742, %v3701, 0
  %v3931 = vsel %vm3742, %v3704, 0
  %v3934 = vsel %vm3742, %v3705, 0
  %v3937 = vsel %vm3742, %v3708, 0
  %v3940 = vsel %vm3742, %v3709, 0
  %3942 = vmatpush.bf16.msra.mxu0 0
  %3943 = vmatpush.bf16.msra.mxu0 0
  %3944 = vmatpush.bf16.msra.mxu0 0
  %3945 = vmatpush.bf16.msra.mxu0 0
  %3946 = vmatpush.bf16.msra.mxu0 0
  %3947 = vmatpush.bf16.msra.mxu0 %v3895
  %3948 = vmatpush.bf16.msra.mxu0 %v3809
  %3949 = vmatpush.bf16.msra.mxu0 %v3745
  %3950 = vmatmul.bf16.gmra.mxu0 %v3892
  %v3951 = vpop.f32.mrf.mxu0
  %v3952 = vadd.f32 %v3878, %v3951
  %v3953 = vpop.f32.mrf.mxu0
  %v3954 = vadd.f32 %v3883, %v3953
  %3955 = vdwg.mxu0
  %3956 = vmatpush.bf16.msra.mxu0 0
  %3957 = vmatpush.bf16.msra.mxu0 0
  %3958 = vmatpush.bf16.msra.mxu0 0
  %3959 = vmatpush.bf16.msra.mxu0 0
  %3960 = vmatpush.bf16.msra.mxu0 0
  %3961 = vmatpush.bf16.msra.mxu0 %v3898
  %3962 = vmatpush.bf16.msra.mxu0 %v3813
  %3963 = vmatpush.bf16.msra.mxu0 %v3749
  %3964 = vmatmul.bf16.gmra.mxu0 %v3892
  %v3965 = vpop.f32.mrf.mxu0
  %v3966 = vadd.f32 %v3878, %v3965
  %v3967 = vpop.f32.mrf.mxu0
  %v3968 = vadd.f32 %v3883, %v3967
  %3969 = vdwg.mxu0
  %3970 = vmatpush.bf16.msra.mxu0 0
  %3971 = vmatpush.bf16.msra.mxu0 0
  %3972 = vmatpush.bf16.msra.mxu0 0
  %3973 = vmatpush.bf16.msra.mxu0 0
  %3974 = vmatpush.bf16.msra.mxu0 0
  %3975 = vmatpush.bf16.msra.mxu0 %v3901
  %3976 = vmatpush.bf16.msra.mxu0 %v3817
  %3977 = vmatpush.bf16.msra.mxu0 %v3753
  %3978 = vmatmul.bf16.gmra.mxu0 %v3892
  %v3979 = vpop.f32.mrf.mxu0
  %v3980 = vadd.f32 %v3878, %v3979
  %v3981 = vpop.f32.mrf.mxu0
  %v3982 = vadd.f32 %v3883, %v3981
  %3983 = vdwg.mxu0
  %3984 = vmatpush.bf16.msra.mxu0 0
  %3985 = vmatpush.bf16.msra.mxu0 0
  %3986 = vmatpush.bf16.msra.mxu0 0
  %3987 = vmatpush.bf16.msra.mxu0 0
  %3988 = vmatpush.bf16.msra.mxu0 0
  %3989 = vmatpush.bf16.msra.mxu0 %v3904
  %3990 = vmatpush.bf16.msra.mxu0 %v3821
  %3991 = vmatpush.bf16.msra.mxu0 %v3757
  %3992 = vmatmul.bf16.gmra.mxu0 %v3892
  %v3993 = vpop.f32.mrf.mxu0
  %v3994 = vadd.f32 %v3878, %v3993
  %v3995 = vpop.f32.mrf.mxu0
  %v3996 = vadd.f32 %v3883, %v3995
  %3997 = vdwg.mxu0
  %3998 = vmatpush.bf16.msra.mxu0 0
  %3999 = vmatpush.bf16.msra.mxu0 0
  %4000 = vmatpush.bf16.msra.mxu0 0
  %4001 = vmatpush.bf16.msra.mxu0 0
  %4002 = vmatpush.bf16.msra.mxu0 0
  %4003 = vmatpush.bf16.msra.mxu0 %v3907
  %4004 = vmatpush.bf16.msra.mxu0 %v3825
  %4005 = vmatpush.bf16.msra.mxu0 %v3761
  %4006 = vmatmul.bf16.gmra.mxu0 %v3892
  %v4007 = vpop.f32.mrf.mxu0
  %v4008 = vadd.f32 %v3878, %v4007
  %v4009 = vpop.f32.mrf.mxu0
  %v4010 = vadd.f32 %v3883, %v4009
  %4011 = vdwg.mxu0
  %4012 = vmatpush.bf16.msra.mxu0 0
  %4013 = vmatpush.bf16.msra.mxu0 0
  %4014 = vmatpush.bf16.msra.mxu0 0
  %4015 = vmatpush.bf16.msra.mxu0 0
  %4016 = vmatpush.bf16.msra.mxu0 0
  %4017 = vmatpush.bf16.msra.mxu0 %v3910
  %4018 = vmatpush.bf16.msra.mxu0 %v3829
  %4019 = vmatpush.bf16.msra.mxu0 %v3765
  %4020 = vmatmul.bf16.gmra.mxu0 %v3892
  %v4021 = vpop.f32.mrf.mxu0
  %v4022 = vadd.f32 %v3878, %v4021
  %v4023 = vpop.f32.mrf.mxu0
  %v4024 = vadd.f32 %v3883, %v4023
  %4025 = vdwg.mxu0
  %4026 = vmatpush.bf16.msra.mxu0 0
  %4027 = vmatpush.bf16.msra.mxu0 0
  %4028 = vmatpush.bf16.msra.mxu0 0
  %4029 = vmatpush.bf16.msra.mxu0 0
  %4030 = vmatpush.bf16.msra.mxu0 0
  %4031 = vmatpush.bf16.msra.mxu0 %v3913
  %4032 = vmatpush.bf16.msra.mxu0 %v3833
  %4033 = vmatpush.bf16.msra.mxu0 %v3769
  %4034 = vmatmul.bf16.gmra.mxu0 %v3892
  %v4035 = vpop.f32.mrf.mxu0
  %v4036 = vadd.f32 %v3878, %v4035
  %v4037 = vpop.f32.mrf.mxu0
  %v4038 = vadd.f32 %v3883, %v4037
  %4039 = vdwg.mxu0
  %4040 = vmatpush.bf16.msra.mxu0 0
  %4041 = vmatpush.bf16.msra.mxu0 0
  %4042 = vmatpush.bf16.msra.mxu0 0
  %4043 = vmatpush.bf16.msra.mxu0 0
  %4044 = vmatpush.bf16.msra.mxu0 0
  %4045 = vmatpush.bf16.msra.mxu0 %v3916
  %4046 = vmatpush.bf16.msra.mxu0 %v3837
  %4047 = vmatpush.bf16.msra.mxu0 %v3773
  %4048 = vmatmul.bf16.gmra.mxu0 %v3892
  %v4049 = vpop.f32.mrf.mxu0
  %v4050 = vadd.f32 %v3878, %v4049
  %v4051 = vpop.f32.mrf.mxu0
  %v4052 = vadd.f32 %v3883, %v4051
  %4053 = vdwg.mxu0
  %4054 = vmatpush.bf16.msra.mxu0 0
  %4055 = vmatpush.bf16.msra.mxu0 0
  %4056 = vmatpush.bf16.msra.mxu0 0
  %4057 = vmatpush.bf16.msra.mxu0 0
  %4058 = vmatpush.bf16.msra.mxu0 0
  %4059 = vmatpush.bf16.msra.mxu0 %v3919
  %4060 = vmatpush.bf16.msra.mxu0 %v3841
  %4061 = vmatpush.bf16.msra.mxu0 %v3777
  %4062 = vmatmul.bf16.gmra.mxu0 %v3892
  %v4063 = vpop.f32.mrf.mxu0
  %v4064 = vadd.f32 %v3878, %v4063
  %v4065 = vpop.f32.mrf.mxu0
  %v4066 = vadd.f32 %v3883, %v4065
  %4067 = vdwg.mxu0
  %4068 = vmatpush.bf16.msra.mxu0 0
  %4069 = vmatpush.bf16.msra.mxu0 0
  %4070 = vmatpush.bf16.msra.mxu0 0
  %4071 = vmatpush.bf16.msra.mxu0 0
  %4072 = vmatpush.bf16.msra.mxu0 0
  %4073 = vmatpush.bf16.msra.mxu0 %v3922
  %4074 = vmatpush.bf16.msra.mxu0 %v3845
  %4075 = vmatpush.bf16.msra.mxu0 %v3781
  %4076 = vmatmul.bf16.gmra.mxu0 %v3892
  %v4077 = vpop.f32.mrf.mxu0
  %v4078 = vadd.f32 %v3878, %v4077
  %v4079 = vpop.f32.mrf.mxu0
  %v4080 = vadd.f32 %v3883, %v4079
  %4081 = vdwg.mxu0
  %4082 = vmatpush.bf16.msra.mxu0 0
  %4083 = vmatpush.bf16.msra.mxu0 0
  %4084 = vmatpush.bf16.msra.mxu0 0
  %4085 = vmatpush.bf16.msra.mxu0 0
  %4086 = vmatpush.bf16.msra.mxu0 0
  %4087 = vmatpush.bf16.msra.mxu0 %v3925
  %4088 = vmatpush.bf16.msra.mxu0 %v3849
  %4089 = vmatpush.bf16.msra.mxu0 %v3785
  %4090 = vmatmul.bf16.gmra.mxu0 %v3892
  %v4091 = vpop.f32.mrf.mxu0
  %v4092 = vadd.f32 %v3878, %v4091
  %v4093 = vpop.f32.mrf.mxu0
  %v4094 = vadd.f32 %v3883, %v4093
  %4095 = vdwg.mxu0
  %4096 = vmatpush.bf16.msra.mxu0 0
  %4097 = vmatpush.bf16.msra.mxu0 0
  %4098 = vmatpush.bf16.msra.mxu0 0
  %4099 = vmatpush.bf16.msra.mxu0 0
  %4100 = vmatpush.bf16.msra.mxu0 0
  %4101 = vmatpush.bf16.msra.mxu0 %v3928
  %4102 = vmatpush.bf16.msra.mxu0 %v3853
  %4103 = vmatpush.bf16.msra.mxu0 %v3789
  %4104 = vmatmul.bf16.gmra.mxu0 %v3892
  %v4105 = vpop.f32.mrf.mxu0
  %v4106 = vadd.f32 %v3878, %v4105
  %v4107 = vpop.f32.mrf.mxu0
  %v4108 = vadd.f32 %v3883, %v4107
  %4109 = vdwg.mxu0
  %4110 = vmatpush.bf16.msra.mxu0 0
  %4111 = vmatpush.bf16.msra.mxu0 0
  %4112 = vmatpush.bf16.msra.mxu0 0
  %4113 = vmatpush.bf16.msra.mxu0 0
  %4114 = vmatpush.bf16.msra.mxu0 0
  %4115 = vmatpush.bf16.msra.mxu0 %v3931
  %4116 = vmatpush.bf16.msra.mxu0 %v3857
  %4117 = vmatpush.bf16.msra.mxu0 %v3793
  %4118 = vmatmul.bf16.gmra.mxu0 %v3892
  %v4119 = vpop.f32.mrf.mxu0
  %v4120 = vadd.f32 %v3878, %v4119
  %v4121 = vpop.f32.mrf.mxu0
  %v4122 = vadd.f32 %v3883, %v4121
  %4123 = vdwg.mxu0
  %4124 = vmatpush.bf16.msra.mxu0 0
  %4125 = vmatpush.bf16.msra.mxu0 0
  %4126 = vmatpush.bf16.msra.mxu0 0
  %4127 = vmatpush.bf16.msra.mxu0 0
  %4128 = vmatpush.bf16.msra.mxu0 0
  %4129 = vmatpush.bf16.msra.mxu0 %v3934
  %4130 = vmatpush.bf16.msra.mxu0 %v3861
  %4131 = vmatpush.bf16.msra.mxu0 %v3797
  %4132 = vmatmul.bf16.gmra.mxu0 %v3892
  %v4133 = vpop.f32.mrf.mxu0
  %v4134 = vadd.f32 %v3878, %v4133
  %v4135 = vpop.f32.mrf.mxu0
  %v4136 = vadd.f32 %v3883, %v4135
  %4137 = vdwg.mxu0
  %4138 = vmatpush.bf16.msra.mxu0 0
  %4139 = vmatpush.bf16.msra.mxu0 0
  %4140 = vmatpush.bf16.msra.mxu0 0
  %4141 = vmatpush.bf16.msra.mxu0 0
  %4142 = vmatpush.bf16.msra.mxu0 0
  %4143 = vmatpush.bf16.msra.mxu0 %v3937
  %4144 = vmatpush.bf16.msra.mxu0 %v3865
  %4145 = vmatpush.bf16.msra.mxu0 %v3801
  %4146 = vmatmul.bf16.gmra.mxu0 %v3892
  %v4147 = vpop.f32.mrf.mxu0
  %v4148 = vadd.f32 %v3878, %v4147
  %v4149 = vpop.f32.mrf.mxu0
  %v4150 = vadd.f32 %v3883, %v4149
  %4151 = vdwg.mxu0
  %4152 = vmatpush.bf16.msra.mxu0 0
  %4153 = vmatpush.bf16.msra.mxu0 0
  %4154 = vmatpush.bf16.msra.mxu0 0
  %4155 = vmatpush.bf16.msra.mxu0 0
  %4156 = vmatpush.bf16.msra.mxu0 0
  %4157 = vmatpush.bf16.msra.mxu0 %v3940
  %4158 = vmatpush.bf16.msra.mxu0 %v3869
  %4159 = vmatpush.bf16.msra.mxu0 %v3805
  %4160 = vmatmul.bf16.gmra.mxu0 %v3892
  %v4161 = vpop.f32.mrf.mxu0
  %v4162 = vadd.f32 %v3878, %v4161
  %v4163 = vpop.f32.mrf.mxu0
  %v4164 = vadd.f32 %v3883, %v4163
  %4165 = vdwg.mxu0
  %v4166 = vmax.f32 %v3952, 0.0
  %v4167 = vmax.f32 %v3966, 0.0
  %v4168 = vmax.f32 %v3980, 0.0
  %v4169 = vmax.f32 %v3994, 0.0
  %v4170 = vmax.f32 %v4008, 0.0
  %v4171 = vmax.f32 %v4022, 0.0
  %v4172 = vmax.f32 %v4036, 0.0
  %v4173 = vmax.f32 %v4050, 0.0
  %v4174 = vmax.f32 %v4064, 0.0
  %v4175 = vmax.f32 %v4078, 0.0
  %v4176 = vmax.f32 %v4092, 0.0
  %v4177 = vmax.f32 %v4106, 0.0
  %v4178 = vmax.f32 %v4120, 0.0
  %v4179 = vmax.f32 %v4134, 0.0
  %v4180 = vmax.f32 %v4148, 0.0
  %v4181 = vmax.f32 %v4162, 0.0
  %v4182 = vmax.f32 %v3954, 0.0
  %v4183 = vmax.f32 %v3968, 0.0
  %v4184 = vmax.f32 %v3982, 0.0
  %v4185 = vmax.f32 %v3996, 0.0
  %v4186 = vmax.f32 %v4010, 0.0
  %v4187 = vmax.f32 %v4024, 0.0
  %v4188 = vmax.f32 %v4038, 0.0
  %v4189 = vmax.f32 %v4052, 0.0
  %v4190 = vmax.f32 %v4066, 0.0
  %v4191 = vmax.f32 %v4080, 0.0
  %v4192 = vmax.f32 %v4094, 0.0
  %v4193 = vmax.f32 %v4108, 0.0
  %v4194 = vmax.f32 %v4122, 0.0
  %v4195 = vmax.f32 %v4136, 0.0
  %v4196 = vmax.f32 %v4150, 0.0
  %v4197 = vmax.f32 %v4164, 0.0
  %v4230 = vrot.slane %v4167, 7
  %v4231 = vrot.slane %v4168, 6
  %v4232 = vrot.slane %v4169, 5
  %v4233 = vrot.slane %v4170, 4
  %v4234 = vrot.slane %v4171, 3
  %v4235 = vrot.slane %v4172, 2
  %v4236 = vrot.slane %v4173, 1
  %v4237 = vrot.slane %v4175, 7
  %v4238 = vrot.slane %v4176, 6
  %v4239 = vrot.slane %v4177, 5
  %v4240 = vrot.slane %v4178, 4
  %v4241 = vrot.slane %v4179, 3
  %v4242 = vrot.slane %v4180, 2
  %v4243 = vrot.slane %v4181, 1
  %v4244 = vrot.slane %v4183, 7
  %v4245 = vrot.slane %v4184, 6
  %v4246 = vrot.slane %v4185, 5
  %v4247 = vrot.slane %v4186, 4
  %v4248 = vrot.slane %v4187, 3
  %v4249 = vrot.slane %v4188, 2
  %v4250 = vrot.slane %v4189, 1
  %v4251 = vrot.slane %v4191, 7
  %v4252 = vrot.slane %v4192, 6
  %v4253 = vrot.slane %v4193, 5
  %v4254 = vrot.slane %v4194, 4
  %v4255 = vrot.slane %v4195, 3
  %v4256 = vrot.slane %v4196, 2
  %v4257 = vrot.slane %v4197, 1
  %vm4258 = vcmask 1040384
  %v4259 = vsel %vm4258, %v4166, %v4230
  %vm4260 = vcmask 1042434
  %v4261 = vsel %vm4260, %v4231, %v4232
  %vm4262 = vcmask 1041408
  %v4263 = vsel %vm4262, %v4259, %v4261
  %vm4264 = vcmask 1044484
  %v4265 = vsel %vm4264, %v4233, %v4234
  %vm4266 = vcmask 1046534
  %v4267 = vsel %vm4266, %v4235, %v4236
  %vm4268 = vcmask 1045508
  %v4269 = vsel %vm4268, %v4265, %v4267
  %v4270 = vsel %vm3742, %v4263, %v4269
  %v4271 = vsel %vm4258, %v4174, %v4237
  %v4272 = vsel %vm4260, %v4238, %v4239
  %v4273 = vsel %vm4262, %v4271, %v4272
  %v4274 = vsel %vm4264, %v4240, %v4241
  %v4275 = vsel %vm4266, %v4242, %v4243
  %v4276 = vsel %vm4268, %v4274, %v4275
  %v4277 = vsel %vm3742, %v4273, %v4276
  %vm4278 = vcmask 1041409
  %v4279 = vsel %vm4278, %v4166, %v4230
  %vm4280 = vcmask 1043459
  %v4281 = vsel %vm4280, %v4231, %v4232
  %vm4282 = vcmask 1042433
  %v4283 = vsel %vm4282, %v4279, %v4281
  %vm4284 = vcmask 1045509
  %v4285 = vsel %vm4284, %v4233, %v4234
  %vm4286 = vcmask 1046528
  %v4287 = vsel %vm4286, %v4236, %v4235
  %vm4288 = vcmask 1046533
  %v4289 = vsel %vm4288, %v4285, %v4287
  %vm4290 = vcmask 1044481
  %v4291 = vsel %vm4290, %v4283, %v4289
  %v4292 = vrot.slane %v4291, 1
  %v4293 = vsel %vm4278, %v4174, %v4237
  %v4294 = vsel %vm4280, %v4238, %v4239
  %v4295 = vsel %vm4282, %v4293, %v4294
  %v4296 = vsel %vm4284, %v4240, %v4241
  %v4297 = vsel %vm4286, %v4243, %v4242
  %v4298 = vsel %vm4288, %v4296, %v4297
  %v4299 = vsel %vm4290, %v4295, %v4298
  %v4300 = vrot.slane %v4299, 1
  %v4301 = vsel %vm4260, %v4166, %v4230
  %v4302 = vsel %vm4264, %v4231, %v4232
  %vm4303 = vcmask 1043458
  %v4304 = vsel %vm4303, %v4301, %v4302
  %v4305 = vsel %vm4266, %v4233, %v4234
  %v4306 = vsel %vm4258, %v4235, %v4236
  %vm4307 = vcmask 1045504
  %v4308 = vsel %vm4307, %v4306, %v4305
  %vm4309 = vcmask 1045506
  %v4310 = vsel %vm4309, %v4304, %v4308
  %v4311 = vrot.slane %v4310, 2
  %v4312 = vsel %vm4260, %v4174, %v4237
  %v4313 = vsel %vm4264, %v4238, %v4239
  %v4314 = vsel %vm4303, %v4312, %v4313
  %v4315 = vsel %vm4266, %v4240, %v4241
  %v4316 = vsel %vm4258, %v4242, %v4243
  %v4317 = vsel %vm4307, %v4316, %v4315
  %v4318 = vsel %vm4309, %v4314, %v4317
  %v4319 = vrot.slane %v4318, 2
  %v4320 = vsel %vm4280, %v4166, %v4230
  %v4321 = vsel %vm4284, %v4231, %v4232
  %vm4322 = vcmask 1044483
  %v4323 = vsel %vm4322, %v4320, %v4321
  %v4324 = vsel %vm4286, %v4234, %v4233
  %v4325 = vsel %vm4278, %v4235, %v4236
  %vm4326 = vcmask 1046529
  %v4327 = vsel %vm4326, %v4325, %v4324
  %vm4328 = vcmask 1046531
  %v4329 = vsel %vm4328, %v4323, %v4327
  %v4330 = vrot.slane %v4329, 3
  %v4331 = vsel %vm4280, %v4174, %v4237
  %v4332 = vsel %vm4284, %v4238, %v4239
  %v4333 = vsel %vm4322, %v4331, %v4332
  %v4334 = vsel %vm4286, %v4241, %v4240
  %v4335 = vsel %vm4278, %v4242, %v4243
  %v4336 = vsel %vm4326, %v4335, %v4334
  %v4337 = vsel %vm4328, %v4333, %v4336
  %v4338 = vrot.slane %v4337, 3
  %v4339 = vsel %vm4264, %v4166, %v4230
  %v4340 = vsel %vm4266, %v4231, %v4232
  %v4341 = vsel %vm4268, %v4339, %v4340
  %v4342 = vsel %vm4258, %v4233, %v4234
  %v4343 = vsel %vm4260, %v4235, %v4236
  %v4344 = vsel %vm4262, %v4342, %v4343
  %v4345 = vsel %vm3742, %v4344, %v4341
  %v4346 = vrot.slane %v4345, 4
  %v4347 = vsel %vm4264, %v4174, %v4237
  %v4348 = vsel %vm4266, %v4238, %v4239
  %v4349 = vsel %vm4268, %v4347, %v4348
  %v4350 = vsel %vm4258, %v4240, %v4241
  %v4351 = vsel %vm4260, %v4242, %v4243
  %v4352 = vsel %vm4262, %v4350, %v4351
  %v4353 = vsel %vm3742, %v4352, %v4349
  %v4354 = vrot.slane %v4353, 4
  %v4355 = vsel %vm4284, %v4166, %v4230
  %v4356 = vsel %vm4286, %v4232, %v4231
  %v4357 = vsel %vm4288, %v4355, %v4356
  %v4358 = vsel %vm4278, %v4233, %v4234
  %v4359 = vsel %vm4280, %v4235, %v4236
  %v4360 = vsel %vm4282, %v4358, %v4359
  %v4361 = vsel %vm4290, %v4360, %v4357
  %v4362 = vrot.slane %v4361, 5
  %v4363 = vsel %vm4284, %v4174, %v4237
  %v4364 = vsel %vm4286, %v4239, %v4238
  %v4365 = vsel %vm4288, %v4363, %v4364
  %v4366 = vsel %vm4278, %v4240, %v4241
  %v4367 = vsel %vm4280, %v4242, %v4243
  %v4368 = vsel %vm4282, %v4366, %v4367
  %v4369 = vsel %vm4290, %v4368, %v4365
  %v4370 = vrot.slane %v4369, 5
  %v4371 = vsel %vm4266, %v4166, %v4230
  %v4372 = vsel %vm4258, %v4231, %v4232
  %v4373 = vsel %vm4307, %v4372, %v4371
  %v4374 = vsel %vm4260, %v4233, %v4234
  %v4375 = vsel %vm4264, %v4235, %v4236
  %v4376 = vsel %vm4303, %v4374, %v4375
  %v4377 = vsel %vm4309, %v4376, %v4373
  %v4378 = vrot.slane %v4377, 6
  %v4379 = vsel %vm4266, %v4174, %v4237
  %v4380 = vsel %vm4258, %v4238, %v4239
  %v4381 = vsel %vm4307, %v4380, %v4379
  %v4382 = vsel %vm4260, %v4240, %v4241
  %v4383 = vsel %vm4264, %v4242, %v4243
  %v4384 = vsel %vm4303, %v4382, %v4383
  %v4385 = vsel %vm4309, %v4384, %v4381
  %v4386 = vrot.slane %v4385, 6
  %v4387 = vsel %vm4286, %v4230, %v4166
  %v4388 = vsel %vm4278, %v4231, %v4232
  %v4389 = vsel %vm4326, %v4388, %v4387
  %v4390 = vsel %vm4280, %v4233, %v4234
  %v4391 = vsel %vm4284, %v4235, %v4236
  %v4392 = vsel %vm4322, %v4390, %v4391
  %v4393 = vsel %vm4328, %v4392, %v4389
  %v4394 = vrot.slane %v4393, 7
  %v4395 = vsel %vm4286, %v4237, %v4174
  %v4396 = vsel %vm4278, %v4238, %v4239
  %v4397 = vsel %vm4326, %v4396, %v4395
  %v4398 = vsel %vm4280, %v4240, %v4241
  %v4399 = vsel %vm4284, %v4242, %v4243
  %v4400 = vsel %vm4322, %v4398, %v4399
  %v4401 = vsel %vm4328, %v4400, %v4397
  %v4402 = vrot.slane %v4401, 7
  %v4403 = vsel %vm4258, %v4182, %v4244
  %v4404 = vsel %vm4260, %v4245, %v4246
  %v4405 = vsel %vm4262, %v4403, %v4404
  %v4406 = vsel %vm4264, %v4247, %v4248
  %v4407 = vsel %vm4266, %v4249, %v4250
  %v4408 = vsel %vm4268, %v4406, %v4407
  %v4409 = vsel %vm3742, %v4405, %v4408
  %v4410 = vsel %vm4258, %v4190, %v4251
  %v4411 = vsel %vm4260, %v4252, %v4253
  %v4412 = vsel %vm4262, %v4410, %v4411
  %v4413 = vsel %vm4264, %v4254, %v4255
  %v4414 = vsel %vm4266, %v4256, %v4257
  %v4415 = vsel %vm4268, %v4413, %v4414
  %v4416 = vsel %vm3742, %v4412, %v4415
  %v4417 = vsel %vm4278, %v4182, %v4244
  %v4418 = vsel %vm4280, %v4245, %v4246
  %v4419 = vsel %vm4282, %v4417, %v4418
  %v4420 = vsel %vm4284, %v4247, %v4248
  %v4421 = vsel %vm4286, %v4250, %v4249
  %v4422 = vsel %vm4288, %v4420, %v4421
  %v4423 = vsel %vm4290, %v4419, %v4422
  %v4424 = vrot.slane %v4423, 1
  %v4425 = vsel %vm4278, %v4190, %v4251
  %v4426 = vsel %vm4280, %v4252, %v4253
  %v4427 = vsel %vm4282, %v4425, %v4426
  %v4428 = vsel %vm4284, %v4254, %v4255
  %v4429 = vsel %vm4286, %v4257, %v4256
  %v4430 = vsel %vm4288, %v4428, %v4429
  %v4431 = vsel %vm4290, %v4427, %v4430
  %v4432 = vrot.slane %v4431, 1
  %v4433 = vsel %vm4260, %v4182, %v4244
  %v4434 = vsel %vm4264, %v4245, %v4246
  %v4435 = vsel %vm4303, %v4433, %v4434
  %v4436 = vsel %vm4266, %v4247, %v4248
  %v4437 = vsel %vm4258, %v4249, %v4250
  %v4438 = vsel %vm4307, %v4437, %v4436
  %v4439 = vsel %vm4309, %v4435, %v4438
  %v4440 = vrot.slane %v4439, 2
  %v4441 = vsel %vm4260, %v4190, %v4251
  %v4442 = vsel %vm4264, %v4252, %v4253
  %v4443 = vsel %vm4303, %v4441, %v4442
  %v4444 = vsel %vm4266, %v4254, %v4255
  %v4445 = vsel %vm4258, %v4256, %v4257
  %v4446 = vsel %vm4307, %v4445, %v4444
  %v4447 = vsel %vm4309, %v4443, %v4446
  %v4448 = vrot.slane %v4447, 2
  %v4449 = vsel %vm4280, %v4182, %v4244
  %v4450 = vsel %vm4284, %v4245, %v4246
  %v4451 = vsel %vm4322, %v4449, %v4450
  %v4452 = vsel %vm4286, %v4248, %v4247
  %v4453 = vsel %vm4278, %v4249, %v4250
  %v4454 = vsel %vm4326, %v4453, %v4452
  %v4455 = vsel %vm4328, %v4451, %v4454
  %v4456 = vrot.slane %v4455, 3
  %v4457 = vsel %vm4280, %v4190, %v4251
  %v4458 = vsel %vm4284, %v4252, %v4253
  %v4459 = vsel %vm4322, %v4457, %v4458
  %v4460 = vsel %vm4286, %v4255, %v4254
  %v4461 = vsel %vm4278, %v4256, %v4257
  %v4462 = vsel %vm4326, %v4461, %v4460
  %v4463 = vsel %vm4328, %v4459, %v4462
  %v4464 = vrot.slane %v4463, 3
  %v4465 = vsel %vm4264, %v4182, %v4244
  %v4466 = vsel %vm4266, %v4245, %v4246
  %v4467 = vsel %vm4268, %v4465, %v4466
  %v4468 = vsel %vm4258, %v4247, %v4248
  %v4469 = vsel %vm4260, %v4249, %v4250
  %v4470 = vsel %vm4262, %v4468, %v4469
  %v4471 = vsel %vm3742, %v4470, %v4467
  %v4472 = vrot.slane %v4471, 4
  %v4473 = vsel %vm4264, %v4190, %v4251
  %v4474 = vsel %vm4266, %v4252, %v4253
  %v4475 = vsel %vm4268, %v4473, %v4474
  %v4476 = vsel %vm4258, %v4254, %v4255
  %v4477 = vsel %vm4260, %v4256, %v4257
  %v4478 = vsel %vm4262, %v4476, %v4477
  %v4479 = vsel %vm3742, %v4478, %v4475
  %v4480 = vrot.slane %v4479, 4
  %v4481 = vsel %vm4284, %v4182, %v4244
  %v4482 = vsel %vm4286, %v4246, %v4245
  %v4483 = vsel %vm4288, %v4481, %v4482
  %v4484 = vsel %vm4278, %v4247, %v4248
  %v4485 = vsel %vm4280, %v4249, %v4250
  %v4486 = vsel %vm4282, %v4484, %v4485
  %v4487 = vsel %vm4290, %v4486, %v4483
  %v4488 = vrot.slane %v4487, 5
  %v4489 = vsel %vm4284, %v4190, %v4251
  %v4490 = vsel %vm4286, %v4253, %v4252
  %v4491 = vsel %vm4288, %v4489, %v4490
  %v4492 = vsel %vm4278, %v4254, %v4255
  %v4493 = vsel %vm4280, %v4256, %v4257
  %v4494 = vsel %vm4282, %v4492, %v4493
  %v4495 = vsel %vm4290, %v4494, %v4491
  %v4496 = vrot.slane %v4495, 5
  %v4497 = vsel %vm4266, %v4182, %v4244
  %v4498 = vsel %vm4258, %v4245, %v4246
  %v4499 = vsel %vm4307, %v4498, %v4497
  %v4500 = vsel %vm4260, %v4247, %v4248
  %v4501 = vsel %vm4264, %v4249, %v4250
  %v4502 = vsel %vm4303, %v4500, %v4501
  %v4503 = vsel %vm4309, %v4502, %v4499
  %v4504 = vrot.slane %v4503, 6
  %v4505 = vsel %vm4266, %v4190, %v4251
  %v4506 = vsel %vm4258, %v4252, %v4253
  %v4507 = vsel %vm4307, %v4506, %v4505
  %v4508 = vsel %vm4260, %v4254, %v4255
  %v4509 = vsel %vm4264, %v4256, %v4257
  %v4510 = vsel %vm4303, %v4508, %v4509
  %v4511 = vsel %vm4309, %v4510, %v4507
  %v4512 = vrot.slane %v4511, 6
  %v4513 = vsel %vm4286, %v4244, %v4182
  %v4514 = vsel %vm4278, %v4245, %v4246
  %v4515 = vsel %vm4326, %v4514, %v4513
  %v4516 = vsel %vm4280, %v4247, %v4248
  %v4517 = vsel %vm4284, %v4249, %v4250
  %v4518 = vsel %vm4322, %v4516, %v4517
  %v4519 = vsel %vm4328, %v4518, %v4515
  %v4520 = vrot.slane %v4519, 7
  %v4521 = vsel %vm4286, %v4251, %v4190
  %v4522 = vsel %vm4278, %v4252, %v4253
  %v4523 = vsel %vm4326, %v4522, %v4521
  %v4524 = vsel %vm4280, %v4254, %v4255
  %v4525 = vsel %vm4284, %v4256, %v4257
  %v4526 = vsel %vm4322, %v4524, %v4525
  %v4527 = vsel %vm4328, %v4526, %v4523
  %v4528 = vrot.slane %v4527, 7
  %v4562 = vunpack.c.l.s4 1966171168
  %v4563 = vunpack.c.0.s8 %v4562
  %v4564 = vperm.slane %v4270, %v4563
  %v4566 = vunpack.c.l.s4 1966171168
  %v4567 = vunpack.c.0.s8 %v4566
  %v4568 = vperm.slane %v4277, %v4567
  %v4570 = vunpack.c.l.s4 1966171168
  %v4571 = vunpack.c.0.s8 %v4570
  %v4572 = vperm.slane %v4292, %v4571
  %v4574 = vunpack.c.l.s4 1966171168
  %v4575 = vunpack.c.0.s8 %v4574
  %v4576 = vperm.slane %v4300, %v4575
  %v4578 = vunpack.c.l.s4 1966171168
  %v4579 = vunpack.c.0.s8 %v4578
  %v4580 = vperm.slane %v4311, %v4579
  %v4582 = vunpack.c.l.s4 1966171168
  %v4583 = vunpack.c.0.s8 %v4582
  %v4584 = vperm.slane %v4319, %v4583
  %v4586 = vunpack.c.l.s4 1966171168
  %v4587 = vunpack.c.0.s8 %v4586
  %v4588 = vperm.slane %v4330, %v4587
  %v4590 = vunpack.c.l.s4 1966171168
  %v4591 = vunpack.c.0.s8 %v4590
  %v4592 = vperm.slane %v4338, %v4591
  %v4594 = vunpack.c.l.s4 1966171168
  %v4595 = vunpack.c.0.s8 %v4594
  %v4596 = vperm.slane %v4346, %v4595
  %v4598 = vunpack.c.l.s4 1966171168
  %v4599 = vunpack.c.0.s8 %v4598
  %v4600 = vperm.slane %v4354, %v4599
  %v4602 = vunpack.c.l.s4 1966171168
  %v4603 = vunpack.c.0.s8 %v4602
  %v4604 = vperm.slane %v4362, %v4603
  %v4606 = vunpack.c.l.s4 1966171168
  %v4607 = vunpack.c.0.s8 %v4606
  %v4608 = vperm.slane %v4370, %v4607
  %v4610 = vunpack.c.l.s4 1966171168
  %v4611 = vunpack.c.0.s8 %v4610
  %v4612 = vperm.slane %v4378, %v4611
  %v4614 = vunpack.c.l.s4 1966171168
  %v4615 = vunpack.c.0.s8 %v4614
  %v4616 = vperm.slane %v4386, %v4615
  %v4618 = vunpack.c.l.s4 1966171168
  %v4619 = vunpack.c.0.s8 %v4618
  %v4620 = vperm.slane %v4394, %v4619
  %v4622 = vunpack.c.l.s4 1966171168
  %v4623 = vunpack.c.0.s8 %v4622
  %v4624 = vperm.slane %v4402, %v4623
  %v4626 = vunpack.c.l.s4 1966171168
  %v4627 = vunpack.c.0.s8 %v4626
  %v4628 = vperm.slane %v4409, %v4627
  %v4630 = vunpack.c.l.s4 1966171168
  %v4631 = vunpack.c.0.s8 %v4630
  %v4632 = vperm.slane %v4416, %v4631
  %v4634 = vunpack.c.l.s4 1966171168
  %v4635 = vunpack.c.0.s8 %v4634
  %v4636 = vperm.slane %v4424, %v4635
  %v4638 = vunpack.c.l.s4 1966171168
  %v4639 = vunpack.c.0.s8 %v4638
  %v4640 = vperm.slane %v4432, %v4639
  %v4642 = vunpack.c.l.s4 1966171168
  %v4643 = vunpack.c.0.s8 %v4642
  %v4644 = vperm.slane %v4440, %v4643
  %v4646 = vunpack.c.l.s4 1966171168
  %v4647 = vunpack.c.0.s8 %v4646
  %v4648 = vperm.slane %v4448, %v4647
  %v4650 = vunpack.c.l.s4 1966171168
  %v4651 = vunpack.c.0.s8 %v4650
  %v4652 = vperm.slane %v4456, %v4651
  %v4654 = vunpack.c.l.s4 1966171168
  %v4655 = vunpack.c.0.s8 %v4654
  %v4656 = vperm.slane %v4464, %v4655
  %v4658 = vunpack.c.l.s4 1966171168
  %v4659 = vunpack.c.0.s8 %v4658
  %v4660 = vperm.slane %v4472, %v4659
  %v4662 = vunpack.c.l.s4 1966171168
  %v4663 = vunpack.c.0.s8 %v4662
  %v4664 = vperm.slane %v4480, %v4663
  %v4666 = vunpack.c.l.s4 1966171168
  %v4667 = vunpack.c.0.s8 %v4666
  %v4668 = vperm.slane %v4488, %v4667
  %v4670 = vunpack.c.l.s4 1966171168
  %v4671 = vunpack.c.0.s8 %v4670
  %v4672 = vperm.slane %v4496, %v4671
  %v4674 = vunpack.c.l.s4 1966171168
  %v4675 = vunpack.c.0.s8 %v4674
  %v4676 = vperm.slane %v4504, %v4675
  %v4678 = vunpack.c.l.s4 1966171168
  %v4679 = vunpack.c.0.s8 %v4678
  %v4680 = vperm.slane %v4512, %v4679
  %v4682 = vunpack.c.l.s4 1966171168
  %v4683 = vunpack.c.0.s8 %v4682
  %v4684 = vperm.slane %v4520, %v4683
  %v4686 = vunpack.c.l.s4 1966171168
  %v4687 = vunpack.c.0.s8 %v4686
  %v4688 = vperm.slane %v4528, %v4687
  %4721 = vst [vmem:[#allocation1] ss:$2 sm:$0xff] %v4564
  %s4722 = scalar_lea.vmem [#allocation1], 1
  %4723 = vst [vmem:[%s4722] ss:$2 sm:$0xff] %v4568
  %s4724 = scalar_lea.vmem [#allocation1], 16
  %4725 = vst [vmem:[%s4724] ss:$2 sm:$0xff] %v4572
  %s4726 = scalar_lea.vmem [#allocation1], 17
  %4727 = vst [vmem:[%s4726] ss:$2 sm:$0xff] %v4576
  %s4728 = scalar_lea.vmem [#allocation1], 32
  %4729 = vst [vmem:[%s4728] ss:$2 sm:$0xff] %v4580
  %s4730 = scalar_lea.vmem [#allocation1], 33
  %4731 = vst [vmem:[%s4730] ss:$2 sm:$0xff] %v4584
  %s4732 = scalar_lea.vmem [#allocation1], 48
  %4733 = vst [vmem:[%s4732] ss:$2 sm:$0xff] %v4588
  %s4734 = scalar_lea.vmem [#allocation1], 49
  %4735 = vst [vmem:[%s4734] ss:$2 sm:$0xff] %v4592
  %v4736 = vld.sshfl [vmem:[#allocation1] sm:$0xff pattern:$0x75316420]
  %v4737 = vld.sshfl [vmem:[#allocation1 + $0x8] sm:$0xff pattern:$0x75316420]
  %v4738 = vld.sshfl [vmem:[#allocation1 + $0x10] sm:$0xff pattern:$0x75316420]
  %v4739 = vld.sshfl [vmem:[#allocation1 + $0x18] sm:$0xff pattern:$0x75316420]
  %v4740 = vld.sshfl [vmem:[#allocation1 + $0x20] sm:$0xff pattern:$0x75316420]
  %v4741 = vld.sshfl [vmem:[#allocation1 + $0x28] sm:$0xff pattern:$0x75316420]
  %v4742 = vld.sshfl [vmem:[#allocation1 + $0x30] sm:$0xff pattern:$0x75316420]
  %v4743 = vld.sshfl [vmem:[#allocation1 + $0x38] sm:$0xff pattern:$0x75316420]
  %4744 = vst [vmem:[#allocation1] ss:$2 sm:$0xff] %v4596
  %4745 = vst [vmem:[%s4722] ss:$2 sm:$0xff] %v4600
  %4746 = vst [vmem:[%s4724] ss:$2 sm:$0xff] %v4604
  %4747 = vst [vmem:[%s4726] ss:$2 sm:$0xff] %v4608
  %4748 = vst [vmem:[%s4728] ss:$2 sm:$0xff] %v4612
  %4749 = vst [vmem:[%s4730] ss:$2 sm:$0xff] %v4616
  %4750 = vst [vmem:[%s4732] ss:$2 sm:$0xff] %v4620
  %4751 = vst [vmem:[%s4734] ss:$2 sm:$0xff] %v4624
  %v4752 = vld.sshfl [vmem:[#allocation1] sm:$0xff pattern:$0x75316420]
  %v4753 = vld.sshfl [vmem:[#allocation1 + $0x8] sm:$0xff pattern:$0x75316420]
  %v4754 = vld.sshfl [vmem:[#allocation1 + $0x10] sm:$0xff pattern:$0x75316420]
  %v4755 = vld.sshfl [vmem:[#allocation1 + $0x18] sm:$0xff pattern:$0x75316420]
  %v4756 = vld.sshfl [vmem:[#allocation1 + $0x20] sm:$0xff pattern:$0x75316420]
  %v4757 = vld.sshfl [vmem:[#allocation1 + $0x28] sm:$0xff pattern:$0x75316420]
  %v4758 = vld.sshfl [vmem:[#allocation1 + $0x30] sm:$0xff pattern:$0x75316420]
  %v4759 = vld.sshfl [vmem:[#allocation1 + $0x38] sm:$0xff pattern:$0x75316420]
  %4760 = vst [vmem:[#allocation1] ss:$2 sm:$0xff] %v4628
  %4761 = vst [vmem:[%s4722] ss:$2 sm:$0xff] %v4632
  %4762 = vst [vmem:[%s4724] ss:$2 sm:$0xff] %v4636
  %4763 = vst [vmem:[%s4726] ss:$2 sm:$0xff] %v4640
  %4764 = vst [vmem:[%s4728] ss:$2 sm:$0xff] %v4644
  %4765 = vst [vmem:[%s4730] ss:$2 sm:$0xff] %v4648
  %4766 = vst [vmem:[%s4732] ss:$2 sm:$0xff] %v4652
  %4767 = vst [vmem:[%s4734] ss:$2 sm:$0xff] %v4656
  %v4768 = vld.sshfl [vmem:[#allocation1] sm:$0xff pattern:$0x75316420]
  %v4769 = vld.sshfl [vmem:[#allocation1 + $0x8] sm:$0xff pattern:$0x75316420]
  %v4770 = vld.sshfl [vmem:[#allocation1 + $0x10] sm:$0xff pattern:$0x75316420]
  %v4771 = vld.sshfl [vmem:[#allocation1 + $0x18] sm:$0xff pattern:$0x75316420]
  %v4772 = vld.sshfl [vmem:[#allocation1 + $0x20] sm:$0xff pattern:$0x75316420]
  %v4773 = vld.sshfl [vmem:[#allocation1 + $0x28] sm:$0xff pattern:$0x75316420]
  %v4774 = vld.sshfl [vmem:[#allocation1 + $0x30] sm:$0xff pattern:$0x75316420]
  %v4775 = vld.sshfl [vmem:[#allocation1 + $0x38] sm:$0xff pattern:$0x75316420]
  %4776 = vst [vmem:[#allocation1] ss:$2 sm:$0xff] %v4660
  %4777 = vst [vmem:[%s4722] ss:$2 sm:$0xff] %v4664
  %4778 = vst [vmem:[%s4724] ss:$2 sm:$0xff] %v4668
  %4779 = vst [vmem:[%s4726] ss:$2 sm:$0xff] %v4672
  %4780 = vst [vmem:[%s4728] ss:$2 sm:$0xff] %v4676
  %4781 = vst [vmem:[%s4730] ss:$2 sm:$0xff] %v4680
  %4782 = vst [vmem:[%s4732] ss:$2 sm:$0xff] %v4684
  %4783 = vst [vmem:[%s4734] ss:$2 sm:$0xff] %v4688
  %v4784 = vld.sshfl [vmem:[#allocation1] sm:$0xff pattern:$0x75316420]
  %v4785 = vld.sshfl [vmem:[#allocation1 + $0x8] sm:$0xff pattern:$0x75316420]
  %v4786 = vld.sshfl [vmem:[#allocation1 + $0x10] sm:$0xff pattern:$0x75316420]
  %v4787 = vld.sshfl [vmem:[#allocation1 + $0x18] sm:$0xff pattern:$0x75316420]
  %v4788 = vld.sshfl [vmem:[#allocation1 + $0x20] sm:$0xff pattern:$0x75316420]
  %v4789 = vld.sshfl [vmem:[#allocation1 + $0x28] sm:$0xff pattern:$0x75316420]
  %v4790 = vld.sshfl [vmem:[#allocation1 + $0x30] sm:$0xff pattern:$0x75316420]
  %v4791 = vld.sshfl [vmem:[#allocation1 + $0x38] sm:$0xff pattern:$0x75316420]
  %4824 = vrot.lane.b32.xlu0 %v4736, 127
  %v4825 = vpop.permute.xlu0 %4824
  %4826 = vrot.lane.b32.xlu0 %v4738, 127
  %v4827 = vpop.permute.xlu0 %4826
  %4828 = vrot.lane.b32.xlu0 %v4740, 127
  %v4829 = vpop.permute.xlu0 %4828
  %4830 = vrot.lane.b32.xlu0 %v4742, 127
  %v4831 = vpop.permute.xlu0 %4830
  %4832 = vrot.lane.b32.xlu0 %v4752, 127
  %v4833 = vpop.permute.xlu0 %4832
  %4834 = vrot.lane.b32.xlu0 %v4754, 127
  %v4835 = vpop.permute.xlu0 %4834
  %4836 = vrot.lane.b32.xlu0 %v4756, 127
  %v4837 = vpop.permute.xlu0 %4836
  %4838 = vrot.lane.b32.xlu0 %v4758, 127
  %v4839 = vpop.permute.xlu0 %4838
  %4840 = vrot.lane.b32.xlu0 %v4768, 127
  %v4841 = vpop.permute.xlu0 %4840
  %4842 = vrot.lane.b32.xlu0 %v4770, 127
  %v4843 = vpop.permute.xlu0 %4842
  %4844 = vrot.lane.b32.xlu0 %v4772, 127
  %v4845 = vpop.permute.xlu0 %4844
  %4846 = vrot.lane.b32.xlu0 %v4774, 127
  %v4847 = vpop.permute.xlu0 %4846
  %4848 = vrot.lane.b32.xlu0 %v4784, 127
  %v4849 = vpop.permute.xlu0 %4848
  %4850 = vrot.lane.b32.xlu0 %v4786, 127
  %v4851 = vpop.permute.xlu0 %4850
  %4852 = vrot.lane.b32.xlu0 %v4788, 127
  %v4853 = vpop.permute.xlu0 %4852
  %4854 = vrot.lane.b32.xlu0 %v4790, 127
  %v4855 = vpop.permute.xlu0 %4854
  %4856 = vrot.lane.b32.xlu0 %v4737, 127
  %v4857 = vpop.permute.xlu0 %4856
  %4858 = vrot.lane.b32.xlu0 %v4739, 127
  %v4859 = vpop.permute.xlu0 %4858
  %4860 = vrot.lane.b32.xlu0 %v4741, 127
  %v4861 = vpop.permute.xlu0 %4860
  %4862 = vrot.lane.b32.xlu0 %v4743, 127
  %v4863 = vpop.permute.xlu0 %4862
  %4864 = vrot.lane.b32.xlu0 %v4753, 127
  %v4865 = vpop.permute.xlu0 %4864
  %4866 = vrot.lane.b32.xlu0 %v4755, 127
  %v4867 = vpop.permute.xlu0 %4866
  %4868 = vrot.lane.b32.xlu0 %v4757, 127
  %v4869 = vpop.permute.xlu0 %4868
  %4870 = vrot.lane.b32.xlu0 %v4759, 127
  %v4871 = vpop.permute.xlu0 %4870
  %4872 = vrot.lane.b32.xlu0 %v4769, 127
  %v4873 = vpop.permute.xlu0 %4872
  %4874 = vrot.lane.b32.xlu0 %v4771, 127
  %v4875 = vpop.permute.xlu0 %4874
  %4876 = vrot.lane.b32.xlu0 %v4773, 127
  %v4877 = vpop.permute.xlu0 %4876
  %4878 = vrot.lane.b32.xlu0 %v4775, 127
  %v4879 = vpop.permute.xlu0 %4878
  %4880 = vrot.lane.b32.xlu0 %v4785, 127
  %v4881 = vpop.permute.xlu0 %4880
  %4882 = vrot.lane.b32.xlu0 %v4787, 127
  %v4883 = vpop.permute.xlu0 %4882
  %4884 = vrot.lane.b32.xlu0 %v4789, 127
  %v4885 = vpop.permute.xlu0 %4884
  %4886 = vrot.lane.b32.xlu0 %v4791, 127
  %v4887 = vpop.permute.xlu0 %4886
  %v4888 = vsel %vm1475, %v4825, %v4857
  %v4889 = vsel %vm1475, %v4827, %v4859
  %v4890 = vsel %vm1475, %v4829, %v4861
  %v4891 = vsel %vm1475, %v4831, %v4863
  %v4892 = vsel %vm1475, %v4833, %v4865
  %v4893 = vsel %vm1475, %v4835, %v4867
  %v4894 = vsel %vm1475, %v4837, %v4869
  %v4895 = vsel %vm1475, %v4839, %v4871
  %v4896 = vsel %vm1475, %v4841, %v4873
  %v4897 = vsel %vm1475, %v4843, %v4875
  %v4898 = vsel %vm1475, %v4845, %v4877
  %v4899 = vsel %vm1475, %v4847, %v4879
  %v4900 = vsel %vm1475, %v4849, %v4881
  %v4901 = vsel %vm1475, %v4851, %v4883
  %v4902 = vsel %vm1475, %v4853, %v4885
  %v4903 = vsel %vm1475, %v4855, %v4887
  %v4904 = vsel %vm1475, %v4857, %v4825
  %v4905 = vsel %vm1475, %v4859, %v4827
  %v4906 = vsel %vm1475, %v4861, %v4829
  %v4907 = vsel %vm1475, %v4863, %v4831
  %v4908 = vsel %vm1475, %v4865, %v4833
  %v4909 = vsel %vm1475, %v4867, %v4835
  %v4910 = vsel %vm1475, %v4869, %v4837
  %v4911 = vsel %vm1475, %v4871, %v4839
  %v4912 = vsel %vm1475, %v4873, %v4841
  %v4913 = vsel %vm1475, %v4875, %v4843
  %v4914 = vsel %vm1475, %v4877, %v4845
  %v4915 = vsel %vm1475, %v4879, %v4847
  %v4916 = vsel %vm1475, %v4881, %v4849
  %v4917 = vsel %vm1475, %v4883, %v4851
  %v4918 = vsel %vm1475, %v4885, %v4853
  %v4919 = vsel %vm1475, %v4887, %v4855
  %v4952 = vrot.slane %v4904, 4
  %v4953 = vrot.slane %v4905, 4
  %v4954 = vrot.slane %v4906, 4
  %v4955 = vrot.slane %v4907, 4
  %v4956 = vrot.slane %v4908, 4
  %v4957 = vrot.slane %v4909, 4
  %v4958 = vrot.slane %v4910, 4
  %v4959 = vrot.slane %v4911, 4
  %v4960 = vrot.slane %v4912, 4
  %v4961 = vrot.slane %v4913, 4
  %v4962 = vrot.slane %v4914, 4
  %v4963 = vrot.slane %v4915, 4
  %v4964 = vrot.slane %v4916, 4
  %v4965 = vrot.slane %v4917, 4
  %v4966 = vrot.slane %v4918, 4
  %v4967 = vrot.slane %v4919, 4
  %v4968 = vsel %vm3742, %v4888, %v4952
  %v4969 = vsel %vm3742, %v4952, %v4888
  %v4970 = vrot.slane %v4969, 4
  %v4971 = vsel %vm3742, %v4889, %v4953
  %v4972 = vsel %vm3742, %v4953, %v4889
  %v4973 = vrot.slane %v4972, 4
  %v4974 = vsel %vm3742, %v4890, %v4954
  %v4975 = vsel %vm3742, %v4954, %v4890
  %v4976 = vrot.slane %v4975, 4
  %v4977 = vsel %vm3742, %v4891, %v4955
  %v4978 = vsel %vm3742, %v4955, %v4891
  %v4979 = vrot.slane %v4978, 4
  %v4980 = vsel %vm3742, %v4892, %v4956
  %v4981 = vsel %vm3742, %v4956, %v4892
  %v4982 = vrot.slane %v4981, 4
  %v4983 = vsel %vm3742, %v4893, %v4957
  %v4984 = vsel %vm3742, %v4957, %v4893
  %v4985 = vrot.slane %v4984, 4
  %v4986 = vsel %vm3742, %v4894, %v4958
  %v4987 = vsel %vm3742, %v4958, %v4894
  %v4988 = vrot.slane %v4987, 4
  %v4989 = vsel %vm3742, %v4895, %v4959
  %v4990 = vsel %vm3742, %v4959, %v4895
  %v4991 = vrot.slane %v4990, 4
  %v4992 = vsel %vm3742, %v4896, %v4960
  %v4993 = vsel %vm3742, %v4960, %v4896
  %v4994 = vrot.slane %v4993, 4
  %v4995 = vsel %vm3742, %v4897, %v4961
  %v4996 = vsel %vm3742, %v4961, %v4897
  %v4997 = vrot.slane %v4996, 4
  %v4998 = vsel %vm3742, %v4898, %v4962
  %v4999 = vsel %vm3742, %v4962, %v4898
  %v5000 = vrot.slane %v4999, 4
  %v5001 = vsel %vm3742, %v4899, %v4963
  %v5002 = vsel %vm3742, %v4963, %v4899
  %v5003 = vrot.slane %v5002, 4
  %v5004 = vsel %vm3742, %v4900, %v4964
  %v5005 = vsel %vm3742, %v4964, %v4900
  %v5006 = vrot.slane %v5005, 4
  %v5007 = vsel %vm3742, %v4901, %v4965
  %v5008 = vsel %vm3742, %v4965, %v4901
  %v5009 = vrot.slane %v5008, 4
  %v5010 = vsel %vm3742, %v4902, %v4966
  %v5011 = vsel %vm3742, %v4966, %v4902
  %v5012 = vrot.slane %v5011, 4
  %v5013 = vsel %vm3742, %v4903, %v4967
  %v5014 = vsel %vm3742, %v4967, %v4903
  %v5015 = vrot.slane %v5014, 4
  %v5048 = vmax.f32 %v4564, %v4968
  %v5049 = vmax.f32 %v4568, %v4970
  %v5050 = vmax.f32 %v4572, %v4971
  %v5051 = vmax.f32 %v4576, %v4973
  %v5052 = vmax.f32 %v4580, %v4974
  %v5053 = vmax.f32 %v4584, %v4976
  %v5054 = vmax.f32 %v4588, %v4977
  %v5055 = vmax.f32 %v4592, %v4979
  %v5056 = vmax.f32 %v4596, %v4980
  %v5057 = vmax.f32 %v4600, %v4982
  %v5058 = vmax.f32 %v4604, %v4983
  %v5059 = vmax.f32 %v4608, %v4985
  %v5060 = vmax.f32 %v4612, %v4986
  %v5061 = vmax.f32 %v4616, %v4988
  %v5062 = vmax.f32 %v4620, %v4989
  %v5063 = vmax.f32 %v4624, %v4991
  %v5064 = vmax.f32 %v4628, %v4992
  %v5065 = vmax.f32 %v4632, %v4994
  %v5066 = vmax.f32 %v4636, %v4995
  %v5067 = vmax.f32 %v4640, %v4997
  %v5068 = vmax.f32 %v4644, %v4998
  %v5069 = vmax.f32 %v4648, %v5000
  %v5070 = vmax.f32 %v4652, %v5001
  %v5071 = vmax.f32 %v4656, %v5003
  %v5072 = vmax.f32 %v4660, %v5004
  %v5073 = vmax.f32 %v4664, %v5006
  %v5074 = vmax.f32 %v4668, %v5007
  %v5075 = vmax.f32 %v4672, %v5009
  %v5076 = vmax.f32 %v4676, %v5010
  %v5077 = vmax.f32 %v4680, %v5012
  %v5078 = vmax.f32 %v4684, %v5013
  %v5079 = vmax.f32 %v4688, %v5015
  %5112 = vst [vmem:[#allocation1] ss:$2 sm:$0xff] %v5048
  %s5113 = scalar_lea.vmem [#allocation1], 1
  %5114 = vst [vmem:[%s5113] ss:$2 sm:$0xff] %v5049
  %s5115 = scalar_lea.vmem [#allocation1], 16
  %5116 = vst [vmem:[%s5115] ss:$2 sm:$0xff] %v5050
  %s5117 = scalar_lea.vmem [#allocation1], 17
  %5118 = vst [vmem:[%s5117] ss:$2 sm:$0xff] %v5051
  %s5119 = scalar_lea.vmem [#allocation1], 32
  %5120 = vst [vmem:[%s5119] ss:$2 sm:$0xff] %v5052
  %s5121 = scalar_lea.vmem [#allocation1], 33
  %5122 = vst [vmem:[%s5121] ss:$2 sm:$0xff] %v5053
  %s5123 = scalar_lea.vmem [#allocation1], 48
  %5124 = vst [vmem:[%s5123] ss:$2 sm:$0xff] %v5054
  %s5125 = scalar_lea.vmem [#allocation1], 49
  %5126 = vst [vmem:[%s5125] ss:$2 sm:$0xff] %v5055
  %v5127 = vld.sshfl [vmem:[#allocation1] sm:$0xff pattern:$0x75316420]
  %v5128 = vld.sshfl [vmem:[#allocation1 + $0x8] sm:$0xff pattern:$0x75316420]
  %v5129 = vld.sshfl [vmem:[#allocation1 + $0x10] sm:$0xff pattern:$0x75316420]
  %v5130 = vld.sshfl [vmem:[#allocation1 + $0x18] sm:$0xff pattern:$0x75316420]
  %v5131 = vld.sshfl [vmem:[#allocation1 + $0x20] sm:$0xff pattern:$0x75316420]
  %v5132 = vld.sshfl [vmem:[#allocation1 + $0x28] sm:$0xff pattern:$0x75316420]
  %v5133 = vld.sshfl [vmem:[#allocation1 + $0x30] sm:$0xff pattern:$0x75316420]
  %v5134 = vld.sshfl [vmem:[#allocation1 + $0x38] sm:$0xff pattern:$0x75316420]
  %5135 = vst [vmem:[#allocation1] ss:$2 sm:$0xff] %v5056
  %5136 = vst [vmem:[%s5113] ss:$2 sm:$0xff] %v5057
  %5137 = vst [vmem:[%s5115] ss:$2 sm:$0xff] %v5058
  %5138 = vst [vmem:[%s5117] ss:$2 sm:$0xff] %v5059
  %5139 = vst [vmem:[%s5119] ss:$2 sm:$0xff] %v5060
  %5140 = vst [vmem:[%s5121] ss:$2 sm:$0xff] %v5061
  %5141 = vst [vmem:[%s5123] ss:$2 sm:$0xff] %v5062
  %5142 = vst [vmem:[%s5125] ss:$2 sm:$0xff] %v5063
  %v5143 = vld.sshfl [vmem:[#allocation1] sm:$0xff pattern:$0x75316420]
  %v5144 = vld.sshfl [vmem:[#allocation1 + $0x8] sm:$0xff pattern:$0x75316420]
  %v5145 = vld.sshfl [vmem:[#allocation1 + $0x10] sm:$0xff pattern:$0x75316420]
  %v5146 = vld.sshfl [vmem:[#allocation1 + $0x18] sm:$0xff pattern:$0x75316420]
  %v5147 = vld.sshfl [vmem:[#allocation1 + $0x20] sm:$0xff pattern:$0x75316420]
  %v5148 = vld.sshfl [vmem:[#allocation1 + $0x28] sm:$0xff pattern:$0x75316420]
  %v5149 = vld.sshfl [vmem:[#allocation1 + $0x30] sm:$0xff pattern:$0x75316420]
  %v5150 = vld.sshfl [vmem:[#allocation1 + $0x38] sm:$0xff pattern:$0x75316420]
  %5151 = vst [vmem:[#allocation1] ss:$2 sm:$0xff] %v5064
  %5152 = vst [vmem:[%s5113] ss:$2 sm:$0xff] %v5065
  %5153 = vst [vmem:[%s5115] ss:$2 sm:$0xff] %v5066
  %5154 = vst [vmem:[%s5117] ss:$2 sm:$0xff] %v5067
  %5155 = vst [vmem:[%s5119] ss:$2 sm:$0xff] %v5068
  %5156 = vst [vmem:[%s5121] ss:$2 sm:$0xff] %v5069
  %5157 = vst [vmem:[%s5123] ss:$2 sm:$0xff] %v5070
  %5158 = vst [vmem:[%s5125] ss:$2 sm:$0xff] %v5071
  %v5159 = vld.sshfl [vmem:[#allocation1] sm:$0xff pattern:$0x75316420]
  %v5160 = vld.sshfl [vmem:[#allocation1 + $0x8] sm:$0xff pattern:$0x75316420]
  %v5161 = vld.sshfl [vmem:[#allocation1 + $0x10] sm:$0xff pattern:$0x75316420]
  %v5162 = vld.sshfl [vmem:[#allocation1 + $0x18] sm:$0xff pattern:$0x75316420]
  %v5163 = vld.sshfl [vmem:[#allocation1 + $0x20] sm:$0xff pattern:$0x75316420]
  %v5164 = vld.sshfl [vmem:[#allocation1 + $0x28] sm:$0xff pattern:$0x75316420]
  %v5165 = vld.sshfl [vmem:[#allocation1 + $0x30] sm:$0xff pattern:$0x75316420]
  %v5166 = vld.sshfl [vmem:[#allocation1 + $0x38] sm:$0xff pattern:$0x75316420]
  %5167 = vst [vmem:[#allocation1] ss:$2 sm:$0xff] %v5072
  %5168 = vst [vmem:[%s5113] ss:$2 sm:$0xff] %v5073
  %5169 = vst [vmem:[%s5115] ss:$2 sm:$0xff] %v5074
  %5170 = vst [vmem:[%s5117] ss:$2 sm:$0xff] %v5075
  %5171 = vst [vmem:[%s5119] ss:$2 sm:$0xff] %v5076
  %5172 = vst [vmem:[%s5121] ss:$2 sm:$0xff] %v5077
  %5173 = vst [vmem:[%s5123] ss:$2 sm:$0xff] %v5078
  %5174 = vst [vmem:[%s5125] ss:$2 sm:$0xff] %v5079
  %v5175 = vld.sshfl [vmem:[#allocation1] sm:$0xff pattern:$0x75316420]
  %v5176 = vld.sshfl [vmem:[#allocation1 + $0x8] sm:$0xff pattern:$0x75316420]
  %v5177 = vld.sshfl [vmem:[#allocation1 + $0x10] sm:$0xff pattern:$0x75316420]
  %v5178 = vld.sshfl [vmem:[#allocation1 + $0x18] sm:$0xff pattern:$0x75316420]
  %v5179 = vld.sshfl [vmem:[#allocation1 + $0x20] sm:$0xff pattern:$0x75316420]
  %v5180 = vld.sshfl [vmem:[#allocation1 + $0x28] sm:$0xff pattern:$0x75316420]
  %v5181 = vld.sshfl [vmem:[#allocation1 + $0x30] sm:$0xff pattern:$0x75316420]
  %v5182 = vld.sshfl [vmem:[#allocation1 + $0x38] sm:$0xff pattern:$0x75316420]
  %v5215 = vpack.c.bf16 %v5129, %v5127
  %v5216 = vpack.c.bf16 %v5130, %v5128
  %v5217 = vpack.c.bf16 %v5133, %v5131
  %v5218 = vpack.c.bf16 %v5134, %v5132
  %v5219 = vpack.c.bf16 %v5145, %v5143
  %v5220 = vpack.c.bf16 %v5146, %v5144
  %v5221 = vpack.c.bf16 %v5149, %v5147
  %v5222 = vpack.c.bf16 %v5150, %v5148
  %v5223 = vpack.c.bf16 %v5161, %v5159
  %v5224 = vpack.c.bf16 %v5162, %v5160
  %v5225 = vpack.c.bf16 %v5165, %v5163
  %v5226 = vpack.c.bf16 %v5166, %v5164
  %v5227 = vpack.c.bf16 %v5177, %v5175
  %v5228 = vpack.c.bf16 %v5178, %v5176
  %v5229 = vpack.c.bf16 %v5181, %v5179
  %v5230 = vpack.c.bf16 %v5182, %v5180
  %v5231 = vld [vmem:[%s6] sm:$0xff]
  %v5232 = vld [vmem:[%s6 + $0x8] sm:$0xff]
  %v5233 = vld [vmem:[%s6 + $0x10] sm:$0xff]
  %v5234 = vld [vmem:[%s6 + $0x18] sm:$0xff]
  %v5235 = vld [vmem:[%s6 + $0x20] sm:$0xff]
  %v5236 = vld [vmem:[%s6 + $0x28] sm:$0xff]
  %v5237 = vld [vmem:[%s6 + $0x30] sm:$0xff]
  %v5238 = vld [vmem:[%s6 + $0x38] sm:$0xff]
  %v5239 = vld [vmem:[%s6 + $0x40] sm:$0xff]
  %v5240 = vld [vmem:[%s6 + $0x48] sm:$0xff]
  %v5241 = vld [vmem:[%s6 + $0x50] sm:$0xff]
  %v5242 = vld [vmem:[%s6 + $0x58] sm:$0xff]
  %v5243 = vld [vmem:[%s6 + $0x60] sm:$0xff]
  %v5244 = vld [vmem:[%s6 + $0x68] sm:$0xff]
  %v5245 = vld [vmem:[%s6 + $0x70] sm:$0xff]
  %v5246 = vld [vmem:[%s6 + $0x78] sm:$0xff]
  %v5247 = vld [vmem:[%s6 + $0x80] sm:$0xff]
  %v5248 = vld [vmem:[%s6 + $0x88] sm:$0xff]
  %v5249 = vld [vmem:[%s6 + $0x90] sm:$0xff]
  %v5250 = vld [vmem:[%s6 + $0x98] sm:$0xff]
  %v5251 = vld [vmem:[%s6 + $0xa0] sm:$0xff]
  %v5252 = vld [vmem:[%s6 + $0xa8] sm:$0xff]
  %v5253 = vld [vmem:[%s6 + $0xb0] sm:$0xff]
  %v5254 = vld [vmem:[%s6 + $0xb8] sm:$0xff]
  %v5255 = vld [vmem:[%s6 + $0xc0] sm:$0xff]
  %v5256 = vld [vmem:[%s6 + $0xc8] sm:$0xff]
  %v5257 = vld [vmem:[%s6 + $0xd0] sm:$0xff]
  %v5258 = vld [vmem:[%s6 + $0xd8] sm:$0xff]
  %v5259 = vld [vmem:[%s6 + $0xe0] sm:$0xff]
  %v5260 = vld [vmem:[%s6 + $0xe8] sm:$0xff]
  %v5261 = vld [vmem:[%s6 + $0xf0] sm:$0xff]
  %v5262 = vld [vmem:[%s6 + $0xf8] sm:$0xff]
  %v5295 = vunpack.c.l.b16 %v5231
  %v5296 = vunpack.c.h.b16 %v5231
  %v5297 = vunpack.c.l.b16 %v5232
  %v5298 = vunpack.c.h.b16 %v5232
  %v5299 = vunpack.c.l.b16 %v5233
  %v5300 = vunpack.c.h.b16 %v5233
  %v5301 = vunpack.c.l.b16 %v5234
  %v5302 = vunpack.c.h.b16 %v5234
  %v5303 = vunpack.c.l.b16 %v5235
  %v5304 = vunpack.c.h.b16 %v5235
  %v5305 = vunpack.c.l.b16 %v5236
  %v5306 = vunpack.c.h.b16 %v5236
  %v5307 = vunpack.c.l.b16 %v5237
  %v5308 = vunpack.c.h.b16 %v5237
  %v5309 = vunpack.c.l.b16 %v5238
  %v5310 = vunpack.c.h.b16 %v5238
  %v5311 = vunpack.c.l.b16 %v5239
  %v5312 = vunpack.c.h.b16 %v5239
  %v5313 = vunpack.c.l.b16 %v5240
  %v5314 = vunpack.c.h.b16 %v5240
  %v5315 = vunpack.c.l.b16 %v5241
  %v5316 = vunpack.c.h.b16 %v5241
  %v5317 = vunpack.c.l.b16 %v5242
  %v5318 = vunpack.c.h.b16 %v5242
  %v5319 = vunpack.c.l.b16 %v5243
  %v5320 = vunpack.c.h.b16 %v5243
  %v5321 = vunpack.c.l.b16 %v5244
  %v5322 = vunpack.c.h.b16 %v5244
  %v5323 = vunpack.c.l.b16 %v5245
  %v5324 = vunpack.c.h.b16 %v5245
  %v5325 = vunpack.c.l.b16 %v5246
  %v5326 = vunpack.c.h.b16 %v5246
  %v5327 = vunpack.c.l.b16 %v5247
  %v5328 = vunpack.c.h.b16 %v5247
  %v5329 = vunpack.c.l.b16 %v5248
  %v5330 = vunpack.c.h.b16 %v5248
  %v5331 = vunpack.c.l.b16 %v5249
  %v5332 = vunpack.c.h.b16 %v5249
  %v5333 = vunpack.c.l.b16 %v5250
  %v5334 = vunpack.c.h.b16 %v5250
  %v5335 = vunpack.c.l.b16 %v5251
  %v5336 = vunpack.c.h.b16 %v5251
  %v5337 = vunpack.c.l.b16 %v5252
  %v5338 = vunpack.c.h.b16 %v5252
  %v5339 = vunpack.c.l.b16 %v5253
  %v5340 = vunpack.c.h.b16 %v5253
  %v5341 = vunpack.c.l.b16 %v5254
  %v5342 = vunpack.c.h.b16 %v5254
  %v5343 = vunpack.c.l.b16 %v5255
  %v5344 = vunpack.c.h.b16 %v5255
  %v5345 = vunpack.c.l.b16 %v5256
  %v5346 = vunpack.c.h.b16 %v5256
  %v5347 = vunpack.c.l.b16 %v5257
  %v5348 = vunpack.c.h.b16 %v5257
  %v5349 = vunpack.c.l.b16 %v5258
  %v5350 = vunpack.c.h.b16 %v5258
  %v5351 = vunpack.c.l.b16 %v5259
  %v5352 = vunpack.c.h.b16 %v5259
  %v5353 = vunpack.c.l.b16 %v5260
  %v5354 = vunpack.c.h.b16 %v5260
  %v5355 = vunpack.c.l.b16 %v5261
  %v5356 = vunpack.c.h.b16 %v5261
  %v5357 = vunpack.c.l.b16 %v5262
  %v5358 = vunpack.c.h.b16 %v5262
  %v5359 = vpack.c.b16 %v5297, %v5295
  %v5360 = vpack.c.b16 %v5298, %v5296
  %v5361 = vpack.c.b16 %v5301, %v5299
  %v5362 = vpack.c.b16 %v5302, %v5300
  %v5363 = vpack.c.b16 %v5305, %v5303
  %v5364 = vpack.c.b16 %v5306, %v5304
  %v5365 = vpack.c.b16 %v5309, %v5307
  %v5366 = vpack.c.b16 %v5310, %v5308
  %v5367 = vpack.c.b16 %v5313, %v5311
  %v5368 = vpack.c.b16 %v5314, %v5312
  %v5369 = vpack.c.b16 %v5317, %v5315
  %v5370 = vpack.c.b16 %v5318, %v5316
  %v5371 = vpack.c.b16 %v5321, %v5319
  %v5372 = vpack.c.b16 %v5322, %v5320
  %v5373 = vpack.c.b16 %v5325, %v5323
  %v5374 = vpack.c.b16 %v5326, %v5324
  %v5375 = vpack.c.b16 %v5329, %v5327
  %v5376 = vpack.c.b16 %v5330, %v5328
  %v5377 = vpack.c.b16 %v5333, %v5331
  %v5378 = vpack.c.b16 %v5334, %v5332
  %v5379 = vpack.c.b16 %v5337, %v5335
  %v5380 = vpack.c.b16 %v5338, %v5336
  %v5381 = vpack.c.b16 %v5341, %v5339
  %v5382 = vpack.c.b16 %v5342, %v5340
  %v5383 = vpack.c.b16 %v5345, %v5343
  %v5384 = vpack.c.b16 %v5346, %v5344
  %v5385 = vpack.c.b16 %v5349, %v5347
  %v5386 = vpack.c.b16 %v5350, %v5348
  %v5387 = vpack.c.b16 %v5353, %v5351
  %v5388 = vpack.c.b16 %v5354, %v5352
  %v5389 = vpack.c.b16 %v5357, %v5355
  %v5390 = vpack.c.b16 %v5358, %v5356
  %5423 = vmatpush.bf16.msra.mxu0 %v5373
  %5424 = vmatpush.bf16.msra.mxu0 %v5371
  %5425 = vmatpush.bf16.msra.mxu0 %v5369
  %5426 = vmatpush.bf16.msra.mxu0 %v5367
  %5427 = vmatpush.bf16.msra.mxu0 %v5365
  %5428 = vmatpush.bf16.msra.mxu0 %v5363
  %5429 = vmatpush.bf16.msra.mxu0 %v5361
  %5430 = vmatpush.bf16.msra.mxu0 %v5359
  %5431 = vmatmul.bf16.gmra.mxu0 %v5215
  %v5432 = vpop.f32.mrf.mxu0
  %v5433 = vadd.f32 0.0, %v5432
  %v5434 = vpop.f32.mrf.mxu0
  %v5435 = vadd.f32 0.0, %v5434
  %5436 = vmatmul.bf16.gmra.mxu0 %v5217
  %v5437 = vpop.f32.mrf.mxu0
  %v5438 = vadd.f32 0.0, %v5437
  %v5439 = vpop.f32.mrf.mxu0
  %v5440 = vadd.f32 0.0, %v5439
  %5441 = vmatmul.bf16.gmra.mxu0 %v5219
  %v5442 = vpop.f32.mrf.mxu0
  %v5443 = vadd.f32 0.0, %v5442
  %v5444 = vpop.f32.mrf.mxu0
  %v5445 = vadd.f32 0.0, %v5444
  %5446 = vmatmul.bf16.gmra.mxu0 %v5221
  %v5447 = vpop.f32.mrf.mxu0
  %v5448 = vadd.f32 0.0, %v5447
  %v5449 = vpop.f32.mrf.mxu0
  %v5450 = vadd.f32 0.0, %v5449
  %5451 = vmatmul.bf16.gmra.mxu0 %v5223
  %v5452 = vpop.f32.mrf.mxu0
  %v5453 = vadd.f32 0.0, %v5452
  %v5454 = vpop.f32.mrf.mxu0
  %v5455 = vadd.f32 0.0, %v5454
  %5456 = vmatmul.bf16.gmra.mxu0 %v5225
  %v5457 = vpop.f32.mrf.mxu0
  %v5458 = vadd.f32 0.0, %v5457
  %v5459 = vpop.f32.mrf.mxu0
  %v5460 = vadd.f32 0.0, %v5459
  %5461 = vmatmul.bf16.gmra.mxu0 %v5227
  %v5462 = vpop.f32.mrf.mxu0
  %v5463 = vadd.f32 0.0, %v5462
  %v5464 = vpop.f32.mrf.mxu0
  %v5465 = vadd.f32 0.0, %v5464
  %5466 = vmatmul.bf16.gmra.mxu0 %v5229
  %v5467 = vpop.f32.mrf.mxu0
  %v5468 = vadd.f32 0.0, %v5467
  %v5469 = vpop.f32.mrf.mxu0
  %v5470 = vadd.f32 0.0, %v5469
  %5471 = vdwg.mxu0
  %5472 = vmatpush.bf16.msra.mxu0 %v5389
  %5473 = vmatpush.bf16.msra.mxu0 %v5387
  %5474 = vmatpush.bf16.msra.mxu0 %v5385
  %5475 = vmatpush.bf16.msra.mxu0 %v5383
  %5476 = vmatpush.bf16.msra.mxu0 %v5381
  %5477 = vmatpush.bf16.msra.mxu0 %v5379
  %5478 = vmatpush.bf16.msra.mxu0 %v5377
  %5479 = vmatpush.bf16.msra.mxu0 %v5375
  %5480 = vmatmul.bf16.gmra.mxu0 %v5216
  %v5481 = vpop.f32.mrf.mxu0
  %v5482 = vadd.f32 %v5433, %v5481
  %v5483 = vpop.f32.mrf.mxu0
  %v5484 = vadd.f32 %v5435, %v5483
  %5485 = vmatmul.bf16.gmra.mxu0 %v5218
  %v5486 = vpop.f32.mrf.mxu0
  %v5487 = vadd.f32 %v5438, %v5486
  %v5488 = vpop.f32.mrf.mxu0
  %v5489 = vadd.f32 %v5440, %v5488
  %5490 = vmatmul.bf16.gmra.mxu0 %v5220
  %v5491 = vpop.f32.mrf.mxu0
  %v5492 = vadd.f32 %v5443, %v5491
  %v5493 = vpop.f32.mrf.mxu0
  %v5494 = vadd.f32 %v5445, %v5493
  %5495 = vmatmul.bf16.gmra.mxu0 %v5222
  %v5496 = vpop.f32.mrf.mxu0
  %v5497 = vadd.f32 %v5448, %v5496
  %v5498 = vpop.f32.mrf.mxu0
  %v5499 = vadd.f32 %v5450, %v5498
  %5500 = vmatmul.bf16.gmra.mxu0 %v5224
  %v5501 = vpop.f32.mrf.mxu0
  %v5502 = vadd.f32 %v5453, %v5501
  %v5503 = vpop.f32.mrf.mxu0
  %v5504 = vadd.f32 %v5455, %v5503
  %5505 = vmatmul.bf16.gmra.mxu0 %v5226
  %v5506 = vpop.f32.mrf.mxu0
  %v5507 = vadd.f32 %v5458, %v5506
  %v5508 = vpop.f32.mrf.mxu0
  %v5509 = vadd.f32 %v5460, %v5508
  %5510 = vmatmul.bf16.gmra.mxu0 %v5228
  %v5511 = vpop.f32.mrf.mxu0
  %v5512 = vadd.f32 %v5463, %v5511
  %v5513 = vpop.f32.mrf.mxu0
  %v5514 = vadd.f32 %v5465, %v5513
  %5515 = vmatmul.bf16.gmra.mxu0 %v5230
  %v5516 = vpop.f32.mrf.mxu0
  %v5517 = vadd.f32 %v5468, %v5516
  %v5518 = vpop.f32.mrf.mxu0
  %v5519 = vadd.f32 %v5470, %v5518
  %5520 = vdwg.mxu0
  %5521 = vmatpush.bf16.msra.mxu0 %v5374
  %5522 = vmatpush.bf16.msra.mxu0 %v5372
  %5523 = vmatpush.bf16.msra.mxu0 %v5370
  %5524 = vmatpush.bf16.msra.mxu0 %v5368
  %5525 = vmatpush.bf16.msra.mxu0 %v5366
  %5526 = vmatpush.bf16.msra.mxu0 %v5364
  %5527 = vmatpush.bf16.msra.mxu0 %v5362
  %5528 = vmatpush.bf16.msra.mxu0 %v5360
  %5529 = vmatmul.bf16.gmra.mxu0 %v5215
  %v5530 = vpop.f32.mrf.mxu0
  %v5531 = vadd.f32 0.0, %v5530
  %v5532 = vpop.f32.mrf.mxu0
  %v5533 = vadd.f32 0.0, %v5532
  %5534 = vmatmul.bf16.gmra.mxu0 %v5217
  %v5535 = vpop.f32.mrf.mxu0
  %v5536 = vadd.f32 0.0, %v5535
  %v5537 = vpop.f32.mrf.mxu0
  %v5538 = vadd.f32 0.0, %v5537
  %5539 = vmatmul.bf16.gmra.mxu0 %v5219
  %v5540 = vpop.f32.mrf.mxu0
  %v5541 = vadd.f32 0.0, %v5540
  %v5542 = vpop.f32.mrf.mxu0
  %v5543 = vadd.f32 0.0, %v5542
  %5544 = vmatmul.bf16.gmra.mxu0 %v5221
  %v5545 = vpop.f32.mrf.mxu0
  %v5546 = vadd.f32 0.0, %v5545
  %v5547 = vpop.f32.mrf.mxu0
  %v5548 = vadd.f32 0.0, %v5547
  %5549 = vmatmul.bf16.gmra.mxu0 %v5223
  %v5550 = vpop.f32.mrf.mxu0
  %v5551 = vadd.f32 0.0, %v5550
  %v5552 = vpop.f32.mrf.mxu0
  %v5553 = vadd.f32 0.0, %v5552
  %5554 = vmatmul.bf16.gmra.mxu0 %v5225
  %v5555 = vpop.f32.mrf.mxu0
  %v5556 = vadd.f32 0.0, %v5555
  %v5557 = vpop.f32.mrf.mxu0
  %v5558 = vadd.f32 0.0, %v5557
  %5559 = vmatmul.bf16.gmra.mxu0 %v5227
  %v5560 = vpop.f32.mrf.mxu0
  %v5561 = vadd.f32 0.0, %v5560
  %v5562 = vpop.f32.mrf.mxu0
  %v5563 = vadd.f32 0.0, %v5562
  %5564 = vmatmul.bf16.gmra.mxu0 %v5229
  %v5565 = vpop.f32.mrf.mxu0
  %v5566 = vadd.f32 0.0, %v5565
  %v5567 = vpop.f32.mrf.mxu0
  %v5568 = vadd.f32 0.0, %v5567
  %5569 = vdwg.mxu0
  %5570 = vmatpush.bf16.msra.mxu0 %v5390
  %5571 = vmatpush.bf16.msra.mxu0 %v5388
  %5572 = vmatpush.bf16.msra.mxu0 %v5386
  %5573 = vmatpush.bf16.msra.mxu0 %v5384
  %5574 = vmatpush.bf16.msra.mxu0 %v5382
  %5575 = vmatpush.bf16.msra.mxu0 %v5380
  %5576 = vmatpush.bf16.msra.mxu0 %v5378
  %5577 = vmatpush.bf16.msra.mxu0 %v5376
  %5578 = vmatmul.bf16.gmra.mxu0 %v5216
  %v5579 = vpop.f32.mrf.mxu0
  %v5580 = vadd.f32 %v5531, %v5579
  %v5581 = vpop.f32.mrf.mxu0
  %v5582 = vadd.f32 %v5533, %v5581
  %5583 = vmatmul.bf16.gmra.mxu0 %v5218
  %v5584 = vpop.f32.mrf.mxu0
  %v5585 = vadd.f32 %v5536, %v5584
  %v5586 = vpop.f32.mrf.mxu0
  %v5587 = vadd.f32 %v5538, %v5586
  %5588 = vmatmul.bf16.gmra.mxu0 %v5220
  %v5589 = vpop.f32.mrf.mxu0
  %v5590 = vadd.f32 %v5541, %v5589
  %v5591 = vpop.f32.mrf.mxu0
  %v5592 = vadd.f32 %v5543, %v5591
  %5593 = vmatmul.bf16.gmra.mxu0 %v5222
  %v5594 = vpop.f32.mrf.mxu0
  %v5595 = vadd.f32 %v5546, %v5594
  %v5596 = vpop.f32.mrf.mxu0
  %v5597 = vadd.f32 %v5548, %v5596
  %5598 = vmatmul.bf16.gmra.mxu0 %v5224
  %v5599 = vpop.f32.mrf.mxu0
  %v5600 = vadd.f32 %v5551, %v5599
  %v5601 = vpop.f32.mrf.mxu0
  %v5602 = vadd.f32 %v5553, %v5601
  %5603 = vmatmul.bf16.gmra.mxu0 %v5226
  %v5604 = vpop.f32.mrf.mxu0
  %v5605 = vadd.f32 %v5556, %v5604
  %v5606 = vpop.f32.mrf.mxu0
  %v5607 = vadd.f32 %v5558, %v5606
  %5608 = vmatmul.bf16.gmra.mxu0 %v5228
  %v5609 = vpop.f32.mrf.mxu0
  %v5610 = vadd.f32 %v5561, %v5609
  %v5611 = vpop.f32.mrf.mxu0
  %v5612 = vadd.f32 %v5563, %v5611
  %5613 = vmatmul.bf16.gmra.mxu0 %v5230
  %v5614 = vpop.f32.mrf.mxu0
  %v5615 = vadd.f32 %v5566, %v5614
  %v5616 = vpop.f32.mrf.mxu0
  %v5617 = vadd.f32 %v5568, %v5616
  %5618 = vdwg.mxu0
  %v5619 = vpack.c.bf16 %v5580, %v5482
  %v5620 = vpack.c.bf16 %v5582, %v5484
  %v5621 = vpack.c.bf16 %v5585, %v5487
  %v5622 = vpack.c.bf16 %v5587, %v5489
  %v5623 = vpack.c.bf16 %v5590, %v5492
  %v5624 = vpack.c.bf16 %v5592, %v5494
  %v5625 = vpack.c.bf16 %v5595, %v5497
  %v5626 = vpack.c.bf16 %v5597, %v5499
  %v5627 = vpack.c.bf16 %v5600, %v5502
  %v5628 = vpack.c.bf16 %v5602, %v5504
  %v5629 = vpack.c.bf16 %v5605, %v5507
  %v5630 = vpack.c.bf16 %v5607, %v5509
  %v5631 = vpack.c.bf16 %v5610, %v5512
  %v5632 = vpack.c.bf16 %v5612, %v5514
  %v5633 = vpack.c.bf16 %v5615, %v5517
  %v5634 = vpack.c.bf16 %v5617, %v5519
  %v5635 = vrot.slane %v5623, 4
  %v5636 = vsel %vm2561, %v5635, %v5619
  %v5638 = vunpack.c.l.s4 1983009808
  %v5639 = vunpack.c.0.s8 %v5638
  %v5640 = vperm.slane %v5636, %v5639
  %v5641 = vrot.slane %v5625, 4
  %v5642 = vsel %vm2561, %v5641, %v5621
  %v5644 = vunpack.c.l.s4 1983009808
  %v5645 = vunpack.c.0.s8 %v5644
  %v5646 = vperm.slane %v5642, %v5645
  %v5647 = vrot.slane %v5646, 4
  %v5648 = vsel %vm2561, %v5647, %v5640
  %v5649 = vrot.slane %v5640, 4
  %v5650 = vsel %vm2561, %v5646, %v5649
  %v5652 = vunpack.c.l.s4 1934713408
  %v5653 = vunpack.c.0.s8 %v5652
  %v5654 = vperm.slane %v5648, %v5653
  %v5656 = vunpack.c.l.s4 1934713408
  %v5657 = vunpack.c.0.s8 %v5656
  %v5658 = vperm.slane %v5650, %v5657
  %v5659 = vrot.slane %v5654, 4
  %v5660 = vsel %vm2561, 0, %v5659
  %v5661 = vrot.slane %v5658, 4
  %v5662 = vsel %vm2561, 0, %v5661
  %v5663 = vrot.slane %v5624, 4
  %v5664 = vsel %vm2561, %v5663, %v5620
  %v5666 = vunpack.c.l.s4 1983009808
  %v5667 = vunpack.c.0.s8 %v5666
  %v5668 = vperm.slane %v5664, %v5667
  %v5669 = vrot.slane %v5626, 4
  %v5670 = vsel %vm2561, %v5669, %v5622
  %v5672 = vunpack.c.l.s4 1983009808
  %v5673 = vunpack.c.0.s8 %v5672
  %v5674 = vperm.slane %v5670, %v5673
  %v5675 = vrot.slane %v5674, 4
  %v5676 = vsel %vm2561, %v5675, %v5668
  %v5677 = vrot.slane %v5668, 4
  %v5678 = vsel %vm2561, %v5674, %v5677
  %v5680 = vunpack.c.l.s4 1934713408
  %v5681 = vunpack.c.0.s8 %v5680
  %v5682 = vperm.slane %v5676, %v5681
  %v5684 = vunpack.c.l.s4 1934713408
  %v5685 = vunpack.c.0.s8 %v5684
  %v5686 = vperm.slane %v5678, %v5685
  %v5687 = vrot.slane %v5682, 4
  %v5688 = vsel %vm2561, 0, %v5687
  %v5689 = vrot.slane %v5686, 4
  %v5690 = vsel %vm2561, 0, %v5689
  %v5691 = vrot.slane %v5631, 4
  %v5692 = vsel %vm2561, %v5691, %v5627
  %v5694 = vunpack.c.l.s4 1983009808
  %v5695 = vunpack.c.0.s8 %v5694
  %v5696 = vperm.slane %v5692, %v5695
  %v5697 = vrot.slane %v5633, 4
  %v5698 = vsel %vm2561, %v5697, %v5629
  %v5700 = vunpack.c.l.s4 1983009808
  %v5701 = vunpack.c.0.s8 %v5700
  %v5702 = vperm.slane %v5698, %v5701
  %v5703 = vrot.slane %v5702, 4
  %v5704 = vsel %vm2561, %v5703, %v5696
  %v5705 = vrot.slane %v5696, 4
  %v5706 = vsel %vm2561, %v5702, %v5705
  %v5708 = vunpack.c.l.s4 1934713408
  %v5709 = vunpack.c.0.s8 %v5708
  %v5710 = vperm.slane %v5704, %v5709
  %v5712 = vunpack.c.l.s4 1934713408
  %v5713 = vunpack.c.0.s8 %v5712
  %v5714 = vperm.slane %v5706, %v5713
  %v5715 = vrot.slane %v5710, 4
  %v5716 = vsel %vm2561, 0, %v5715
  %v5717 = vrot.slane %v5714, 4
  %v5718 = vsel %vm2561, 0, %v5717
  %v5719 = vrot.slane %v5632, 4
  %v5720 = vsel %vm2561, %v5719, %v5628
  %v5722 = vunpack.c.l.s4 1983009808
  %v5723 = vunpack.c.0.s8 %v5722
  %v5724 = vperm.slane %v5720, %v5723
  %v5725 = vrot.slane %v5634, 4
  %v5726 = vsel %vm2561, %v5725, %v5630
  %v5728 = vunpack.c.l.s4 1983009808
  %v5729 = vunpack.c.0.s8 %v5728
  %v5730 = vperm.slane %v5726, %v5729
  %v5731 = vrot.slane %v5730, 4
  %v5732 = vsel %vm2561, %v5731, %v5724
  %v5733 = vrot.slane %v5724, 4
  %v5734 = vsel %vm2561, %v5730, %v5733
  %v5736 = vunpack.c.l.s4 1934713408
  %v5737 = vunpack.c.0.s8 %v5736
  %v5738 = vperm.slane %v5732, %v5737
  %v5740 = vunpack.c.l.s4 1934713408
  %v5741 = vunpack.c.0.s8 %v5740
  %v5742 = vperm.slane %v5734, %v5741
  %v5743 = vrot.slane %v5738, 4
  %v5744 = vsel %vm2561, 0, %v5743
  %v5745 = vrot.slane %v5742, 4
  %v5746 = vsel %vm2561, 0, %v5745
  %v5749 = vpack.i.b16 %v5682, %v5654
  %v5750 = vshrl.u32 %v5654, 16
  %v5751 = vshrl.u32 %v5682, 16
  %v5752 = vpack.i.b16 %v5751, %v5750
  %v5755 = vpack.i.b16 %v5688, %v5660
  %v5756 = vshrl.u32 %v5660, 16
  %v5757 = vshrl.u32 %v5688, 16
  %v5758 = vpack.i.b16 %v5757, %v5756
  %v5761 = vpack.i.b16 %v5686, %v5658
  %v5762 = vshrl.u32 %v5658, 16
  %v5763 = vshrl.u32 %v5686, 16
  %v5764 = vpack.i.b16 %v5763, %v5762
  %v5767 = vpack.i.b16 %v5690, %v5662
  %v5768 = vshrl.u32 %v5662, 16
  %v5769 = vshrl.u32 %v5690, 16
  %v5770 = vpack.i.b16 %v5769, %v5768
  %v5773 = vpack.i.b16 %v5738, %v5710
  %v5774 = vshrl.u32 %v5710, 16
  %v5775 = vshrl.u32 %v5738, 16
  %v5776 = vpack.i.b16 %v5775, %v5774
  %v5779 = vpack.i.b16 %v5744, %v5716
  %v5780 = vshrl.u32 %v5716, 16
  %v5781 = vshrl.u32 %v5744, 16
  %v5782 = vpack.i.b16 %v5781, %v5780
  %v5785 = vpack.i.b16 %v5742, %v5714
  %v5786 = vshrl.u32 %v5714, 16
  %v5787 = vshrl.u32 %v5742, 16
  %v5788 = vpack.i.b16 %v5787, %v5786
  %v5791 = vpack.i.b16 %v5746, %v5718
  %v5792 = vshrl.u32 %v5718, 16
  %v5793 = vshrl.u32 %v5746, 16
  %v5794 = vpack.i.b16 %v5793, %v5792
  %v5795 = vunpack.c.l.b16 %v5749
  %v5796 = vunpack.c.l.b16 %v5773
  %v5797 = vpack.c.b16 %v5796, %v5795
  %v5799 = vunpack.c.l.b16 %v5752
  %v5800 = vunpack.c.l.b16 %v5776
  %v5801 = vpack.c.b16 %v5800, %v5799
  %v5803 = vunpack.c.l.b16 %v5755
  %v5804 = vunpack.c.l.b16 %v5779
  %v5805 = vpack.c.b16 %v5804, %v5803
  %v5807 = vunpack.c.l.b16 %v5758
  %v5808 = vunpack.c.l.b16 %v5782
  %v5809 = vpack.c.b16 %v5808, %v5807
  %v5811 = vunpack.c.l.b16 %v5761
  %v5812 = vunpack.c.l.b16 %v5785
  %v5813 = vpack.c.b16 %v5812, %v5811
  %v5815 = vunpack.c.l.b16 %v5764
  %v5816 = vunpack.c.l.b16 %v5788
  %v5817 = vpack.c.b16 %v5816, %v5815
  %v5819 = vunpack.c.l.b16 %v5767
  %v5820 = vunpack.c.l.b16 %v5791
  %v5821 = vpack.c.b16 %v5820, %v5819
  %v5823 = vunpack.c.l.b16 %v5770
  %v5824 = vunpack.c.l.b16 %v5794
  %v5825 = vpack.c.b16 %v5824, %v5823
  %5843 = vrot.lane.b32.xlu0 %v5619, 127
  %v5844 = vpop.permute.xlu0 %5843
  %5845 = vrot.lane.b32.xlu0 %v5620, 127
  %v5846 = vpop.permute.xlu0 %5845
  %5847 = vrot.lane.b32.xlu0 %v5621, 127
  %v5848 = vpop.permute.xlu0 %5847
  %5849 = vrot.lane.b32.xlu0 %v5622, 127
  %v5850 = vpop.permute.xlu0 %5849
  %5851 = vrot.lane.b32.xlu0 %v5623, 127
  %v5852 = vpop.permute.xlu0 %5851
  %5853 = vrot.lane.b32.xlu0 %v5624, 127
  %v5854 = vpop.permute.xlu0 %5853
  %5855 = vrot.lane.b32.xlu0 %v5625, 127
  %v5856 = vpop.permute.xlu0 %5855
  %5857 = vrot.lane.b32.xlu0 %v5626, 127
  %v5858 = vpop.permute.xlu0 %5857
  %5859 = vrot.lane.b32.xlu0 %v5627, 127
  %v5860 = vpop.permute.xlu0 %5859
  %5861 = vrot.lane.b32.xlu0 %v5628, 127
  %v5862 = vpop.permute.xlu0 %5861
  %5863 = vrot.lane.b32.xlu0 %v5629, 127
  %v5864 = vpop.permute.xlu0 %5863
  %5865 = vrot.lane.b32.xlu0 %v5630, 127
  %v5866 = vpop.permute.xlu0 %5865
  %5867 = vrot.lane.b32.xlu0 %v5631, 127
  %v5868 = vpop.permute.xlu0 %5867
  %5869 = vrot.lane.b32.xlu0 %v5632, 127
  %v5870 = vpop.permute.xlu0 %5869
  %5871 = vrot.lane.b32.xlu0 %v5633, 127
  %v5872 = vpop.permute.xlu0 %5871
  %5873 = vrot.lane.b32.xlu0 %v5634, 127
  %v5874 = vpop.permute.xlu0 %5873
  %v5875 = vrot.slane %v5844, 4
  %v5876 = vrot.slane %v5846, 4
  %v5877 = vrot.slane %v5848, 4
  %v5878 = vrot.slane %v5850, 4
  %v5879 = vrot.slane %v5852, 4
  %v5880 = vrot.slane %v5854, 4
  %v5881 = vrot.slane %v5856, 4
  %v5882 = vrot.slane %v5858, 4
  %v5883 = vrot.slane %v5860, 4
  %v5884 = vrot.slane %v5862, 4
  %v5885 = vrot.slane %v5864, 4
  %v5886 = vrot.slane %v5866, 4
  %v5887 = vrot.slane %v5868, 4
  %v5888 = vrot.slane %v5870, 4
  %v5889 = vrot.slane %v5872, 4
  %v5890 = vrot.slane %v5874, 4
  %v5891 = vsel %vm2795, %v5844, %v5875
  %v5892 = vsel %vm2795, %v5846, %v5876
  %v5893 = vsel %vm2795, %v5848, %v5877
  %v5894 = vsel %vm2795, %v5850, %v5878
  %v5895 = vsel %vm2795, %v5852, %v5879
  %v5896 = vsel %vm2795, %v5854, %v5880
  %v5897 = vsel %vm2795, %v5856, %v5881
  %v5898 = vsel %vm2795, %v5858, %v5882
  %v5899 = vsel %vm2795, %v5860, %v5883
  %v5900 = vsel %vm2795, %v5862, %v5884
  %v5901 = vsel %vm2795, %v5864, %v5885
  %v5902 = vsel %vm2795, %v5866, %v5886
  %v5903 = vsel %vm2795, %v5868, %v5887
  %v5904 = vsel %vm2795, %v5870, %v5888
  %v5905 = vsel %vm2795, %v5872, %v5889
  %v5906 = vsel %vm2795, %v5874, %v5890
  %v5923 = vrot.slane %v5895, 4
  %v5924 = vsel %vm2561, %v5923, %v5891
  %v5926 = vunpack.c.l.s4 1983009808
  %v5927 = vunpack.c.0.s8 %v5926
  %v5928 = vperm.slane %v5924, %v5927
  %v5929 = vrot.slane %v5897, 4
  %v5930 = vsel %vm2561, %v5929, %v5893
  %v5932 = vunpack.c.l.s4 1983009808
  %v5933 = vunpack.c.0.s8 %v5932
  %v5934 = vperm.slane %v5930, %v5933
  %v5935 = vrot.slane %v5934, 4
  %v5936 = vsel %vm2561, %v5935, %v5928
  %v5937 = vrot.slane %v5928, 4
  %v5938 = vsel %vm2561, %v5934, %v5937
  %v5940 = vunpack.c.l.s4 1934713408
  %v5941 = vunpack.c.0.s8 %v5940
  %v5942 = vperm.slane %v5936, %v5941
  %v5944 = vunpack.c.l.s4 1934713408
  %v5945 = vunpack.c.0.s8 %v5944
  %v5946 = vperm.slane %v5938, %v5945
  %v5947 = vrot.slane %v5942, 4
  %v5948 = vsel %vm2561, 0, %v5947
  %v5949 = vrot.slane %v5946, 4
  %v5950 = vsel %vm2561, 0, %v5949
  %v5951 = vrot.slane %v5896, 4
  %v5952 = vsel %vm2561, %v5951, %v5892
  %v5954 = vunpack.c.l.s4 1983009808
  %v5955 = vunpack.c.0.s8 %v5954
  %v5956 = vperm.slane %v5952, %v5955
  %v5957 = vrot.slane %v5898, 4
  %v5958 = vsel %vm2561, %v5957, %v5894
  %v5960 = vunpack.c.l.s4 1983009808
  %v5961 = vunpack.c.0.s8 %v5960
  %v5962 = vperm.slane %v5958, %v5961
  %v5963 = vrot.slane %v5962, 4
  %v5964 = vsel %vm2561, %v5963, %v5956
  %v5965 = vrot.slane %v5956, 4
  %v5966 = vsel %vm2561, %v5962, %v5965
  %v5968 = vunpack.c.l.s4 1934713408
  %v5969 = vunpack.c.0.s8 %v5968
  %v5970 = vperm.slane %v5964, %v5969
  %v5972 = vunpack.c.l.s4 1934713408
  %v5973 = vunpack.c.0.s8 %v5972
  %v5974 = vperm.slane %v5966, %v5973
  %v5975 = vrot.slane %v5970, 4
  %v5976 = vsel %vm2561, 0, %v5975
  %v5977 = vrot.slane %v5974, 4
  %v5978 = vsel %vm2561, 0, %v5977
  %v5979 = vrot.slane %v5903, 4
  %v5980 = vsel %vm2561, %v5979, %v5899
  %v5982 = vunpack.c.l.s4 1983009808
  %v5983 = vunpack.c.0.s8 %v5982
  %v5984 = vperm.slane %v5980, %v5983
  %v5985 = vrot.slane %v5905, 4
  %v5986 = vsel %vm2561, %v5985, %v5901
  %v5988 = vunpack.c.l.s4 1983009808
  %v5989 = vunpack.c.0.s8 %v5988
  %v5990 = vperm.slane %v5986, %v5989
  %v5991 = vrot.slane %v5990, 4
  %v5992 = vsel %vm2561, %v5991, %v5984
  %v5993 = vrot.slane %v5984, 4
  %v5994 = vsel %vm2561, %v5990, %v5993
  %v5996 = vunpack.c.l.s4 1934713408
  %v5997 = vunpack.c.0.s8 %v5996
  %v5998 = vperm.slane %v5992, %v5997
  %v6000 = vunpack.c.l.s4 1934713408
  %v6001 = vunpack.c.0.s8 %v6000
  %v6002 = vperm.slane %v5994, %v6001
  %v6003 = vrot.slane %v5998, 4
  %v6004 = vsel %vm2561, 0, %v6003
  %v6005 = vrot.slane %v6002, 4
  %v6006 = vsel %vm2561, 0, %v6005
  %v6007 = vrot.slane %v5904, 4
  %v6008 = vsel %vm2561, %v6007, %v5900
  %v6010 = vunpack.c.l.s4 1983009808
  %v6011 = vunpack.c.0.s8 %v6010
  %v6012 = vperm.slane %v6008, %v6011
  %v6013 = vrot.slane %v5906, 4
  %v6014 = vsel %vm2561, %v6013, %v5902
  %v6016 = vunpack.c.l.s4 1983009808
  %v6017 = vunpack.c.0.s8 %v6016
  %v6018 = vperm.slane %v6014, %v6017
  %v6019 = vrot.slane %v6018, 4
  %v6020 = vsel %vm2561, %v6019, %v6012
  %v6021 = vrot.slane %v6012, 4
  %v6022 = vsel %vm2561, %v6018, %v6021
  %v6024 = vunpack.c.l.s4 1934713408
  %v6025 = vunpack.c.0.s8 %v6024
  %v6026 = vperm.slane %v6020, %v6025
  %v6028 = vunpack.c.l.s4 1934713408
  %v6029 = vunpack.c.0.s8 %v6028
  %v6030 = vperm.slane %v6022, %v6029
  %v6031 = vrot.slane %v6026, 4
  %v6032 = vsel %vm2561, 0, %v6031
  %v6033 = vrot.slane %v6030, 4
  %v6034 = vsel %vm2561, 0, %v6033
  %v6037 = vpack.i.b16 %v5970, %v5942
  %v6038 = vshrl.u32 %v5942, 16
  %v6039 = vshrl.u32 %v5970, 16
  %v6040 = vpack.i.b16 %v6039, %v6038
  %v6043 = vpack.i.b16 %v5976, %v5948
  %v6044 = vshrl.u32 %v5948, 16
  %v6045 = vshrl.u32 %v5976, 16
  %v6046 = vpack.i.b16 %v6045, %v6044
  %v6049 = vpack.i.b16 %v5974, %v5946
  %v6050 = vshrl.u32 %v5946, 16
  %v6051 = vshrl.u32 %v5974, 16
  %v6052 = vpack.i.b16 %v6051, %v6050
  %v6055 = vpack.i.b16 %v5978, %v5950
  %v6056 = vshrl.u32 %v5950, 16
  %v6057 = vshrl.u32 %v5978, 16
  %v6058 = vpack.i.b16 %v6057, %v6056
  %v6061 = vpack.i.b16 %v6026, %v5998
  %v6062 = vshrl.u32 %v5998, 16
  %v6063 = vshrl.u32 %v6026, 16
  %v6064 = vpack.i.b16 %v6063, %v6062
  %v6067 = vpack.i.b16 %v6032, %v6004
  %v6068 = vshrl.u32 %v6004, 16
  %v6069 = vshrl.u32 %v6032, 16
  %v6070 = vpack.i.b16 %v6069, %v6068
  %v6073 = vpack.i.b16 %v6030, %v6002
  %v6074 = vshrl.u32 %v6002, 16
  %v6075 = vshrl.u32 %v6030, 16
  %v6076 = vpack.i.b16 %v6075, %v6074
  %v6079 = vpack.i.b16 %v6034, %v6006
  %v6080 = vshrl.u32 %v6006, 16
  %v6081 = vshrl.u32 %v6034, 16
  %v6082 = vpack.i.b16 %v6081, %v6080
  %v6083 = vunpack.c.l.b16 %v6037
  %v6084 = vunpack.c.l.b16 %v6061
  %v6085 = vpack.c.b16 %v6084, %v6083
  %v6087 = vunpack.c.l.b16 %v6040
  %v6088 = vunpack.c.l.b16 %v6064
  %v6089 = vpack.c.b16 %v6088, %v6087
  %v6091 = vunpack.c.l.b16 %v6043
  %v6092 = vunpack.c.l.b16 %v6067
  %v6093 = vpack.c.b16 %v6092, %v6091
  %v6095 = vunpack.c.l.b16 %v6046
  %v6096 = vunpack.c.l.b16 %v6070
  %v6097 = vpack.c.b16 %v6096, %v6095
  %v6099 = vunpack.c.l.b16 %v6049
  %v6100 = vunpack.c.l.b16 %v6073
  %v6101 = vpack.c.b16 %v6100, %v6099
  %v6103 = vunpack.c.l.b16 %v6052
  %v6104 = vunpack.c.l.b16 %v6076
  %v6105 = vpack.c.b16 %v6104, %v6103
  %v6107 = vunpack.c.l.b16 %v6055
  %v6108 = vunpack.c.l.b16 %v6079
  %v6109 = vpack.c.b16 %v6108, %v6107
  %v6111 = vunpack.c.l.b16 %v6058
  %v6112 = vunpack.c.l.b16 %v6082
  %v6113 = vpack.c.b16 %v6112, %v6111
  %6115 = vrot.lane.b32.xlu0 %v5619, 126
  %v6116 = vpop.permute.xlu0 %6115
  %6117 = vrot.lane.b32.xlu0 %v5620, 126
  %v6118 = vpop.permute.xlu0 %6117
  %6119 = vrot.lane.b32.xlu0 %v5621, 126
  %v6120 = vpop.permute.xlu0 %6119
  %6121 = vrot.lane.b32.xlu0 %v5622, 126
  %v6122 = vpop.permute.xlu0 %6121
  %6123 = vrot.lane.b32.xlu0 %v5623, 126
  %v6124 = vpop.permute.xlu0 %6123
  %6125 = vrot.lane.b32.xlu0 %v5624, 126
  %v6126 = vpop.permute.xlu0 %6125
  %6127 = vrot.lane.b32.xlu0 %v5625, 126
  %v6128 = vpop.permute.xlu0 %6127
  %6129 = vrot.lane.b32.xlu0 %v5626, 126
  %v6130 = vpop.permute.xlu0 %6129
  %6131 = vrot.lane.b32.xlu0 %v5627, 126
  %v6132 = vpop.permute.xlu0 %6131
  %6133 = vrot.lane.b32.xlu0 %v5628, 126
  %v6134 = vpop.permute.xlu0 %6133
  %6135 = vrot.lane.b32.xlu0 %v5629, 126
  %v6136 = vpop.permute.xlu0 %6135
  %6137 = vrot.lane.b32.xlu0 %v5630, 126
  %v6138 = vpop.permute.xlu0 %6137
  %6139 = vrot.lane.b32.xlu0 %v5631, 126
  %v6140 = vpop.permute.xlu0 %6139
  %6141 = vrot.lane.b32.xlu0 %v5632, 126
  %v6142 = vpop.permute.xlu0 %6141
  %6143 = vrot.lane.b32.xlu0 %v5633, 126
  %v6144 = vpop.permute.xlu0 %6143
  %6145 = vrot.lane.b32.xlu0 %v5634, 126
  %v6146 = vpop.permute.xlu0 %6145
  %v6147 = vrot.slane %v6116, 4
  %v6148 = vrot.slane %v6118, 4
  %v6149 = vrot.slane %v6120, 4
  %v6150 = vrot.slane %v6122, 4
  %v6151 = vrot.slane %v6124, 4
  %v6152 = vrot.slane %v6126, 4
  %v6153 = vrot.slane %v6128, 4
  %v6154 = vrot.slane %v6130, 4
  %v6155 = vrot.slane %v6132, 4
  %v6156 = vrot.slane %v6134, 4
  %v6157 = vrot.slane %v6136, 4
  %v6158 = vrot.slane %v6138, 4
  %v6159 = vrot.slane %v6140, 4
  %v6160 = vrot.slane %v6142, 4
  %v6161 = vrot.slane %v6144, 4
  %v6162 = vrot.slane %v6146, 4
  %v6163 = vsel %vm3036, %v6116, %v6147
  %v6164 = vsel %vm3036, %v6118, %v6148
  %v6165 = vsel %vm3036, %v6120, %v6149
  %v6166 = vsel %vm3036, %v6122, %v6150
  %v6167 = vsel %vm3036, %v6124, %v6151
  %v6168 = vsel %vm3036, %v6126, %v6152
  %v6169 = vsel %vm3036, %v6128, %v6153
  %v6170 = vsel %vm3036, %v6130, %v6154
  %v6171 = vsel %vm3036, %v6132, %v6155
  %v6172 = vsel %vm3036, %v6134, %v6156
  %v6173 = vsel %vm3036, %v6136, %v6157
  %v6174 = vsel %vm3036, %v6138, %v6158
  %v6175 = vsel %vm3036, %v6140, %v6159
  %v6176 = vsel %vm3036, %v6142, %v6160
  %v6177 = vsel %vm3036, %v6144, %v6161
  %v6178 = vsel %vm3036, %v6146, %v6162
  %v6195 = vrot.slane %v6167, 4
  %v6196 = vsel %vm2561, %v6195, %v6163
  %v6198 = vunpack.c.l.s4 1983009808
  %v6199 = vunpack.c.0.s8 %v6198
  %v6200 = vperm.slane %v6196, %v6199
  %v6201 = vrot.slane %v6169, 4
  %v6202 = vsel %vm2561, %v6201, %v6165
  %v6204 = vunpack.c.l.s4 1983009808
  %v6205 = vunpack.c.0.s8 %v6204
  %v6206 = vperm.slane %v6202, %v6205
  %v6207 = vrot.slane %v6206, 4
  %v6208 = vsel %vm2561, %v6207, %v6200
  %v6209 = vrot.slane %v6200, 4
  %v6210 = vsel %vm2561, %v6206, %v6209
  %v6212 = vunpack.c.l.s4 1934713408
  %v6213 = vunpack.c.0.s8 %v6212
  %v6214 = vperm.slane %v6208, %v6213
  %v6216 = vunpack.c.l.s4 1934713408
  %v6217 = vunpack.c.0.s8 %v6216
  %v6218 = vperm.slane %v6210, %v6217
  %v6219 = vrot.slane %v6214, 4
  %v6220 = vsel %vm2561, 0, %v6219
  %v6221 = vrot.slane %v6218, 4
  %v6222 = vsel %vm2561, 0, %v6221
  %v6223 = vrot.slane %v6168, 4
  %v6224 = vsel %vm2561, %v6223, %v6164
  %v6226 = vunpack.c.l.s4 1983009808
  %v6227 = vunpack.c.0.s8 %v6226
  %v6228 = vperm.slane %v6224, %v6227
  %v6229 = vrot.slane %v6170, 4
  %v6230 = vsel %vm2561, %v6229, %v6166
  %v6232 = vunpack.c.l.s4 1983009808
  %v6233 = vunpack.c.0.s8 %v6232
  %v6234 = vperm.slane %v6230, %v6233
  %v6235 = vrot.slane %v6234, 4
  %v6236 = vsel %vm2561, %v6235, %v6228
  %v6237 = vrot.slane %v6228, 4
  %v6238 = vsel %vm2561, %v6234, %v6237
  %v6240 = vunpack.c.l.s4 1934713408
  %v6241 = vunpack.c.0.s8 %v6240
  %v6242 = vperm.slane %v6236, %v6241
  %v6244 = vunpack.c.l.s4 1934713408
  %v6245 = vunpack.c.0.s8 %v6244
  %v6246 = vperm.slane %v6238, %v6245
  %v6247 = vrot.slane %v6242, 4
  %v6248 = vsel %vm2561, 0, %v6247
  %v6249 = vrot.slane %v6246, 4
  %v6250 = vsel %vm2561, 0, %v6249
  %v6251 = vrot.slane %v6175, 4
  %v6252 = vsel %vm2561, %v6251, %v6171
  %v6254 = vunpack.c.l.s4 1983009808
  %v6255 = vunpack.c.0.s8 %v6254
  %v6256 = vperm.slane %v6252, %v6255
  %v6257 = vrot.slane %v6177, 4
  %v6258 = vsel %vm2561, %v6257, %v6173
  %v6260 = vunpack.c.l.s4 1983009808
  %v6261 = vunpack.c.0.s8 %v6260
  %v6262 = vperm.slane %v6258, %v6261
  %v6263 = vrot.slane %v6262, 4
  %v6264 = vsel %vm2561, %v6263, %v6256
  %v6265 = vrot.slane %v6256, 4
  %v6266 = vsel %vm2561, %v6262, %v6265
  %v6268 = vunpack.c.l.s4 1934713408
  %v6269 = vunpack.c.0.s8 %v6268
  %v6270 = vperm.slane %v6264, %v6269
  %v6272 = vunpack.c.l.s4 1934713408
  %v6273 = vunpack.c.0.s8 %v6272
  %v6274 = vperm.slane %v6266, %v6273
  %v6275 = vrot.slane %v6270, 4
  %v6276 = vsel %vm2561, 0, %v6275
  %v6277 = vrot.slane %v6274, 4
  %v6278 = vsel %vm2561, 0, %v6277
  %v6279 = vrot.slane %v6176, 4
  %v6280 = vsel %vm2561, %v6279, %v6172
  %v6282 = vunpack.c.l.s4 1983009808
  %v6283 = vunpack.c.0.s8 %v6282
  %v6284 = vperm.slane %v6280, %v6283
  %v6285 = vrot.slane %v6178, 4
  %v6286 = vsel %vm2561, %v6285, %v6174
  %v6288 = vunpack.c.l.s4 1983009808
  %v6289 = vunpack.c.0.s8 %v6288
  %v6290 = vperm.slane %v6286, %v6289
  %v6291 = vrot.slane %v6290, 4
  %v6292 = vsel %vm2561, %v6291, %v6284
  %v6293 = vrot.slane %v6284, 4
  %v6294 = vsel %vm2561, %v6290, %v6293
  %v6296 = vunpack.c.l.s4 1934713408
  %v6297 = vunpack.c.0.s8 %v6296
  %v6298 = vperm.slane %v6292, %v6297
  %v6300 = vunpack.c.l.s4 1934713408
  %v6301 = vunpack.c.0.s8 %v6300
  %v6302 = vperm.slane %v6294, %v6301
  %v6303 = vrot.slane %v6298, 4
  %v6304 = vsel %vm2561, 0, %v6303
  %v6305 = vrot.slane %v6302, 4
  %v6306 = vsel %vm2561, 0, %v6305
  %v6309 = vpack.i.b16 %v6242, %v6214
  %v6310 = vshrl.u32 %v6214, 16
  %v6311 = vshrl.u32 %v6242, 16
  %v6312 = vpack.i.b16 %v6311, %v6310
  %v6315 = vpack.i.b16 %v6248, %v6220
  %v6316 = vshrl.u32 %v6220, 16
  %v6317 = vshrl.u32 %v6248, 16
  %v6318 = vpack.i.b16 %v6317, %v6316
  %v6321 = vpack.i.b16 %v6246, %v6218
  %v6322 = vshrl.u32 %v6218, 16
  %v6323 = vshrl.u32 %v6246, 16
  %v6324 = vpack.i.b16 %v6323, %v6322
  %v6327 = vpack.i.b16 %v6250, %v6222
  %v6328 = vshrl.u32 %v6222, 16
  %v6329 = vshrl.u32 %v6250, 16
  %v6330 = vpack.i.b16 %v6329, %v6328
  %v6333 = vpack.i.b16 %v6298, %v6270
  %v6334 = vshrl.u32 %v6270, 16
  %v6335 = vshrl.u32 %v6298, 16
  %v6336 = vpack.i.b16 %v6335, %v6334
  %v6339 = vpack.i.b16 %v6304, %v6276
  %v6340 = vshrl.u32 %v6276, 16
  %v6341 = vshrl.u32 %v6304, 16
  %v6342 = vpack.i.b16 %v6341, %v6340
  %v6345 = vpack.i.b16 %v6302, %v6274
  %v6346 = vshrl.u32 %v6274, 16
  %v6347 = vshrl.u32 %v6302, 16
  %v6348 = vpack.i.b16 %v6347, %v6346
  %v6351 = vpack.i.b16 %v6306, %v6278
  %v6352 = vshrl.u32 %v6278, 16
  %v6353 = vshrl.u32 %v6306, 16
  %v6354 = vpack.i.b16 %v6353, %v6352
  %v6355 = vunpack.c.l.b16 %v6309
  %v6356 = vunpack.c.l.b16 %v6333
  %v6357 = vpack.c.b16 %v6356, %v6355
  %v6359 = vunpack.c.l.b16 %v6312
  %v6360 = vunpack.c.l.b16 %v6336
  %v6361 = vpack.c.b16 %v6360, %v6359
  %v6363 = vunpack.c.l.b16 %v6315
  %v6364 = vunpack.c.l.b16 %v6339
  %v6365 = vpack.c.b16 %v6364, %v6363
  %v6367 = vunpack.c.l.b16 %v6318
  %v6368 = vunpack.c.l.b16 %v6342
  %v6369 = vpack.c.b16 %v6368, %v6367
  %v6371 = vunpack.c.l.b16 %v6321
  %v6372 = vunpack.c.l.b16 %v6345
  %v6373 = vpack.c.b16 %v6372, %v6371
  %v6375 = vunpack.c.l.b16 %v6324
  %v6376 = vunpack.c.l.b16 %v6348
  %v6377 = vpack.c.b16 %v6376, %v6375
  %v6379 = vunpack.c.l.b16 %v6327
  %v6380 = vunpack.c.l.b16 %v6351
  %v6381 = vpack.c.b16 %v6380, %v6379
  %v6383 = vunpack.c.l.b16 %v6330
  %v6384 = vunpack.c.l.b16 %v6354
  %v6385 = vpack.c.b16 %v6384, %v6383
  %6387 = vrot.lane.b32.xlu0 %v5619, 125
  %v6388 = vpop.permute.xlu0 %6387
  %6389 = vrot.lane.b32.xlu0 %v5620, 125
  %v6390 = vpop.permute.xlu0 %6389
  %6391 = vrot.lane.b32.xlu0 %v5621, 125
  %v6392 = vpop.permute.xlu0 %6391
  %6393 = vrot.lane.b32.xlu0 %v5622, 125
  %v6394 = vpop.permute.xlu0 %6393
  %6395 = vrot.lane.b32.xlu0 %v5623, 125
  %v6396 = vpop.permute.xlu0 %6395
  %6397 = vrot.lane.b32.xlu0 %v5624, 125
  %v6398 = vpop.permute.xlu0 %6397
  %6399 = vrot.lane.b32.xlu0 %v5625, 125
  %v6400 = vpop.permute.xlu0 %6399
  %6401 = vrot.lane.b32.xlu0 %v5626, 125
  %v6402 = vpop.permute.xlu0 %6401
  %6403 = vrot.lane.b32.xlu0 %v5627, 125
  %v6404 = vpop.permute.xlu0 %6403
  %6405 = vrot.lane.b32.xlu0 %v5628, 125
  %v6406 = vpop.permute.xlu0 %6405
  %6407 = vrot.lane.b32.xlu0 %v5629, 125
  %v6408 = vpop.permute.xlu0 %6407
  %6409 = vrot.lane.b32.xlu0 %v5630, 125
  %v6410 = vpop.permute.xlu0 %6409
  %6411 = vrot.lane.b32.xlu0 %v5631, 125
  %v6412 = vpop.permute.xlu0 %6411
  %6413 = vrot.lane.b32.xlu0 %v5632, 125
  %v6414 = vpop.permute.xlu0 %6413
  %6415 = vrot.lane.b32.xlu0 %v5633, 125
  %v6416 = vpop.permute.xlu0 %6415
  %6417 = vrot.lane.b32.xlu0 %v5634, 125
  %v6418 = vpop.permute.xlu0 %6417
  %v6419 = vrot.slane %v6388, 4
  %v6420 = vrot.slane %v6390, 4
  %v6421 = vrot.slane %v6392, 4
  %v6422 = vrot.slane %v6394, 4
  %v6423 = vrot.slane %v6396, 4
  %v6424 = vrot.slane %v6398, 4
  %v6425 = vrot.slane %v6400, 4
  %v6426 = vrot.slane %v6402, 4
  %v6427 = vrot.slane %v6404, 4
  %v6428 = vrot.slane %v6406, 4
  %v6429 = vrot.slane %v6408, 4
  %v6430 = vrot.slane %v6410, 4
  %v6431 = vrot.slane %v6412, 4
  %v6432 = vrot.slane %v6414, 4
  %v6433 = vrot.slane %v6416, 4
  %v6434 = vrot.slane %v6418, 4
  %v6435 = vsel %vm3277, %v6388, %v6419
  %v6436 = vsel %vm3277, %v6390, %v6420
  %v6437 = vsel %vm3277, %v6392, %v6421
  %v6438 = vsel %vm3277, %v6394, %v6422
  %v6439 = vsel %vm3277, %v6396, %v6423
  %v6440 = vsel %vm3277, %v6398, %v6424
  %v6441 = vsel %vm3277, %v6400, %v6425
  %v6442 = vsel %vm3277, %v6402, %v6426
  %v6443 = vsel %vm3277, %v6404, %v6427
  %v6444 = vsel %vm3277, %v6406, %v6428
  %v6445 = vsel %vm3277, %v6408, %v6429
  %v6446 = vsel %vm3277, %v6410, %v6430
  %v6447 = vsel %vm3277, %v6412, %v6431
  %v6448 = vsel %vm3277, %v6414, %v6432
  %v6449 = vsel %vm3277, %v6416, %v6433
  %v6450 = vsel %vm3277, %v6418, %v6434
  %v6467 = vrot.slane %v6439, 4
  %v6468 = vsel %vm2561, %v6467, %v6435
  %v6470 = vunpack.c.l.s4 1983009808
  %v6471 = vunpack.c.0.s8 %v6470
  %v6472 = vperm.slane %v6468, %v6471
  %v6473 = vrot.slane %v6441, 4
  %v6474 = vsel %vm2561, %v6473, %v6437
  %v6476 = vunpack.c.l.s4 1983009808
  %v6477 = vunpack.c.0.s8 %v6476
  %v6478 = vperm.slane %v6474, %v6477
  %v6479 = vrot.slane %v6478, 4
  %v6480 = vsel %vm2561, %v6479, %v6472
  %v6481 = vrot.slane %v6472, 4
  %v6482 = vsel %vm2561, %v6478, %v6481
  %v6484 = vunpack.c.l.s4 1934713408
  %v6485 = vunpack.c.0.s8 %v6484
  %v6486 = vperm.slane %v6480, %v6485
  %v6488 = vunpack.c.l.s4 1934713408
  %v6489 = vunpack.c.0.s8 %v6488
  %v6490 = vperm.slane %v6482, %v6489
  %v6491 = vrot.slane %v6486, 4
  %v6492 = vsel %vm2561, 0, %v6491
  %v6493 = vrot.slane %v6490, 4
  %v6494 = vsel %vm2561, 0, %v6493
  %v6495 = vrot.slane %v6440, 4
  %v6496 = vsel %vm2561, %v6495, %v6436
  %v6498 = vunpack.c.l.s4 1983009808
  %v6499 = vunpack.c.0.s8 %v6498
  %v6500 = vperm.slane %v6496, %v6499
  %v6501 = vrot.slane %v6442, 4
  %v6502 = vsel %vm2561, %v6501, %v6438
  %v6504 = vunpack.c.l.s4 1983009808
  %v6505 = vunpack.c.0.s8 %v6504
  %v6506 = vperm.slane %v6502, %v6505
  %v6507 = vrot.slane %v6506, 4
  %v6508 = vsel %vm2561, %v6507, %v6500
  %v6509 = vrot.slane %v6500, 4
  %v6510 = vsel %vm2561, %v6506, %v6509
  %v6512 = vunpack.c.l.s4 1934713408
  %v6513 = vunpack.c.0.s8 %v6512
  %v6514 = vperm.slane %v6508, %v6513
  %v6516 = vunpack.c.l.s4 1934713408
  %v6517 = vunpack.c.0.s8 %v6516
  %v6518 = vperm.slane %v6510, %v6517
  %v6519 = vrot.slane %v6514, 4
  %v6520 = vsel %vm2561, 0, %v6519
  %v6521 = vrot.slane %v6518, 4
  %v6522 = vsel %vm2561, 0, %v6521
  %v6523 = vrot.slane %v6447, 4
  %v6524 = vsel %vm2561, %v6523, %v6443
  %v6526 = vunpack.c.l.s4 1983009808
  %v6527 = vunpack.c.0.s8 %v6526
  %v6528 = vperm.slane %v6524, %v6527
  %v6529 = vrot.slane %v6449, 4
  %v6530 = vsel %vm2561, %v6529, %v6445
  %v6532 = vunpack.c.l.s4 1983009808
  %v6533 = vunpack.c.0.s8 %v6532
  %v6534 = vperm.slane %v6530, %v6533
  %v6535 = vrot.slane %v6534, 4
  %v6536 = vsel %vm2561, %v6535, %v6528
  %v6537 = vrot.slane %v6528, 4
  %v6538 = vsel %vm2561, %v6534, %v6537
  %v6540 = vunpack.c.l.s4 1934713408
  %v6541 = vunpack.c.0.s8 %v6540
  %v6542 = vperm.slane %v6536, %v6541
  %v6544 = vunpack.c.l.s4 1934713408
  %v6545 = vunpack.c.0.s8 %v6544
  %v6546 = vperm.slane %v6538, %v6545
  %v6547 = vrot.slane %v6542, 4
  %v6548 = vsel %vm2561, 0, %v6547
  %v6549 = vrot.slane %v6546, 4
  %v6550 = vsel %vm2561, 0, %v6549
  %v6551 = vrot.slane %v6448, 4
  %v6552 = vsel %vm2561, %v6551, %v6444
  %v6554 = vunpack.c.l.s4 1983009808
  %v6555 = vunpack.c.0.s8 %v6554
  %v6556 = vperm.slane %v6552, %v6555
  %v6557 = vrot.slane %v6450, 4
  %v6558 = vsel %vm2561, %v6557, %v6446
  %v6560 = vunpack.c.l.s4 1983009808
  %v6561 = vunpack.c.0.s8 %v6560
  %v6562 = vperm.slane %v6558, %v6561
  %v6563 = vrot.slane %v6562, 4
  %v6564 = vsel %vm2561, %v6563, %v6556
  %v6565 = vrot.slane %v6556, 4
  %v6566 = vsel %vm2561, %v6562, %v6565
  %v6568 = vunpack.c.l.s4 1934713408
  %v6569 = vunpack.c.0.s8 %v6568
  %v6570 = vperm.slane %v6564, %v6569
  %v6572 = vunpack.c.l.s4 1934713408
  %v6573 = vunpack.c.0.s8 %v6572
  %v6574 = vperm.slane %v6566, %v6573
  %v6575 = vrot.slane %v6570, 4
  %v6576 = vsel %vm2561, 0, %v6575
  %v6577 = vrot.slane %v6574, 4
  %v6578 = vsel %vm2561, 0, %v6577
  %v6581 = vpack.i.b16 %v6514, %v6486
  %v6582 = vshrl.u32 %v6486, 16
  %v6583 = vshrl.u32 %v6514, 16
  %v6584 = vpack.i.b16 %v6583, %v6582
  %v6587 = vpack.i.b16 %v6520, %v6492
  %v6588 = vshrl.u32 %v6492, 16
  %v6589 = vshrl.u32 %v6520, 16
  %v6590 = vpack.i.b16 %v6589, %v6588
  %v6593 = vpack.i.b16 %v6518, %v6490
  %v6594 = vshrl.u32 %v6490, 16
  %v6595 = vshrl.u32 %v6518, 16
  %v6596 = vpack.i.b16 %v6595, %v6594
  %v6599 = vpack.i.b16 %v6522, %v6494
  %v6600 = vshrl.u32 %v6494, 16
  %v6601 = vshrl.u32 %v6522, 16
  %v6602 = vpack.i.b16 %v6601, %v6600
  %v6605 = vpack.i.b16 %v6570, %v6542
  %v6606 = vshrl.u32 %v6542, 16
  %v6607 = vshrl.u32 %v6570, 16
  %v6608 = vpack.i.b16 %v6607, %v6606
  %v6611 = vpack.i.b16 %v6576, %v6548
  %v6612 = vshrl.u32 %v6548, 16
  %v6613 = vshrl.u32 %v6576, 16
  %v6614 = vpack.i.b16 %v6613, %v6612
  %v6617 = vpack.i.b16 %v6574, %v6546
  %v6618 = vshrl.u32 %v6546, 16
  %v6619 = vshrl.u32 %v6574, 16
  %v6620 = vpack.i.b16 %v6619, %v6618
  %v6623 = vpack.i.b16 %v6578, %v6550
  %v6624 = vshrl.u32 %v6550, 16
  %v6625 = vshrl.u32 %v6578, 16
  %v6626 = vpack.i.b16 %v6625, %v6624
  %v6627 = vunpack.c.l.b16 %v6581
  %v6628 = vunpack.c.l.b16 %v6605
  %v6629 = vpack.c.b16 %v6628, %v6627
  %v6631 = vunpack.c.l.b16 %v6584
  %v6632 = vunpack.c.l.b16 %v6608
  %v6633 = vpack.c.b16 %v6632, %v6631
  %v6635 = vunpack.c.l.b16 %v6587
  %v6636 = vunpack.c.l.b16 %v6611
  %v6637 = vpack.c.b16 %v6636, %v6635
  %v6639 = vunpack.c.l.b16 %v6590
  %v6640 = vunpack.c.l.b16 %v6614
  %v6641 = vpack.c.b16 %v6640, %v6639
  %v6643 = vunpack.c.l.b16 %v6593
  %v6644 = vunpack.c.l.b16 %v6617
  %v6645 = vpack.c.b16 %v6644, %v6643
  %v6647 = vunpack.c.l.b16 %v6596
  %v6648 = vunpack.c.l.b16 %v6620
  %v6649 = vpack.c.b16 %v6648, %v6647
  %v6651 = vunpack.c.l.b16 %v6599
  %v6652 = vunpack.c.l.b16 %v6623
  %v6653 = vpack.c.b16 %v6652, %v6651
  %v6655 = vunpack.c.l.b16 %v6602
  %v6656 = vunpack.c.l.b16 %v6626
  %v6657 = vpack.c.b16 %v6656, %v6655
  %6659 = vrot.lane.b32.xlu0 %v5619, 124
  %v6660 = vpop.permute.xlu0 %6659
  %6661 = vrot.lane.b32.xlu0 %v5620, 124
  %v6662 = vpop.permute.xlu0 %6661
  %6663 = vrot.lane.b32.xlu0 %v5621, 124
  %v6664 = vpop.permute.xlu0 %6663
  %6665 = vrot.lane.b32.xlu0 %v5622, 124
  %v6666 = vpop.permute.xlu0 %6665
  %6667 = vrot.lane.b32.xlu0 %v5623, 124
  %v6668 = vpop.permute.xlu0 %6667
  %6669 = vrot.lane.b32.xlu0 %v5624, 124
  %v6670 = vpop.permute.xlu0 %6669
  %6671 = vrot.lane.b32.xlu0 %v5625, 124
  %v6672 = vpop.permute.xlu0 %6671
  %6673 = vrot.lane.b32.xlu0 %v5626, 124
  %v6674 = vpop.permute.xlu0 %6673
  %6675 = vrot.lane.b32.xlu0 %v5627, 124
  %v6676 = vpop.permute.xlu0 %6675
  %6677 = vrot.lane.b32.xlu0 %v5628, 124
  %v6678 = vpop.permute.xlu0 %6677
  %6679 = vrot.lane.b32.xlu0 %v5629, 124
  %v6680 = vpop.permute.xlu0 %6679
  %6681 = vrot.lane.b32.xlu0 %v5630, 124
  %v6682 = vpop.permute.xlu0 %6681
  %6683 = vrot.lane.b32.xlu0 %v5631, 124
  %v6684 = vpop.permute.xlu0 %6683
  %6685 = vrot.lane.b32.xlu0 %v5632, 124
  %v6686 = vpop.permute.xlu0 %6685
  %6687 = vrot.lane.b32.xlu0 %v5633, 124
  %v6688 = vpop.permute.xlu0 %6687
  %6689 = vrot.lane.b32.xlu0 %v5634, 124
  %v6690 = vpop.permute.xlu0 %6689
  %v6691 = vrot.slane %v6660, 4
  %v6692 = vrot.slane %v6662, 4
  %v6693 = vrot.slane %v6664, 4
  %v6694 = vrot.slane %v6666, 4
  %v6695 = vrot.slane %v6668, 4
  %v6696 = vrot.slane %v6670, 4
  %v6697 = vrot.slane %v6672, 4
  %v6698 = vrot.slane %v6674, 4
  %v6699 = vrot.slane %v6676, 4
  %v6700 = vrot.slane %v6678, 4
  %v6701 = vrot.slane %v6680, 4
  %v6702 = vrot.slane %v6682, 4
  %v6703 = vrot.slane %v6684, 4
  %v6704 = vrot.slane %v6686, 4
  %v6705 = vrot.slane %v6688, 4
  %v6706 = vrot.slane %v6690, 4
  %v6707 = vsel %vm3518, %v6660, %v6691
  %v6708 = vsel %vm3518, %v6662, %v6692
  %v6709 = vsel %vm3518, %v6664, %v6693
  %v6710 = vsel %vm3518, %v6666, %v6694
  %v6711 = vsel %vm3518, %v6668, %v6695
  %v6712 = vsel %vm3518, %v6670, %v6696
  %v6713 = vsel %vm3518, %v6672, %v6697
  %v6714 = vsel %vm3518, %v6674, %v6698
  %v6715 = vsel %vm3518, %v6676, %v6699
  %v6716 = vsel %vm3518, %v6678, %v6700
  %v6717 = vsel %vm3518, %v6680, %v6701
  %v6718 = vsel %vm3518, %v6682, %v6702
  %v6719 = vsel %vm3518, %v6684, %v6703
  %v6720 = vsel %vm3518, %v6686, %v6704
  %v6721 = vsel %vm3518, %v6688, %v6705
  %v6722 = vsel %vm3518, %v6690, %v6706
  %v6739 = vrot.slane %v6711, 4
  %v6740 = vsel %vm2561, %v6739, %v6707
  %v6742 = vunpack.c.l.s4 1983009808
  %v6743 = vunpack.c.0.s8 %v6742
  %v6744 = vperm.slane %v6740, %v6743
  %v6745 = vrot.slane %v6713, 4
  %v6746 = vsel %vm2561, %v6745, %v6709
  %v6748 = vunpack.c.l.s4 1983009808
  %v6749 = vunpack.c.0.s8 %v6748
  %v6750 = vperm.slane %v6746, %v6749
  %v6751 = vrot.slane %v6750, 4
  %v6752 = vsel %vm2561, %v6751, %v6744
  %v6753 = vrot.slane %v6744, 4
  %v6754 = vsel %vm2561, %v6750, %v6753
  %v6756 = vunpack.c.l.s4 1934713408
  %v6757 = vunpack.c.0.s8 %v6756
  %v6758 = vperm.slane %v6752, %v6757
  %v6760 = vunpack.c.l.s4 1934713408
  %v6761 = vunpack.c.0.s8 %v6760
  %v6762 = vperm.slane %v6754, %v6761
  %v6763 = vrot.slane %v6758, 4
  %v6764 = vsel %vm2561, 0, %v6763
  %v6765 = vrot.slane %v6762, 4
  %v6766 = vsel %vm2561, 0, %v6765
  %v6767 = vrot.slane %v6712, 4
  %v6768 = vsel %vm2561, %v6767, %v6708
  %v6770 = vunpack.c.l.s4 1983009808
  %v6771 = vunpack.c.0.s8 %v6770
  %v6772 = vperm.slane %v6768, %v6771
  %v6773 = vrot.slane %v6714, 4
  %v6774 = vsel %vm2561, %v6773, %v6710
  %v6776 = vunpack.c.l.s4 1983009808
  %v6777 = vunpack.c.0.s8 %v6776
  %v6778 = vperm.slane %v6774, %v6777
  %v6779 = vrot.slane %v6778, 4
  %v6780 = vsel %vm2561, %v6779, %v6772
  %v6781 = vrot.slane %v6772, 4
  %v6782 = vsel %vm2561, %v6778, %v6781
  %v6784 = vunpack.c.l.s4 1934713408
  %v6785 = vunpack.c.0.s8 %v6784
  %v6786 = vperm.slane %v6780, %v6785
  %v6788 = vunpack.c.l.s4 1934713408
  %v6789 = vunpack.c.0.s8 %v6788
  %v6790 = vperm.slane %v6782, %v6789
  %v6791 = vrot.slane %v6786, 4
  %v6792 = vsel %vm2561, 0, %v6791
  %v6793 = vrot.slane %v6790, 4
  %v6794 = vsel %vm2561, 0, %v6793
  %v6795 = vrot.slane %v6719, 4
  %v6796 = vsel %vm2561, %v6795, %v6715
  %v6798 = vunpack.c.l.s4 1983009808
  %v6799 = vunpack.c.0.s8 %v6798
  %v6800 = vperm.slane %v6796, %v6799
  %v6801 = vrot.slane %v6721, 4
  %v6802 = vsel %vm2561, %v6801, %v6717
  %v6804 = vunpack.c.l.s4 1983009808
  %v6805 = vunpack.c.0.s8 %v6804
  %v6806 = vperm.slane %v6802, %v6805
  %v6807 = vrot.slane %v6806, 4
  %v6808 = vsel %vm2561, %v6807, %v6800
  %v6809 = vrot.slane %v6800, 4
  %v6810 = vsel %vm2561, %v6806, %v6809
  %v6812 = vunpack.c.l.s4 1934713408
  %v6813 = vunpack.c.0.s8 %v6812
  %v6814 = vperm.slane %v6808, %v6813
  %v6816 = vunpack.c.l.s4 1934713408
  %v6817 = vunpack.c.0.s8 %v6816
  %v6818 = vperm.slane %v6810, %v6817
  %v6819 = vrot.slane %v6814, 4
  %v6820 = vsel %vm2561, 0, %v6819
  %v6821 = vrot.slane %v6818, 4
  %v6822 = vsel %vm2561, 0, %v6821
  %v6823 = vrot.slane %v6720, 4
  %v6824 = vsel %vm2561, %v6823, %v6716
  %v6826 = vunpack.c.l.s4 1983009808
  %v6827 = vunpack.c.0.s8 %v6826
  %v6828 = vperm.slane %v6824, %v6827
  %v6829 = vrot.slane %v6722, 4
  %v6830 = vsel %vm2561, %v6829, %v6718
  %v6832 = vunpack.c.l.s4 1983009808
  %v6833 = vunpack.c.0.s8 %v6832
  %v6834 = vperm.slane %v6830, %v6833
  %v6835 = vrot.slane %v6834, 4
  %v6836 = vsel %vm2561, %v6835, %v6828
  %v6837 = vrot.slane %v6828, 4
  %v6838 = vsel %vm2561, %v6834, %v6837
  %v6840 = vunpack.c.l.s4 1934713408
  %v6841 = vunpack.c.0.s8 %v6840
  %v6842 = vperm.slane %v6836, %v6841
  %v6844 = vunpack.c.l.s4 1934713408
  %v6845 = vunpack.c.0.s8 %v6844
  %v6846 = vperm.slane %v6838, %v6845
  %v6847 = vrot.slane %v6842, 4
  %v6848 = vsel %vm2561, 0, %v6847
  %v6849 = vrot.slane %v6846, 4
  %v6850 = vsel %vm2561, 0, %v6849
  %v6853 = vpack.i.b16 %v6786, %v6758
  %v6854 = vshrl.u32 %v6758, 16
  %v6855 = vshrl.u32 %v6786, 16
  %v6856 = vpack.i.b16 %v6855, %v6854
  %v6859 = vpack.i.b16 %v6792, %v6764
  %v6860 = vshrl.u32 %v6764, 16
  %v6861 = vshrl.u32 %v6792, 16
  %v6862 = vpack.i.b16 %v6861, %v6860
  %v6865 = vpack.i.b16 %v6790, %v6762
  %v6866 = vshrl.u32 %v6762, 16
  %v6867 = vshrl.u32 %v6790, 16
  %v6868 = vpack.i.b16 %v6867, %v6866
  %v6871 = vpack.i.b16 %v6794, %v6766
  %v6872 = vshrl.u32 %v6766, 16
  %v6873 = vshrl.u32 %v6794, 16
  %v6874 = vpack.i.b16 %v6873, %v6872
  %v6877 = vpack.i.b16 %v6842, %v6814
  %v6878 = vshrl.u32 %v6814, 16
  %v6879 = vshrl.u32 %v6842, 16
  %v6880 = vpack.i.b16 %v6879, %v6878
  %v6883 = vpack.i.b16 %v6848, %v6820
  %v6884 = vshrl.u32 %v6820, 16
  %v6885 = vshrl.u32 %v6848, 16
  %v6886 = vpack.i.b16 %v6885, %v6884
  %v6889 = vpack.i.b16 %v6846, %v6818
  %v6890 = vshrl.u32 %v6818, 16
  %v6891 = vshrl.u32 %v6846, 16
  %v6892 = vpack.i.b16 %v6891, %v6890
  %v6895 = vpack.i.b16 %v6850, %v6822
  %v6896 = vshrl.u32 %v6822, 16
  %v6897 = vshrl.u32 %v6850, 16
  %v6898 = vpack.i.b16 %v6897, %v6896
  %v6899 = vunpack.c.l.b16 %v6853
  %v6900 = vunpack.c.l.b16 %v6877
  %v6901 = vpack.c.b16 %v6900, %v6899
  %v6903 = vunpack.c.l.b16 %v6856
  %v6904 = vunpack.c.l.b16 %v6880
  %v6905 = vpack.c.b16 %v6904, %v6903
  %v6907 = vunpack.c.l.b16 %v6859
  %v6908 = vunpack.c.l.b16 %v6883
  %v6909 = vpack.c.b16 %v6908, %v6907
  %v6911 = vunpack.c.l.b16 %v6862
  %v6912 = vunpack.c.l.b16 %v6886
  %v6913 = vpack.c.b16 %v6912, %v6911
  %v6915 = vunpack.c.l.b16 %v6865
  %v6916 = vunpack.c.l.b16 %v6889
  %v6917 = vpack.c.b16 %v6916, %v6915
  %v6919 = vunpack.c.l.b16 %v6868
  %v6920 = vunpack.c.l.b16 %v6892
  %v6921 = vpack.c.b16 %v6920, %v6919
  %v6923 = vunpack.c.l.b16 %v6871
  %v6924 = vunpack.c.l.b16 %v6895
  %v6925 = vpack.c.b16 %v6924, %v6923
  %v6927 = vunpack.c.l.b16 %v6874
  %v6928 = vunpack.c.l.b16 %v6898
  %v6929 = vpack.c.b16 %v6928, %v6927
  %v6931 = vld [vmem:[%s7] sm:$0xf]
  %v6932 = vld [vmem:[%s7 + $0x4] sm:$0xf]
  %v6933 = vld [vmem:[%s7 + $0x8] sm:$0xf]
  %v6934 = vld [vmem:[%s7 + $0xc] sm:$0xf]
  %v6935 = vld [vmem:[%s8] sm:$0xff]
  %v6936 = vld [vmem:[%s8 + $0x8] sm:$0xff]
  %v6937 = vld [vmem:[%s8 + $0x10] sm:$0xff]
  %v6938 = vld [vmem:[%s8 + $0x18] sm:$0xff]
  %6940 = vset.pattern.permute.xlu0 0
  %6941 = vperm.xlu0 %6940, %v6935
  %v6942 = vpop.permute.xlu0 %6941
  %6945 = vset.pattern.permute.xlu0 0
  %6946 = vperm.xlu0 %6945, %v6936
  %v6947 = vpop.permute.xlu0 %6946
  %6950 = vset.pattern.permute.xlu0 0
  %6951 = vperm.xlu0 %6950, %v6937
  %v6952 = vpop.permute.xlu0 %6951
  %6955 = vset.pattern.permute.xlu0 0
  %6956 = vperm.xlu0 %6955, %v6938
  %v6957 = vpop.permute.xlu0 %6956
  %v6963 = vunpack.c.l.b16 %v6931
  %v6964 = vunpack.c.l.b16 %v6932
  %v6965 = vunpack.c.l.b16 %v6933
  %v6966 = vunpack.c.l.b16 %v6934
  %v6967 = vpack.c.b16 %v6964, %v6963
  %v6968 = vpack.c.b16 %v6966, %v6965
  %vm6969 = vcmask 654336
  %v6971 = vsel %vm6969, %v6967, 0
  %v6974 = vsel %vm6969, %v6968, 0
  %6976 = vmatpush.bf16.msra.mxu0 0
  %6977 = vmatpush.bf16.msra.mxu0 0
  %6978 = vmatpush.bf16.msra.mxu0 0
  %6979 = vmatpush.bf16.msra.mxu0 %v6901
  %6980 = vmatpush.bf16.msra.mxu0 %v6629
  %6981 = vmatpush.bf16.msra.mxu0 %v6357
  %6982 = vmatpush.bf16.msra.mxu0 %v6085
  %6983 = vmatpush.bf16.msra.mxu0 %v5797
  %6984 = vmatmul.bf16.gmra.mxu0 %v6971
  %v6985 = vpop.f32.mrf.mxu0
  %v6986 = vadd.f32 %v6942, %v6985
  %v6987 = vpop.f32.mrf.mxu0
  %v6988 = vadd.f32 %v6947, %v6987
  %6989 = vmatmul.bf16.gmra.mxu0 %v6974
  %v6990 = vpop.f32.mrf.mxu0
  %v6991 = vadd.f32 %v6952, %v6990
  %v6992 = vpop.f32.mrf.mxu0
  %v6993 = vadd.f32 %v6957, %v6992
  %6994 = vdwg.mxu0
  %6995 = vmatpush.bf16.msra.mxu0 0
  %6996 = vmatpush.bf16.msra.mxu0 0
  %6997 = vmatpush.bf16.msra.mxu0 0
  %6998 = vmatpush.bf16.msra.mxu0 %v6905
  %6999 = vmatpush.bf16.msra.mxu0 %v6633
  %7000 = vmatpush.bf16.msra.mxu0 %v6361
  %7001 = vmatpush.bf16.msra.mxu0 %v6089
  %7002 = vmatpush.bf16.msra.mxu0 %v5801
  %7003 = vmatmul.bf16.gmra.mxu0 %v6971
  %v7004 = vpop.f32.mrf.mxu0
  %v7005 = vadd.f32 %v6942, %v7004
  %v7006 = vpop.f32.mrf.mxu0
  %v7007 = vadd.f32 %v6947, %v7006
  %7008 = vmatmul.bf16.gmra.mxu0 %v6974
  %v7009 = vpop.f32.mrf.mxu0
  %v7010 = vadd.f32 %v6952, %v7009
  %v7011 = vpop.f32.mrf.mxu0
  %v7012 = vadd.f32 %v6957, %v7011
  %7013 = vdwg.mxu0
  %7014 = vmatpush.bf16.msra.mxu0 0
  %7015 = vmatpush.bf16.msra.mxu0 0
  %7016 = vmatpush.bf16.msra.mxu0 0
  %7017 = vmatpush.bf16.msra.mxu0 %v6909
  %7018 = vmatpush.bf16.msra.mxu0 %v6637
  %7019 = vmatpush.bf16.msra.mxu0 %v6365
  %7020 = vmatpush.bf16.msra.mxu0 %v6093
  %7021 = vmatpush.bf16.msra.mxu0 %v5805
  %7022 = vmatmul.bf16.gmra.mxu0 %v6971
  %v7023 = vpop.f32.mrf.mxu0
  %v7024 = vadd.f32 %v6942, %v7023
  %v7025 = vpop.f32.mrf.mxu0
  %v7026 = vadd.f32 %v6947, %v7025
  %7027 = vmatmul.bf16.gmra.mxu0 %v6974
  %v7028 = vpop.f32.mrf.mxu0
  %v7029 = vadd.f32 %v6952, %v7028
  %v7030 = vpop.f32.mrf.mxu0
  %v7031 = vadd.f32 %v6957, %v7030
  %7032 = vdwg.mxu0
  %7033 = vmatpush.bf16.msra.mxu0 0
  %7034 = vmatpush.bf16.msra.mxu0 0
  %7035 = vmatpush.bf16.msra.mxu0 0
  %7036 = vmatpush.bf16.msra.mxu0 %v6913
  %7037 = vmatpush.bf16.msra.mxu0 %v6641
  %7038 = vmatpush.bf16.msra.mxu0 %v6369
  %7039 = vmatpush.bf16.msra.mxu0 %v6097
  %7040 = vmatpush.bf16.msra.mxu0 %v5809
  %7041 = vmatmul.bf16.gmra.mxu0 %v6971
  %v7042 = vpop.f32.mrf.mxu0
  %v7043 = vadd.f32 %v6942, %v7042
  %v7044 = vpop.f32.mrf.mxu0
  %v7045 = vadd.f32 %v6947, %v7044
  %7046 = vmatmul.bf16.gmra.mxu0 %v6974
  %v7047 = vpop.f32.mrf.mxu0
  %v7048 = vadd.f32 %v6952, %v7047
  %v7049 = vpop.f32.mrf.mxu0
  %v7050 = vadd.f32 %v6957, %v7049
  %7051 = vdwg.mxu0
  %7052 = vmatpush.bf16.msra.mxu0 0
  %7053 = vmatpush.bf16.msra.mxu0 0
  %7054 = vmatpush.bf16.msra.mxu0 0
  %7055 = vmatpush.bf16.msra.mxu0 %v6917
  %7056 = vmatpush.bf16.msra.mxu0 %v6645
  %7057 = vmatpush.bf16.msra.mxu0 %v6373
  %7058 = vmatpush.bf16.msra.mxu0 %v6101
  %7059 = vmatpush.bf16.msra.mxu0 %v5813
  %7060 = vmatmul.bf16.gmra.mxu0 %v6971
  %v7061 = vpop.f32.mrf.mxu0
  %v7062 = vadd.f32 %v6942, %v7061
  %v7063 = vpop.f32.mrf.mxu0
  %v7064 = vadd.f32 %v6947, %v7063
  %7065 = vmatmul.bf16.gmra.mxu0 %v6974
  %v7066 = vpop.f32.mrf.mxu0
  %v7067 = vadd.f32 %v6952, %v7066
  %v7068 = vpop.f32.mrf.mxu0
  %v7069 = vadd.f32 %v6957, %v7068
  %7070 = vdwg.mxu0
  %7071 = vmatpush.bf16.msra.mxu0 0
  %7072 = vmatpush.bf16.msra.mxu0 0
  %7073 = vmatpush.bf16.msra.mxu0 0
  %7074 = vmatpush.bf16.msra.mxu0 %v6921
  %7075 = vmatpush.bf16.msra.mxu0 %v6649
  %7076 = vmatpush.bf16.msra.mxu0 %v6377
  %7077 = vmatpush.bf16.msra.mxu0 %v6105
  %7078 = vmatpush.bf16.msra.mxu0 %v5817
  %7079 = vmatmul.bf16.gmra.mxu0 %v6971
  %v7080 = vpop.f32.mrf.mxu0
  %v7081 = vadd.f32 %v6942, %v7080
  %v7082 = vpop.f32.mrf.mxu0
  %v7083 = vadd.f32 %v6947, %v7082
  %7084 = vmatmul.bf16.gmra.mxu0 %v6974
  %v7085 = vpop.f32.mrf.mxu0
  %v7086 = vadd.f32 %v6952, %v7085
  %v7087 = vpop.f32.mrf.mxu0
  %v7088 = vadd.f32 %v6957, %v7087
  %7089 = vdwg.mxu0
  %7090 = vmatpush.bf16.msra.mxu0 0
  %7091 = vmatpush.bf16.msra.mxu0 0
  %7092 = vmatpush.bf16.msra.mxu0 0
  %7093 = vmatpush.bf16.msra.mxu0 %v6925
  %7094 = vmatpush.bf16.msra.mxu0 %v6653
  %7095 = vmatpush.bf16.msra.mxu0 %v6381
  %7096 = vmatpush.bf16.msra.mxu0 %v6109
  %7097 = vmatpush.bf16.msra.mxu0 %v5821
  %7098 = vmatmul.bf16.gmra.mxu0 %v6971
  %v7099 = vpop.f32.mrf.mxu0
  %v7100 = vadd.f32 %v6942, %v7099
  %v7101 = vpop.f32.mrf.mxu0
  %v7102 = vadd.f32 %v6947, %v7101
  %7103 = vmatmul.bf16.gmra.mxu0 %v6974
  %v7104 = vpop.f32.mrf.mxu0
  %v7105 = vadd.f32 %v6952, %v7104
  %v7106 = vpop.f32.mrf.mxu0
  %v7107 = vadd.f32 %v6957, %v7106
  %7108 = vdwg.mxu0
  %7109 = vmatpush.bf16.msra.mxu0 0
  %7110 = vmatpush.bf16.msra.mxu0 0
  %7111 = vmatpush.bf16.msra.mxu0 0
  %7112 = vmatpush.bf16.msra.mxu0 %v6929
  %7113 = vmatpush.bf16.msra.mxu0 %v6657
  %7114 = vmatpush.bf16.msra.mxu0 %v6385
  %7115 = vmatpush.bf16.msra.mxu0 %v6113
  %7116 = vmatpush.bf16.msra.mxu0 %v5825
  %7117 = vmatmul.bf16.gmra.mxu0 %v6971
  %v7118 = vpop.f32.mrf.mxu0
  %v7119 = vadd.f32 %v6942, %v7118
  %v7120 = vpop.f32.mrf.mxu0
  %v7121 = vadd.f32 %v6947, %v7120
  %7122 = vmatmul.bf16.gmra.mxu0 %v6974
  %v7123 = vpop.f32.mrf.mxu0
  %v7124 = vadd.f32 %v6952, %v7123
  %v7125 = vpop.f32.mrf.mxu0
  %v7126 = vadd.f32 %v6957, %v7125
  %7127 = vdwg.mxu0
  %v7128 = vmax.f32 %v6986, 0.0
  %v7129 = vmax.f32 %v7005, 0.0
  %v7130 = vmax.f32 %v7024, 0.0
  %v7131 = vmax.f32 %v7043, 0.0
  %v7132 = vmax.f32 %v7062, 0.0
  %v7133 = vmax.f32 %v7081, 0.0
  %v7134 = vmax.f32 %v7100, 0.0
  %v7135 = vmax.f32 %v7119, 0.0
  %v7136 = vmax.f32 %v6988, 0.0
  %v7137 = vmax.f32 %v7007, 0.0
  %v7138 = vmax.f32 %v7026, 0.0
  %v7139 = vmax.f32 %v7045, 0.0
  %v7140 = vmax.f32 %v7064, 0.0
  %v7141 = vmax.f32 %v7083, 0.0
  %v7142 = vmax.f32 %v7102, 0.0
  %v7143 = vmax.f32 %v7121, 0.0
  %v7144 = vmax.f32 %v6991, 0.0
  %v7145 = vmax.f32 %v7010, 0.0
  %v7146 = vmax.f32 %v7029, 0.0
  %v7147 = vmax.f32 %v7048, 0.0
  %v7148 = vmax.f32 %v7067, 0.0
  %v7149 = vmax.f32 %v7086, 0.0
  %v7150 = vmax.f32 %v7105, 0.0
  %v7151 = vmax.f32 %v7124, 0.0
  %v7152 = vmax.f32 %v6993, 0.0
  %v7153 = vmax.f32 %v7012, 0.0
  %v7154 = vmax.f32 %v7031, 0.0
  %v7155 = vmax.f32 %v7050, 0.0
  %v7156 = vmax.f32 %v7069, 0.0
  %v7157 = vmax.f32 %v7088, 0.0
  %v7158 = vmax.f32 %v7107, 0.0
  %v7159 = vmax.f32 %v7126, 0.0
  %v7192 = vrot.slane %v7129, 7
  %v7193 = vrot.slane %v7130, 6
  %v7194 = vrot.slane %v7131, 5
  %v7195 = vrot.slane %v7132, 4
  %v7196 = vrot.slane %v7133, 3
  %v7197 = vrot.slane %v7134, 2
  %v7198 = vrot.slane %v7135, 1
  %v7199 = vrot.slane %v7137, 7
  %v7200 = vrot.slane %v7138, 6
  %v7201 = vrot.slane %v7139, 5
  %v7202 = vrot.slane %v7140, 4
  %v7203 = vrot.slane %v7141, 3
  %v7204 = vrot.slane %v7142, 2
  %v7205 = vrot.slane %v7143, 1
  %v7206 = vrot.slane %v7145, 7
  %v7207 = vrot.slane %v7146, 6
  %v7208 = vrot.slane %v7147, 5
  %v7209 = vrot.slane %v7148, 4
  %v7210 = vrot.slane %v7149, 3
  %v7211 = vrot.slane %v7150, 2
  %v7212 = vrot.slane %v7151, 1
  %v7213 = vrot.slane %v7153, 7
  %v7214 = vrot.slane %v7154, 6
  %v7215 = vrot.slane %v7155, 5
  %v7216 = vrot.slane %v7156, 4
  %v7217 = vrot.slane %v7157, 3
  %v7218 = vrot.slane %v7158, 2
  %v7219 = vrot.slane %v7159, 1
  %v7220 = vsel %vm4258, %v7128, %v7192
  %v7221 = vsel %vm4260, %v7193, %v7194
  %v7222 = vsel %vm4262, %v7220, %v7221
  %v7223 = vsel %vm4264, %v7195, %v7196
  %v7224 = vsel %vm4266, %v7197, %v7198
  %v7225 = vsel %vm4268, %v7223, %v7224
  %v7226 = vsel %vm3742, %v7222, %v7225
  %v7227 = vsel %vm4278, %v7128, %v7192
  %v7228 = vsel %vm4280, %v7193, %v7194
  %v7229 = vsel %vm4282, %v7227, %v7228
  %v7230 = vsel %vm4284, %v7195, %v7196
  %v7231 = vsel %vm4286, %v7198, %v7197
  %v7232 = vsel %vm4288, %v7230, %v7231
  %v7233 = vsel %vm4290, %v7229, %v7232
  %v7234 = vrot.slane %v7233, 1
  %v7235 = vsel %vm4260, %v7128, %v7192
  %v7236 = vsel %vm4264, %v7193, %v7194
  %v7237 = vsel %vm4303, %v7235, %v7236
  %v7238 = vsel %vm4266, %v7195, %v7196
  %v7239 = vsel %vm4258, %v7197, %v7198
  %v7240 = vsel %vm4307, %v7239, %v7238
  %v7241 = vsel %vm4309, %v7237, %v7240
  %v7242 = vrot.slane %v7241, 2
  %v7243 = vsel %vm4280, %v7128, %v7192
  %v7244 = vsel %vm4284, %v7193, %v7194
  %v7245 = vsel %vm4322, %v7243, %v7244
  %v7246 = vsel %vm4286, %v7196, %v7195
  %v7247 = vsel %vm4278, %v7197, %v7198
  %v7248 = vsel %vm4326, %v7247, %v7246
  %v7249 = vsel %vm4328, %v7245, %v7248
  %v7250 = vrot.slane %v7249, 3
  %v7251 = vsel %vm4264, %v7128, %v7192
  %v7252 = vsel %vm4266, %v7193, %v7194
  %v7253 = vsel %vm4268, %v7251, %v7252
  %v7254 = vsel %vm4258, %v7195, %v7196
  %v7255 = vsel %vm4260, %v7197, %v7198
  %v7256 = vsel %vm4262, %v7254, %v7255
  %v7257 = vsel %vm3742, %v7256, %v7253
  %v7258 = vrot.slane %v7257, 4
  %v7259 = vsel %vm4284, %v7128, %v7192
  %v7260 = vsel %vm4286, %v7194, %v7193
  %v7261 = vsel %vm4288, %v7259, %v7260
  %v7262 = vsel %vm4278, %v7195, %v7196
  %v7263 = vsel %vm4280, %v7197, %v7198
  %v7264 = vsel %vm4282, %v7262, %v7263
  %v7265 = vsel %vm4290, %v7264, %v7261
  %v7266 = vrot.slane %v7265, 5
  %v7267 = vsel %vm4266, %v7128, %v7192
  %v7268 = vsel %vm4258, %v7193, %v7194
  %v7269 = vsel %vm4307, %v7268, %v7267
  %v7270 = vsel %vm4260, %v7195, %v7196
  %v7271 = vsel %vm4264, %v7197, %v7198
  %v7272 = vsel %vm4303, %v7270, %v7271
  %v7273 = vsel %vm4309, %v7272, %v7269
  %v7274 = vrot.slane %v7273, 6
  %v7275 = vsel %vm4286, %v7192, %v7128
  %v7276 = vsel %vm4278, %v7193, %v7194
  %v7277 = vsel %vm4326, %v7276, %v7275
  %v7278 = vsel %vm4280, %v7195, %v7196
  %v7279 = vsel %vm4284, %v7197, %v7198
  %v7280 = vsel %vm4322, %v7278, %v7279
  %v7281 = vsel %vm4328, %v7280, %v7277
  %v7282 = vrot.slane %v7281, 7
  %v7283 = vsel %vm4258, %v7136, %v7199
  %v7284 = vsel %vm4260, %v7200, %v7201
  %v7285 = vsel %vm4262, %v7283, %v7284
  %v7286 = vsel %vm4264, %v7202, %v7203
  %v7287 = vsel %vm4266, %v7204, %v7205
  %v7288 = vsel %vm4268, %v7286, %v7287
  %v7289 = vsel %vm3742, %v7285, %v7288
  %v7290 = vsel %vm4278, %v7136, %v7199
  %v7291 = vsel %vm4280, %v7200, %v7201
  %v7292 = vsel %vm4282, %v7290, %v7291
  %v7293 = vsel %vm4284, %v7202, %v7203
  %v7294 = vsel %vm4286, %v7205, %v7204
  %v7295 = vsel %vm4288, %v7293, %v7294
  %v7296 = vsel %vm4290, %v7292, %v7295
  %v7297 = vrot.slane %v7296, 1
  %v7298 = vsel %vm4260, %v7136, %v7199
  %v7299 = vsel %vm4264, %v7200, %v7201
  %v7300 = vsel %vm4303, %v7298, %v7299
  %v7301 = vsel %vm4266, %v7202, %v7203
  %v7302 = vsel %vm4258, %v7204, %v7205
  %v7303 = vsel %vm4307, %v7302, %v7301
  %v7304 = vsel %vm4309, %v7300, %v7303
  %v7305 = vrot.slane %v7304, 2
  %v7306 = vsel %vm4280, %v7136, %v7199
  %v7307 = vsel %vm4284, %v7200, %v7201
  %v7308 = vsel %vm4322, %v7306, %v7307
  %v7309 = vsel %vm4286, %v7203, %v7202
  %v7310 = vsel %vm4278, %v7204, %v7205
  %v7311 = vsel %vm4326, %v7310, %v7309
  %v7312 = vsel %vm4328, %v7308, %v7311
  %v7313 = vrot.slane %v7312, 3
  %v7314 = vsel %vm4264, %v7136, %v7199
  %v7315 = vsel %vm4266, %v7200, %v7201
  %v7316 = vsel %vm4268, %v7314, %v7315
  %v7317 = vsel %vm4258, %v7202, %v7203
  %v7318 = vsel %vm4260, %v7204, %v7205
  %v7319 = vsel %vm4262, %v7317, %v7318
  %v7320 = vsel %vm3742, %v7319, %v7316
  %v7321 = vrot.slane %v7320, 4
  %v7322 = vsel %vm4284, %v7136, %v7199
  %v7323 = vsel %vm4286, %v7201, %v7200
  %v7324 = vsel %vm4288, %v7322, %v7323
  %v7325 = vsel %vm4278, %v7202, %v7203
  %v7326 = vsel %vm4280, %v7204, %v7205
  %v7327 = vsel %vm4282, %v7325, %v7326
  %v7328 = vsel %vm4290, %v7327, %v7324
  %v7329 = vrot.slane %v7328, 5
  %v7330 = vsel %vm4266, %v7136, %v7199
  %v7331 = vsel %vm4258, %v7200, %v7201
  %v7332 = vsel %vm4307, %v7331, %v7330
  %v7333 = vsel %vm4260, %v7202, %v7203
  %v7334 = vsel %vm4264, %v7204, %v7205
  %v7335 = vsel %vm4303, %v7333, %v7334
  %v7336 = vsel %vm4309, %v7335, %v7332
  %v7337 = vrot.slane %v7336, 6
  %v7338 = vsel %vm4286, %v7199, %v7136
  %v7339 = vsel %vm4278, %v7200, %v7201
  %v7340 = vsel %vm4326, %v7339, %v7338
  %v7341 = vsel %vm4280, %v7202, %v7203
  %v7342 = vsel %vm4284, %v7204, %v7205
  %v7343 = vsel %vm4322, %v7341, %v7342
  %v7344 = vsel %vm4328, %v7343, %v7340
  %v7345 = vrot.slane %v7344, 7
  %v7346 = vsel %vm4258, %v7144, %v7206
  %v7347 = vsel %vm4260, %v7207, %v7208
  %v7348 = vsel %vm4262, %v7346, %v7347
  %v7349 = vsel %vm4264, %v7209, %v7210
  %v7350 = vsel %vm4266, %v7211, %v7212
  %v7351 = vsel %vm4268, %v7349, %v7350
  %v7352 = vsel %vm3742, %v7348, %v7351
  %v7353 = vsel %vm4278, %v7144, %v7206
  %v7354 = vsel %vm4280, %v7207, %v7208
  %v7355 = vsel %vm4282, %v7353, %v7354
  %v7356 = vsel %vm4284, %v7209, %v7210
  %v7357 = vsel %vm4286, %v7212, %v7211
  %v7358 = vsel %vm4288, %v7356, %v7357
  %v7359 = vsel %vm4290, %v7355, %v7358
  %v7360 = vrot.slane %v7359, 1
  %v7361 = vsel %vm4260, %v7144, %v7206
  %v7362 = vsel %vm4264, %v7207, %v7208
  %v7363 = vsel %vm4303, %v7361, %v7362
  %v7364 = vsel %vm4266, %v7209, %v7210
  %v7365 = vsel %vm4258, %v7211, %v7212
  %v7366 = vsel %vm4307, %v7365, %v7364
  %v7367 = vsel %vm4309, %v7363, %v7366
  %v7368 = vrot.slane %v7367, 2
  %v7369 = vsel %vm4280, %v7144, %v7206
  %v7370 = vsel %vm4284, %v7207, %v7208
  %v7371 = vsel %vm4322, %v7369, %v7370
  %v7372 = vsel %vm4286, %v7210, %v7209
  %v7373 = vsel %vm4278, %v7211, %v7212
  %v7374 = vsel %vm4326, %v7373, %v7372
  %v7375 = vsel %vm4328, %v7371, %v7374
  %v7376 = vrot.slane %v7375, 3
  %v7377 = vsel %vm4264, %v7144, %v7206
  %v7378 = vsel %vm4266, %v7207, %v7208
  %v7379 = vsel %vm4268, %v7377, %v7378
  %v7380 = vsel %vm4258, %v7209, %v7210
  %v7381 = vsel %vm4260, %v7211, %v7212
  %v7382 = vsel %vm4262, %v7380, %v7381
  %v7383 = vsel %vm3742, %v7382, %v7379
  %v7384 = vrot.slane %v7383, 4
  %v7385 = vsel %vm4284, %v7144, %v7206
  %v7386 = vsel %vm4286, %v7208, %v7207
  %v7387 = vsel %vm4288, %v7385, %v7386
  %v7388 = vsel %vm4278, %v7209, %v7210
  %v7389 = vsel %vm4280, %v7211, %v7212
  %v7390 = vsel %vm4282, %v7388, %v7389
  %v7391 = vsel %vm4290, %v7390, %v7387
  %v7392 = vrot.slane %v7391, 5
  %v7393 = vsel %vm4266, %v7144, %v7206
  %v7394 = vsel %vm4258, %v7207, %v7208
  %v7395 = vsel %vm4307, %v7394, %v7393
  %v7396 = vsel %vm4260, %v7209, %v7210
  %v7397 = vsel %vm4264, %v7211, %v7212
  %v7398 = vsel %vm4303, %v7396, %v7397
  %v7399 = vsel %vm4309, %v7398, %v7395
  %v7400 = vrot.slane %v7399, 6
  %v7401 = vsel %vm4286, %v7206, %v7144
  %v7402 = vsel %vm4278, %v7207, %v7208
  %v7403 = vsel %vm4326, %v7402, %v7401
  %v7404 = vsel %vm4280, %v7209, %v7210
  %v7405 = vsel %vm4284, %v7211, %v7212
  %v7406 = vsel %vm4322, %v7404, %v7405
  %v7407 = vsel %vm4328, %v7406, %v7403
  %v7408 = vrot.slane %v7407, 7
  %v7409 = vsel %vm4258, %v7152, %v7213
  %v7410 = vsel %vm4260, %v7214, %v7215
  %v7411 = vsel %vm4262, %v7409, %v7410
  %v7412 = vsel %vm4264, %v7216, %v7217
  %v7413 = vsel %vm4266, %v7218, %v7219
  %v7414 = vsel %vm4268, %v7412, %v7413
  %v7415 = vsel %vm3742, %v7411, %v7414
  %v7416 = vsel %vm4278, %v7152, %v7213
  %v7417 = vsel %vm4280, %v7214, %v7215
  %v7418 = vsel %vm4282, %v7416, %v7417
  %v7419 = vsel %vm4284, %v7216, %v7217
  %v7420 = vsel %vm4286, %v7219, %v7218
  %v7421 = vsel %vm4288, %v7419, %v7420
  %v7422 = vsel %vm4290, %v7418, %v7421
  %v7423 = vrot.slane %v7422, 1
  %v7424 = vsel %vm4260, %v7152, %v7213
  %v7425 = vsel %vm4264, %v7214, %v7215
  %v7426 = vsel %vm4303, %v7424, %v7425
  %v7427 = vsel %vm4266, %v7216, %v7217
  %v7428 = vsel %vm4258, %v7218, %v7219
  %v7429 = vsel %vm4307, %v7428, %v7427
  %v7430 = vsel %vm4309, %v7426, %v7429
  %v7431 = vrot.slane %v7430, 2
  %v7432 = vsel %vm4280, %v7152, %v7213
  %v7433 = vsel %vm4284, %v7214, %v7215
  %v7434 = vsel %vm4322, %v7432, %v7433
  %v7435 = vsel %vm4286, %v7217, %v7216
  %v7436 = vsel %vm4278, %v7218, %v7219
  %v7437 = vsel %vm4326, %v7436, %v7435
  %v7438 = vsel %vm4328, %v7434, %v7437
  %v7439 = vrot.slane %v7438, 3
  %v7440 = vsel %vm4264, %v7152, %v7213
  %v7441 = vsel %vm4266, %v7214, %v7215
  %v7442 = vsel %vm4268, %v7440, %v7441
  %v7443 = vsel %vm4258, %v7216, %v7217
  %v7444 = vsel %vm4260, %v7218, %v7219
  %v7445 = vsel %vm4262, %v7443, %v7444
  %v7446 = vsel %vm3742, %v7445, %v7442
  %v7447 = vrot.slane %v7446, 4
  %v7448 = vsel %vm4284, %v7152, %v7213
  %v7449 = vsel %vm4286, %v7215, %v7214
  %v7450 = vsel %vm4288, %v7448, %v7449
  %v7451 = vsel %vm4278, %v7216, %v7217
  %v7452 = vsel %vm4280, %v7218, %v7219
  %v7453 = vsel %vm4282, %v7451, %v7452
  %v7454 = vsel %vm4290, %v7453, %v7450
  %v7455 = vrot.slane %v7454, 5
  %v7456 = vsel %vm4266, %v7152, %v7213
  %v7457 = vsel %vm4258, %v7214, %v7215
  %v7458 = vsel %vm4307, %v7457, %v7456
  %v7459 = vsel %vm4260, %v7216, %v7217
  %v7460 = vsel %vm4264, %v7218, %v7219
  %v7461 = vsel %vm4303, %v7459, %v7460
  %v7462 = vsel %vm4309, %v7461, %v7458
  %v7463 = vrot.slane %v7462, 6
  %v7464 = vsel %vm4286, %v7213, %v7152
  %v7465 = vsel %vm4278, %v7214, %v7215
  %v7466 = vsel %vm4326, %v7465, %v7464
  %v7467 = vsel %vm4280, %v7216, %v7217
  %v7468 = vsel %vm4284, %v7218, %v7219
  %v7469 = vsel %vm4322, %v7467, %v7468
  %v7470 = vsel %vm4328, %v7469, %v7466
  %v7471 = vrot.slane %v7470, 7
  %7504 = vrot.lane.b32.xlu0 %v7226, 127
  %v7505 = vpop.permute.xlu0 %7504
  %7506 = vrot.lane.b32.xlu0 %v7234, 127
  %v7507 = vpop.permute.xlu0 %7506
  %7508 = vrot.lane.b32.xlu0 %v7242, 127
  %v7509 = vpop.permute.xlu0 %7508
  %7510 = vrot.lane.b32.xlu0 %v7250, 127
  %v7511 = vpop.permute.xlu0 %7510
  %7512 = vrot.lane.b32.xlu0 %v7258, 127
  %v7513 = vpop.permute.xlu0 %7512
  %7514 = vrot.lane.b32.xlu0 %v7266, 127
  %v7515 = vpop.permute.xlu0 %7514
  %7516 = vrot.lane.b32.xlu0 %v7274, 127
  %v7517 = vpop.permute.xlu0 %7516
  %7518 = vrot.lane.b32.xlu0 %v7282, 127
  %v7519 = vpop.permute.xlu0 %7518
  %7520 = vrot.lane.b32.xlu0 %v7289, 127
  %v7521 = vpop.permute.xlu0 %7520
  %7522 = vrot.lane.b32.xlu0 %v7297, 127
  %v7523 = vpop.permute.xlu0 %7522
  %7524 = vrot.lane.b32.xlu0 %v7305, 127
  %v7525 = vpop.permute.xlu0 %7524
  %7526 = vrot.lane.b32.xlu0 %v7313, 127
  %v7527 = vpop.permute.xlu0 %7526
  %7528 = vrot.lane.b32.xlu0 %v7321, 127
  %v7529 = vpop.permute.xlu0 %7528
  %7530 = vrot.lane.b32.xlu0 %v7329, 127
  %v7531 = vpop.permute.xlu0 %7530
  %7532 = vrot.lane.b32.xlu0 %v7337, 127
  %v7533 = vpop.permute.xlu0 %7532
  %7534 = vrot.lane.b32.xlu0 %v7345, 127
  %v7535 = vpop.permute.xlu0 %7534
  %7536 = vrot.lane.b32.xlu0 %v7352, 127
  %v7537 = vpop.permute.xlu0 %7536
  %7538 = vrot.lane.b32.xlu0 %v7360, 127
  %v7539 = vpop.permute.xlu0 %7538
  %7540 = vrot.lane.b32.xlu0 %v7368, 127
  %v7541 = vpop.permute.xlu0 %7540
  %7542 = vrot.lane.b32.xlu0 %v7376, 127
  %v7543 = vpop.permute.xlu0 %7542
  %7544 = vrot.lane.b32.xlu0 %v7384, 127
  %v7545 = vpop.permute.xlu0 %7544
  %7546 = vrot.lane.b32.xlu0 %v7392, 127
  %v7547 = vpop.permute.xlu0 %7546
  %7548 = vrot.lane.b32.xlu0 %v7400, 127
  %v7549 = vpop.permute.xlu0 %7548
  %7550 = vrot.lane.b32.xlu0 %v7408, 127
  %v7551 = vpop.permute.xlu0 %7550
  %7552 = vrot.lane.b32.xlu0 %v7415, 127
  %v7553 = vpop.permute.xlu0 %7552
  %7554 = vrot.lane.b32.xlu0 %v7423, 127
  %v7555 = vpop.permute.xlu0 %7554
  %7556 = vrot.lane.b32.xlu0 %v7431, 127
  %v7557 = vpop.permute.xlu0 %7556
  %7558 = vrot.lane.b32.xlu0 %v7439, 127
  %v7559 = vpop.permute.xlu0 %7558
  %7560 = vrot.lane.b32.xlu0 %v7447, 127
  %v7561 = vpop.permute.xlu0 %7560
  %7562 = vrot.lane.b32.xlu0 %v7455, 127
  %v7563 = vpop.permute.xlu0 %7562
  %7564 = vrot.lane.b32.xlu0 %v7463, 127
  %v7565 = vpop.permute.xlu0 %7564
  %7566 = vrot.lane.b32.xlu0 %v7471, 127
  %v7567 = vpop.permute.xlu0 %7566
  %v7568 = vmax.f32 %v7226, %v7505
  %v7569 = vmax.f32 %v7234, %v7507
  %v7570 = vmax.f32 %v7242, %v7509
  %v7571 = vmax.f32 %v7250, %v7511
  %v7572 = vmax.f32 %v7258, %v7513
  %v7573 = vmax.f32 %v7266, %v7515
  %v7574 = vmax.f32 %v7274, %v7517
  %v7575 = vmax.f32 %v7282, %v7519
  %v7576 = vmax.f32 %v7289, %v7521
  %v7577 = vmax.f32 %v7297, %v7523
  %v7578 = vmax.f32 %v7305, %v7525
  %v7579 = vmax.f32 %v7313, %v7527
  %v7580 = vmax.f32 %v7321, %v7529
  %v7581 = vmax.f32 %v7329, %v7531
  %v7582 = vmax.f32 %v7337, %v7533
  %v7583 = vmax.f32 %v7345, %v7535
  %v7584 = vmax.f32 %v7352, %v7537
  %v7585 = vmax.f32 %v7360, %v7539
  %v7586 = vmax.f32 %v7368, %v7541
  %v7587 = vmax.f32 %v7376, %v7543
  %v7588 = vmax.f32 %v7384, %v7545
  %v7589 = vmax.f32 %v7392, %v7547
  %v7590 = vmax.f32 %v7400, %v7549
  %v7591 = vmax.f32 %v7408, %v7551
  %v7592 = vmax.f32 %v7415, %v7553
  %v7593 = vmax.f32 %v7423, %v7555
  %v7594 = vmax.f32 %v7431, %v7557
  %v7595 = vmax.f32 %v7439, %v7559
  %v7596 = vmax.f32 %v7447, %v7561
  %v7597 = vmax.f32 %v7455, %v7563
  %v7598 = vmax.f32 %v7463, %v7565
  %v7599 = vmax.f32 %v7471, %v7567
  %v7600 = vpack.c.bf16 %v7568, %v7568
  %v7601 = vpack.c.bf16 %v7569, %v7569
  %v7602 = vpack.c.bf16 %v7570, %v7570
  %v7603 = vpack.c.bf16 %v7571, %v7571
  %v7604 = vpack.c.bf16 %v7572, %v7572
  %v7605 = vpack.c.bf16 %v7573, %v7573
  %v7606 = vpack.c.bf16 %v7574, %v7574
  %v7607 = vpack.c.bf16 %v7575, %v7575
  %v7608 = vpack.c.bf16 %v7576, %v7576
  %v7609 = vpack.c.bf16 %v7577, %v7577
  %v7610 = vpack.c.bf16 %v7578, %v7578
  %v7611 = vpack.c.bf16 %v7579, %v7579
  %v7612 = vpack.c.bf16 %v7580, %v7580
  %v7613 = vpack.c.bf16 %v7581, %v7581
  %v7614 = vpack.c.bf16 %v7582, %v7582
  %v7615 = vpack.c.bf16 %v7583, %v7583
  %v7616 = vpack.c.bf16 %v7584, %v7584
  %v7617 = vpack.c.bf16 %v7585, %v7585
  %v7618 = vpack.c.bf16 %v7586, %v7586
  %v7619 = vpack.c.bf16 %v7587, %v7587
  %v7620 = vpack.c.bf16 %v7588, %v7588
  %v7621 = vpack.c.bf16 %v7589, %v7589
  %v7622 = vpack.c.bf16 %v7590, %v7590
  %v7623 = vpack.c.bf16 %v7591, %v7591
  %v7624 = vpack.c.bf16 %v7592, %v7592
  %v7625 = vpack.c.bf16 %v7593, %v7593
  %v7626 = vpack.c.bf16 %v7594, %v7594
  %v7627 = vpack.c.bf16 %v7595, %v7595
  %v7628 = vpack.c.bf16 %v7596, %v7596
  %v7629 = vpack.c.bf16 %v7597, %v7597
  %v7630 = vpack.c.bf16 %v7598, %v7598
  %v7631 = vpack.c.bf16 %v7599, %v7599
  %v7632 = vld [vmem:[%s9] sm:$0xf]
  %v7633 = vld [vmem:[%s9 + $0x4] sm:$0xf]
  %v7634 = vld [vmem:[%s9 + $0x8] sm:$0xf]
  %v7635 = vld [vmem:[%s9 + $0xc] sm:$0xf]
  %v7636 = vld [vmem:[%s9 + $0x10] sm:$0xf]
  %v7637 = vld [vmem:[%s9 + $0x14] sm:$0xf]
  %v7638 = vld [vmem:[%s9 + $0x18] sm:$0xf]
  %v7639 = vld [vmem:[%s9 + $0x1c] sm:$0xf]
  %v7640 = vld [vmem:[%s9 + $0x20] sm:$0xf]
  %v7641 = vld [vmem:[%s9 + $0x24] sm:$0xf]
  %v7642 = vld [vmem:[%s9 + $0x28] sm:$0xf]
  %v7643 = vld [vmem:[%s9 + $0x2c] sm:$0xf]
  %v7644 = vld [vmem:[%s9 + $0x30] sm:$0xf]
  %v7645 = vld [vmem:[%s9 + $0x34] sm:$0xf]
  %v7646 = vld [vmem:[%s9 + $0x38] sm:$0xf]
  %v7647 = vld [vmem:[%s9 + $0x3c] sm:$0xf]
  %v7648 = vld [vmem:[%s9 + $0x40] sm:$0xf]
  %v7649 = vld [vmem:[%s9 + $0x44] sm:$0xf]
  %v7650 = vld [vmem:[%s9 + $0x48] sm:$0xf]
  %v7651 = vld [vmem:[%s9 + $0x4c] sm:$0xf]
  %v7652 = vld [vmem:[%s9 + $0x50] sm:$0xf]
  %v7653 = vld [vmem:[%s9 + $0x54] sm:$0xf]
  %v7654 = vld [vmem:[%s9 + $0x58] sm:$0xf]
  %v7655 = vld [vmem:[%s9 + $0x5c] sm:$0xf]
  %v7656 = vld [vmem:[%s9 + $0x60] sm:$0xf]
  %v7657 = vld [vmem:[%s9 + $0x64] sm:$0xf]
  %v7658 = vld [vmem:[%s9 + $0x68] sm:$0xf]
  %v7659 = vld [vmem:[%s9 + $0x6c] sm:$0xf]
  %v7660 = vld [vmem:[%s9 + $0x70] sm:$0xf]
  %v7661 = vld [vmem:[%s9 + $0x74] sm:$0xf]
  %v7662 = vld [vmem:[%s9 + $0x78] sm:$0xf]
  %v7663 = vld [vmem:[%s9 + $0x7c] sm:$0xf]
  %v7664 = vld [vmem:[%s9 + $0x80] sm:$0xf]
  %v7665 = vld [vmem:[%s9 + $0x84] sm:$0xf]
  %v7666 = vld [vmem:[%s9 + $0x88] sm:$0xf]
  %v7667 = vld [vmem:[%s9 + $0x8c] sm:$0xf]
  %v7668 = vld [vmem:[%s9 + $0x90] sm:$0xf]
  %v7669 = vld [vmem:[%s9 + $0x94] sm:$0xf]
  %v7670 = vld [vmem:[%s9 + $0x98] sm:$0xf]
  %v7671 = vld [vmem:[%s9 + $0x9c] sm:$0xf]
  %v7672 = vld [vmem:[%s9 + $0xa0] sm:$0xf]
  %v7673 = vld [vmem:[%s9 + $0xa4] sm:$0xf]
  %v7674 = vld [vmem:[%s9 + $0xa8] sm:$0xf]
  %v7675 = vld [vmem:[%s9 + $0xac] sm:$0xf]
  %v7676 = vld [vmem:[%s9 + $0xb0] sm:$0xf]
  %v7677 = vld [vmem:[%s9 + $0xb4] sm:$0xf]
  %v7678 = vld [vmem:[%s9 + $0xb8] sm:$0xf]
  %v7679 = vld [vmem:[%s9 + $0xbc] sm:$0xf]
  %v7680 = vld [vmem:[%s9 + $0xc0] sm:$0xf]
  %v7681 = vld [vmem:[%s9 + $0xc4] sm:$0xf]
  %v7682 = vld [vmem:[%s9 + $0xc8] sm:$0xf]
  %v7683 = vld [vmem:[%s9 + $0xcc] sm:$0xf]
  %v7684 = vld [vmem:[%s9 + $0xd0] sm:$0xf]
  %v7685 = vld [vmem:[%s9 + $0xd4] sm:$0xf]
  %v7686 = vld [vmem:[%s9 + $0xd8] sm:$0xf]
  %v7687 = vld [vmem:[%s9 + $0xdc] sm:$0xf]
  %v7688 = vld [vmem:[%s9 + $0xe0] sm:$0xf]
  %v7689 = vld [vmem:[%s9 + $0xe4] sm:$0xf]
  %v7690 = vld [vmem:[%s9 + $0xe8] sm:$0xf]
  %v7691 = vld [vmem:[%s9 + $0xec] sm:$0xf]
  %v7692 = vld [vmem:[%s9 + $0xf0] sm:$0xf]
  %v7693 = vld [vmem:[%s9 + $0xf4] sm:$0xf]
  %v7694 = vld [vmem:[%s9 + $0xf8] sm:$0xf]
  %v7695 = vld [vmem:[%s9 + $0xfc] sm:$0xf]
  %v7696 = vld [vmem:[%s9 + $0x100] sm:$0xf]
  %v7697 = vld [vmem:[%s9 + $0x104] sm:$0xf]
  %v7698 = vld [vmem:[%s9 + $0x108] sm:$0xf]
  %v7699 = vld [vmem:[%s9 + $0x10c] sm:$0xf]
  %v7700 = vld [vmem:[%s9 + $0x110] sm:$0xf]
  %v7701 = vld [vmem:[%s9 + $0x114] sm:$0xf]
  %v7702 = vld [vmem:[%s9 + $0x118] sm:$0xf]
  %v7703 = vld [vmem:[%s9 + $0x11c] sm:$0xf]
  %v7704 = vld [vmem:[%s9 + $0x120] sm:$0xf]
  %v7705 = vld [vmem:[%s9 + $0x124] sm:$0xf]
  %v7706 = vld [vmem:[%s9 + $0x128] sm:$0xf]
  %v7707 = vld [vmem:[%s9 + $0x12c] sm:$0xf]
  %v7708 = vld [vmem:[%s9 + $0x130] sm:$0xf]
  %v7709 = vld [vmem:[%s9 + $0x134] sm:$0xf]
  %v7710 = vld [vmem:[%s9 + $0x138] sm:$0xf]
  %v7711 = vld [vmem:[%s9 + $0x13c] sm:$0xf]
  %v7712 = vld [vmem:[%s9 + $0x140] sm:$0xf]
  %v7713 = vld [vmem:[%s9 + $0x144] sm:$0xf]
  %v7714 = vld [vmem:[%s9 + $0x148] sm:$0xf]
  %v7715 = vld [vmem:[%s9 + $0x14c] sm:$0xf]
  %v7716 = vld [vmem:[%s9 + $0x150] sm:$0xf]
  %v7717 = vld [vmem:[%s9 + $0x154] sm:$0xf]
  %v7718 = vld [vmem:[%s9 + $0x158] sm:$0xf]
  %v7719 = vld [vmem:[%s9 + $0x15c] sm:$0xf]
  %v7720 = vld [vmem:[%s9 + $0x160] sm:$0xf]
  %v7721 = vld [vmem:[%s9 + $0x164] sm:$0xf]
  %v7722 = vld [vmem:[%s9 + $0x168] sm:$0xf]
  %v7723 = vld [vmem:[%s9 + $0x16c] sm:$0xf]
  %v7724 = vld [vmem:[%s9 + $0x170] sm:$0xf]
  %v7725 = vld [vmem:[%s9 + $0x174] sm:$0xf]
  %v7726 = vld [vmem:[%s9 + $0x178] sm:$0xf]
  %v7727 = vld [vmem:[%s9 + $0x17c] sm:$0xf]
  %v7728 = vld [vmem:[%s9 + $0x180] sm:$0xf]
  %v7729 = vld [vmem:[%s9 + $0x184] sm:$0xf]
  %v7730 = vld [vmem:[%s9 + $0x188] sm:$0xf]
  %v7731 = vld [vmem:[%s9 + $0x18c] sm:$0xf]
  %v7732 = vld [vmem:[%s9 + $0x190] sm:$0xf]
  %v7733 = vld [vmem:[%s9 + $0x194] sm:$0xf]
  %v7734 = vld [vmem:[%s9 + $0x198] sm:$0xf]
  %v7735 = vld [vmem:[%s9 + $0x19c] sm:$0xf]
  %v7736 = vld [vmem:[%s9 + $0x1a0] sm:$0xf]
  %v7737 = vld [vmem:[%s9 + $0x1a4] sm:$0xf]
  %v7738 = vld [vmem:[%s9 + $0x1a8] sm:$0xf]
  %v7739 = vld [vmem:[%s9 + $0x1ac] sm:$0xf]
  %v7740 = vld [vmem:[%s9 + $0x1b0] sm:$0xf]
  %v7741 = vld [vmem:[%s9 + $0x1b4] sm:$0xf]
  %v7742 = vld [vmem:[%s9 + $0x1b8] sm:$0xf]
  %v7743 = vld [vmem:[%s9 + $0x1bc] sm:$0xf]
  %v7744 = vld [vmem:[%s9 + $0x1c0] sm:$0xf]
  %v7745 = vld [vmem:[%s9 + $0x1c4] sm:$0xf]
  %v7746 = vld [vmem:[%s9 + $0x1c8] sm:$0xf]
  %v7747 = vld [vmem:[%s9 + $0x1cc] sm:$0xf]
  %v7748 = vld [vmem:[%s9 + $0x1d0] sm:$0xf]
  %v7749 = vld [vmem:[%s9 + $0x1d4] sm:$0xf]
  %v7750 = vld [vmem:[%s9 + $0x1d8] sm:$0xf]
  %v7751 = vld [vmem:[%s9 + $0x1dc] sm:$0xf]
  %v7752 = vld [vmem:[%s9 + $0x1e0] sm:$0xf]
  %v7753 = vld [vmem:[%s9 + $0x1e4] sm:$0xf]
  %v7754 = vld [vmem:[%s9 + $0x1e8] sm:$0xf]
  %v7755 = vld [vmem:[%s9 + $0x1ec] sm:$0xf]
  %v7756 = vld [vmem:[%s9 + $0x1f0] sm:$0xf]
  %v7757 = vld [vmem:[%s9 + $0x1f4] sm:$0xf]
  %v7758 = vld [vmem:[%s9 + $0x1f8] sm:$0xf]
  %v7759 = vld [vmem:[%s9 + $0x1fc] sm:$0xf]
  %v7764 = vunpack.c.l.b16 %v7632
  %v7765 = vunpack.c.l.b16 %v7633
  %v7766 = vunpack.c.l.b16 %v7634
  %v7767 = vunpack.c.l.b16 %v7635
  %v7768 = vpack.c.b16 %v7765, %v7764
  %v7769 = vpack.c.b16 %v7767, %v7766
  %7772 = vmatpush.bf16.xpose.msra.mxu0 0
  %7773 = vmatpush.bf16.xpose.msra.mxu0 0
  %7774 = vmatpush.bf16.xpose.msra.mxu0 0
  %7775 = vmatpush.bf16.xpose.msra.mxu0 0
  %7776 = vmatpush.bf16.xpose.msra.mxu0 0
  %7777 = vmatpush.bf16.xpose.msra.mxu0 0
  %7778 = vmatpush.bf16.xpose.msra.mxu0 0
  %7779 = vmatpush.bf16.xpose.msra.mxu0 %v7600
  %7780 = vmatmul.bf16.gmra.mxu0 %v7768
  %v7781 = vpop.f32.mrf.mxu0
  %v7782 = vadd.f32 0.0, %v7781
  %v7783 = vpop.f32.mrf.mxu0
  %v7784 = vadd.f32 0.0, %v7783
  %7785 = vmatmul.bf16.gmra.mxu0 %v7769
  %v7786 = vpop.f32.mrf.mxu0
  %v7787 = vadd.f32 0.0, %v7786
  %v7788 = vpop.f32.mrf.mxu0
  %v7789 = vadd.f32 0.0, %v7788
  %7790 = vdwg.mxu0
  %v7795 = vunpack.c.l.b16 %v7636
  %v7796 = vunpack.c.l.b16 %v7637
  %v7797 = vunpack.c.l.b16 %v7638
  %v7798 = vunpack.c.l.b16 %v7639
  %v7799 = vpack.c.b16 %v7796, %v7795
  %v7800 = vpack.c.b16 %v7798, %v7797
  %7803 = vmatpush.bf16.xpose.msra.mxu0 0
  %7804 = vmatpush.bf16.xpose.msra.mxu0 0
  %7805 = vmatpush.bf16.xpose.msra.mxu0 0
  %7806 = vmatpush.bf16.xpose.msra.mxu0 0
  %7807 = vmatpush.bf16.xpose.msra.mxu0 0
  %7808 = vmatpush.bf16.xpose.msra.mxu0 0
  %7809 = vmatpush.bf16.xpose.msra.mxu0 0
  %7810 = vmatpush.bf16.xpose.msra.mxu0 %v7601
  %7811 = vmatmul.bf16.gmra.mxu0 %v7799
  %v7812 = vpop.f32.mrf.mxu0
  %v7813 = vadd.f32 0.0, %v7812
  %v7814 = vpop.f32.mrf.mxu0
  %v7815 = vadd.f32 0.0, %v7814
  %7816 = vmatmul.bf16.gmra.mxu0 %v7800
  %v7817 = vpop.f32.mrf.mxu0
  %v7818 = vadd.f32 0.0, %v7817
  %v7819 = vpop.f32.mrf.mxu0
  %v7820 = vadd.f32 0.0, %v7819
  %7821 = vdwg.mxu0
  %v7826 = vunpack.c.l.b16 %v7640
  %v7827 = vunpack.c.l.b16 %v7641
  %v7828 = vunpack.c.l.b16 %v7642
  %v7829 = vunpack.c.l.b16 %v7643
  %v7830 = vpack.c.b16 %v7827, %v7826
  %v7831 = vpack.c.b16 %v7829, %v7828
  %7834 = vmatpush.bf16.xpose.msra.mxu0 0
  %7835 = vmatpush.bf16.xpose.msra.mxu0 0
  %7836 = vmatpush.bf16.xpose.msra.mxu0 0
  %7837 = vmatpush.bf16.xpose.msra.mxu0 0
  %7838 = vmatpush.bf16.xpose.msra.mxu0 0
  %7839 = vmatpush.bf16.xpose.msra.mxu0 0
  %7840 = vmatpush.bf16.xpose.msra.mxu0 0
  %7841 = vmatpush.bf16.xpose.msra.mxu0 %v7602
  %7842 = vmatmul.bf16.gmra.mxu0 %v7830
  %v7843 = vpop.f32.mrf.mxu0
  %v7844 = vadd.f32 0.0, %v7843
  %v7845 = vpop.f32.mrf.mxu0
  %v7846 = vadd.f32 0.0, %v7845
  %7847 = vmatmul.bf16.gmra.mxu0 %v7831
  %v7848 = vpop.f32.mrf.mxu0
  %v7849 = vadd.f32 0.0, %v7848
  %v7850 = vpop.f32.mrf.mxu0
  %v7851 = vadd.f32 0.0, %v7850
  %7852 = vdwg.mxu0
  %v7857 = vunpack.c.l.b16 %v7644
  %v7858 = vunpack.c.l.b16 %v7645
  %v7859 = vunpack.c.l.b16 %v7646
  %v7860 = vunpack.c.l.b16 %v7647
  %v7861 = vpack.c.b16 %v7858, %v7857
  %v7862 = vpack.c.b16 %v7860, %v7859
  %7865 = vmatpush.bf16.xpose.msra.mxu0 0
  %7866 = vmatpush.bf16.xpose.msra.mxu0 0
  %7867 = vmatpush.bf16.xpose.msra.mxu0 0
  %7868 = vmatpush.bf16.xpose.msra.mxu0 0
  %7869 = vmatpush.bf16.xpose.msra.mxu0 0
  %7870 = vmatpush.bf16.xpose.msra.mxu0 0
  %7871 = vmatpush.bf16.xpose.msra.mxu0 0
  %7872 = vmatpush.bf16.xpose.msra.mxu0 %v7603
  %7873 = vmatmul.bf16.gmra.mxu0 %v7861
  %v7874 = vpop.f32.mrf.mxu0
  %v7875 = vadd.f32 0.0, %v7874
  %v7876 = vpop.f32.mrf.mxu0
  %v7877 = vadd.f32 0.0, %v7876
  %7878 = vmatmul.bf16.gmra.mxu0 %v7862
  %v7879 = vpop.f32.mrf.mxu0
  %v7880 = vadd.f32 0.0, %v7879
  %v7881 = vpop.f32.mrf.mxu0
  %v7882 = vadd.f32 0.0, %v7881
  %7883 = vdwg.mxu0
  %v7888 = vunpack.c.l.b16 %v7648
  %v7889 = vunpack.c.l.b16 %v7649
  %v7890 = vunpack.c.l.b16 %v7650
  %v7891 = vunpack.c.l.b16 %v7651
  %v7892 = vpack.c.b16 %v7889, %v7888
  %v7893 = vpack.c.b16 %v7891, %v7890
  %7896 = vmatpush.bf16.xpose.msra.mxu0 0
  %7897 = vmatpush.bf16.xpose.msra.mxu0 0
  %7898 = vmatpush.bf16.xpose.msra.mxu0 0
  %7899 = vmatpush.bf16.xpose.msra.mxu0 0
  %7900 = vmatpush.bf16.xpose.msra.mxu0 0
  %7901 = vmatpush.bf16.xpose.msra.mxu0 0
  %7902 = vmatpush.bf16.xpose.msra.mxu0 0
  %7903 = vmatpush.bf16.xpose.msra.mxu0 %v7604
  %7904 = vmatmul.bf16.gmra.mxu0 %v7892
  %v7905 = vpop.f32.mrf.mxu0
  %v7906 = vadd.f32 0.0, %v7905
  %v7907 = vpop.f32.mrf.mxu0
  %v7908 = vadd.f32 0.0, %v7907
  %7909 = vmatmul.bf16.gmra.mxu0 %v7893
  %v7910 = vpop.f32.mrf.mxu0
  %v7911 = vadd.f32 0.0, %v7910
  %v7912 = vpop.f32.mrf.mxu0
  %v7913 = vadd.f32 0.0, %v7912
  %7914 = vdwg.mxu0
  %v7919 = vunpack.c.l.b16 %v7652
  %v7920 = vunpack.c.l.b16 %v7653
  %v7921 = vunpack.c.l.b16 %v7654
  %v7922 = vunpack.c.l.b16 %v7655
  %v7923 = vpack.c.b16 %v7920, %v7919
  %v7924 = vpack.c.b16 %v7922, %v7921
  %7927 = vmatpush.bf16.xpose.msra.mxu0 0
  %7928 = vmatpush.bf16.xpose.msra.mxu0 0
  %7929 = vmatpush.bf16.xpose.msra.mxu0 0
  %7930 = vmatpush.bf16.xpose.msra.mxu0 0
  %7931 = vmatpush.bf16.xpose.msra.mxu0 0
  %7932 = vmatpush.bf16.xpose.msra.mxu0 0
  %7933 = vmatpush.bf16.xpose.msra.mxu0 0
  %7934 = vmatpush.bf16.xpose.msra.mxu0 %v7605
  %7935 = vmatmul.bf16.gmra.mxu0 %v7923
  %v7936 = vpop.f32.mrf.mxu0
  %v7937 = vadd.f32 0.0, %v7936
  %v7938 = vpop.f32.mrf.mxu0
  %v7939 = vadd.f32 0.0, %v7938
  %7940 = vmatmul.bf16.gmra.mxu0 %v7924
  %v7941 = vpop.f32.mrf.mxu0
  %v7942 = vadd.f32 0.0, %v7941
  %v7943 = vpop.f32.mrf.mxu0
  %v7944 = vadd.f32 0.0, %v7943
  %7945 = vdwg.mxu0
  %v7950 = vunpack.c.l.b16 %v7656
  %v7951 = vunpack.c.l.b16 %v7657
  %v7952 = vunpack.c.l.b16 %v7658
  %v7953 = vunpack.c.l.b16 %v7659
  %v7954 = vpack.c.b16 %v7951, %v7950
  %v7955 = vpack.c.b16 %v7953, %v7952
  %7958 = vmatpush.bf16.xpose.msra.mxu0 0
  %7959 = vmatpush.bf16.xpose.msra.mxu0 0
  %7960 = vmatpush.bf16.xpose.msra.mxu0 0
  %7961 = vmatpush.bf16.xpose.msra.mxu0 0
  %7962 = vmatpush.bf16.xpose.msra.mxu0 0
  %7963 = vmatpush.bf16.xpose.msra.mxu0 0
  %7964 = vmatpush.bf16.xpose.msra.mxu0 0
  %7965 = vmatpush.bf16.xpose.msra.mxu0 %v7606
  %7966 = vmatmul.bf16.gmra.mxu0 %v7954
  %v7967 = vpop.f32.mrf.mxu0
  %v7968 = vadd.f32 0.0, %v7967
  %v7969 = vpop.f32.mrf.mxu0
  %v7970 = vadd.f32 0.0, %v7969
  %7971 = vmatmul.bf16.gmra.mxu0 %v7955
  %v7972 = vpop.f32.mrf.mxu0
  %v7973 = vadd.f32 0.0, %v7972
  %v7974 = vpop.f32.mrf.mxu0
  %v7975 = vadd.f32 0.0, %v7974
  %7976 = vdwg.mxu0
  %v7981 = vunpack.c.l.b16 %v7660
  %v7982 = vunpack.c.l.b16 %v7661
  %v7983 = vunpack.c.l.b16 %v7662
  %v7984 = vunpack.c.l.b16 %v7663
  %v7985 = vpack.c.b16 %v7982, %v7981
  %v7986 = vpack.c.b16 %v7984, %v7983
  %7989 = vmatpush.bf16.xpose.msra.mxu0 0
  %7990 = vmatpush.bf16.xpose.msra.mxu0 0
  %7991 = vmatpush.bf16.xpose.msra.mxu0 0
  %7992 = vmatpush.bf16.xpose.msra.mxu0 0
  %7993 = vmatpush.bf16.xpose.msra.mxu0 0
  %7994 = vmatpush.bf16.xpose.msra.mxu0 0
  %7995 = vmatpush.bf16.xpose.msra.mxu0 0
  %7996 = vmatpush.bf16.xpose.msra.mxu0 %v7607
  %7997 = vmatmul.bf16.gmra.mxu0 %v7985
  %v7998 = vpop.f32.mrf.mxu0
  %v7999 = vadd.f32 0.0, %v7998
  %v8000 = vpop.f32.mrf.mxu0
  %v8001 = vadd.f32 0.0, %v8000
  %8002 = vmatmul.bf16.gmra.mxu0 %v7986
  %v8003 = vpop.f32.mrf.mxu0
  %v8004 = vadd.f32 0.0, %v8003
  %v8005 = vpop.f32.mrf.mxu0
  %v8006 = vadd.f32 0.0, %v8005
  %8007 = vdwg.mxu0
  %v8012 = vunpack.c.l.b16 %v7664
  %v8013 = vunpack.c.l.b16 %v7665
  %v8014 = vunpack.c.l.b16 %v7666
  %v8015 = vunpack.c.l.b16 %v7667
  %v8016 = vpack.c.b16 %v8013, %v8012
  %v8017 = vpack.c.b16 %v8015, %v8014
  %8020 = vmatpush.bf16.xpose.msra.mxu0 0
  %8021 = vmatpush.bf16.xpose.msra.mxu0 0
  %8022 = vmatpush.bf16.xpose.msra.mxu0 0
  %8023 = vmatpush.bf16.xpose.msra.mxu0 0
  %8024 = vmatpush.bf16.xpose.msra.mxu0 0
  %8025 = vmatpush.bf16.xpose.msra.mxu0 0
  %8026 = vmatpush.bf16.xpose.msra.mxu0 0
  %8027 = vmatpush.bf16.xpose.msra.mxu0 %v7608
  %8028 = vmatmul.bf16.gmra.mxu0 %v8016
  %v8029 = vpop.f32.mrf.mxu0
  %v8030 = vadd.f32 0.0, %v8029
  %v8031 = vpop.f32.mrf.mxu0
  %v8032 = vadd.f32 0.0, %v8031
  %8033 = vmatmul.bf16.gmra.mxu0 %v8017
  %v8034 = vpop.f32.mrf.mxu0
  %v8035 = vadd.f32 0.0, %v8034
  %v8036 = vpop.f32.mrf.mxu0
  %v8037 = vadd.f32 0.0, %v8036
  %8038 = vdwg.mxu0
  %v8043 = vunpack.c.l.b16 %v7668
  %v8044 = vunpack.c.l.b16 %v7669
  %v8045 = vunpack.c.l.b16 %v7670
  %v8046 = vunpack.c.l.b16 %v7671
  %v8047 = vpack.c.b16 %v8044, %v8043
  %v8048 = vpack.c.b16 %v8046, %v8045
  %8051 = vmatpush.bf16.xpose.msra.mxu0 0
  %8052 = vmatpush.bf16.xpose.msra.mxu0 0
  %8053 = vmatpush.bf16.xpose.msra.mxu0 0
  %8054 = vmatpush.bf16.xpose.msra.mxu0 0
  %8055 = vmatpush.bf16.xpose.msra.mxu0 0
  %8056 = vmatpush.bf16.xpose.msra.mxu0 0
  %8057 = vmatpush.bf16.xpose.msra.mxu0 0
  %8058 = vmatpush.bf16.xpose.msra.mxu0 %v7609
  %8059 = vmatmul.bf16.gmra.mxu0 %v8047
  %v8060 = vpop.f32.mrf.mxu0
  %v8061 = vadd.f32 0.0, %v8060
  %v8062 = vpop.f32.mrf.mxu0
  %v8063 = vadd.f32 0.0, %v8062
  %8064 = vmatmul.bf16.gmra.mxu0 %v8048
  %v8065 = vpop.f32.mrf.mxu0
  %v8066 = vadd.f32 0.0, %v8065
  %v8067 = vpop.f32.mrf.mxu0
  %v8068 = vadd.f32 0.0, %v8067
  %8069 = vdwg.mxu0
  %v8074 = vunpack.c.l.b16 %v7672
  %v8075 = vunpack.c.l.b16 %v7673
  %v8076 = vunpack.c.l.b16 %v7674
  %v8077 = vunpack.c.l.b16 %v7675
  %v8078 = vpack.c.b16 %v8075, %v8074
  %v8079 = vpack.c.b16 %v8077, %v8076
  %8082 = vmatpush.bf16.xpose.msra.mxu0 0
  %8083 = vmatpush.bf16.xpose.msra.mxu0 0
  %8084 = vmatpush.bf16.xpose.msra.mxu0 0
  %8085 = vmatpush.bf16.xpose.msra.mxu0 0
  %8086 = vmatpush.bf16.xpose.msra.mxu0 0
  %8087 = vmatpush.bf16.xpose.msra.mxu0 0
  %8088 = vmatpush.bf16.xpose.msra.mxu0 0
  %8089 = vmatpush.bf16.xpose.msra.mxu0 %v7610
  %8090 = vmatmul.bf16.gmra.mxu0 %v8078
  %v8091 = vpop.f32.mrf.mxu0
  %v8092 = vadd.f32 0.0, %v8091
  %v8093 = vpop.f32.mrf.mxu0
  %v8094 = vadd.f32 0.0, %v8093
  %8095 = vmatmul.bf16.gmra.mxu0 %v8079
  %v8096 = vpop.f32.mrf.mxu0
  %v8097 = vadd.f32 0.0, %v8096
  %v8098 = vpop.f32.mrf.mxu0
  %v8099 = vadd.f32 0.0, %v8098
  %8100 = vdwg.mxu0
  %v8105 = vunpack.c.l.b16 %v7676
  %v8106 = vunpack.c.l.b16 %v7677
  %v8107 = vunpack.c.l.b16 %v7678
  %v8108 = vunpack.c.l.b16 %v7679
  %v8109 = vpack.c.b16 %v8106, %v8105
  %v8110 = vpack.c.b16 %v8108, %v8107
  %8113 = vmatpush.bf16.xpose.msra.mxu0 0
  %8114 = vmatpush.bf16.xpose.msra.mxu0 0
  %8115 = vmatpush.bf16.xpose.msra.mxu0 0
  %8116 = vmatpush.bf16.xpose.msra.mxu0 0
  %8117 = vmatpush.bf16.xpose.msra.mxu0 0
  %8118 = vmatpush.bf16.xpose.msra.mxu0 0
  %8119 = vmatpush.bf16.xpose.msra.mxu0 0
  %8120 = vmatpush.bf16.xpose.msra.mxu0 %v7611
  %8121 = vmatmul.bf16.gmra.mxu0 %v8109
  %v8122 = vpop.f32.mrf.mxu0
  %v8123 = vadd.f32 0.0, %v8122
  %v8124 = vpop.f32.mrf.mxu0
  %v8125 = vadd.f32 0.0, %v8124
  %8126 = vmatmul.bf16.gmra.mxu0 %v8110
  %v8127 = vpop.f32.mrf.mxu0
  %v8128 = vadd.f32 0.0, %v8127
  %v8129 = vpop.f32.mrf.mxu0
  %v8130 = vadd.f32 0.0, %v8129
  %8131 = vdwg.mxu0
  %v8136 = vunpack.c.l.b16 %v7680
  %v8137 = vunpack.c.l.b16 %v7681
  %v8138 = vunpack.c.l.b16 %v7682
  %v8139 = vunpack.c.l.b16 %v7683
  %v8140 = vpack.c.b16 %v8137, %v8136
  %v8141 = vpack.c.b16 %v8139, %v8138
  %8144 = vmatpush.bf16.xpose.msra.mxu0 0
  %8145 = vmatpush.bf16.xpose.msra.mxu0 0
  %8146 = vmatpush.bf16.xpose.msra.mxu0 0
  %8147 = vmatpush.bf16.xpose.msra.mxu0 0
  %8148 = vmatpush.bf16.xpose.msra.mxu0 0
  %8149 = vmatpush.bf16.xpose.msra.mxu0 0
  %8150 = vmatpush.bf16.xpose.msra.mxu0 0
  %8151 = vmatpush.bf16.xpose.msra.mxu0 %v7612
  %8152 = vmatmul.bf16.gmra.mxu0 %v8140
  %v8153 = vpop.f32.mrf.mxu0
  %v8154 = vadd.f32 0.0, %v8153
  %v8155 = vpop.f32.mrf.mxu0
  %v8156 = vadd.f32 0.0, %v8155
  %8157 = vmatmul.bf16.gmra.mxu0 %v8141
  %v8158 = vpop.f32.mrf.mxu0
  %v8159 = vadd.f32 0.0, %v8158
  %v8160 = vpop.f32.mrf.mxu0
  %v8161 = vadd.f32 0.0, %v8160
  %8162 = vdwg.mxu0
  %v8167 = vunpack.c.l.b16 %v7684
  %v8168 = vunpack.c.l.b16 %v7685
  %v8169 = vunpack.c.l.b16 %v7686
  %v8170 = vunpack.c.l.b16 %v7687
  %v8171 = vpack.c.b16 %v8168, %v8167
  %v8172 = vpack.c.b16 %v8170, %v8169
  %8175 = vmatpush.bf16.xpose.msra.mxu0 0
  %8176 = vmatpush.bf16.xpose.msra.mxu0 0
  %8177 = vmatpush.bf16.xpose.msra.mxu0 0
  %8178 = vmatpush.bf16.xpose.msra.mxu0 0
  %8179 = vmatpush.bf16.xpose.msra.mxu0 0
  %8180 = vmatpush.bf16.xpose.msra.mxu0 0
  %8181 = vmatpush.bf16.xpose.msra.mxu0 0
  %8182 = vmatpush.bf16.xpose.msra.mxu0 %v7613
  %8183 = vmatmul.bf16.gmra.mxu0 %v8171
  %v8184 = vpop.f32.mrf.mxu0
  %v8185 = vadd.f32 0.0, %v8184
  %v8186 = vpop.f32.mrf.mxu0
  %v8187 = vadd.f32 0.0, %v8186
  %8188 = vmatmul.bf16.gmra.mxu0 %v8172
  %v8189 = vpop.f32.mrf.mxu0
  %v8190 = vadd.f32 0.0, %v8189
  %v8191 = vpop.f32.mrf.mxu0
  %v8192 = vadd.f32 0.0, %v8191
  %8193 = vdwg.mxu0
  %v8198 = vunpack.c.l.b16 %v7688
  %v8199 = vunpack.c.l.b16 %v7689
  %v8200 = vunpack.c.l.b16 %v7690
  %v8201 = vunpack.c.l.b16 %v7691
  %v8202 = vpack.c.b16 %v8199, %v8198
  %v8203 = vpack.c.b16 %v8201, %v8200
  %8206 = vmatpush.bf16.xpose.msra.mxu0 0
  %8207 = vmatpush.bf16.xpose.msra.mxu0 0
  %8208 = vmatpush.bf16.xpose.msra.mxu0 0
  %8209 = vmatpush.bf16.xpose.msra.mxu0 0
  %8210 = vmatpush.bf16.xpose.msra.mxu0 0
  %8211 = vmatpush.bf16.xpose.msra.mxu0 0
  %8212 = vmatpush.bf16.xpose.msra.mxu0 0
  %8213 = vmatpush.bf16.xpose.msra.mxu0 %v7614
  %8214 = vmatmul.bf16.gmra.mxu0 %v8202
  %v8215 = vpop.f32.mrf.mxu0
  %v8216 = vadd.f32 0.0, %v8215
  %v8217 = vpop.f32.mrf.mxu0
  %v8218 = vadd.f32 0.0, %v8217
  %8219 = vmatmul.bf16.gmra.mxu0 %v8203
  %v8220 = vpop.f32.mrf.mxu0
  %v8221 = vadd.f32 0.0, %v8220
  %v8222 = vpop.f32.mrf.mxu0
  %v8223 = vadd.f32 0.0, %v8222
  %8224 = vdwg.mxu0
  %v8229 = vunpack.c.l.b16 %v7692
  %v8230 = vunpack.c.l.b16 %v7693
  %v8231 = vunpack.c.l.b16 %v7694
  %v8232 = vunpack.c.l.b16 %v7695
  %v8233 = vpack.c.b16 %v8230, %v8229
  %v8234 = vpack.c.b16 %v8232, %v8231
  %8237 = vmatpush.bf16.xpose.msra.mxu0 0
  %8238 = vmatpush.bf16.xpose.msra.mxu0 0
  %8239 = vmatpush.bf16.xpose.msra.mxu0 0
  %8240 = vmatpush.bf16.xpose.msra.mxu0 0
  %8241 = vmatpush.bf16.xpose.msra.mxu0 0
  %8242 = vmatpush.bf16.xpose.msra.mxu0 0
  %8243 = vmatpush.bf16.xpose.msra.mxu0 0
  %8244 = vmatpush.bf16.xpose.msra.mxu0 %v7615
  %8245 = vmatmul.bf16.gmra.mxu0 %v8233
  %v8246 = vpop.f32.mrf.mxu0
  %v8247 = vadd.f32 0.0, %v8246
  %v8248 = vpop.f32.mrf.mxu0
  %v8249 = vadd.f32 0.0, %v8248
  %8250 = vmatmul.bf16.gmra.mxu0 %v8234
  %v8251 = vpop.f32.mrf.mxu0
  %v8252 = vadd.f32 0.0, %v8251
  %v8253 = vpop.f32.mrf.mxu0
  %v8254 = vadd.f32 0.0, %v8253
  %8255 = vdwg.mxu0
  %v8260 = vunpack.c.l.b16 %v7696
  %v8261 = vunpack.c.l.b16 %v7697
  %v8262 = vunpack.c.l.b16 %v7698
  %v8263 = vunpack.c.l.b16 %v7699
  %v8264 = vpack.c.b16 %v8261, %v8260
  %v8265 = vpack.c.b16 %v8263, %v8262
  %8268 = vmatpush.bf16.xpose.msra.mxu0 0
  %8269 = vmatpush.bf16.xpose.msra.mxu0 0
  %8270 = vmatpush.bf16.xpose.msra.mxu0 0
  %8271 = vmatpush.bf16.xpose.msra.mxu0 0
  %8272 = vmatpush.bf16.xpose.msra.mxu0 0
  %8273 = vmatpush.bf16.xpose.msra.mxu0 0
  %8274 = vmatpush.bf16.xpose.msra.mxu0 0
  %8275 = vmatpush.bf16.xpose.msra.mxu0 %v7616
  %8276 = vmatmul.bf16.gmra.mxu0 %v8264
  %v8277 = vpop.f32.mrf.mxu0
  %v8278 = vadd.f32 0.0, %v8277
  %v8279 = vpop.f32.mrf.mxu0
  %v8280 = vadd.f32 0.0, %v8279
  %8281 = vmatmul.bf16.gmra.mxu0 %v8265
  %v8282 = vpop.f32.mrf.mxu0
  %v8283 = vadd.f32 0.0, %v8282
  %v8284 = vpop.f32.mrf.mxu0
  %v8285 = vadd.f32 0.0, %v8284
  %8286 = vdwg.mxu0
  %v8291 = vunpack.c.l.b16 %v7700
  %v8292 = vunpack.c.l.b16 %v7701
  %v8293 = vunpack.c.l.b16 %v7702
  %v8294 = vunpack.c.l.b16 %v7703
  %v8295 = vpack.c.b16 %v8292, %v8291
  %v8296 = vpack.c.b16 %v8294, %v8293
  %8299 = vmatpush.bf16.xpose.msra.mxu0 0
  %8300 = vmatpush.bf16.xpose.msra.mxu0 0
  %8301 = vmatpush.bf16.xpose.msra.mxu0 0
  %8302 = vmatpush.bf16.xpose.msra.mxu0 0
  %8303 = vmatpush.bf16.xpose.msra.mxu0 0
  %8304 = vmatpush.bf16.xpose.msra.mxu0 0
  %8305 = vmatpush.bf16.xpose.msra.mxu0 0
  %8306 = vmatpush.bf16.xpose.msra.mxu0 %v7617
  %8307 = vmatmul.bf16.gmra.mxu0 %v8295
  %v8308 = vpop.f32.mrf.mxu0
  %v8309 = vadd.f32 0.0, %v8308
  %v8310 = vpop.f32.mrf.mxu0
  %v8311 = vadd.f32 0.0, %v8310
  %8312 = vmatmul.bf16.gmra.mxu0 %v8296
  %v8313 = vpop.f32.mrf.mxu0
  %v8314 = vadd.f32 0.0, %v8313
  %v8315 = vpop.f32.mrf.mxu0
  %v8316 = vadd.f32 0.0, %v8315
  %8317 = vdwg.mxu0
  %v8322 = vunpack.c.l.b16 %v7704
  %v8323 = vunpack.c.l.b16 %v7705
  %v8324 = vunpack.c.l.b16 %v7706
  %v8325 = vunpack.c.l.b16 %v7707
  %v8326 = vpack.c.b16 %v8323, %v8322
  %v8327 = vpack.c.b16 %v8325, %v8324
  %8330 = vmatpush.bf16.xpose.msra.mxu0 0
  %8331 = vmatpush.bf16.xpose.msra.mxu0 0
  %8332 = vmatpush.bf16.xpose.msra.mxu0 0
  %8333 = vmatpush.bf16.xpose.msra.mxu0 0
  %8334 = vmatpush.bf16.xpose.msra.mxu0 0
  %8335 = vmatpush.bf16.xpose.msra.mxu0 0
  %8336 = vmatpush.bf16.xpose.msra.mxu0 0
  %8337 = vmatpush.bf16.xpose.msra.mxu0 %v7618
  %8338 = vmatmul.bf16.gmra.mxu0 %v8326
  %v8339 = vpop.f32.mrf.mxu0
  %v8340 = vadd.f32 0.0, %v8339
  %v8341 = vpop.f32.mrf.mxu0
  %v8342 = vadd.f32 0.0, %v8341
  %8343 = vmatmul.bf16.gmra.mxu0 %v8327
  %v8344 = vpop.f32.mrf.mxu0
  %v8345 = vadd.f32 0.0, %v8344
  %v8346 = vpop.f32.mrf.mxu0
  %v8347 = vadd.f32 0.0, %v8346
  %8348 = vdwg.mxu0
  %v8353 = vunpack.c.l.b16 %v7708
  %v8354 = vunpack.c.l.b16 %v7709
  %v8355 = vunpack.c.l.b16 %v7710
  %v8356 = vunpack.c.l.b16 %v7711
  %v8357 = vpack.c.b16 %v8354, %v8353
  %v8358 = vpack.c.b16 %v8356, %v8355
  %8361 = vmatpush.bf16.xpose.msra.mxu0 0
  %8362 = vmatpush.bf16.xpose.msra.mxu0 0
  %8363 = vmatpush.bf16.xpose.msra.mxu0 0
  %8364 = vmatpush.bf16.xpose.msra.mxu0 0
  %8365 = vmatpush.bf16.xpose.msra.mxu0 0
  %8366 = vmatpush.bf16.xpose.msra.mxu0 0
  %8367 = vmatpush.bf16.xpose.msra.mxu0 0
  %8368 = vmatpush.bf16.xpose.msra.mxu0 %v7619
  %8369 = vmatmul.bf16.gmra.mxu0 %v8357
  %v8370 = vpop.f32.mrf.mxu0
  %v8371 = vadd.f32 0.0, %v8370
  %v8372 = vpop.f32.mrf.mxu0
  %v8373 = vadd.f32 0.0, %v8372
  %8374 = vmatmul.bf16.gmra.mxu0 %v8358
  %v8375 = vpop.f32.mrf.mxu0
  %v8376 = vadd.f32 0.0, %v8375
  %v8377 = vpop.f32.mrf.mxu0
  %v8378 = vadd.f32 0.0, %v8377
  %8379 = vdwg.mxu0
  %v8384 = vunpack.c.l.b16 %v7712
  %v8385 = vunpack.c.l.b16 %v7713
  %v8386 = vunpack.c.l.b16 %v7714
  %v8387 = vunpack.c.l.b16 %v7715
  %v8388 = vpack.c.b16 %v8385, %v8384
  %v8389 = vpack.c.b16 %v8387, %v8386
  %8392 = vmatpush.bf16.xpose.msra.mxu0 0
  %8393 = vmatpush.bf16.xpose.msra.mxu0 0
  %8394 = vmatpush.bf16.xpose.msra.mxu0 0
  %8395 = vmatpush.bf16.xpose.msra.mxu0 0
  %8396 = vmatpush.bf16.xpose.msra.mxu0 0
  %8397 = vmatpush.bf16.xpose.msra.mxu0 0
  %8398 = vmatpush.bf16.xpose.msra.mxu0 0
  %8399 = vmatpush.bf16.xpose.msra.mxu0 %v7620
  %8400 = vmatmul.bf16.gmra.mxu0 %v8388
  %v8401 = vpop.f32.mrf.mxu0
  %v8402 = vadd.f32 0.0, %v8401
  %v8403 = vpop.f32.mrf.mxu0
  %v8404 = vadd.f32 0.0, %v8403
  %8405 = vmatmul.bf16.gmra.mxu0 %v8389
  %v8406 = vpop.f32.mrf.mxu0
  %v8407 = vadd.f32 0.0, %v8406
  %v8408 = vpop.f32.mrf.mxu0
  %v8409 = vadd.f32 0.0, %v8408
  %8410 = vdwg.mxu0
  %v8415 = vunpack.c.l.b16 %v7716
  %v8416 = vunpack.c.l.b16 %v7717
  %v8417 = vunpack.c.l.b16 %v7718
  %v8418 = vunpack.c.l.b16 %v7719
  %v8419 = vpack.c.b16 %v8416, %v8415
  %v8420 = vpack.c.b16 %v8418, %v8417
  %8423 = vmatpush.bf16.xpose.msra.mxu0 0
  %8424 = vmatpush.bf16.xpose.msra.mxu0 0
  %8425 = vmatpush.bf16.xpose.msra.mxu0 0
  %8426 = vmatpush.bf16.xpose.msra.mxu0 0
  %8427 = vmatpush.bf16.xpose.msra.mxu0 0
  %8428 = vmatpush.bf16.xpose.msra.mxu0 0
  %8429 = vmatpush.bf16.xpose.msra.mxu0 0
  %8430 = vmatpush.bf16.xpose.msra.mxu0 %v7621
  %8431 = vmatmul.bf16.gmra.mxu0 %v8419
  %v8432 = vpop.f32.mrf.mxu0
  %v8433 = vadd.f32 0.0, %v8432
  %v8434 = vpop.f32.mrf.mxu0
  %v8435 = vadd.f32 0.0, %v8434
  %8436 = vmatmul.bf16.gmra.mxu0 %v8420
  %v8437 = vpop.f32.mrf.mxu0
  %v8438 = vadd.f32 0.0, %v8437
  %v8439 = vpop.f32.mrf.mxu0
  %v8440 = vadd.f32 0.0, %v8439
  %8441 = vdwg.mxu0
  %v8446 = vunpack.c.l.b16 %v7720
  %v8447 = vunpack.c.l.b16 %v7721
  %v8448 = vunpack.c.l.b16 %v7722
  %v8449 = vunpack.c.l.b16 %v7723
  %v8450 = vpack.c.b16 %v8447, %v8446
  %v8451 = vpack.c.b16 %v8449, %v8448
  %8454 = vmatpush.bf16.xpose.msra.mxu0 0
  %8455 = vmatpush.bf16.xpose.msra.mxu0 0
  %8456 = vmatpush.bf16.xpose.msra.mxu0 0
  %8457 = vmatpush.bf16.xpose.msra.mxu0 0
  %8458 = vmatpush.bf16.xpose.msra.mxu0 0
  %8459 = vmatpush.bf16.xpose.msra.mxu0 0
  %8460 = vmatpush.bf16.xpose.msra.mxu0 0
  %8461 = vmatpush.bf16.xpose.msra.mxu0 %v7622
  %8462 = vmatmul.bf16.gmra.mxu0 %v8450
  %v8463 = vpop.f32.mrf.mxu0
  %v8464 = vadd.f32 0.0, %v8463
  %v8465 = vpop.f32.mrf.mxu0
  %v8466 = vadd.f32 0.0, %v8465
  %8467 = vmatmul.bf16.gmra.mxu0 %v8451
  %v8468 = vpop.f32.mrf.mxu0
  %v8469 = vadd.f32 0.0, %v8468
  %v8470 = vpop.f32.mrf.mxu0
  %v8471 = vadd.f32 0.0, %v8470
  %8472 = vdwg.mxu0
  %v8477 = vunpack.c.l.b16 %v7724
  %v8478 = vunpack.c.l.b16 %v7725
  %v8479 = vunpack.c.l.b16 %v7726
  %v8480 = vunpack.c.l.b16 %v7727
  %v8481 = vpack.c.b16 %v8478, %v8477
  %v8482 = vpack.c.b16 %v8480, %v8479
  %8485 = vmatpush.bf16.xpose.msra.mxu0 0
  %8486 = vmatpush.bf16.xpose.msra.mxu0 0
  %8487 = vmatpush.bf16.xpose.msra.mxu0 0
  %8488 = vmatpush.bf16.xpose.msra.mxu0 0
  %8489 = vmatpush.bf16.xpose.msra.mxu0 0
  %8490 = vmatpush.bf16.xpose.msra.mxu0 0
  %8491 = vmatpush.bf16.xpose.msra.mxu0 0
  %8492 = vmatpush.bf16.xpose.msra.mxu0 %v7623
  %8493 = vmatmul.bf16.gmra.mxu0 %v8481
  %v8494 = vpop.f32.mrf.mxu0
  %v8495 = vadd.f32 0.0, %v8494
  %v8496 = vpop.f32.mrf.mxu0
  %v8497 = vadd.f32 0.0, %v8496
  %8498 = vmatmul.bf16.gmra.mxu0 %v8482
  %v8499 = vpop.f32.mrf.mxu0
  %v8500 = vadd.f32 0.0, %v8499
  %v8501 = vpop.f32.mrf.mxu0
  %v8502 = vadd.f32 0.0, %v8501
  %8503 = vdwg.mxu0
  %v8508 = vunpack.c.l.b16 %v7728
  %v8509 = vunpack.c.l.b16 %v7729
  %v8510 = vunpack.c.l.b16 %v7730
  %v8511 = vunpack.c.l.b16 %v7731
  %v8512 = vpack.c.b16 %v8509, %v8508
  %v8513 = vpack.c.b16 %v8511, %v8510
  %8516 = vmatpush.bf16.xpose.msra.mxu0 0
  %8517 = vmatpush.bf16.xpose.msra.mxu0 0
  %8518 = vmatpush.bf16.xpose.msra.mxu0 0
  %8519 = vmatpush.bf16.xpose.msra.mxu0 0
  %8520 = vmatpush.bf16.xpose.msra.mxu0 0
  %8521 = vmatpush.bf16.xpose.msra.mxu0 0
  %8522 = vmatpush.bf16.xpose.msra.mxu0 0
  %8523 = vmatpush.bf16.xpose.msra.mxu0 %v7624
  %8524 = vmatmul.bf16.gmra.mxu0 %v8512
  %v8525 = vpop.f32.mrf.mxu0
  %v8526 = vadd.f32 0.0, %v8525
  %v8527 = vpop.f32.mrf.mxu0
  %v8528 = vadd.f32 0.0, %v8527
  %8529 = vmatmul.bf16.gmra.mxu0 %v8513
  %v8530 = vpop.f32.mrf.mxu0
  %v8531 = vadd.f32 0.0, %v8530
  %v8532 = vpop.f32.mrf.mxu0
  %v8533 = vadd.f32 0.0, %v8532
  %8534 = vdwg.mxu0
  %v8539 = vunpack.c.l.b16 %v7732
  %v8540 = vunpack.c.l.b16 %v7733
  %v8541 = vunpack.c.l.b16 %v7734
  %v8542 = vunpack.c.l.b16 %v7735
  %v8543 = vpack.c.b16 %v8540, %v8539
  %v8544 = vpack.c.b16 %v8542, %v8541
  %8547 = vmatpush.bf16.xpose.msra.mxu0 0
  %8548 = vmatpush.bf16.xpose.msra.mxu0 0
  %8549 = vmatpush.bf16.xpose.msra.mxu0 0
  %8550 = vmatpush.bf16.xpose.msra.mxu0 0
  %8551 = vmatpush.bf16.xpose.msra.mxu0 0
  %8552 = vmatpush.bf16.xpose.msra.mxu0 0
  %8553 = vmatpush.bf16.xpose.msra.mxu0 0
  %8554 = vmatpush.bf16.xpose.msra.mxu0 %v7625
  %8555 = vmatmul.bf16.gmra.mxu0 %v8543
  %v8556 = vpop.f32.mrf.mxu0
  %v8557 = vadd.f32 0.0, %v8556
  %v8558 = vpop.f32.mrf.mxu0
  %v8559 = vadd.f32 0.0, %v8558
  %8560 = vmatmul.bf16.gmra.mxu0 %v8544
  %v8561 = vpop.f32.mrf.mxu0
  %v8562 = vadd.f32 0.0, %v8561
  %v8563 = vpop.f32.mrf.mxu0
  %v8564 = vadd.f32 0.0, %v8563
  %8565 = vdwg.mxu0
  %v8570 = vunpack.c.l.b16 %v7736
  %v8571 = vunpack.c.l.b16 %v7737
  %v8572 = vunpack.c.l.b16 %v7738
  %v8573 = vunpack.c.l.b16 %v7739
  %v8574 = vpack.c.b16 %v8571, %v8570
  %v8575 = vpack.c.b16 %v8573, %v8572
  %8578 = vmatpush.bf16.xpose.msra.mxu0 0
  %8579 = vmatpush.bf16.xpose.msra.mxu0 0
  %8580 = vmatpush.bf16.xpose.msra.mxu0 0
  %8581 = vmatpush.bf16.xpose.msra.mxu0 0
  %8582 = vmatpush.bf16.xpose.msra.mxu0 0
  %8583 = vmatpush.bf16.xpose.msra.mxu0 0
  %8584 = vmatpush.bf16.xpose.msra.mxu0 0
  %8585 = vmatpush.bf16.xpose.msra.mxu0 %v7626
  %8586 = vmatmul.bf16.gmra.mxu0 %v8574
  %v8587 = vpop.f32.mrf.mxu0
  %v8588 = vadd.f32 0.0, %v8587
  %v8589 = vpop.f32.mrf.mxu0
  %v8590 = vadd.f32 0.0, %v8589
  %8591 = vmatmul.bf16.gmra.mxu0 %v8575
  %v8592 = vpop.f32.mrf.mxu0
  %v8593 = vadd.f32 0.0, %v8592
  %v8594 = vpop.f32.mrf.mxu0
  %v8595 = vadd.f32 0.0, %v8594
  %8596 = vdwg.mxu0
  %v8601 = vunpack.c.l.b16 %v7740
  %v8602 = vunpack.c.l.b16 %v7741
  %v8603 = vunpack.c.l.b16 %v7742
  %v8604 = vunpack.c.l.b16 %v7743
  %v8605 = vpack.c.b16 %v8602, %v8601
  %v8606 = vpack.c.b16 %v8604, %v8603
  %8609 = vmatpush.bf16.xpose.msra.mxu0 0
  %8610 = vmatpush.bf16.xpose.msra.mxu0 0
  %8611 = vmatpush.bf16.xpose.msra.mxu0 0
  %8612 = vmatpush.bf16.xpose.msra.mxu0 0
  %8613 = vmatpush.bf16.xpose.msra.mxu0 0
  %8614 = vmatpush.bf16.xpose.msra.mxu0 0
  %8615 = vmatpush.bf16.xpose.msra.mxu0 0
  %8616 = vmatpush.bf16.xpose.msra.mxu0 %v7627
  %8617 = vmatmul.bf16.gmra.mxu0 %v8605
  %v8618 = vpop.f32.mrf.mxu0
  %v8619 = vadd.f32 0.0, %v8618
  %v8620 = vpop.f32.mrf.mxu0
  %v8621 = vadd.f32 0.0, %v8620
  %8622 = vmatmul.bf16.gmra.mxu0 %v8606
  %v8623 = vpop.f32.mrf.mxu0
  %v8624 = vadd.f32 0.0, %v8623
  %v8625 = vpop.f32.mrf.mxu0
  %v8626 = vadd.f32 0.0, %v8625
  %8627 = vdwg.mxu0
  %v8632 = vunpack.c.l.b16 %v7744
  %v8633 = vunpack.c.l.b16 %v7745
  %v8634 = vunpack.c.l.b16 %v7746
  %v8635 = vunpack.c.l.b16 %v7747
  %v8636 = vpack.c.b16 %v8633, %v8632
  %v8637 = vpack.c.b16 %v8635, %v8634
  %8640 = vmatpush.bf16.xpose.msra.mxu0 0
  %8641 = vmatpush.bf16.xpose.msra.mxu0 0
  %8642 = vmatpush.bf16.xpose.msra.mxu0 0
  %8643 = vmatpush.bf16.xpose.msra.mxu0 0
  %8644 = vmatpush.bf16.xpose.msra.mxu0 0
  %8645 = vmatpush.bf16.xpose.msra.mxu0 0
  %8646 = vmatpush.bf16.xpose.msra.mxu0 0
  %8647 = vmatpush.bf16.xpose.msra.mxu0 %v7628
  %8648 = vmatmul.bf16.gmra.mxu0 %v8636
  %v8649 = vpop.f32.mrf.mxu0
  %v8650 = vadd.f32 0.0, %v8649
  %v8651 = vpop.f32.mrf.mxu0
  %v8652 = vadd.f32 0.0, %v8651
  %8653 = vmatmul.bf16.gmra.mxu0 %v8637
  %v8654 = vpop.f32.mrf.mxu0
  %v8655 = vadd.f32 0.0, %v8654
  %v8656 = vpop.f32.mrf.mxu0
  %v8657 = vadd.f32 0.0, %v8656
  %8658 = vdwg.mxu0
  %v8663 = vunpack.c.l.b16 %v7748
  %v8664 = vunpack.c.l.b16 %v7749
  %v8665 = vunpack.c.l.b16 %v7750
  %v8666 = vunpack.c.l.b16 %v7751
  %v8667 = vpack.c.b16 %v8664, %v8663
  %v8668 = vpack.c.b16 %v8666, %v8665
  %8671 = vmatpush.bf16.xpose.msra.mxu0 0
  %8672 = vmatpush.bf16.xpose.msra.mxu0 0
  %8673 = vmatpush.bf16.xpose.msra.mxu0 0
  %8674 = vmatpush.bf16.xpose.msra.mxu0 0
  %8675 = vmatpush.bf16.xpose.msra.mxu0 0
  %8676 = vmatpush.bf16.xpose.msra.mxu0 0
  %8677 = vmatpush.bf16.xpose.msra.mxu0 0
  %8678 = vmatpush.bf16.xpose.msra.mxu0 %v7629
  %8679 = vmatmul.bf16.gmra.mxu0 %v8667
  %v8680 = vpop.f32.mrf.mxu0
  %v8681 = vadd.f32 0.0, %v8680
  %v8682 = vpop.f32.mrf.mxu0
  %v8683 = vadd.f32 0.0, %v8682
  %8684 = vmatmul.bf16.gmra.mxu0 %v8668
  %v8685 = vpop.f32.mrf.mxu0
  %v8686 = vadd.f32 0.0, %v8685
  %v8687 = vpop.f32.mrf.mxu0
  %v8688 = vadd.f32 0.0, %v8687
  %8689 = vdwg.mxu0
  %v8694 = vunpack.c.l.b16 %v7752
  %v8695 = vunpack.c.l.b16 %v7753
  %v8696 = vunpack.c.l.b16 %v7754
  %v8697 = vunpack.c.l.b16 %v7755
  %v8698 = vpack.c.b16 %v8695, %v8694
  %v8699 = vpack.c.b16 %v8697, %v8696
  %8702 = vmatpush.bf16.xpose.msra.mxu0 0
  %8703 = vmatpush.bf16.xpose.msra.mxu0 0
  %8704 = vmatpush.bf16.xpose.msra.mxu0 0
  %8705 = vmatpush.bf16.xpose.msra.mxu0 0
  %8706 = vmatpush.bf16.xpose.msra.mxu0 0
  %8707 = vmatpush.bf16.xpose.msra.mxu0 0
  %8708 = vmatpush.bf16.xpose.msra.mxu0 0
  %8709 = vmatpush.bf16.xpose.msra.mxu0 %v7630
  %8710 = vmatmul.bf16.gmra.mxu0 %v8698
  %v8711 = vpop.f32.mrf.mxu0
  %v8712 = vadd.f32 0.0, %v8711
  %v8713 = vpop.f32.mrf.mxu0
  %v8714 = vadd.f32 0.0, %v8713
  %8715 = vmatmul.bf16.gmra.mxu0 %v8699
  %v8716 = vpop.f32.mrf.mxu0
  %v8717 = vadd.f32 0.0, %v8716
  %v8718 = vpop.f32.mrf.mxu0
  %v8719 = vadd.f32 0.0, %v8718
  %8720 = vdwg.mxu0
  %v8725 = vunpack.c.l.b16 %v7756
  %v8726 = vunpack.c.l.b16 %v7757
  %v8727 = vunpack.c.l.b16 %v7758
  %v8728 = vunpack.c.l.b16 %v7759
  %v8729 = vpack.c.b16 %v8726, %v8725
  %v8730 = vpack.c.b16 %v8728, %v8727
  %8733 = vmatpush.bf16.xpose.msra.mxu0 0
  %8734 = vmatpush.bf16.xpose.msra.mxu0 0
  %8735 = vmatpush.bf16.xpose.msra.mxu0 0
  %8736 = vmatpush.bf16.xpose.msra.mxu0 0
  %8737 = vmatpush.bf16.xpose.msra.mxu0 0
  %8738 = vmatpush.bf16.xpose.msra.mxu0 0
  %8739 = vmatpush.bf16.xpose.msra.mxu0 0
  %8740 = vmatpush.bf16.xpose.msra.mxu0 %v7631
  %8741 = vmatmul.bf16.gmra.mxu0 %v8729
  %v8742 = vpop.f32.mrf.mxu0
  %v8743 = vadd.f32 0.0, %v8742
  %v8744 = vpop.f32.mrf.mxu0
  %v8745 = vadd.f32 0.0, %v8744
  %8746 = vmatmul.bf16.gmra.mxu0 %v8730
  %v8747 = vpop.f32.mrf.mxu0
  %v8748 = vadd.f32 0.0, %v8747
  %v8749 = vpop.f32.mrf.mxu0
  %v8750 = vadd.f32 0.0, %v8749
  %8751 = vdwg.mxu0
  %vm8752 = vcmask 64512
  %v8753 = vsel %vm8752, %v7782, 0.0
  %v8754 = vsel %vm8752, %v7813, 0.0
  %v8755 = vadd.f32 %v8753, %v8754
  %v8756 = vsel %vm8752, %v7844, 0.0
  %v8757 = vadd.f32 %v8755, %v8756
  %v8758 = vsel %vm8752, %v7875, 0.0
  %v8759 = vadd.f32 %v8757, %v8758
  %v8760 = vsel %vm8752, %v7906, 0.0
  %v8761 = vadd.f32 %v8759, %v8760
  %v8762 = vsel %vm8752, %v7937, 0.0
  %v8763 = vadd.f32 %v8761, %v8762
  %v8764 = vsel %vm8752, %v7968, 0.0
  %v8765 = vadd.f32 %v8763, %v8764
  %v8766 = vsel %vm8752, %v7999, 0.0
  %v8767 = vadd.f32 %v8765, %v8766
  %v8768 = vsel %vm8752, %v8030, 0.0
  %v8769 = vadd.f32 %v8767, %v8768
  %v8770 = vsel %vm8752, %v8061, 0.0
  %v8771 = vadd.f32 %v8769, %v8770
  %v8772 = vsel %vm8752, %v8092, 0.0
  %v8773 = vadd.f32 %v8771, %v8772
  %v8774 = vsel %vm8752, %v8123, 0.0
  %v8775 = vadd.f32 %v8773, %v8774
  %v8776 = vsel %vm8752, %v8154, 0.0
  %v8777 = vadd.f32 %v8775, %v8776
  %v8778 = vsel %vm8752, %v8185, 0.0
  %v8779 = vadd.f32 %v8777, %v8778
  %v8780 = vsel %vm8752, %v8216, 0.0
  %v8781 = vadd.f32 %v8779, %v8780
  %v8782 = vsel %vm8752, %v8247, 0.0
  %v8783 = vadd.f32 %v8781, %v8782
  %v8784 = vsel %vm8752, %v8278, 0.0
  %v8785 = vadd.f32 %v8783, %v8784
  %v8786 = vsel %vm8752, %v8309, 0.0
  %v8787 = vadd.f32 %v8785, %v8786
  %v8788 = vsel %vm8752, %v8340, 0.0
  %v8789 = vadd.f32 %v8787, %v8788
  %v8790 = vsel %vm8752, %v8371, 0.0
  %v8791 = vadd.f32 %v8789, %v8790
  %v8792 = vsel %vm8752, %v8402, 0.0
  %v8793 = vadd.f32 %v8791, %v8792
  %v8794 = vsel %vm8752, %v8433, 0.0
  %v8795 = vadd.f32 %v8793, %v8794
  %v8796 = vsel %vm8752, %v8464, 0.0
  %v8797 = vadd.f32 %v8795, %v8796
  %v8798 = vsel %vm8752, %v8495, 0.0
  %v8799 = vadd.f32 %v8797, %v8798
  %v8800 = vsel %vm8752, %v8526, 0.0
  %v8801 = vadd.f32 %v8799, %v8800
  %v8802 = vsel %vm8752, %v8557, 0.0
  %v8803 = vadd.f32 %v8801, %v8802
  %v8804 = vsel %vm8752, %v8588, 0.0
  %v8805 = vadd.f32 %v8803, %v8804
  %v8806 = vsel %vm8752, %v8619, 0.0
  %v8807 = vadd.f32 %v8805, %v8806
  %v8808 = vsel %vm8752, %v8650, 0.0
  %v8809 = vadd.f32 %v8807, %v8808
  %v8810 = vsel %vm8752, %v8681, 0.0
  %v8811 = vadd.f32 %v8809, %v8810
  %v8812 = vsel %vm8752, %v8712, 0.0
  %v8813 = vadd.f32 %v8811, %v8812
  %v8814 = vsel %vm8752, %v8743, 0.0
  %v8815 = vadd.f32 %v8813, %v8814
  %v8816 = vsel %vm8752, %v7784, 0.0
  %v8817 = vsel %vm8752, %v7815, 0.0
  %v8818 = vadd.f32 %v8816, %v8817
  %v8819 = vsel %vm8752, %v7846, 0.0
  %v8820 = vadd.f32 %v8818, %v8819
  %v8821 = vsel %vm8752, %v7877, 0.0
  %v8822 = vadd.f32 %v8820, %v8821
  %v8823 = vsel %vm8752, %v7908, 0.0
  %v8824 = vadd.f32 %v8822, %v8823
  %v8825 = vsel %vm8752, %v7939, 0.0
  %v8826 = vadd.f32 %v8824, %v8825
  %v8827 = vsel %vm8752, %v7970, 0.0
  %v8828 = vadd.f32 %v8826, %v8827
  %v8829 = vsel %vm8752, %v8001, 0.0
  %v8830 = vadd.f32 %v8828, %v8829
  %v8831 = vsel %vm8752, %v8032, 0.0
  %v8832 = vadd.f32 %v8830, %v8831
  %v8833 = vsel %vm8752, %v8063, 0.0
  %v8834 = vadd.f32 %v8832, %v8833
  %v8835 = vsel %vm8752, %v8094, 0.0
  %v8836 = vadd.f32 %v8834, %v8835
  %v8837 = vsel %vm8752, %v8125, 0.0
  %v8838 = vadd.f32 %v8836, %v8837
  %v8839 = vsel %vm8752, %v8156, 0.0
  %v8840 = vadd.f32 %v8838, %v8839
  %v8841 = vsel %vm8752, %v8187, 0.0
  %v8842 = vadd.f32 %v8840, %v8841
  %v8843 = vsel %vm8752, %v8218, 0.0
  %v8844 = vadd.f32 %v8842, %v8843
  %v8845 = vsel %vm8752, %v8249, 0.0
  %v8846 = vadd.f32 %v8844, %v8845
  %v8847 = vsel %vm8752, %v8280, 0.0
  %v8848 = vadd.f32 %v8846, %v8847
  %v8849 = vsel %vm8752, %v8311, 0.0
  %v8850 = vadd.f32 %v8848, %v8849
  %v8851 = vsel %vm8752, %v8342, 0.0
  %v8852 = vadd.f32 %v8850, %v8851
  %v8853 = vsel %vm8752, %v8373, 0.0
  %v8854 = vadd.f32 %v8852, %v8853
  %v8855 = vsel %vm8752, %v8404, 0.0
  %v8856 = vadd.f32 %v8854, %v8855
  %v8857 = vsel %vm8752, %v8435, 0.0
  %v8858 = vadd.f32 %v8856, %v8857
  %v8859 = vsel %vm8752, %v8466, 0.0
  %v8860 = vadd.f32 %v8858, %v8859
  %v8861 = vsel %vm8752, %v8497, 0.0
  %v8862 = vadd.f32 %v8860, %v8861
  %v8863 = vsel %vm8752, %v8528, 0.0
  %v8864 = vadd.f32 %v8862, %v8863
  %v8865 = vsel %vm8752, %v8559, 0.0
  %v8866 = vadd.f32 %v8864, %v8865
  %v8867 = vsel %vm8752, %v8590, 0.0
  %v8868 = vadd.f32 %v8866, %v8867
  %v8869 = vsel %vm8752, %v8621, 0.0
  %v8870 = vadd.f32 %v8868, %v8869
  %v8871 = vsel %vm8752, %v8652, 0.0
  %v8872 = vadd.f32 %v8870, %v8871
  %v8873 = vsel %vm8752, %v8683, 0.0
  %v8874 = vadd.f32 %v8872, %v8873
  %v8875 = vsel %vm8752, %v8714, 0.0
  %v8876 = vadd.f32 %v8874, %v8875
  %v8877 = vsel %vm8752, %v8745, 0.0
  %v8878 = vadd.f32 %v8876, %v8877
  %v8879 = vsel %vm8752, %v7787, 0.0
  %v8880 = vsel %vm8752, %v7818, 0.0
  %v8881 = vadd.f32 %v8879, %v8880
  %v8882 = vsel %vm8752, %v7849, 0.0
  %v8883 = vadd.f32 %v8881, %v8882
  %v8884 = vsel %vm8752, %v7880, 0.0
  %v8885 = vadd.f32 %v8883, %v8884
  %v8886 = vsel %vm8752, %v7911, 0.0
  %v8887 = vadd.f32 %v8885, %v8886
  %v8888 = vsel %vm8752, %v7942, 0.0
  %v8889 = vadd.f32 %v8887, %v8888
  %v8890 = vsel %vm8752, %v7973, 0.0
  %v8891 = vadd.f32 %v8889, %v8890
  %v8892 = vsel %vm8752, %v8004, 0.0
  %v8893 = vadd.f32 %v8891, %v8892
  %v8894 = vsel %vm8752, %v8035, 0.0
  %v8895 = vadd.f32 %v8893, %v8894
  %v8896 = vsel %vm8752, %v8066, 0.0
  %v8897 = vadd.f32 %v8895, %v8896
  %v8898 = vsel %vm8752, %v8097, 0.0
  %v8899 = vadd.f32 %v8897, %v8898
  %v8900 = vsel %vm8752, %v8128, 0.0
  %v8901 = vadd.f32 %v8899, %v8900
  %v8902 = vsel %vm8752, %v8159, 0.0
  %v8903 = vadd.f32 %v8901, %v8902
  %v8904 = vsel %vm8752, %v8190, 0.0
  %v8905 = vadd.f32 %v8903, %v8904
  %v8906 = vsel %vm8752, %v8221, 0.0
  %v8907 = vadd.f32 %v8905, %v8906
  %v8908 = vsel %vm8752, %v8252, 0.0
  %v8909 = vadd.f32 %v8907, %v8908
  %v8910 = vsel %vm8752, %v8283, 0.0
  %v8911 = vadd.f32 %v8909, %v8910
  %v8912 = vsel %vm8752, %v8314, 0.0
  %v8913 = vadd.f32 %v8911, %v8912
  %v8914 = vsel %vm8752, %v8345, 0.0
  %v8915 = vadd.f32 %v8913, %v8914
  %v8916 = vsel %vm8752, %v8376, 0.0
  %v8917 = vadd.f32 %v8915, %v8916
  %v8918 = vsel %vm8752, %v8407, 0.0
  %v8919 = vadd.f32 %v8917, %v8918
  %v8920 = vsel %vm8752, %v8438, 0.0
  %v8921 = vadd.f32 %v8919, %v8920
  %v8922 = vsel %vm8752, %v8469, 0.0
  %v8923 = vadd.f32 %v8921, %v8922
  %v8924 = vsel %vm8752, %v8500, 0.0
  %v8925 = vadd.f32 %v8923, %v8924
  %v8926 = vsel %vm8752, %v8531, 0.0
  %v8927 = vadd.f32 %v8925, %v8926
  %v8928 = vsel %vm8752, %v8562, 0.0
  %v8929 = vadd.f32 %v8927, %v8928
  %v8930 = vsel %vm8752, %v8593, 0.0
  %v8931 = vadd.f32 %v8929, %v8930
  %v8932 = vsel %vm8752, %v8624, 0.0
  %v8933 = vadd.f32 %v8931, %v8932
  %v8934 = vsel %vm8752, %v8655, 0.0
  %v8935 = vadd.f32 %v8933, %v8934
  %v8936 = vsel %vm8752, %v8686, 0.0
  %v8937 = vadd.f32 %v8935, %v8936
  %v8938 = vsel %vm8752, %v8717, 0.0
  %v8939 = vadd.f32 %v8937, %v8938
  %v8940 = vsel %vm8752, %v8748, 0.0
  %v8941 = vadd.f32 %v8939, %v8940
  %v8942 = vsel %vm8752, %v7789, 0.0
  %v8943 = vsel %vm8752, %v7820, 0.0
  %v8944 = vadd.f32 %v8942, %v8943
  %v8945 = vsel %vm8752, %v7851, 0.0
  %v8946 = vadd.f32 %v8944, %v8945
  %v8947 = vsel %vm8752, %v7882, 0.0
  %v8948 = vadd.f32 %v8946, %v8947
  %v8949 = vsel %vm8752, %v7913, 0.0
  %v8950 = vadd.f32 %v8948, %v8949
  %v8951 = vsel %vm8752, %v7944, 0.0
  %v8952 = vadd.f32 %v8950, %v8951
  %v8953 = vsel %vm8752, %v7975, 0.0
  %v8954 = vadd.f32 %v8952, %v8953
  %v8955 = vsel %vm8752, %v8006, 0.0
  %v8956 = vadd.f32 %v8954, %v8955
  %v8957 = vsel %vm8752, %v8037, 0.0
  %v8958 = vadd.f32 %v8956, %v8957
  %v8959 = vsel %vm8752, %v8068, 0.0
  %v8960 = vadd.f32 %v8958, %v8959
  %v8961 = vsel %vm8752, %v8099, 0.0
  %v8962 = vadd.f32 %v8960, %v8961
  %v8963 = vsel %vm8752, %v8130, 0.0
  %v8964 = vadd.f32 %v8962, %v8963
  %v8965 = vsel %vm8752, %v8161, 0.0
  %v8966 = vadd.f32 %v8964, %v8965
  %v8967 = vsel %vm8752, %v8192, 0.0
  %v8968 = vadd.f32 %v8966, %v8967
  %v8969 = vsel %vm8752, %v8223, 0.0
  %v8970 = vadd.f32 %v8968, %v8969
  %v8971 = vsel %vm8752, %v8254, 0.0
  %v8972 = vadd.f32 %v8970, %v8971
  %v8973 = vsel %vm8752, %v8285, 0.0
  %v8974 = vadd.f32 %v8972, %v8973
  %v8975 = vsel %vm8752, %v8316, 0.0
  %v8976 = vadd.f32 %v8974, %v8975
  %v8977 = vsel %vm8752, %v8347, 0.0
  %v8978 = vadd.f32 %v8976, %v8977
  %v8979 = vsel %vm8752, %v8378, 0.0
  %v8980 = vadd.f32 %v8978, %v8979
  %v8981 = vsel %vm8752, %v8409, 0.0
  %v8982 = vadd.f32 %v8980, %v8981
  %v8983 = vsel %vm8752, %v8440, 0.0
  %v8984 = vadd.f32 %v8982, %v8983
  %v8985 = vsel %vm8752, %v8471, 0.0
  %v8986 = vadd.f32 %v8984, %v8985
  %v8987 = vsel %vm8752, %v8502, 0.0
  %v8988 = vadd.f32 %v8986, %v8987
  %v8989 = vsel %vm8752, %v8533, 0.0
  %v8990 = vadd.f32 %v8988, %v8989
  %v8991 = vsel %vm8752, %v8564, 0.0
  %v8992 = vadd.f32 %v8990, %v8991
  %v8993 = vsel %vm8752, %v8595, 0.0
  %v8994 = vadd.f32 %v8992, %v8993
  %v8995 = vsel %vm8752, %v8626, 0.0
  %v8996 = vadd.f32 %v8994, %v8995
  %v8997 = vsel %vm8752, %v8657, 0.0
  %v8998 = vadd.f32 %v8996, %v8997
  %v8999 = vsel %vm8752, %v8688, 0.0
  %v9000 = vadd.f32 %v8998, %v8999
  %v9001 = vsel %vm8752, %v8719, 0.0
  %v9002 = vadd.f32 %v9000, %v9001
  %v9003 = vsel %vm8752, %v8750, 0.0
  %v9004 = vadd.f32 %v9002, %v9003
  %v9005 = vld [vmem:[%s10] sm:$0xff]
  %v9006 = vld [vmem:[%s10 + $0x8] sm:$0xff]
  %v9007 = vld [vmem:[%s10 + $0x10] sm:$0xff]
  %v9008 = vld [vmem:[%s10 + $0x18] sm:$0xff]
  %9010 = vset.pattern.permute.xlu0 0
  %9011 = vperm.xlu0 %9010, %v9005
  %v9012 = vpop.permute.xlu0 %9011
  %9015 = vset.pattern.permute.xlu0 0
  %9016 = vperm.xlu0 %9015, %v9006
  %v9017 = vpop.permute.xlu0 %9016
  %9020 = vset.pattern.permute.xlu0 0
  %9021 = vperm.xlu0 %9020, %v9007
  %v9022 = vpop.permute.xlu0 %9021
  %9025 = vset.pattern.permute.xlu0 0
  %9026 = vperm.xlu0 %9025, %v9008
  %v9027 = vpop.permute.xlu0 %9026
  %v9029 = vadd.f32 %v8815, %v9012
  %v9030 = vadd.f32 %v8878, %v9017
  %v9031 = vadd.f32 %v8941, %v9022
  %v9032 = vadd.f32 %v9004, %v9027
  %v9033 = vmax.f32 %v9029, 0.0
  %v9034 = vmax.f32 %v9030, 0.0
  %v9035 = vmax.f32 %v9031, 0.0
  %v9036 = vmax.f32 %v9032, 0.0
  %v9037 = vld [vmem:[%s11] sm:$0xff]
  %v9038 = vld [vmem:[%s11 + $0x8] sm:$0xff]
  %v9039 = vld [vmem:[%s11 + $0x10] sm:$0xff]
  %v9040 = vld [vmem:[%s11 + $0x18] sm:$0xff]
  %9042 = vset.pattern.permute.xlu0 0
  %9043 = vperm.xlu0 %9042, %v9037
  %v9044 = vpop.permute.xlu0 %9043
  %9047 = vset.pattern.permute.xlu0 0
  %9048 = vperm.xlu0 %9047, %v9038
  %v9049 = vpop.permute.xlu0 %9048
  %9052 = vset.pattern.permute.xlu0 0
  %9053 = vperm.xlu0 %9052, %v9039
  %v9054 = vpop.permute.xlu0 %9053
  %9057 = vset.pattern.permute.xlu0 0
  %9058 = vperm.xlu0 %9057, %v9040
  %v9059 = vpop.permute.xlu0 %9058
  %v9061 = vmul.f32 %v9033, %v9044
  %v9062 = vmul.f32 %v9034, %v9049
  %v9063 = vmul.f32 %v9035, %v9054
  %v9064 = vmul.f32 %v9036, %v9059
  %v9065 = vsel %vm8752, %v9061, 0.0
  %v9066 = vsel %vm8752, %v9062, 0.0
  %v9067 = vadd.f32 %v9065, %v9066
  %v9068 = vsel %vm8752, %v9063, 0.0
  %v9069 = vadd.f32 %v9067, %v9068
  %v9070 = vsel %vm8752, %v9064, 0.0
  %v9071 = vadd.f32 %v9069, %v9070
  %v9072 = vrot.slane %v9071, 4
  %v9073 = vadd.f32 %v9071, %v9072
  %v9074 = vrot.slane %v9073, 2
  %v9075 = vadd.f32 %v9073, %v9074
  %v9076 = vrot.slane %v9075, 1
  %v9077 = vadd.f32 %v9075, %v9076
  %v9078 = vld [vmem:[#allocation2] sm:$0x1]
  %9080 = vset.pattern.permute.xlu0 0
  %9081 = vperm.xlu0 %9080, %v9078
  %v9082 = vpop.permute.xlu0 %9081
  %v9084 = vperm.slane %v9082, 0
  %v9085 = vadd.f32 %v9077, %v9084
  %vm9086 = vcmask 57344
  %9087 = vst.msk [vmem:[%s13] sm:$0x1] %vm9086, %v9085
  // Predicated region
  $region54: #{seismic_cnn_forward.1} parent=0 // pred_check
    _
  $region55: #{seismic_cnn_forward.1} parent=0 // pred_check_branch
    %9089 = sbr.rel (0) target = $region57
  $region56: #{seismic_cnn_forward.1} parent=0 // pred_region
    _
  $region57: #{seismic_cnn_forward.1} parent=0 // pred_fallthru
    _
  // Predicated region
  $region58: #{seismic_cnn_forward.1} parent=0 // pred_check
    _
  $region59: #{seismic_cnn_forward.1} parent=0 // pred_check_branch
    %9091 = sbr.rel (0) target = $region61
  $region60: #{seismic_cnn_forward.1} parent=0 // pred_region
    _
  $region61: #{seismic_cnn_forward.1} parent=0 // pred_fallthru
    _

</llo_original>
